<compile_context>
chip_gen: v5e
topology: v5e:2x2
jax: 0.10.0
libtpu: 0.0.40
codegen_flags: <defaults>
</compile_context>

<pallas_src>
import functools

import jax
import jax.numpy as jnp
from jax.experimental import pallas as pl
from jax.experimental.pallas import tpu as pltpu


LANES = 128  # lane-dense width for the final output store


# ----------------------------------------------------------------------------
# Fused forward kernel: one grid step == TILE_B batch samples, end to end.
# ----------------------------------------------------------------------------
def fused_forward_kernel(
    tcr_ref, epi_ref,
    tcr_w_ref, tcr_b_ref, tcr_pos_ref,
    epi_w_ref, epi_b_ref, epi_pos_ref,
    wq_ref, bq_ref, wk_ref, bk_ref, wv_ref, bv_ref,
    wo_ref, bo_ref, gamma_ref, beta_ref,
    outw_ref, outb_ref,
    o_ref,
    *, num_heads, num_layers, l_tcr, l_epi, tile_b,
):
    E = tcr_w_ref.shape[1]
    H = num_heads
    Dh = E // H
    L = l_tcr + l_epi
    TB = tile_b
    Din = tcr_ref.shape[2]

    # ---- embeddings: (TB*Lx, 1024) x (1024, E) bf16 MXU matmuls (f32 acc)
    # ---- + bias + positional encoding; concat happens in registers.
    tcr_e = jnp.dot(tcr_ref[...].reshape(TB * l_tcr, Din), tcr_w_ref[...],
                    preferred_element_type=jnp.float32)
    tcr_e = tcr_e.reshape(TB, l_tcr, E) + tcr_b_ref[...] + tcr_pos_ref[...]
    epi_e = jnp.dot(epi_ref[...].reshape(TB * l_epi, Din), epi_w_ref[...],
                    preferred_element_type=jnp.float32)
    epi_e = epi_e.reshape(TB, l_epi, E) + epi_b_ref[...] + epi_pos_ref[...]
    x = jnp.concatenate([tcr_e, epi_e], axis=1)            # (TB, L, E) f32

    # ---- transformer layers (static unroll; per-head weights pre-split in
    # ---- the wrapper, so nothing lane-slices Dh-wide stripes in the kernel).
    for layer in range(num_layers):
        x_bf = x.reshape(TB * L, E).astype(jnp.bfloat16)
        attn_flat = jnp.zeros((TB * L, E), jnp.float32)
        for h in range(H):
            # NOTE: 1/sqrt(Dh) query scale is pre-folded into wq / bq.
            q = (jnp.dot(x_bf, wq_ref[layer, h],
                         preferred_element_type=jnp.float32)
                 + bq_ref[layer, h])
            k = (jnp.dot(x_bf, wk_ref[layer, h],
                         preferred_element_type=jnp.float32)
                 + bk_ref[layer, h])
            v = (jnp.dot(x_bf, wv_ref[layer, h],
                         preferred_element_type=jnp.float32)
                 + bv_ref[layer, h])
            qb = q.reshape(TB, L, Dh).astype(jnp.bfloat16)
            kb = k.reshape(TB, L, Dh).astype(jnp.bfloat16)
            vb = v.reshape(TB, L, Dh).astype(jnp.bfloat16)

            # scores: NT dot_general (contract last dims, batch over samples)
            # -> no materialized XLU transpose.
            s = jax.lax.dot_general(qb, kb, (((2,), (2,)), ((0,), (0,))),
                                    preferred_element_type=jnp.float32)
            s = s - jnp.max(s, axis=-1, keepdims=True)
            p = jnp.exp(s)
            # TODO(synk): switch to an exact divide (p / denom) when
            # validating tight allclose vs PyTorch; approx recip is ~1e-3 rel.
            p = p * pl.reciprocal(jnp.sum(p, axis=-1, keepdims=True),
                                  approx=True)
            ctx = jax.lax.dot_general(p.astype(jnp.bfloat16), vb,
                                      (((2,), (1,)), ((0,), (0,))),
                                      preferred_element_type=jnp.float32)
            # Fold this head straight into the output projection accumulator:
            # no Dh-lane stripe stores of a concatenated head-context buffer.
            attn_flat = attn_flat + jnp.dot(
                ctx.reshape(TB * L, Dh).astype(jnp.bfloat16), wo_ref[layer, h],
                preferred_element_type=jnp.float32)

        attn = attn_flat.reshape(TB, L, E) + bo_ref[layer]

        # residual + LayerNorm (f32 statistics, eps=1e-5).
        # Dropout layers are identity in eval/inference mode.
        y = x + attn
        mean = jnp.mean(y, axis=-1, keepdims=True)
        var = jnp.mean((y - mean) ** 2, axis=-1, keepdims=True)
        x = ((y - mean) * jax.lax.rsqrt(var + 1e-5)) * gamma_ref[layer] \
            + beta_ref[layer]

    # ---- mean-pool over the sequence, output linear (VPU lane reduction),
    # ---- sigmoid, dense (TB, 1, 128) lane-dense writeback.
    # TODO(synk): like the reference module, there is no key-padding mask and
    # the mean-pool averages all positions.
    pooled = jnp.mean(x, axis=1)                            # (TB, E)
    logit = jnp.sum(pooled * outw_ref[...], axis=-1, keepdims=True) \
        + outb_ref[0]                                       # (TB, 1)
    prob = jax.nn.sigmoid(logit)
    o_ref[...] = jnp.broadcast_to(prob[:, :, None], (TB, 1, o_ref.shape[2]))


# ----------------------------------------------------------------------------
# Wrapper: one pallas_call for the whole forward pass (batch-tiled grid).
# ----------------------------------------------------------------------------
@functools.partial(jax.jit, static_argnames=("num_heads", "tile_b"))
def tcr_epitope_transformer(params, tcr, epitope, num_heads, tile_b=8):
    B, L_tcr, Din = tcr.shape
    _, L_epi, _ = epitope.shape
    E = params["tcr_w"].shape[1]
    num_layers = params["wqkv"].shape[0]
    H = num_heads
    Dh = E // H

    # Batch tiling: fill the MXU M dimension; keep grid >= 2 when possible so
    # both v7x TensorCores are used (harmless on single-TC v5e/v6e).
    tile_b = max(1, min(tile_b, B // 2)) if B >= 2 else 1
    Bp = pl.cdiv(B, tile_b) * tile_b
    if Bp != B:
        tcr = jnp.pad(tcr, ((0, Bp - B), (0, 0), (0, 0)))
        epitope = jnp.pad(epitope, ((0, Bp - B), (0, 0), (0, 0)))
    grid = (Bp // tile_b,)

    # bf16 MXU operands (f32 accumulation happens inside the kernel).
    tcr_bf = tcr.astype(jnp.bfloat16)
    epi_bf = epitope.astype(jnp.bfloat16)
    tcr_w = params["tcr_w"].astype(jnp.bfloat16)
    epi_w = params["epi_w"].astype(jnp.bfloat16)

    # Split fused QKV / output-projection weights per head at trace time
    # (static, free), fold 1/sqrt(Dh) into the query projection + bias.
    qscale = 1.0 / jnp.sqrt(jnp.float32(Dh))
    wqkv, bqkv = params["wqkv"], params["bqkv"]             # (nl,E,3E), (nl,3E)

    def per_head_w(w):                                      # (nl,E,E)->(nl,H,E,Dh)
        return (w.reshape(num_layers, E, H, Dh)
                 .transpose(0, 2, 1, 3).astype(jnp.bfloat16))

    def per_head_b(b):                                      # (nl,E)->(nl,H,1,Dh)
        return b.reshape(num_layers, H, 1, Dh).astype(jnp.float32)

    wq_h = per_head_w(wqkv[:, :, :E] * qscale)
    wk_h = per_head_w(wqkv[:, :, E:2 * E])
    wv_h = per_head_w(wqkv[:, :, 2 * E:])
    bq_h = per_head_b(bqkv[:, :E] * qscale)
    bk_h = per_head_b(bqkv[:, E:2 * E])
    bv_h = per_head_b(bqkv[:, 2 * E:])
    # output-projection rows per head: (nl,E,E) -> (nl,H,Dh,E)
    wo_h = params["wo"].reshape(num_layers, H, Dh, E).astype(jnp.bfloat16)
    bo = params["bo"].reshape(num_layers, 1, E)
    gamma = params["gamma"].reshape(num_layers, 1, E)
    beta = params["beta"].reshape(num_layers, 1, E)

    kernel = functools.partial(
        fused_forward_kernel,
        num_heads=H, num_layers=num_layers,
        l_tcr=L_tcr, l_epi=L_epi, tile_b=tile_b,
    )

    def full(shape):  # whole-array VMEM block, constant index map
        return pl.BlockSpec(shape, lambda i, _n=len(shape): (0,) * _n)

    out = pl.pallas_call(
        kernel,
        out_shape=jax.ShapeDtypeStruct((Bp, 1, LANES), jnp.float32),
        grid=grid,
        in_specs=[
            pl.BlockSpec((tile_b, L_tcr, Din), lambda i: (i, 0, 0)),
            pl.BlockSpec((tile_b, L_epi, Din), lambda i: (i, 0, 0)),
            full((Din, E)), full((1, E)), full((L_tcr, E)),
            full((Din, E)), full((1, E)), full((L_epi, E)),
            full((num_layers, H, E, Dh)), full((num_layers, H, 1, Dh)),
            full((num_layers, H, E, Dh)), full((num_layers, H, 1, Dh)),
            full((num_layers, H, E, Dh)), full((num_layers, H, 1, Dh)),
            full((num_layers, H, Dh, E)), full((num_layers, 1, E)),
            full((num_layers, 1, E)), full((num_layers, 1, E)),
            full((1, E)),
            pl.BlockSpec(memory_space=pltpu.MemorySpace.SMEM),  # out_b scalar
        ],
        out_specs=pl.BlockSpec((tile_b, 1, LANES), lambda i: (i, 0, 0)),
        compiler_params=pltpu.CompilerParams(
            dimension_semantics=("parallel",)),
    )(
        tcr_bf, epi_bf,
        tcr_w, params["tcr_b"], params["tcr_pos"],
        epi_w, params["epi_b"], params["epi_pos"],
        wq_h, bq_h, wk_h, bk_h, wv_h, bv_h,
        wo_h, bo, gamma, beta,
        params["out_w"], params["out_b"],
    )
    return out[:B, 0, 0]                                    # (B,)


# ----------------------------------------------------------------------------
# Parameter construction (deterministic, synthetic, PyTorch-like layout).
# ----------------------------------------------------------------------------
def init_params(key, embed_dim, num_heads, num_layers, max_tcr_len, max_epi_len):
    del num_heads  # head split happens in the wrapper
    ks = iter(jax.random.split(key, 8 + 4 * num_layers))
    scale = 0.05
    E = embed_dim
    p = {
        "tcr_w": jax.random.normal(next(ks), (1024, E), jnp.float32) * scale,
        "tcr_b": jax.random.normal(next(ks), (1, E), jnp.float32) * scale,
        "epi_w": jax.random.normal(next(ks), (1024, E), jnp.float32) * scale,
        "epi_b": jax.random.normal(next(ks), (1, E), jnp.float32) * scale,
        "tcr_pos": jax.random.normal(next(ks), (max_tcr_len, E), jnp.float32),
        "epi_pos": jax.random.normal(next(ks), (max_epi_len, E), jnp.float32),
        "out_w": jax.random.normal(next(ks), (1, E), jnp.float32) * scale,
        "out_b": jax.random.normal(next(ks), (1,), jnp.float32) * scale,
    }
    wqkv, bqkv, wo, bo = [], [], [], []
    for _ in range(num_layers):
        wqkv.append(jax.random.normal(next(ks), (E, 3 * E), jnp.float32) * scale)
        bqkv.append(jax.random.normal(next(ks), (3 * E,), jnp.float32) * scale)
        wo.append(jax.random.normal(next(ks), (E, E), jnp.float32) * scale)
        bo.append(jax.random.normal(next(ks), (E,), jnp.float32) * scale)
    p["wqkv"] = jnp.stack(wqkv)
    p["bqkv"] = jnp.stack(bqkv)
    p["wo"] = jnp.stack(wo)
    p["bo"] = jnp.stack(bo)
    p["gamma"] = jnp.ones((num_layers, E), jnp.float32)
    p["beta"] = jnp.zeros((num_layers, E), jnp.float32)
    return p


if __name__ == "__main__":
    # Small, module-consistent shapes (batch chosen so the tiled grid has 2
    # steps: TILE_B=4, grid=(2,)).
    batch = 8
    embed_dim = 32
    num_heads = 4
    num_layers = 2
    max_tcr_length = 8
    max_epitope_length = 8

    key = jax.random.PRNGKey(0)
    k_params, k_tcr, k_epi = jax.random.split(key, 3)

    params = init_params(k_params, embed_dim, num_heads, num_layers,
                         max_tcr_length, max_epitope_length)
    tcr = jax.random.normal(k_tcr, (batch, max_tcr_length, 1024), jnp.float32)
    epitope = jax.random.normal(k_epi, (batch, max_epitope_length, 1024),
                                jnp.float32)

    out = tcr_epitope_transformer(params, tcr, epitope, num_heads)
    out = jax.block_until_ready(out)
    assert out.shape == (batch,)
    assert bool(jnp.all(jnp.isfinite(out)))
    assert bool(jnp.all((out >= 0.0) & (out <= 1.0)))
    print("KERNEL_OK")
</pallas_src>

<mosaic_0001>
module attributes {stable_mosaic.version = 11 : i64} {
  func.func @fused_forward_kernel(%arg0: i32, %arg1: memref<4x8x1024xbf16, #tpu.memory_space<vmem>>, %arg2: memref<4x8x1024xbf16, #tpu.memory_space<vmem>>, %arg3: memref<1024x32xbf16, #tpu.memory_space<vmem>>, %arg4: memref<1x32xf32, #tpu.memory_space<vmem>>, %arg5: memref<8x32xf32, #tpu.memory_space<vmem>>, %arg6: memref<1024x32xbf16, #tpu.memory_space<vmem>>, %arg7: memref<1x32xf32, #tpu.memory_space<vmem>>, %arg8: memref<8x32xf32, #tpu.memory_space<vmem>>, %arg9: memref<2x4x32x8xbf16, #tpu.memory_space<vmem>>, %arg10: memref<2x4x1x8xf32, #tpu.memory_space<vmem>>, %arg11: memref<2x4x32x8xbf16, #tpu.memory_space<vmem>>, %arg12: memref<2x4x1x8xf32, #tpu.memory_space<vmem>>, %arg13: memref<2x4x32x8xbf16, #tpu.memory_space<vmem>>, %arg14: memref<2x4x1x8xf32, #tpu.memory_space<vmem>>, %arg15: memref<2x4x8x32xbf16, #tpu.memory_space<vmem>>, %arg16: memref<2x1x32xf32, #tpu.memory_space<vmem>>, %arg17: memref<2x1x32xf32, #tpu.memory_space<vmem>>, %arg18: memref<2x1x32xf32, #tpu.memory_space<vmem>>, %arg19: memref<1x32xf32, #tpu.memory_space<vmem>>, %arg20: memref<1xf32, #tpu.memory_space<smem>>, %arg21: memref<4x1x128xf32, #tpu.memory_space<vmem>>) attributes {dimension_semantics = [#tpu.dimension_semantics<parallel>], iteration_bounds = array<i64: 2>, scalar_prefetch = 0 : i64, scratch_operands = 0 : i64, tpu.core_type = #tpu.core_type<tc>, window_params = [{transform_indices = @transform_0, window_bounds = array<i64: 4, 8, 1024>}, {transform_indices = @transform_1, window_bounds = array<i64: 4, 8, 1024>}, {pipeline_mode = #tpu.pipeline_mode<synchronous>, transform_indices = @transform_2, window_bounds = array<i64: 1024, 32>}, {pipeline_mode = #tpu.pipeline_mode<synchronous>, transform_indices = @transform_3, window_bounds = array<i64: 1, 32>}, {pipeline_mode = #tpu.pipeline_mode<synchronous>, transform_indices = @transform_4, window_bounds = array<i64: 8, 32>}, {pipeline_mode = #tpu.pipeline_mode<synchronous>, transform_indices = @transform_5, window_bounds = array<i64: 1024, 32>}, {pipeline_mode = #tpu.pipeline_mode<synchronous>, transform_indices = @transform_6, window_bounds = array<i64: 1, 32>}, {pipeline_mode = #tpu.pipeline_mode<synchronous>, transform_indices = @transform_7, window_bounds = array<i64: 8, 32>}, {pipeline_mode = #tpu.pipeline_mode<synchronous>, transform_indices = @transform_8, window_bounds = array<i64: 2, 4, 32, 8>}, {pipeline_mode = #tpu.pipeline_mode<synchronous>, transform_indices = @transform_9, window_bounds = array<i64: 2, 4, 1, 8>}, {pipeline_mode = #tpu.pipeline_mode<synchronous>, transform_indices = @transform_10, window_bounds = array<i64: 2, 4, 32, 8>}, {pipeline_mode = #tpu.pipeline_mode<synchronous>, transform_indices = @transform_11, window_bounds = array<i64: 2, 4, 1, 8>}, {pipeline_mode = #tpu.pipeline_mode<synchronous>, transform_indices = @transform_12, window_bounds = array<i64: 2, 4, 32, 8>}, {pipeline_mode = #tpu.pipeline_mode<synchronous>, transform_indices = @transform_13, window_bounds = array<i64: 2, 4, 1, 8>}, {pipeline_mode = #tpu.pipeline_mode<synchronous>, transform_indices = @transform_14, window_bounds = array<i64: 2, 4, 8, 32>}, {pipeline_mode = #tpu.pipeline_mode<synchronous>, transform_indices = @transform_15, window_bounds = array<i64: 2, 1, 32>}, {pipeline_mode = #tpu.pipeline_mode<synchronous>, transform_indices = @transform_16, window_bounds = array<i64: 2, 1, 32>}, {pipeline_mode = #tpu.pipeline_mode<synchronous>, transform_indices = @transform_17, window_bounds = array<i64: 2, 1, 32>}, {pipeline_mode = #tpu.pipeline_mode<synchronous>, transform_indices = @transform_18, window_bounds = array<i64: 1, 32>}, {transform_indices = @transform_19, window_bounds = array<i64: 1>}, {transform_indices = @transform_20, window_bounds = array<i64: 4, 1, 128>}]} {
    %c0 = arith.constant 0 : index
    %c0_0 = arith.constant 0 : index
    %c0_1 = arith.constant 0 : index
    %0 = vector.load %arg1[%c0, %c0_0, %c0_1] : memref<4x8x1024xbf16, #tpu.memory_space<vmem>>, vector<4x8x1024xbf16>
    %1 = vector.shape_cast %0 : vector<4x8x1024xbf16> to vector<32x1024xbf16>
    %c0_2 = arith.constant 0 : index
    %c0_3 = arith.constant 0 : index
    %2 = vector.load %arg3[%c0_2, %c0_3] : memref<1024x32xbf16, #tpu.memory_space<vmem>>, vector<1024x32xbf16>
    %cst = arith.constant dense<0.000000e+00> : vector<32x32xf32>
    %3 = tpu.matmul %1, %2, %cst {dimension_numbers = #tpu.dot_dimension_numbers<[1], [0], [0], [1], [0, 0, 1, 1], [], []>} : vector<32x1024xbf16>, vector<1024x32xbf16>, vector<32x32xf32> -> vector<32x32xf32>
    %4 = vector.shape_cast %3 : vector<32x32xf32> to vector<4x8x32xf32>
    %c0_4 = arith.constant 0 : index
    %c0_5 = arith.constant 0 : index
    %5 = vector.load %arg4[%c0_4, %c0_5] : memref<1x32xf32, #tpu.memory_space<vmem>>, vector<1x32xf32>
    %6 = vector.shape_cast %5 : vector<1x32xf32> to vector<1x1x32xf32>
    %7 = vector.broadcast %6 : vector<1x1x32xf32> to vector<4x8x32xf32>
    %8 = arith.addf %4, %7 : vector<4x8x32xf32>
    %c0_6 = arith.constant 0 : index
    %c0_7 = arith.constant 0 : index
    %9 = vector.load %arg5[%c0_6, %c0_7] : memref<8x32xf32, #tpu.memory_space<vmem>>, vector<8x32xf32>
    %10 = vector.shape_cast %9 : vector<8x32xf32> to vector<1x8x32xf32>
    %11 = vector.broadcast %10 : vector<1x8x32xf32> to vector<4x8x32xf32>
    %12 = arith.addf %8, %11 : vector<4x8x32xf32>
    %c0_8 = arith.constant 0 : index
    %c0_9 = arith.constant 0 : index
    %c0_10 = arith.constant 0 : index
    %13 = vector.load %arg2[%c0_8, %c0_9, %c0_10] : memref<4x8x1024xbf16, #tpu.memory_space<vmem>>, vector<4x8x1024xbf16>
    %14 = vector.shape_cast %13 : vector<4x8x1024xbf16> to vector<32x1024xbf16>
    %c0_11 = arith.constant 0 : index
    %c0_12 = arith.constant 0 : index
    %15 = vector.load %arg6[%c0_11, %c0_12] : memref<1024x32xbf16, #tpu.memory_space<vmem>>, vector<1024x32xbf16>
    %cst_13 = arith.constant dense<0.000000e+00> : vector<32x32xf32>
    %16 = tpu.matmul %14, %15, %cst_13 {dimension_numbers = #tpu.dot_dimension_numbers<[1], [0], [0], [1], [0, 0, 1, 1], [], []>} : vector<32x1024xbf16>, vector<1024x32xbf16>, vector<32x32xf32> -> vector<32x32xf32>
    %17 = vector.shape_cast %16 : vector<32x32xf32> to vector<4x8x32xf32>
    %c0_14 = arith.constant 0 : index
    %c0_15 = arith.constant 0 : index
    %18 = vector.load %arg7[%c0_14, %c0_15] : memref<1x32xf32, #tpu.memory_space<vmem>>, vector<1x32xf32>
    %19 = vector.shape_cast %18 : vector<1x32xf32> to vector<1x1x32xf32>
    %20 = vector.broadcast %19 : vector<1x1x32xf32> to vector<4x8x32xf32>
    %21 = arith.addf %17, %20 : vector<4x8x32xf32>
    %c0_16 = arith.constant 0 : index
    %c0_17 = arith.constant 0 : index
    %22 = vector.load %arg8[%c0_16, %c0_17] : memref<8x32xf32, #tpu.memory_space<vmem>>, vector<8x32xf32>
    %23 = vector.shape_cast %22 : vector<8x32xf32> to vector<1x8x32xf32>
    %24 = vector.broadcast %23 : vector<1x8x32xf32> to vector<4x8x32xf32>
    %25 = arith.addf %21, %24 : vector<4x8x32xf32>
    %26 = tpu.concatenate %12, %25 in 1 : vector<4x8x32xf32>, vector<4x8x32xf32> -> vector<4x16x32xf32>
    %27 = vector.shape_cast %26 : vector<4x16x32xf32> to vector<64x32xf32>
    %28 = arith.truncf %27 : vector<64x32xf32> to vector<64x32xbf16>
    %cst_18 = arith.constant 0.000000e+00 : f32
    %29 = vector.broadcast %cst_18 : f32 to vector<64x32xf32>
    %c0_19 = arith.constant 0 : index
    %c0_20 = arith.constant 0 : index
    %c0_21 = arith.constant 0 : index
    %c0_22 = arith.constant 0 : index
    %30 = vector.load %arg9[%c0_19, %c0_20, %c0_21, %c0_22] : memref<2x4x32x8xbf16, #tpu.memory_space<vmem>>, vector<1x1x32x8xbf16>
    %31 = vector.shape_cast %30 : vector<1x1x32x8xbf16> to vector<32x8xbf16>
    %cst_23 = arith.constant dense<0.000000e+00> : vector<64x8xf32>
    %32 = tpu.matmul %28, %31, %cst_23 {dimension_numbers = #tpu.dot_dimension_numbers<[1], [0], [0], [1], [0, 0, 1, 1], [], []>} : vector<64x32xbf16>, vector<32x8xbf16>, vector<64x8xf32> -> vector<64x8xf32>
    %c0_24 = arith.constant 0 : index
    %c0_25 = arith.constant 0 : index
    %c0_26 = arith.constant 0 : index
    %c0_27 = arith.constant 0 : index
    %33 = vector.load %arg10[%c0_24, %c0_25, %c0_26, %c0_27] : memref<2x4x1x8xf32, #tpu.memory_space<vmem>>, vector<1x1x1x8xf32>
    %34 = vector.shape_cast %33 : vector<1x1x1x8xf32> to vector<1x8xf32>
    %35 = vector.broadcast %34 : vector<1x8xf32> to vector<64x8xf32>
    %36 = arith.addf %32, %35 : vector<64x8xf32>
    %c0_28 = arith.constant 0 : index
    %c0_29 = arith.constant 0 : index
    %c0_30 = arith.constant 0 : index
    %c0_31 = arith.constant 0 : index
    %37 = vector.load %arg11[%c0_28, %c0_29, %c0_30, %c0_31] : memref<2x4x32x8xbf16, #tpu.memory_space<vmem>>, vector<1x1x32x8xbf16>
    %38 = vector.shape_cast %37 : vector<1x1x32x8xbf16> to vector<32x8xbf16>
    %cst_32 = arith.constant dense<0.000000e+00> : vector<64x8xf32>
    %39 = tpu.matmul %28, %38, %cst_32 {dimension_numbers = #tpu.dot_dimension_numbers<[1], [0], [0], [1], [0, 0, 1, 1], [], []>} : vector<64x32xbf16>, vector<32x8xbf16>, vector<64x8xf32> -> vector<64x8xf32>
    %c0_33 = arith.constant 0 : index
    %c0_34 = arith.constant 0 : index
    %c0_35 = arith.constant 0 : index
    %c0_36 = arith.constant 0 : index
    %40 = vector.load %arg12[%c0_33, %c0_34, %c0_35, %c0_36] : memref<2x4x1x8xf32, #tpu.memory_space<vmem>>, vector<1x1x1x8xf32>
    %41 = vector.shape_cast %40 : vector<1x1x1x8xf32> to vector<1x8xf32>
    %42 = vector.broadcast %41 : vector<1x8xf32> to vector<64x8xf32>
    %43 = arith.addf %39, %42 : vector<64x8xf32>
    %c0_37 = arith.constant 0 : index
    %c0_38 = arith.constant 0 : index
    %c0_39 = arith.constant 0 : index
    %c0_40 = arith.constant 0 : index
    %44 = vector.load %arg13[%c0_37, %c0_38, %c0_39, %c0_40] : memref<2x4x32x8xbf16, #tpu.memory_space<vmem>>, vector<1x1x32x8xbf16>
    %45 = vector.shape_cast %44 : vector<1x1x32x8xbf16> to vector<32x8xbf16>
    %cst_41 = arith.constant dense<0.000000e+00> : vector<64x8xf32>
    %46 = tpu.matmul %28, %45, %cst_41 {dimension_numbers = #tpu.dot_dimension_numbers<[1], [0], [0], [1], [0, 0, 1, 1], [], []>} : vector<64x32xbf16>, vector<32x8xbf16>, vector<64x8xf32> -> vector<64x8xf32>
    %c0_42 = arith.constant 0 : index
    %c0_43 = arith.constant 0 : index
    %c0_44 = arith.constant 0 : index
    %c0_45 = arith.constant 0 : index
    %47 = vector.load %arg14[%c0_42, %c0_43, %c0_44, %c0_45] : memref<2x4x1x8xf32, #tpu.memory_space<vmem>>, vector<1x1x1x8xf32>
    %48 = vector.shape_cast %47 : vector<1x1x1x8xf32> to vector<1x8xf32>
    %49 = vector.broadcast %48 : vector<1x8xf32> to vector<64x8xf32>
    %50 = arith.addf %46, %49 : vector<64x8xf32>
    %51 = vector.shape_cast %36 : vector<64x8xf32> to vector<4x16x8xf32>
    %52 = arith.truncf %51 : vector<4x16x8xf32> to vector<4x16x8xbf16>
    %53 = vector.shape_cast %43 : vector<64x8xf32> to vector<4x16x8xf32>
    %54 = arith.truncf %53 : vector<4x16x8xf32> to vector<4x16x8xbf16>
    %55 = vector.shape_cast %50 : vector<64x8xf32> to vector<4x16x8xf32>
    %56 = arith.truncf %55 : vector<4x16x8xf32> to vector<4x16x8xbf16>
    %cst_46 = arith.constant dense<0.000000e+00> : vector<4x16x16xf32>
    %57 = tpu.matmul %52, %54, %cst_46 {dimension_numbers = #tpu.dot_dimension_numbers<[2], [2], [1], [1], [0, 0, 0, 1, 1, 1], [0], [0]>} : vector<4x16x8xbf16>, vector<4x16x8xbf16>, vector<4x16x16xf32> -> vector<4x16x16xf32>
    %cst_47 = arith.constant dense<0xFF800000> : vector<4x16xf32>
    %58 = vector.multi_reduction <maximumf>, %57, %cst_47 [2] : vector<4x16x16xf32> to vector<4x16xf32>
    %59 = vector.shape_cast %58 : vector<4x16xf32> to vector<4x16x1xf32>
    %60 = vector.broadcast %59 : vector<4x16x1xf32> to vector<4x16x16xf32>
    %61 = arith.subf %57, %60 : vector<4x16x16xf32>
    %62 = math.exp %61 : vector<4x16x16xf32>
    %cst_48 = arith.constant dense<0.000000e+00> : vector<4x16xf32>
    %63 = vector.multi_reduction <add>, %62, %cst_48 [2] : vector<4x16x16xf32> to vector<4x16xf32>
    %64 = vector.shape_cast %63 : vector<4x16xf32> to vector<4x16x1xf32>
    %65 = tpu.reciprocal %64 {approx = true} : vector<4x16x1xf32> -> vector<4x16x1xf32>
    %66 = vector.broadcast %65 : vector<4x16x1xf32> to vector<4x16x16xf32>
    %67 = arith.mulf %62, %66 : vector<4x16x16xf32>
    %68 = arith.truncf %67 : vector<4x16x16xf32> to vector<4x16x16xbf16>
    %cst_49 = arith.constant dense<0.000000e+00> : vector<4x16x8xf32>
    %69 = tpu.matmul %68, %56, %cst_49 {dimension_numbers = #tpu.dot_dimension_numbers<[2], [1], [1], [2], [0, 0, 0, 1, 1, 2], [0], [0]>} : vector<4x16x16xbf16>, vector<4x16x8xbf16>, vector<4x16x8xf32> -> vector<4x16x8xf32>
    %70 = vector.shape_cast %69 : vector<4x16x8xf32> to vector<64x8xf32>
    %71 = arith.truncf %70 : vector<64x8xf32> to vector<64x8xbf16>
    %c0_50 = arith.constant 0 : index
    %c0_51 = arith.constant 0 : index
    %c0_52 = arith.constant 0 : index
    %c0_53 = arith.constant 0 : index
    %72 = vector.load %arg15[%c0_50, %c0_51, %c0_52, %c0_53] : memref<2x4x8x32xbf16, #tpu.memory_space<vmem>>, vector<1x1x8x32xbf16>
    %73 = vector.shape_cast %72 : vector<1x1x8x32xbf16> to vector<8x32xbf16>
    %cst_54 = arith.constant dense<0.000000e+00> : vector<64x32xf32>
    %74 = tpu.matmul %71, %73, %cst_54 {dimension_numbers = #tpu.dot_dimension_numbers<[1], [0], [0], [1], [0, 0, 1, 1], [], []>} : vector<64x8xbf16>, vector<8x32xbf16>, vector<64x32xf32> -> vector<64x32xf32>
    %75 = arith.addf %29, %74 : vector<64x32xf32>
    %c0_55 = arith.constant 0 : index
    %c1 = arith.constant 1 : index
    %c0_56 = arith.constant 0 : index
    %c0_57 = arith.constant 0 : index
    %76 = vector.load %arg9[%c0_55, %c1, %c0_56, %c0_57] : memref<2x4x32x8xbf16, #tpu.memory_space<vmem>>, vector<1x1x32x8xbf16>
    %77 = vector.shape_cast %76 : vector<1x1x32x8xbf16> to vector<32x8xbf16>
    %cst_58 = arith.constant dense<0.000000e+00> : vector<64x8xf32>
    %78 = tpu.matmul %28, %77, %cst_58 {dimension_numbers = #tpu.dot_dimension_numbers<[1], [0], [0], [1], [0, 0, 1, 1], [], []>} : vector<64x32xbf16>, vector<32x8xbf16>, vector<64x8xf32> -> vector<64x8xf32>
    %c0_59 = arith.constant 0 : index
    %c1_60 = arith.constant 1 : index
    %c0_61 = arith.constant 0 : index
    %c0_62 = arith.constant 0 : index
    %79 = vector.load %arg10[%c0_59, %c1_60, %c0_61, %c0_62] : memref<2x4x1x8xf32, #tpu.memory_space<vmem>>, vector<1x1x1x8xf32>
    %80 = vector.shape_cast %79 : vector<1x1x1x8xf32> to vector<1x8xf32>
    %81 = vector.broadcast %80 : vector<1x8xf32> to vector<64x8xf32>
    %82 = arith.addf %78, %81 : vector<64x8xf32>
    %c0_63 = arith.constant 0 : index
    %c1_64 = arith.constant 1 : index
    %c0_65 = arith.constant 0 : index
    %c0_66 = arith.constant 0 : index
    %83 = vector.load %arg11[%c0_63, %c1_64, %c0_65, %c0_66] : memref<2x4x32x8xbf16, #tpu.memory_space<vmem>>, vector<1x1x32x8xbf16>
    %84 = vector.shape_cast %83 : vector<1x1x32x8xbf16> to vector<32x8xbf16>
    %cst_67 = arith.constant dense<0.000000e+00> : vector<64x8xf32>
    %85 = tpu.matmul %28, %84, %cst_67 {dimension_numbers = #tpu.dot_dimension_numbers<[1], [0], [0], [1], [0, 0, 1, 1], [], []>} : vector<64x32xbf16>, vector<32x8xbf16>, vector<64x8xf32> -> vector<64x8xf32>
    %c0_68 = arith.constant 0 : index
    %c1_69 = arith.constant 1 : index
    %c0_70 = arith.constant 0 : index
    %c0_71 = arith.constant 0 : index
    %86 = vector.load %arg12[%c0_68, %c1_69, %c0_70, %c0_71] : memref<2x4x1x8xf32, #tpu.memory_space<vmem>>, vector<1x1x1x8xf32>
    %87 = vector.shape_cast %86 : vector<1x1x1x8xf32> to vector<1x8xf32>
    %88 = vector.broadcast %87 : vector<1x8xf32> to vector<64x8xf32>
    %89 = arith.addf %85, %88 : vector<64x8xf32>
    %c0_72 = arith.constant 0 : index
    %c1_73 = arith.constant 1 : index
    %c0_74 = arith.constant 0 : index
    %c0_75 = arith.constant 0 : index
    %90 = vector.load %arg13[%c0_72, %c1_73, %c0_74, %c0_75] : memref<2x4x32x8xbf16, #tpu.memory_space<vmem>>, vector<1x1x32x8xbf16>
    %91 = vector.shape_cast %90 : vector<1x1x32x8xbf16> to vector<32x8xbf16>
    %cst_76 = arith.constant dense<0.000000e+00> : vector<64x8xf32>
    %92 = tpu.matmul %28, %91, %cst_76 {dimension_numbers = #tpu.dot_dimension_numbers<[1], [0], [0], [1], [0, 0, 1, 1], [], []>} : vector<64x32xbf16>, vector<32x8xbf16>, vector<64x8xf32> -> vector<64x8xf32>
    %c0_77 = arith.constant 0 : index
    %c1_78 = arith.constant 1 : index
    %c0_79 = arith.constant 0 : index
    %c0_80 = arith.constant 0 : index
    %93 = vector.load %arg14[%c0_77, %c1_78, %c0_79, %c0_80] : memref<2x4x1x8xf32, #tpu.memory_space<vmem>>, vector<1x1x1x8xf32>
    %94 = vector.shape_cast %93 : vector<1x1x1x8xf32> to vector<1x8xf32>
    %95 = vector.broadcast %94 : vector<1x8xf32> to vector<64x8xf32>
    %96 = arith.addf %92, %95 : vector<64x8xf32>
    %97 = vector.shape_cast %82 : vector<64x8xf32> to vector<4x16x8xf32>
    %98 = arith.truncf %97 : vector<4x16x8xf32> to vector<4x16x8xbf16>
    %99 = vector.shape_cast %89 : vector<64x8xf32> to vector<4x16x8xf32>
    %100 = arith.truncf %99 : vector<4x16x8xf32> to vector<4x16x8xbf16>
    %101 = vector.shape_cast %96 : vector<64x8xf32> to vector<4x16x8xf32>
    %102 = arith.truncf %101 : vector<4x16x8xf32> to vector<4x16x8xbf16>
    %cst_81 = arith.constant dense<0.000000e+00> : vector<4x16x16xf32>
    %103 = tpu.matmul %98, %100, %cst_81 {dimension_numbers = #tpu.dot_dimension_numbers<[2], [2], [1], [1], [0, 0, 0, 1, 1, 1], [0], [0]>} : vector<4x16x8xbf16>, vector<4x16x8xbf16>, vector<4x16x16xf32> -> vector<4x16x16xf32>
    %cst_82 = arith.constant dense<0xFF800000> : vector<4x16xf32>
    %104 = vector.multi_reduction <maximumf>, %103, %cst_82 [2] : vector<4x16x16xf32> to vector<4x16xf32>
    %105 = vector.shape_cast %104 : vector<4x16xf32> to vector<4x16x1xf32>
    %106 = vector.broadcast %105 : vector<4x16x1xf32> to vector<4x16x16xf32>
    %107 = arith.subf %103, %106 : vector<4x16x16xf32>
    %108 = math.exp %107 : vector<4x16x16xf32>
    %cst_83 = arith.constant dense<0.000000e+00> : vector<4x16xf32>
    %109 = vector.multi_reduction <add>, %108, %cst_83 [2] : vector<4x16x16xf32> to vector<4x16xf32>
    %110 = vector.shape_cast %109 : vector<4x16xf32> to vector<4x16x1xf32>
    %111 = tpu.reciprocal %110 {approx = true} : vector<4x16x1xf32> -> vector<4x16x1xf32>
    %112 = vector.broadcast %111 : vector<4x16x1xf32> to vector<4x16x16xf32>
    %113 = arith.mulf %108, %112 : vector<4x16x16xf32>
    %114 = arith.truncf %113 : vector<4x16x16xf32> to vector<4x16x16xbf16>
    %cst_84 = arith.constant dense<0.000000e+00> : vector<4x16x8xf32>
    %115 = tpu.matmul %114, %102, %cst_84 {dimension_numbers = #tpu.dot_dimension_numbers<[2], [1], [1], [2], [0, 0, 0, 1, 1, 2], [0], [0]>} : vector<4x16x16xbf16>, vector<4x16x8xbf16>, vector<4x16x8xf32> -> vector<4x16x8xf32>
    %116 = vector.shape_cast %115 : vector<4x16x8xf32> to vector<64x8xf32>
    %117 = arith.truncf %116 : vector<64x8xf32> to vector<64x8xbf16>
    %c0_85 = arith.constant 0 : index
    %c1_86 = arith.constant 1 : index
    %c0_87 = arith.constant 0 : index
    %c0_88 = arith.constant 0 : index
    %118 = vector.load %arg15[%c0_85, %c1_86, %c0_87, %c0_88] : memref<2x4x8x32xbf16, #tpu.memory_space<vmem>>, vector<1x1x8x32xbf16>
    %119 = vector.shape_cast %118 : vector<1x1x8x32xbf16> to vector<8x32xbf16>
    %cst_89 = arith.constant dense<0.000000e+00> : vector<64x32xf32>
    %120 = tpu.matmul %117, %119, %cst_89 {dimension_numbers = #tpu.dot_dimension_numbers<[1], [0], [0], [1], [0, 0, 1, 1], [], []>} : vector<64x8xbf16>, vector<8x32xbf16>, vector<64x32xf32> -> vector<64x32xf32>
    %121 = arith.addf %75, %120 : vector<64x32xf32>
    %c0_90 = arith.constant 0 : index
    %c2 = arith.constant 2 : index
    %c0_91 = arith.constant 0 : index
    %c0_92 = arith.constant 0 : index
    %122 = vector.load %arg9[%c0_90, %c2, %c0_91, %c0_92] : memref<2x4x32x8xbf16, #tpu.memory_space<vmem>>, vector<1x1x32x8xbf16>
    %123 = vector.shape_cast %122 : vector<1x1x32x8xbf16> to vector<32x8xbf16>
    %cst_93 = arith.constant dense<0.000000e+00> : vector<64x8xf32>
    %124 = tpu.matmul %28, %123, %cst_93 {dimension_numbers = #tpu.dot_dimension_numbers<[1], [0], [0], [1], [0, 0, 1, 1], [], []>} : vector<64x32xbf16>, vector<32x8xbf16>, vector<64x8xf32> -> vector<64x8xf32>
    %c0_94 = arith.constant 0 : index
    %c2_95 = arith.constant 2 : index
    %c0_96 = arith.constant 0 : index
    %c0_97 = arith.constant 0 : index
    %125 = vector.load %arg10[%c0_94, %c2_95, %c0_96, %c0_97] : memref<2x4x1x8xf32, #tpu.memory_space<vmem>>, vector<1x1x1x8xf32>
    %126 = vector.shape_cast %125 : vector<1x1x1x8xf32> to vector<1x8xf32>
    %127 = vector.broadcast %126 : vector<1x8xf32> to vector<64x8xf32>
    %128 = arith.addf %124, %127 : vector<64x8xf32>
    %c0_98 = arith.constant 0 : index
    %c2_99 = arith.constant 2 : index
    %c0_100 = arith.constant 0 : index
    %c0_101 = arith.constant 0 : index
    %129 = vector.load %arg11[%c0_98, %c2_99, %c0_100, %c0_101] : memref<2x4x32x8xbf16, #tpu.memory_space<vmem>>, vector<1x1x32x8xbf16>
    %130 = vector.shape_cast %129 : vector<1x1x32x8xbf16> to vector<32x8xbf16>
    %cst_102 = arith.constant dense<0.000000e+00> : vector<64x8xf32>
    %131 = tpu.matmul %28, %130, %cst_102 {dimension_numbers = #tpu.dot_dimension_numbers<[1], [0], [0], [1], [0, 0, 1, 1], [], []>} : vector<64x32xbf16>, vector<32x8xbf16>, vector<64x8xf32> -> vector<64x8xf32>
    %c0_103 = arith.constant 0 : index
    %c2_104 = arith.constant 2 : index
    %c0_105 = arith.constant 0 : index
    %c0_106 = arith.constant 0 : index
    %132 = vector.load %arg12[%c0_103, %c2_104, %c0_105, %c0_106] : memref<2x4x1x8xf32, #tpu.memory_space<vmem>>, vector<1x1x1x8xf32>
    %133 = vector.shape_cast %132 : vector<1x1x1x8xf32> to vector<1x8xf32>
    %134 = vector.broadcast %133 : vector<1x8xf32> to vector<64x8xf32>
    %135 = arith.addf %131, %134 : vector<64x8xf32>
    %c0_107 = arith.constant 0 : index
    %c2_108 = arith.constant 2 : index
    %c0_109 = arith.constant 0 : index
    %c0_110 = arith.constant 0 : index
    %136 = vector.load %arg13[%c0_107, %c2_108, %c0_109, %c0_110] : memref<2x4x32x8xbf16, #tpu.memory_space<vmem>>, vector<1x1x32x8xbf16>
    %137 = vector.shape_cast %136 : vector<1x1x32x8xbf16> to vector<32x8xbf16>
    %cst_111 = arith.constant dense<0.000000e+00> : vector<64x8xf32>
    %138 = tpu.matmul %28, %137, %cst_111 {dimension_numbers = #tpu.dot_dimension_numbers<[1], [0], [0], [1], [0, 0, 1, 1], [], []>} : vector<64x32xbf16>, vector<32x8xbf16>, vector<64x8xf32> -> vector<64x8xf32>
    %c0_112 = arith.constant 0 : index
    %c2_113 = arith.constant 2 : index
    %c0_114 = arith.constant 0 : index
    %c0_115 = arith.constant 0 : index
    %139 = vector.load %arg14[%c0_112, %c2_113, %c0_114, %c0_115] : memref<2x4x1x8xf32, #tpu.memory_space<vmem>>, vector<1x1x1x8xf32>
    %140 = vector.shape_cast %139 : vector<1x1x1x8xf32> to vector<1x8xf32>
    %141 = vector.broadcast %140 : vector<1x8xf32> to vector<64x8xf32>
    %142 = arith.addf %138, %141 : vector<64x8xf32>
    %143 = vector.shape_cast %128 : vector<64x8xf32> to vector<4x16x8xf32>
    %144 = arith.truncf %143 : vector<4x16x8xf32> to vector<4x16x8xbf16>
    %145 = vector.shape_cast %135 : vector<64x8xf32> to vector<4x16x8xf32>
    %146 = arith.truncf %145 : vector<4x16x8xf32> to vector<4x16x8xbf16>
    %147 = vector.shape_cast %142 : vector<64x8xf32> to vector<4x16x8xf32>
    %148 = arith.truncf %147 : vector<4x16x8xf32> to vector<4x16x8xbf16>
    %cst_116 = arith.constant dense<0.000000e+00> : vector<4x16x16xf32>
    %149 = tpu.matmul %144, %146, %cst_116 {dimension_numbers = #tpu.dot_dimension_numbers<[2], [2], [1], [1], [0, 0, 0, 1, 1, 1], [0], [0]>} : vector<4x16x8xbf16>, vector<4x16x8xbf16>, vector<4x16x16xf32> -> vector<4x16x16xf32>
    %cst_117 = arith.constant dense<0xFF800000> : vector<4x16xf32>
    %150 = vector.multi_reduction <maximumf>, %149, %cst_117 [2] : vector<4x16x16xf32> to vector<4x16xf32>
    %151 = vector.shape_cast %150 : vector<4x16xf32> to vector<4x16x1xf32>
    %152 = vector.broadcast %151 : vector<4x16x1xf32> to vector<4x16x16xf32>
    %153 = arith.subf %149, %152 : vector<4x16x16xf32>
    %154 = math.exp %153 : vector<4x16x16xf32>
    %cst_118 = arith.constant dense<0.000000e+00> : vector<4x16xf32>
    %155 = vector.multi_reduction <add>, %154, %cst_118 [2] : vector<4x16x16xf32> to vector<4x16xf32>
    %156 = vector.shape_cast %155 : vector<4x16xf32> to vector<4x16x1xf32>
    %157 = tpu.reciprocal %156 {approx = true} : vector<4x16x1xf32> -> vector<4x16x1xf32>
    %158 = vector.broadcast %157 : vector<4x16x1xf32> to vector<4x16x16xf32>
    %159 = arith.mulf %154, %158 : vector<4x16x16xf32>
    %160 = arith.truncf %159 : vector<4x16x16xf32> to vector<4x16x16xbf16>
    %cst_119 = arith.constant dense<0.000000e+00> : vector<4x16x8xf32>
    %161 = tpu.matmul %160, %148, %cst_119 {dimension_numbers = #tpu.dot_dimension_numbers<[2], [1], [1], [2], [0, 0, 0, 1, 1, 2], [0], [0]>} : vector<4x16x16xbf16>, vector<4x16x8xbf16>, vector<4x16x8xf32> -> vector<4x16x8xf32>
    %162 = vector.shape_cast %161 : vector<4x16x8xf32> to vector<64x8xf32>
    %163 = arith.truncf %162 : vector<64x8xf32> to vector<64x8xbf16>
    %c0_120 = arith.constant 0 : index
    %c2_121 = arith.constant 2 : index
    %c0_122 = arith.constant 0 : index
    %c0_123 = arith.constant 0 : index
    %164 = vector.load %arg15[%c0_120, %c2_121, %c0_122, %c0_123] : memref<2x4x8x32xbf16, #tpu.memory_space<vmem>>, vector<1x1x8x32xbf16>
    %165 = vector.shape_cast %164 : vector<1x1x8x32xbf16> to vector<8x32xbf16>
    %cst_124 = arith.constant dense<0.000000e+00> : vector<64x32xf32>
    %166 = tpu.matmul %163, %165, %cst_124 {dimension_numbers = #tpu.dot_dimension_numbers<[1], [0], [0], [1], [0, 0, 1, 1], [], []>} : vector<64x8xbf16>, vector<8x32xbf16>, vector<64x32xf32> -> vector<64x32xf32>
    %167 = arith.addf %121, %166 : vector<64x32xf32>
    %c0_125 = arith.constant 0 : index
    %c3 = arith.constant 3 : index
    %c0_126 = arith.constant 0 : index
    %c0_127 = arith.constant 0 : index
    %168 = vector.load %arg9[%c0_125, %c3, %c0_126, %c0_127] : memref<2x4x32x8xbf16, #tpu.memory_space<vmem>>, vector<1x1x32x8xbf16>
    %169 = vector.shape_cast %168 : vector<1x1x32x8xbf16> to vector<32x8xbf16>
    %cst_128 = arith.constant dense<0.000000e+00> : vector<64x8xf32>
    %170 = tpu.matmul %28, %169, %cst_128 {dimension_numbers = #tpu.dot_dimension_numbers<[1], [0], [0], [1], [0, 0, 1, 1], [], []>} : vector<64x32xbf16>, vector<32x8xbf16>, vector<64x8xf32> -> vector<64x8xf32>
    %c0_129 = arith.constant 0 : index
    %c3_130 = arith.constant 3 : index
    %c0_131 = arith.constant 0 : index
    %c0_132 = arith.constant 0 : index
    %171 = vector.load %arg10[%c0_129, %c3_130, %c0_131, %c0_132] : memref<2x4x1x8xf32, #tpu.memory_space<vmem>>, vector<1x1x1x8xf32>
    %172 = vector.shape_cast %171 : vector<1x1x1x8xf32> to vector<1x8xf32>
    %173 = vector.broadcast %172 : vector<1x8xf32> to vector<64x8xf32>
    %174 = arith.addf %170, %173 : vector<64x8xf32>
    %c0_133 = arith.constant 0 : index
    %c3_134 = arith.constant 3 : index
    %c0_135 = arith.constant 0 : index
    %c0_136 = arith.constant 0 : index
    %175 = vector.load %arg11[%c0_133, %c3_134, %c0_135, %c0_136] : memref<2x4x32x8xbf16, #tpu.memory_space<vmem>>, vector<1x1x32x8xbf16>
    %176 = vector.shape_cast %175 : vector<1x1x32x8xbf16> to vector<32x8xbf16>
    %cst_137 = arith.constant dense<0.000000e+00> : vector<64x8xf32>
    %177 = tpu.matmul %28, %176, %cst_137 {dimension_numbers = #tpu.dot_dimension_numbers<[1], [0], [0], [1], [0, 0, 1, 1], [], []>} : vector<64x32xbf16>, vector<32x8xbf16>, vector<64x8xf32> -> vector<64x8xf32>
    %c0_138 = arith.constant 0 : index
    %c3_139 = arith.constant 3 : index
    %c0_140 = arith.constant 0 : index
    %c0_141 = arith.constant 0 : index
    %178 = vector.load %arg12[%c0_138, %c3_139, %c0_140, %c0_141] : memref<2x4x1x8xf32, #tpu.memory_space<vmem>>, vector<1x1x1x8xf32>
    %179 = vector.shape_cast %178 : vector<1x1x1x8xf32> to vector<1x8xf32>
    %180 = vector.broadcast %179 : vector<1x8xf32> to vector<64x8xf32>
    %181 = arith.addf %177, %180 : vector<64x8xf32>
    %c0_142 = arith.constant 0 : index
    %c3_143 = arith.constant 3 : index
    %c0_144 = arith.constant 0 : index
    %c0_145 = arith.constant 0 : index
    %182 = vector.load %arg13[%c0_142, %c3_143, %c0_144, %c0_145] : memref<2x4x32x8xbf16, #tpu.memory_space<vmem>>, vector<1x1x32x8xbf16>
    %183 = vector.shape_cast %182 : vector<1x1x32x8xbf16> to vector<32x8xbf16>
    %cst_146 = arith.constant dense<0.000000e+00> : vector<64x8xf32>
    %184 = tpu.matmul %28, %183, %cst_146 {dimension_numbers = #tpu.dot_dimension_numbers<[1], [0], [0], [1], [0, 0, 1, 1], [], []>} : vector<64x32xbf16>, vector<32x8xbf16>, vector<64x8xf32> -> vector<64x8xf32>
    %c0_147 = arith.constant 0 : index
    %c3_148 = arith.constant 3 : index
    %c0_149 = arith.constant 0 : index
    %c0_150 = arith.constant 0 : index
    %185 = vector.load %arg14[%c0_147, %c3_148, %c0_149, %c0_150] : memref<2x4x1x8xf32, #tpu.memory_space<vmem>>, vector<1x1x1x8xf32>
    %186 = vector.shape_cast %185 : vector<1x1x1x8xf32> to vector<1x8xf32>
    %187 = vector.broadcast %186 : vector<1x8xf32> to vector<64x8xf32>
    %188 = arith.addf %184, %187 : vector<64x8xf32>
    %189 = vector.shape_cast %174 : vector<64x8xf32> to vector<4x16x8xf32>
    %190 = arith.truncf %189 : vector<4x16x8xf32> to vector<4x16x8xbf16>
    %191 = vector.shape_cast %181 : vector<64x8xf32> to vector<4x16x8xf32>
    %192 = arith.truncf %191 : vector<4x16x8xf32> to vector<4x16x8xbf16>
    %193 = vector.shape_cast %188 : vector<64x8xf32> to vector<4x16x8xf32>
    %194 = arith.truncf %193 : vector<4x16x8xf32> to vector<4x16x8xbf16>
    %cst_151 = arith.constant dense<0.000000e+00> : vector<4x16x16xf32>
    %195 = tpu.matmul %190, %192, %cst_151 {dimension_numbers = #tpu.dot_dimension_numbers<[2], [2], [1], [1], [0, 0, 0, 1, 1, 1], [0], [0]>} : vector<4x16x8xbf16>, vector<4x16x8xbf16>, vector<4x16x16xf32> -> vector<4x16x16xf32>
    %cst_152 = arith.constant dense<0xFF800000> : vector<4x16xf32>
    %196 = vector.multi_reduction <maximumf>, %195, %cst_152 [2] : vector<4x16x16xf32> to vector<4x16xf32>
    %197 = vector.shape_cast %196 : vector<4x16xf32> to vector<4x16x1xf32>
    %198 = vector.broadcast %197 : vector<4x16x1xf32> to vector<4x16x16xf32>
    %199 = arith.subf %195, %198 : vector<4x16x16xf32>
    %200 = math.exp %199 : vector<4x16x16xf32>
    %cst_153 = arith.constant dense<0.000000e+00> : vector<4x16xf32>
    %201 = vector.multi_reduction <add>, %200, %cst_153 [2] : vector<4x16x16xf32> to vector<4x16xf32>
    %202 = vector.shape_cast %201 : vector<4x16xf32> to vector<4x16x1xf32>
    %203 = tpu.reciprocal %202 {approx = true} : vector<4x16x1xf32> -> vector<4x16x1xf32>
    %204 = vector.broadcast %203 : vector<4x16x1xf32> to vector<4x16x16xf32>
    %205 = arith.mulf %200, %204 : vector<4x16x16xf32>
    %206 = arith.truncf %205 : vector<4x16x16xf32> to vector<4x16x16xbf16>
    %cst_154 = arith.constant dense<0.000000e+00> : vector<4x16x8xf32>
    %207 = tpu.matmul %206, %194, %cst_154 {dimension_numbers = #tpu.dot_dimension_numbers<[2], [1], [1], [2], [0, 0, 0, 1, 1, 2], [0], [0]>} : vector<4x16x16xbf16>, vector<4x16x8xbf16>, vector<4x16x8xf32> -> vector<4x16x8xf32>
    %208 = vector.shape_cast %207 : vector<4x16x8xf32> to vector<64x8xf32>
    %209 = arith.truncf %208 : vector<64x8xf32> to vector<64x8xbf16>
    %c0_155 = arith.constant 0 : index
    %c3_156 = arith.constant 3 : index
    %c0_157 = arith.constant 0 : index
    %c0_158 = arith.constant 0 : index
    %210 = vector.load %arg15[%c0_155, %c3_156, %c0_157, %c0_158] : memref<2x4x8x32xbf16, #tpu.memory_space<vmem>>, vector<1x1x8x32xbf16>
    %211 = vector.shape_cast %210 : vector<1x1x8x32xbf16> to vector<8x32xbf16>
    %cst_159 = arith.constant dense<0.000000e+00> : vector<64x32xf32>
    %212 = tpu.matmul %209, %211, %cst_159 {dimension_numbers = #tpu.dot_dimension_numbers<[1], [0], [0], [1], [0, 0, 1, 1], [], []>} : vector<64x8xbf16>, vector<8x32xbf16>, vector<64x32xf32> -> vector<64x32xf32>
    %213 = arith.addf %167, %212 : vector<64x32xf32>
    %214 = vector.shape_cast %213 : vector<64x32xf32> to vector<4x16x32xf32>
    %c0_160 = arith.constant 0 : index
    %c0_161 = arith.constant 0 : index
    %c0_162 = arith.constant 0 : index
    %215 = vector.load %arg16[%c0_160, %c0_161, %c0_162] : memref<2x1x32xf32, #tpu.memory_space<vmem>>, vector<1x1x32xf32>
    %216 = vector.shape_cast %215 : vector<1x1x32xf32> to vector<1x32xf32>
    %217 = vector.shape_cast %216 : vector<1x32xf32> to vector<1x1x32xf32>
    %218 = vector.broadcast %217 : vector<1x1x32xf32> to vector<4x16x32xf32>
    %219 = arith.addf %214, %218 : vector<4x16x32xf32>
    %220 = arith.addf %26, %219 : vector<4x16x32xf32>
    %cst_163 = arith.constant dense<0.000000e+00> : vector<4x16xf32>
    %221 = vector.multi_reduction <add>, %220, %cst_163 [2] : vector<4x16x32xf32> to vector<4x16xf32>
    %222 = vector.shape_cast %221 : vector<4x16xf32> to vector<4x16x1xf32>
    %cst_164 = arith.constant 3.200000e+01 : f32
    %223 = vector.broadcast %cst_164 : f32 to vector<4x16x1xf32>
    %224 = arith.divf %222, %223 : vector<4x16x1xf32>
    %225 = vector.broadcast %224 : vector<4x16x1xf32> to vector<4x16x32xf32>
    %226 = arith.subf %220, %225 : vector<4x16x32xf32>
    %227 = arith.mulf %226, %226 : vector<4x16x32xf32>
    %cst_165 = arith.constant dense<0.000000e+00> : vector<4x16xf32>
    %228 = vector.multi_reduction <add>, %227, %cst_165 [2] : vector<4x16x32xf32> to vector<4x16xf32>
    %229 = vector.shape_cast %228 : vector<4x16xf32> to vector<4x16x1xf32>
    %cst_166 = arith.constant 3.200000e+01 : f32
    %230 = vector.broadcast %cst_166 : f32 to vector<4x16x1xf32>
    %231 = arith.divf %229, %230 : vector<4x16x1xf32>
    %232 = vector.broadcast %224 : vector<4x16x1xf32> to vector<4x16x32xf32>
    %233 = arith.subf %220, %232 : vector<4x16x32xf32>
    %cst_167 = arith.constant 9.99999974E-6 : f32
    %234 = vector.broadcast %cst_167 : f32 to vector<4x16x1xf32>
    %235 = arith.addf %231, %234 : vector<4x16x1xf32>
    %236 = math.rsqrt %235 : vector<4x16x1xf32>
    %237 = vector.broadcast %236 : vector<4x16x1xf32> to vector<4x16x32xf32>
    %238 = arith.mulf %233, %237 : vector<4x16x32xf32>
    %c0_168 = arith.constant 0 : index
    %c0_169 = arith.constant 0 : index
    %c0_170 = arith.constant 0 : index
    %239 = vector.load %arg17[%c0_168, %c0_169, %c0_170] : memref<2x1x32xf32, #tpu.memory_space<vmem>>, vector<1x1x32xf32>
    %240 = vector.shape_cast %239 : vector<1x1x32xf32> to vector<1x32xf32>
    %241 = vector.shape_cast %240 : vector<1x32xf32> to vector<1x1x32xf32>
    %242 = vector.broadcast %241 : vector<1x1x32xf32> to vector<4x16x32xf32>
    %243 = arith.mulf %238, %242 : vector<4x16x32xf32>
    %c0_171 = arith.constant 0 : index
    %c0_172 = arith.constant 0 : index
    %c0_173 = arith.constant 0 : index
    %244 = vector.load %arg18[%c0_171, %c0_172, %c0_173] : memref<2x1x32xf32, #tpu.memory_space<vmem>>, vector<1x1x32xf32>
    %245 = vector.shape_cast %244 : vector<1x1x32xf32> to vector<1x32xf32>
    %246 = vector.shape_cast %245 : vector<1x32xf32> to vector<1x1x32xf32>
    %247 = vector.broadcast %246 : vector<1x1x32xf32> to vector<4x16x32xf32>
    %248 = arith.addf %243, %247 : vector<4x16x32xf32>
    %249 = vector.shape_cast %248 : vector<4x16x32xf32> to vector<64x32xf32>
    %250 = arith.truncf %249 : vector<64x32xf32> to vector<64x32xbf16>
    %cst_174 = arith.constant 0.000000e+00 : f32
    %251 = vector.broadcast %cst_174 : f32 to vector<64x32xf32>
    %c1_175 = arith.constant 1 : index
    %c0_176 = arith.constant 0 : index
    %c0_177 = arith.constant 0 : index
    %c0_178 = arith.constant 0 : index
    %252 = vector.load %arg9[%c1_175, %c0_176, %c0_177, %c0_178] : memref<2x4x32x8xbf16, #tpu.memory_space<vmem>>, vector<1x1x32x8xbf16>
    %253 = vector.shape_cast %252 : vector<1x1x32x8xbf16> to vector<32x8xbf16>
    %cst_179 = arith.constant dense<0.000000e+00> : vector<64x8xf32>
    %254 = tpu.matmul %250, %253, %cst_179 {dimension_numbers = #tpu.dot_dimension_numbers<[1], [0], [0], [1], [0, 0, 1, 1], [], []>} : vector<64x32xbf16>, vector<32x8xbf16>, vector<64x8xf32> -> vector<64x8xf32>
    %c1_180 = arith.constant 1 : index
    %c0_181 = arith.constant 0 : index
    %c0_182 = arith.constant 0 : index
    %c0_183 = arith.constant 0 : index
    %255 = vector.load %arg10[%c1_180, %c0_181, %c0_182, %c0_183] : memref<2x4x1x8xf32, #tpu.memory_space<vmem>>, vector<1x1x1x8xf32>
    %256 = vector.shape_cast %255 : vector<1x1x1x8xf32> to vector<1x8xf32>
    %257 = vector.broadcast %256 : vector<1x8xf32> to vector<64x8xf32>
    %258 = arith.addf %254, %257 : vector<64x8xf32>
    %c1_184 = arith.constant 1 : index
    %c0_185 = arith.constant 0 : index
    %c0_186 = arith.constant 0 : index
    %c0_187 = arith.constant 0 : index
    %259 = vector.load %arg11[%c1_184, %c0_185, %c0_186, %c0_187] : memref<2x4x32x8xbf16, #tpu.memory_space<vmem>>, vector<1x1x32x8xbf16>
    %260 = vector.shape_cast %259 : vector<1x1x32x8xbf16> to vector<32x8xbf16>
    %cst_188 = arith.constant dense<0.000000e+00> : vector<64x8xf32>
    %261 = tpu.matmul %250, %260, %cst_188 {dimension_numbers = #tpu.dot_dimension_numbers<[1], [0], [0], [1], [0, 0, 1, 1], [], []>} : vector<64x32xbf16>, vector<32x8xbf16>, vector<64x8xf32> -> vector<64x8xf32>
    %c1_189 = arith.constant 1 : index
    %c0_190 = arith.constant 0 : index
    %c0_191 = arith.constant 0 : index
    %c0_192 = arith.constant 0 : index
    %262 = vector.load %arg12[%c1_189, %c0_190, %c0_191, %c0_192] : memref<2x4x1x8xf32, #tpu.memory_space<vmem>>, vector<1x1x1x8xf32>
    %263 = vector.shape_cast %262 : vector<1x1x1x8xf32> to vector<1x8xf32>
    %264 = vector.broadcast %263 : vector<1x8xf32> to vector<64x8xf32>
    %265 = arith.addf %261, %264 : vector<64x8xf32>
    %c1_193 = arith.constant 1 : index
    %c0_194 = arith.constant 0 : index
    %c0_195 = arith.constant 0 : index
    %c0_196 = arith.constant 0 : index
    %266 = vector.load %arg13[%c1_193, %c0_194, %c0_195, %c0_196] : memref<2x4x32x8xbf16, #tpu.memory_space<vmem>>, vector<1x1x32x8xbf16>
    %267 = vector.shape_cast %266 : vector<1x1x32x8xbf16> to vector<32x8xbf16>
    %cst_197 = arith.constant dense<0.000000e+00> : vector<64x8xf32>
    %268 = tpu.matmul %250, %267, %cst_197 {dimension_numbers = #tpu.dot_dimension_numbers<[1], [0], [0], [1], [0, 0, 1, 1], [], []>} : vector<64x32xbf16>, vector<32x8xbf16>, vector<64x8xf32> -> vector<64x8xf32>
    %c1_198 = arith.constant 1 : index
    %c0_199 = arith.constant 0 : index
    %c0_200 = arith.constant 0 : index
    %c0_201 = arith.constant 0 : index
    %269 = vector.load %arg14[%c1_198, %c0_199, %c0_200, %c0_201] : memref<2x4x1x8xf32, #tpu.memory_space<vmem>>, vector<1x1x1x8xf32>
    %270 = vector.shape_cast %269 : vector<1x1x1x8xf32> to vector<1x8xf32>
    %271 = vector.broadcast %270 : vector<1x8xf32> to vector<64x8xf32>
    %272 = arith.addf %268, %271 : vector<64x8xf32>
    %273 = vector.shape_cast %258 : vector<64x8xf32> to vector<4x16x8xf32>
    %274 = arith.truncf %273 : vector<4x16x8xf32> to vector<4x16x8xbf16>
    %275 = vector.shape_cast %265 : vector<64x8xf32> to vector<4x16x8xf32>
    %276 = arith.truncf %275 : vector<4x16x8xf32> to vector<4x16x8xbf16>
    %277 = vector.shape_cast %272 : vector<64x8xf32> to vector<4x16x8xf32>
    %278 = arith.truncf %277 : vector<4x16x8xf32> to vector<4x16x8xbf16>
    %cst_202 = arith.constant dense<0.000000e+00> : vector<4x16x16xf32>
    %279 = tpu.matmul %274, %276, %cst_202 {dimension_numbers = #tpu.dot_dimension_numbers<[2], [2], [1], [1], [0, 0, 0, 1, 1, 1], [0], [0]>} : vector<4x16x8xbf16>, vector<4x16x8xbf16>, vector<4x16x16xf32> -> vector<4x16x16xf32>
    %cst_203 = arith.constant dense<0xFF800000> : vector<4x16xf32>
    %280 = vector.multi_reduction <maximumf>, %279, %cst_203 [2] : vector<4x16x16xf32> to vector<4x16xf32>
    %281 = vector.shape_cast %280 : vector<4x16xf32> to vector<4x16x1xf32>
    %282 = vector.broadcast %281 : vector<4x16x1xf32> to vector<4x16x16xf32>
    %283 = arith.subf %279, %282 : vector<4x16x16xf32>
    %284 = math.exp %283 : vector<4x16x16xf32>
    %cst_204 = arith.constant dense<0.000000e+00> : vector<4x16xf32>
    %285 = vector.multi_reduction <add>, %284, %cst_204 [2] : vector<4x16x16xf32> to vector<4x16xf32>
    %286 = vector.shape_cast %285 : vector<4x16xf32> to vector<4x16x1xf32>
    %287 = tpu.reciprocal %286 {approx = true} : vector<4x16x1xf32> -> vector<4x16x1xf32>
    %288 = vector.broadcast %287 : vector<4x16x1xf32> to vector<4x16x16xf32>
    %289 = arith.mulf %284, %288 : vector<4x16x16xf32>
    %290 = arith.truncf %289 : vector<4x16x16xf32> to vector<4x16x16xbf16>
    %cst_205 = arith.constant dense<0.000000e+00> : vector<4x16x8xf32>
    %291 = tpu.matmul %290, %278, %cst_205 {dimension_numbers = #tpu.dot_dimension_numbers<[2], [1], [1], [2], [0, 0, 0, 1, 1, 2], [0], [0]>} : vector<4x16x16xbf16>, vector<4x16x8xbf16>, vector<4x16x8xf32> -> vector<4x16x8xf32>
    %292 = vector.shape_cast %291 : vector<4x16x8xf32> to vector<64x8xf32>
    %293 = arith.truncf %292 : vector<64x8xf32> to vector<64x8xbf16>
    %c1_206 = arith.constant 1 : index
    %c0_207 = arith.constant 0 : index
    %c0_208 = arith.constant 0 : index
    %c0_209 = arith.constant 0 : index
    %294 = vector.load %arg15[%c1_206, %c0_207, %c0_208, %c0_209] : memref<2x4x8x32xbf16, #tpu.memory_space<vmem>>, vector<1x1x8x32xbf16>
    %295 = vector.shape_cast %294 : vector<1x1x8x32xbf16> to vector<8x32xbf16>
    %cst_210 = arith.constant dense<0.000000e+00> : vector<64x32xf32>
    %296 = tpu.matmul %293, %295, %cst_210 {dimension_numbers = #tpu.dot_dimension_numbers<[1], [0], [0], [1], [0, 0, 1, 1], [], []>} : vector<64x8xbf16>, vector<8x32xbf16>, vector<64x32xf32> -> vector<64x32xf32>
    %297 = arith.addf %251, %296 : vector<64x32xf32>
    %c1_211 = arith.constant 1 : index
    %c1_212 = arith.constant 1 : index
    %c0_213 = arith.constant 0 : index
    %c0_214 = arith.constant 0 : index
    %298 = vector.load %arg9[%c1_211, %c1_212, %c0_213, %c0_214] : memref<2x4x32x8xbf16, #tpu.memory_space<vmem>>, vector<1x1x32x8xbf16>
    %299 = vector.shape_cast %298 : vector<1x1x32x8xbf16> to vector<32x8xbf16>
    %cst_215 = arith.constant dense<0.000000e+00> : vector<64x8xf32>
    %300 = tpu.matmul %250, %299, %cst_215 {dimension_numbers = #tpu.dot_dimension_numbers<[1], [0], [0], [1], [0, 0, 1, 1], [], []>} : vector<64x32xbf16>, vector<32x8xbf16>, vector<64x8xf32> -> vector<64x8xf32>
    %c1_216 = arith.constant 1 : index
    %c1_217 = arith.constant 1 : index
    %c0_218 = arith.constant 0 : index
    %c0_219 = arith.constant 0 : index
    %301 = vector.load %arg10[%c1_216, %c1_217, %c0_218, %c0_219] : memref<2x4x1x8xf32, #tpu.memory_space<vmem>>, vector<1x1x1x8xf32>
    %302 = vector.shape_cast %301 : vector<1x1x1x8xf32> to vector<1x8xf32>
    %303 = vector.broadcast %302 : vector<1x8xf32> to vector<64x8xf32>
    %304 = arith.addf %300, %303 : vector<64x8xf32>
    %c1_220 = arith.constant 1 : index
    %c1_221 = arith.constant 1 : index
    %c0_222 = arith.constant 0 : index
    %c0_223 = arith.constant 0 : index
    %305 = vector.load %arg11[%c1_220, %c1_221, %c0_222, %c0_223] : memref<2x4x32x8xbf16, #tpu.memory_space<vmem>>, vector<1x1x32x8xbf16>
    %306 = vector.shape_cast %305 : vector<1x1x32x8xbf16> to vector<32x8xbf16>
    %cst_224 = arith.constant dense<0.000000e+00> : vector<64x8xf32>
    %307 = tpu.matmul %250, %306, %cst_224 {dimension_numbers = #tpu.dot_dimension_numbers<[1], [0], [0], [1], [0, 0, 1, 1], [], []>} : vector<64x32xbf16>, vector<32x8xbf16>, vector<64x8xf32> -> vector<64x8xf32>
    %c1_225 = arith.constant 1 : index
    %c1_226 = arith.constant 1 : index
    %c0_227 = arith.constant 0 : index
    %c0_228 = arith.constant 0 : index
    %308 = vector.load %arg12[%c1_225, %c1_226, %c0_227, %c0_228] : memref<2x4x1x8xf32, #tpu.memory_space<vmem>>, vector<1x1x1x8xf32>
    %309 = vector.shape_cast %308 : vector<1x1x1x8xf32> to vector<1x8xf32>
    %310 = vector.broadcast %309 : vector<1x8xf32> to vector<64x8xf32>
    %311 = arith.addf %307, %310 : vector<64x8xf32>
    %c1_229 = arith.constant 1 : index
    %c1_230 = arith.constant 1 : index
    %c0_231 = arith.constant 0 : index
    %c0_232 = arith.constant 0 : index
    %312 = vector.load %arg13[%c1_229, %c1_230, %c0_231, %c0_232] : memref<2x4x32x8xbf16, #tpu.memory_space<vmem>>, vector<1x1x32x8xbf16>
    %313 = vector.shape_cast %312 : vector<1x1x32x8xbf16> to vector<32x8xbf16>
    %cst_233 = arith.constant dense<0.000000e+00> : vector<64x8xf32>
    %314 = tpu.matmul %250, %313, %cst_233 {dimension_numbers = #tpu.dot_dimension_numbers<[1], [0], [0], [1], [0, 0, 1, 1], [], []>} : vector<64x32xbf16>, vector<32x8xbf16>, vector<64x8xf32> -> vector<64x8xf32>
    %c1_234 = arith.constant 1 : index
    %c1_235 = arith.constant 1 : index
    %c0_236 = arith.constant 0 : index
    %c0_237 = arith.constant 0 : index
    %315 = vector.load %arg14[%c1_234, %c1_235, %c0_236, %c0_237] : memref<2x4x1x8xf32, #tpu.memory_space<vmem>>, vector<1x1x1x8xf32>
    %316 = vector.shape_cast %315 : vector<1x1x1x8xf32> to vector<1x8xf32>
    %317 = vector.broadcast %316 : vector<1x8xf32> to vector<64x8xf32>
    %318 = arith.addf %314, %317 : vector<64x8xf32>
    %319 = vector.shape_cast %304 : vector<64x8xf32> to vector<4x16x8xf32>
    %320 = arith.truncf %319 : vector<4x16x8xf32> to vector<4x16x8xbf16>
    %321 = vector.shape_cast %311 : vector<64x8xf32> to vector<4x16x8xf32>
    %322 = arith.truncf %321 : vector<4x16x8xf32> to vector<4x16x8xbf16>
    %323 = vector.shape_cast %318 : vector<64x8xf32> to vector<4x16x8xf32>
    %324 = arith.truncf %323 : vector<4x16x8xf32> to vector<4x16x8xbf16>
    %cst_238 = arith.constant dense<0.000000e+00> : vector<4x16x16xf32>
    %325 = tpu.matmul %320, %322, %cst_238 {dimension_numbers = #tpu.dot_dimension_numbers<[2], [2], [1], [1], [0, 0, 0, 1, 1, 1], [0], [0]>} : vector<4x16x8xbf16>, vector<4x16x8xbf16>, vector<4x16x16xf32> -> vector<4x16x16xf32>
    %cst_239 = arith.constant dense<0xFF800000> : vector<4x16xf32>
    %326 = vector.multi_reduction <maximumf>, %325, %cst_239 [2] : vector<4x16x16xf32> to vector<4x16xf32>
    %327 = vector.shape_cast %326 : vector<4x16xf32> to vector<4x16x1xf32>
    %328 = vector.broadcast %327 : vector<4x16x1xf32> to vector<4x16x16xf32>
    %329 = arith.subf %325, %328 : vector<4x16x16xf32>
    %330 = math.exp %329 : vector<4x16x16xf32>
    %cst_240 = arith.constant dense<0.000000e+00> : vector<4x16xf32>
    %331 = vector.multi_reduction <add>, %330, %cst_240 [2] : vector<4x16x16xf32> to vector<4x16xf32>
    %332 = vector.shape_cast %331 : vector<4x16xf32> to vector<4x16x1xf32>
    %333 = tpu.reciprocal %332 {approx = true} : vector<4x16x1xf32> -> vector<4x16x1xf32>
    %334 = vector.broadcast %333 : vector<4x16x1xf32> to vector<4x16x16xf32>
    %335 = arith.mulf %330, %334 : vector<4x16x16xf32>
    %336 = arith.truncf %335 : vector<4x16x16xf32> to vector<4x16x16xbf16>
    %cst_241 = arith.constant dense<0.000000e+00> : vector<4x16x8xf32>
    %337 = tpu.matmul %336, %324, %cst_241 {dimension_numbers = #tpu.dot_dimension_numbers<[2], [1], [1], [2], [0, 0, 0, 1, 1, 2], [0], [0]>} : vector<4x16x16xbf16>, vector<4x16x8xbf16>, vector<4x16x8xf32> -> vector<4x16x8xf32>
    %338 = vector.shape_cast %337 : vector<4x16x8xf32> to vector<64x8xf32>
    %339 = arith.truncf %338 : vector<64x8xf32> to vector<64x8xbf16>
    %c1_242 = arith.constant 1 : index
    %c1_243 = arith.constant 1 : index
    %c0_244 = arith.constant 0 : index
    %c0_245 = arith.constant 0 : index
    %340 = vector.load %arg15[%c1_242, %c1_243, %c0_244, %c0_245] : memref<2x4x8x32xbf16, #tpu.memory_space<vmem>>, vector<1x1x8x32xbf16>
    %341 = vector.shape_cast %340 : vector<1x1x8x32xbf16> to vector<8x32xbf16>
    %cst_246 = arith.constant dense<0.000000e+00> : vector<64x32xf32>
    %342 = tpu.matmul %339, %341, %cst_246 {dimension_numbers = #tpu.dot_dimension_numbers<[1], [0], [0], [1], [0, 0, 1, 1], [], []>} : vector<64x8xbf16>, vector<8x32xbf16>, vector<64x32xf32> -> vector<64x32xf32>
    %343 = arith.addf %297, %342 : vector<64x32xf32>
    %c1_247 = arith.constant 1 : index
    %c2_248 = arith.constant 2 : index
    %c0_249 = arith.constant 0 : index
    %c0_250 = arith.constant 0 : index
    %344 = vector.load %arg9[%c1_247, %c2_248, %c0_249, %c0_250] : memref<2x4x32x8xbf16, #tpu.memory_space<vmem>>, vector<1x1x32x8xbf16>
    %345 = vector.shape_cast %344 : vector<1x1x32x8xbf16> to vector<32x8xbf16>
    %cst_251 = arith.constant dense<0.000000e+00> : vector<64x8xf32>
    %346 = tpu.matmul %250, %345, %cst_251 {dimension_numbers = #tpu.dot_dimension_numbers<[1], [0], [0], [1], [0, 0, 1, 1], [], []>} : vector<64x32xbf16>, vector<32x8xbf16>, vector<64x8xf32> -> vector<64x8xf32>
    %c1_252 = arith.constant 1 : index
    %c2_253 = arith.constant 2 : index
    %c0_254 = arith.constant 0 : index
    %c0_255 = arith.constant 0 : index
    %347 = vector.load %arg10[%c1_252, %c2_253, %c0_254, %c0_255] : memref<2x4x1x8xf32, #tpu.memory_space<vmem>>, vector<1x1x1x8xf32>
    %348 = vector.shape_cast %347 : vector<1x1x1x8xf32> to vector<1x8xf32>
    %349 = vector.broadcast %348 : vector<1x8xf32> to vector<64x8xf32>
    %350 = arith.addf %346, %349 : vector<64x8xf32>
    %c1_256 = arith.constant 1 : index
    %c2_257 = arith.constant 2 : index
    %c0_258 = arith.constant 0 : index
    %c0_259 = arith.constant 0 : index
    %351 = vector.load %arg11[%c1_256, %c2_257, %c0_258, %c0_259] : memref<2x4x32x8xbf16, #tpu.memory_space<vmem>>, vector<1x1x32x8xbf16>
    %352 = vector.shape_cast %351 : vector<1x1x32x8xbf16> to vector<32x8xbf16>
    %cst_260 = arith.constant dense<0.000000e+00> : vector<64x8xf32>
    %353 = tpu.matmul %250, %352, %cst_260 {dimension_numbers = #tpu.dot_dimension_numbers<[1], [0], [0], [1], [0, 0, 1, 1], [], []>} : vector<64x32xbf16>, vector<32x8xbf16>, vector<64x8xf32> -> vector<64x8xf32>
    %c1_261 = arith.constant 1 : index
    %c2_262 = arith.constant 2 : index
    %c0_263 = arith.constant 0 : index
    %c0_264 = arith.constant 0 : index
    %354 = vector.load %arg12[%c1_261, %c2_262, %c0_263, %c0_264] : memref<2x4x1x8xf32, #tpu.memory_space<vmem>>, vector<1x1x1x8xf32>
    %355 = vector.shape_cast %354 : vector<1x1x1x8xf32> to vector<1x8xf32>
    %356 = vector.broadcast %355 : vector<1x8xf32> to vector<64x8xf32>
    %357 = arith.addf %353, %356 : vector<64x8xf32>
    %c1_265 = arith.constant 1 : index
    %c2_266 = arith.constant 2 : index
    %c0_267 = arith.constant 0 : index
    %c0_268 = arith.constant 0 : index
    %358 = vector.load %arg13[%c1_265, %c2_266, %c0_267, %c0_268] : memref<2x4x32x8xbf16, #tpu.memory_space<vmem>>, vector<1x1x32x8xbf16>
    %359 = vector.shape_cast %358 : vector<1x1x32x8xbf16> to vector<32x8xbf16>
    %cst_269 = arith.constant dense<0.000000e+00> : vector<64x8xf32>
    %360 = tpu.matmul %250, %359, %cst_269 {dimension_numbers = #tpu.dot_dimension_numbers<[1], [0], [0], [1], [0, 0, 1, 1], [], []>} : vector<64x32xbf16>, vector<32x8xbf16>, vector<64x8xf32> -> vector<64x8xf32>
    %c1_270 = arith.constant 1 : index
    %c2_271 = arith.constant 2 : index
    %c0_272 = arith.constant 0 : index
    %c0_273 = arith.constant 0 : index
    %361 = vector.load %arg14[%c1_270, %c2_271, %c0_272, %c0_273] : memref<2x4x1x8xf32, #tpu.memory_space<vmem>>, vector<1x1x1x8xf32>
    %362 = vector.shape_cast %361 : vector<1x1x1x8xf32> to vector<1x8xf32>
    %363 = vector.broadcast %362 : vector<1x8xf32> to vector<64x8xf32>
    %364 = arith.addf %360, %363 : vector<64x8xf32>
    %365 = vector.shape_cast %350 : vector<64x8xf32> to vector<4x16x8xf32>
    %366 = arith.truncf %365 : vector<4x16x8xf32> to vector<4x16x8xbf16>
    %367 = vector.shape_cast %357 : vector<64x8xf32> to vector<4x16x8xf32>
    %368 = arith.truncf %367 : vector<4x16x8xf32> to vector<4x16x8xbf16>
    %369 = vector.shape_cast %364 : vector<64x8xf32> to vector<4x16x8xf32>
    %370 = arith.truncf %369 : vector<4x16x8xf32> to vector<4x16x8xbf16>
    %cst_274 = arith.constant dense<0.000000e+00> : vector<4x16x16xf32>
    %371 = tpu.matmul %366, %368, %cst_274 {dimension_numbers = #tpu.dot_dimension_numbers<[2], [2], [1], [1], [0, 0, 0, 1, 1, 1], [0], [0]>} : vector<4x16x8xbf16>, vector<4x16x8xbf16>, vector<4x16x16xf32> -> vector<4x16x16xf32>
    %cst_275 = arith.constant dense<0xFF800000> : vector<4x16xf32>
    %372 = vector.multi_reduction <maximumf>, %371, %cst_275 [2] : vector<4x16x16xf32> to vector<4x16xf32>
    %373 = vector.shape_cast %372 : vector<4x16xf32> to vector<4x16x1xf32>
    %374 = vector.broadcast %373 : vector<4x16x1xf32> to vector<4x16x16xf32>
    %375 = arith.subf %371, %374 : vector<4x16x16xf32>
    %376 = math.exp %375 : vector<4x16x16xf32>
    %cst_276 = arith.constant dense<0.000000e+00> : vector<4x16xf32>
    %377 = vector.multi_reduction <add>, %376, %cst_276 [2] : vector<4x16x16xf32> to vector<4x16xf32>
    %378 = vector.shape_cast %377 : vector<4x16xf32> to vector<4x16x1xf32>
    %379 = tpu.reciprocal %378 {approx = true} : vector<4x16x1xf32> -> vector<4x16x1xf32>
    %380 = vector.broadcast %379 : vector<4x16x1xf32> to vector<4x16x16xf32>
    %381 = arith.mulf %376, %380 : vector<4x16x16xf32>
    %382 = arith.truncf %381 : vector<4x16x16xf32> to vector<4x16x16xbf16>
    %cst_277 = arith.constant dense<0.000000e+00> : vector<4x16x8xf32>
    %383 = tpu.matmul %382, %370, %cst_277 {dimension_numbers = #tpu.dot_dimension_numbers<[2], [1], [1], [2], [0, 0, 0, 1, 1, 2], [0], [0]>} : vector<4x16x16xbf16>, vector<4x16x8xbf16>, vector<4x16x8xf32> -> vector<4x16x8xf32>
    %384 = vector.shape_cast %383 : vector<4x16x8xf32> to vector<64x8xf32>
    %385 = arith.truncf %384 : vector<64x8xf32> to vector<64x8xbf16>
    %c1_278 = arith.constant 1 : index
    %c2_279 = arith.constant 2 : index
    %c0_280 = arith.constant 0 : index
    %c0_281 = arith.constant 0 : index
    %386 = vector.load %arg15[%c1_278, %c2_279, %c0_280, %c0_281] : memref<2x4x8x32xbf16, #tpu.memory_space<vmem>>, vector<1x1x8x32xbf16>
    %387 = vector.shape_cast %386 : vector<1x1x8x32xbf16> to vector<8x32xbf16>
    %cst_282 = arith.constant dense<0.000000e+00> : vector<64x32xf32>
    %388 = tpu.matmul %385, %387, %cst_282 {dimension_numbers = #tpu.dot_dimension_numbers<[1], [0], [0], [1], [0, 0, 1, 1], [], []>} : vector<64x8xbf16>, vector<8x32xbf16>, vector<64x32xf32> -> vector<64x32xf32>
    %389 = arith.addf %343, %388 : vector<64x32xf32>
    %c1_283 = arith.constant 1 : index
    %c3_284 = arith.constant 3 : index
    %c0_285 = arith.constant 0 : index
    %c0_286 = arith.constant 0 : index
    %390 = vector.load %arg9[%c1_283, %c3_284, %c0_285, %c0_286] : memref<2x4x32x8xbf16, #tpu.memory_space<vmem>>, vector<1x1x32x8xbf16>
    %391 = vector.shape_cast %390 : vector<1x1x32x8xbf16> to vector<32x8xbf16>
    %cst_287 = arith.constant dense<0.000000e+00> : vector<64x8xf32>
    %392 = tpu.matmul %250, %391, %cst_287 {dimension_numbers = #tpu.dot_dimension_numbers<[1], [0], [0], [1], [0, 0, 1, 1], [], []>} : vector<64x32xbf16>, vector<32x8xbf16>, vector<64x8xf32> -> vector<64x8xf32>
    %c1_288 = arith.constant 1 : index
    %c3_289 = arith.constant 3 : index
    %c0_290 = arith.constant 0 : index
    %c0_291 = arith.constant 0 : index
    %393 = vector.load %arg10[%c1_288, %c3_289, %c0_290, %c0_291] : memref<2x4x1x8xf32, #tpu.memory_space<vmem>>, vector<1x1x1x8xf32>
    %394 = vector.shape_cast %393 : vector<1x1x1x8xf32> to vector<1x8xf32>
    %395 = vector.broadcast %394 : vector<1x8xf32> to vector<64x8xf32>
    %396 = arith.addf %392, %395 : vector<64x8xf32>
    %c1_292 = arith.constant 1 : index
    %c3_293 = arith.constant 3 : index
    %c0_294 = arith.constant 0 : index
    %c0_295 = arith.constant 0 : index
    %397 = vector.load %arg11[%c1_292, %c3_293, %c0_294, %c0_295] : memref<2x4x32x8xbf16, #tpu.memory_space<vmem>>, vector<1x1x32x8xbf16>
    %398 = vector.shape_cast %397 : vector<1x1x32x8xbf16> to vector<32x8xbf16>
    %cst_296 = arith.constant dense<0.000000e+00> : vector<64x8xf32>
    %399 = tpu.matmul %250, %398, %cst_296 {dimension_numbers = #tpu.dot_dimension_numbers<[1], [0], [0], [1], [0, 0, 1, 1], [], []>} : vector<64x32xbf16>, vector<32x8xbf16>, vector<64x8xf32> -> vector<64x8xf32>
    %c1_297 = arith.constant 1 : index
    %c3_298 = arith.constant 3 : index
    %c0_299 = arith.constant 0 : index
    %c0_300 = arith.constant 0 : index
    %400 = vector.load %arg12[%c1_297, %c3_298, %c0_299, %c0_300] : memref<2x4x1x8xf32, #tpu.memory_space<vmem>>, vector<1x1x1x8xf32>
    %401 = vector.shape_cast %400 : vector<1x1x1x8xf32> to vector<1x8xf32>
    %402 = vector.broadcast %401 : vector<1x8xf32> to vector<64x8xf32>
    %403 = arith.addf %399, %402 : vector<64x8xf32>
    %c1_301 = arith.constant 1 : index
    %c3_302 = arith.constant 3 : index
    %c0_303 = arith.constant 0 : index
    %c0_304 = arith.constant 0 : index
    %404 = vector.load %arg13[%c1_301, %c3_302, %c0_303, %c0_304] : memref<2x4x32x8xbf16, #tpu.memory_space<vmem>>, vector<1x1x32x8xbf16>
    %405 = vector.shape_cast %404 : vector<1x1x32x8xbf16> to vector<32x8xbf16>
    %cst_305 = arith.constant dense<0.000000e+00> : vector<64x8xf32>
    %406 = tpu.matmul %250, %405, %cst_305 {dimension_numbers = #tpu.dot_dimension_numbers<[1], [0], [0], [1], [0, 0, 1, 1], [], []>} : vector<64x32xbf16>, vector<32x8xbf16>, vector<64x8xf32> -> vector<64x8xf32>
    %c1_306 = arith.constant 1 : index
    %c3_307 = arith.constant 3 : index
    %c0_308 = arith.constant 0 : index
    %c0_309 = arith.constant 0 : index
    %407 = vector.load %arg14[%c1_306, %c3_307, %c0_308, %c0_309] : memref<2x4x1x8xf32, #tpu.memory_space<vmem>>, vector<1x1x1x8xf32>
    %408 = vector.shape_cast %407 : vector<1x1x1x8xf32> to vector<1x8xf32>
    %409 = vector.broadcast %408 : vector<1x8xf32> to vector<64x8xf32>
    %410 = arith.addf %406, %409 : vector<64x8xf32>
    %411 = vector.shape_cast %396 : vector<64x8xf32> to vector<4x16x8xf32>
    %412 = arith.truncf %411 : vector<4x16x8xf32> to vector<4x16x8xbf16>
    %413 = vector.shape_cast %403 : vector<64x8xf32> to vector<4x16x8xf32>
    %414 = arith.truncf %413 : vector<4x16x8xf32> to vector<4x16x8xbf16>
    %415 = vector.shape_cast %410 : vector<64x8xf32> to vector<4x16x8xf32>
    %416 = arith.truncf %415 : vector<4x16x8xf32> to vector<4x16x8xbf16>
    %cst_310 = arith.constant dense<0.000000e+00> : vector<4x16x16xf32>
    %417 = tpu.matmul %412, %414, %cst_310 {dimension_numbers = #tpu.dot_dimension_numbers<[2], [2], [1], [1], [0, 0, 0, 1, 1, 1], [0], [0]>} : vector<4x16x8xbf16>, vector<4x16x8xbf16>, vector<4x16x16xf32> -> vector<4x16x16xf32>
    %cst_311 = arith.constant dense<0xFF800000> : vector<4x16xf32>
    %418 = vector.multi_reduction <maximumf>, %417, %cst_311 [2] : vector<4x16x16xf32> to vector<4x16xf32>
    %419 = vector.shape_cast %418 : vector<4x16xf32> to vector<4x16x1xf32>
    %420 = vector.broadcast %419 : vector<4x16x1xf32> to vector<4x16x16xf32>
    %421 = arith.subf %417, %420 : vector<4x16x16xf32>
    %422 = math.exp %421 : vector<4x16x16xf32>
    %cst_312 = arith.constant dense<0.000000e+00> : vector<4x16xf32>
    %423 = vector.multi_reduction <add>, %422, %cst_312 [2] : vector<4x16x16xf32> to vector<4x16xf32>
    %424 = vector.shape_cast %423 : vector<4x16xf32> to vector<4x16x1xf32>
    %425 = tpu.reciprocal %424 {approx = true} : vector<4x16x1xf32> -> vector<4x16x1xf32>
    %426 = vector.broadcast %425 : vector<4x16x1xf32> to vector<4x16x16xf32>
    %427 = arith.mulf %422, %426 : vector<4x16x16xf32>
    %428 = arith.truncf %427 : vector<4x16x16xf32> to vector<4x16x16xbf16>
    %cst_313 = arith.constant dense<0.000000e+00> : vector<4x16x8xf32>
    %429 = tpu.matmul %428, %416, %cst_313 {dimension_numbers = #tpu.dot_dimension_numbers<[2], [1], [1], [2], [0, 0, 0, 1, 1, 2], [0], [0]>} : vector<4x16x16xbf16>, vector<4x16x8xbf16>, vector<4x16x8xf32> -> vector<4x16x8xf32>
    %430 = vector.shape_cast %429 : vector<4x16x8xf32> to vector<64x8xf32>
    %431 = arith.truncf %430 : vector<64x8xf32> to vector<64x8xbf16>
    %c1_314 = arith.constant 1 : index
    %c3_315 = arith.constant 3 : index
    %c0_316 = arith.constant 0 : index
    %c0_317 = arith.constant 0 : index
    %432 = vector.load %arg15[%c1_314, %c3_315, %c0_316, %c0_317] : memref<2x4x8x32xbf16, #tpu.memory_space<vmem>>, vector<1x1x8x32xbf16>
    %433 = vector.shape_cast %432 : vector<1x1x8x32xbf16> to vector<8x32xbf16>
    %cst_318 = arith.constant dense<0.000000e+00> : vector<64x32xf32>
    %434 = tpu.matmul %431, %433, %cst_318 {dimension_numbers = #tpu.dot_dimension_numbers<[1], [0], [0], [1], [0, 0, 1, 1], [], []>} : vector<64x8xbf16>, vector<8x32xbf16>, vector<64x32xf32> -> vector<64x32xf32>
    %435 = arith.addf %389, %434 : vector<64x32xf32>
    %436 = vector.shape_cast %435 : vector<64x32xf32> to vector<4x16x32xf32>
    %c1_319 = arith.constant 1 : index
    %c0_320 = arith.constant 0 : index
    %c0_321 = arith.constant 0 : index
    %437 = vector.load %arg16[%c1_319, %c0_320, %c0_321] : memref<2x1x32xf32, #tpu.memory_space<vmem>>, vector<1x1x32xf32>
    %438 = vector.shape_cast %437 : vector<1x1x32xf32> to vector<1x32xf32>
    %439 = vector.shape_cast %438 : vector<1x32xf32> to vector<1x1x32xf32>
    %440 = vector.broadcast %439 : vector<1x1x32xf32> to vector<4x16x32xf32>
    %441 = arith.addf %436, %440 : vector<4x16x32xf32>
    %442 = arith.addf %248, %441 : vector<4x16x32xf32>
    %cst_322 = arith.constant dense<0.000000e+00> : vector<4x16xf32>
    %443 = vector.multi_reduction <add>, %442, %cst_322 [2] : vector<4x16x32xf32> to vector<4x16xf32>
    %444 = vector.shape_cast %443 : vector<4x16xf32> to vector<4x16x1xf32>
    %cst_323 = arith.constant 3.200000e+01 : f32
    %445 = vector.broadcast %cst_323 : f32 to vector<4x16x1xf32>
    %446 = arith.divf %444, %445 : vector<4x16x1xf32>
    %447 = vector.broadcast %446 : vector<4x16x1xf32> to vector<4x16x32xf32>
    %448 = arith.subf %442, %447 : vector<4x16x32xf32>
    %449 = arith.mulf %448, %448 : vector<4x16x32xf32>
    %cst_324 = arith.constant dense<0.000000e+00> : vector<4x16xf32>
    %450 = vector.multi_reduction <add>, %449, %cst_324 [2] : vector<4x16x32xf32> to vector<4x16xf32>
    %451 = vector.shape_cast %450 : vector<4x16xf32> to vector<4x16x1xf32>
    %cst_325 = arith.constant 3.200000e+01 : f32
    %452 = vector.broadcast %cst_325 : f32 to vector<4x16x1xf32>
    %453 = arith.divf %451, %452 : vector<4x16x1xf32>
    %454 = vector.broadcast %446 : vector<4x16x1xf32> to vector<4x16x32xf32>
    %455 = arith.subf %442, %454 : vector<4x16x32xf32>
    %cst_326 = arith.constant 9.99999974E-6 : f32
    %456 = vector.broadcast %cst_326 : f32 to vector<4x16x1xf32>
    %457 = arith.addf %453, %456 : vector<4x16x1xf32>
    %458 = math.rsqrt %457 : vector<4x16x1xf32>
    %459 = vector.broadcast %458 : vector<4x16x1xf32> to vector<4x16x32xf32>
    %460 = arith.mulf %455, %459 : vector<4x16x32xf32>
    %c1_327 = arith.constant 1 : index
    %c0_328 = arith.constant 0 : index
    %c0_329 = arith.constant 0 : index
    %461 = vector.load %arg17[%c1_327, %c0_328, %c0_329] : memref<2x1x32xf32, #tpu.memory_space<vmem>>, vector<1x1x32xf32>
    %462 = vector.shape_cast %461 : vector<1x1x32xf32> to vector<1x32xf32>
    %463 = vector.shape_cast %462 : vector<1x32xf32> to vector<1x1x32xf32>
    %464 = vector.broadcast %463 : vector<1x1x32xf32> to vector<4x16x32xf32>
    %465 = arith.mulf %460, %464 : vector<4x16x32xf32>
    %c1_330 = arith.constant 1 : index
    %c0_331 = arith.constant 0 : index
    %c0_332 = arith.constant 0 : index
    %466 = vector.load %arg18[%c1_330, %c0_331, %c0_332] : memref<2x1x32xf32, #tpu.memory_space<vmem>>, vector<1x1x32xf32>
    %467 = vector.shape_cast %466 : vector<1x1x32xf32> to vector<1x32xf32>
    %468 = vector.shape_cast %467 : vector<1x32xf32> to vector<1x1x32xf32>
    %469 = vector.broadcast %468 : vector<1x1x32xf32> to vector<4x16x32xf32>
    %470 = arith.addf %465, %469 : vector<4x16x32xf32>
    %cst_333 = arith.constant dense<0.000000e+00> : vector<4x32xf32>
    %471 = vector.multi_reduction <add>, %470, %cst_333 [1] : vector<4x16x32xf32> to vector<4x32xf32>
    %cst_334 = arith.constant 1.600000e+01 : f32
    %472 = vector.broadcast %cst_334 : f32 to vector<4x32xf32>
    %473 = arith.divf %471, %472 : vector<4x32xf32>
    %c0_335 = arith.constant 0 : index
    %c0_336 = arith.constant 0 : index
    %474 = vector.load %arg19[%c0_335, %c0_336] : memref<1x32xf32, #tpu.memory_space<vmem>>, vector<1x32xf32>
    %475 = vector.broadcast %474 : vector<1x32xf32> to vector<4x32xf32>
    %476 = arith.mulf %473, %475 : vector<4x32xf32>
    %cst_337 = arith.constant dense<0.000000e+00> : vector<4xf32>
    %477 = vector.multi_reduction <add>, %476, %cst_337 [1] : vector<4x32xf32> to vector<4xf32>
    %478 = vector.shape_cast %477 : vector<4xf32> to vector<4x1xf32>
    %c0_338 = arith.constant 0 : index
    %479 = memref.load %arg20[%c0_338] : memref<1xf32, #tpu.memory_space<smem>>
    %480 = vector.broadcast %479 : f32 to vector<4x1xf32>
    %481 = arith.addf %478, %480 : vector<4x1xf32>
    %482 = arith.negf %481 : vector<4x1xf32>
    %483 = math.exp %482 : vector<4x1xf32>
    %cst_339 = arith.constant 1.000000e+00 : f32
    %484 = vector.broadcast %cst_339 : f32 to vector<4x1xf32>
    %485 = arith.addf %484, %483 : vector<4x1xf32>
    %486 = arith.divf %484, %485 : vector<4x1xf32>
    %487 = vector.shape_cast %486 : vector<4x1xf32> to vector<4x1x1xf32>
    %488 = vector.shape_cast %487 : vector<4x1x1xf32> to vector<4x1x1xf32>
    %489 = vector.broadcast %488 : vector<4x1x1xf32> to vector<4x1x128xf32>
    %c0_340 = arith.constant 0 : index
    %c0_341 = arith.constant 0 : index
    %c0_342 = arith.constant 0 : index
    %490 = vector.load %arg21[%c0_340, %c0_341, %c0_342] : memref<4x1x128xf32, #tpu.memory_space<vmem>>, vector<4x1x128xf32>
    tpu.vector_store %arg21[%c0_340, %c0_341, %c0_342], %489 {strides = array<i32>} : memref<4x1x128xf32, #tpu.memory_space<vmem>>, vector<4x1x128xf32>,
    return
  }
  func.func @transform_0(%arg0: i32) -> (i32, i32, i32) {
    %c0_i32 = arith.constant 0 : i32
    %c0_i32_0 = arith.constant 0 : i32
    %c0_i32_1 = arith.constant 0 : i32
    return %arg0, %c0_i32, %c0_i32_0 : i32, i32, i32
  }
  func.func @transform_1(%arg0: i32) -> (i32, i32, i32) {
    %c0_i32 = arith.constant 0 : i32
    %c0_i32_0 = arith.constant 0 : i32
    %c0_i32_1 = arith.constant 0 : i32
    return %arg0, %c0_i32, %c0_i32_0 : i32, i32, i32
  }
  func.func @transform_2(%arg0: i32) -> (i32, i32) {
    %c0_i32 = arith.constant 0 : i32
    %c0_i32_0 = arith.constant 0 : i32
    %c0_i32_1 = arith.constant 0 : i32
    return %c0_i32, %c0_i32_0 : i32, i32
  }
  func.func @transform_3(%arg0: i32) -> (i32, i32) {
    %c0_i32 = arith.constant 0 : i32
    %c0_i32_0 = arith.constant 0 : i32
    %c0_i32_1 = arith.constant 0 : i32
    return %c0_i32, %c0_i32_0 : i32, i32
  }
  func.func @transform_4(%arg0: i32) -> (i32, i32) {
    %c0_i32 = arith.constant 0 : i32
    %c0_i32_0 = arith.constant 0 : i32
    %c0_i32_1 = arith.constant 0 : i32
    return %c0_i32, %c0_i32_0 : i32, i32
  }
  func.func @transform_5(%arg0: i32) -> (i32, i32) {
    %c0_i32 = arith.constant 0 : i32
    %c0_i32_0 = arith.constant 0 : i32
    %c0_i32_1 = arith.constant 0 : i32
    return %c0_i32, %c0_i32_0 : i32, i32
  }
  func.func @transform_6(%arg0: i32) -> (i32, i32) {
    %c0_i32 = arith.constant 0 : i32
    %c0_i32_0 = arith.constant 0 : i32
    %c0_i32_1 = arith.constant 0 : i32
    return %c0_i32, %c0_i32_0 : i32, i32
  }
  func.func @transform_7(%arg0: i32) -> (i32, i32) {
    %c0_i32 = arith.constant 0 : i32
    %c0_i32_0 = arith.constant 0 : i32
    %c0_i32_1 = arith.constant 0 : i32
    return %c0_i32, %c0_i32_0 : i32, i32
  }
  func.func @transform_8(%arg0: i32) -> (i32, i32, i32, i32) {
    %c0_i32 = arith.constant 0 : i32
    %c0_i32_0 = arith.constant 0 : i32
    %c0_i32_1 = arith.constant 0 : i32
    %c0_i32_2 = arith.constant 0 : i32
    %c0_i32_3 = arith.constant 0 : i32
    return %c0_i32, %c0_i32_0, %c0_i32_1, %c0_i32_2 : i32, i32, i32, i32
  }
  func.func @transform_9(%arg0: i32) -> (i32, i32, i32, i32) {
    %c0_i32 = arith.constant 0 : i32
    %c0_i32_0 = arith.constant 0 : i32
    %c0_i32_1 = arith.constant 0 : i32
    %c0_i32_2 = arith.constant 0 : i32
    %c0_i32_3 = arith.constant 0 : i32
    return %c0_i32, %c0_i32_0, %c0_i32_1, %c0_i32_2 : i32, i32, i32, i32
  }
  func.func @transform_10(%arg0: i32) -> (i32, i32, i32, i32) {
    %c0_i32 = arith.constant 0 : i32
    %c0_i32_0 = arith.constant 0 : i32
    %c0_i32_1 = arith.constant 0 : i32
    %c0_i32_2 = arith.constant 0 : i32
    %c0_i32_3 = arith.constant 0 : i32
    return %c0_i32, %c0_i32_0, %c0_i32_1, %c0_i32_2 : i32, i32, i32, i32
  }
  func.func @transform_11(%arg0: i32) -> (i32, i32, i32, i32) {
    %c0_i32 = arith.constant 0 : i32
    %c0_i32_0 = arith.constant 0 : i32
    %c0_i32_1 = arith.constant 0 : i32
    %c0_i32_2 = arith.constant 0 : i32
    %c0_i32_3 = arith.constant 0 : i32
    return %c0_i32, %c0_i32_0, %c0_i32_1, %c0_i32_2 : i32, i32, i32, i32
  }
  func.func @transform_12(%arg0: i32) -> (i32, i32, i32, i32) {
    %c0_i32 = arith.constant 0 : i32
    %c0_i32_0 = arith.constant 0 : i32
    %c0_i32_1 = arith.constant 0 : i32
    %c0_i32_2 = arith.constant 0 : i32
    %c0_i32_3 = arith.constant 0 : i32
    return %c0_i32, %c0_i32_0, %c0_i32_1, %c0_i32_2 : i32, i32, i32, i32
  }
  func.func @transform_13(%arg0: i32) -> (i32, i32, i32, i32) {
    %c0_i32 = arith.constant 0 : i32
    %c0_i32_0 = arith.constant 0 : i32
    %c0_i32_1 = arith.constant 0 : i32
    %c0_i32_2 = arith.constant 0 : i32
    %c0_i32_3 = arith.constant 0 : i32
    return %c0_i32, %c0_i32_0, %c0_i32_1, %c0_i32_2 : i32, i32, i32, i32
  }
  func.func @transform_14(%arg0: i32) -> (i32, i32, i32, i32) {
    %c0_i32 = arith.constant 0 : i32
    %c0_i32_0 = arith.constant 0 : i32
    %c0_i32_1 = arith.constant 0 : i32
    %c0_i32_2 = arith.constant 0 : i32
    %c0_i32_3 = arith.constant 0 : i32
    return %c0_i32, %c0_i32_0, %c0_i32_1, %c0_i32_2 : i32, i32, i32, i32
  }
  func.func @transform_15(%arg0: i32) -> (i32, i32, i32) {
    %c0_i32 = arith.constant 0 : i32
    %c0_i32_0 = arith.constant 0 : i32
    %c0_i32_1 = arith.constant 0 : i32
    %c0_i32_2 = arith.constant 0 : i32
    return %c0_i32, %c0_i32_0, %c0_i32_1 : i32, i32, i32
  }
  func.func @transform_16(%arg0: i32) -> (i32, i32, i32) {
    %c0_i32 = arith.constant 0 : i32
    %c0_i32_0 = arith.constant 0 : i32
    %c0_i32_1 = arith.constant 0 : i32
    %c0_i32_2 = arith.constant 0 : i32
    return %c0_i32, %c0_i32_0, %c0_i32_1 : i32, i32, i32
  }
  func.func @transform_17(%arg0: i32) -> (i32, i32, i32) {
    %c0_i32 = arith.constant 0 : i32
    %c0_i32_0 = arith.constant 0 : i32
    %c0_i32_1 = arith.constant 0 : i32
    %c0_i32_2 = arith.constant 0 : i32
    return %c0_i32, %c0_i32_0, %c0_i32_1 : i32, i32, i32
  }
  func.func @transform_18(%arg0: i32) -> (i32, i32) {
    %c0_i32 = arith.constant 0 : i32
    %c0_i32_0 = arith.constant 0 : i32
    %c0_i32_1 = arith.constant 0 : i32
    return %c0_i32, %c0_i32_0 : i32, i32
  }
  func.func @transform_19(%arg0: i32) -> i32 {
    %c0_i32 = arith.constant 0 : i32
    %c0_i32_0 = arith.constant 0 : i32
    return %c0_i32 : i32
  }
  func.func @transform_20(%arg0: i32) -> (i32, i32, i32) {
    %c0_i32 = arith.constant 0 : i32
    %c0_i32_0 = arith.constant 0 : i32
    %c0_i32_1 = arith.constant 0 : i32
    return %arg0, %c0_i32, %c0_i32_0 : i32, i32, i32
  }
}

</mosaic_0001>

<llo_original>
// kernel: tcr_epitope_transformer.1
$region0: #{tcr_epitope_transformer.1}
  #allocation0 [shape = 'u32[]', space=smem, size = 0x4, offset = 0x4, fixed_abs, tag = 'smem constant byte address 0x4 - core index']
  #allocation1 [shape = 'u32[72,128]{1,0:T(1,128)}', space=vmem, size = 0x9000, scoped, tag = 'internal scratch']
  #allocation2 [shape = 'f32[1]{0:T(128)S(6)}', space=smem, size = 0x200, scoped, tag = 'scoped memory for tcr_epitope_transformer.1']
  %s0 = inlined_call_operand.vmem [shape: bf16[8,8,1024], index: 0, kind: input, shape index: {}]
  %s1 = inlined_call_operand.vmem [shape: bf16[8,8,1024], index: 1, kind: input, shape index: {}]
  %s2 = inlined_call_operand.vmem [shape: bf16[1024,32], index: 2, kind: input, shape index: {}]
  %s3 = inlined_call_operand.vmem [shape: f32[1,32], index: 3, kind: input, shape index: {}]
  %s4 = inlined_call_operand.vmem [shape: f32[8,32], index: 4, kind: input, shape index: {}]
  %s5 = inlined_call_operand.vmem [shape: bf16[1024,32], index: 5, kind: input, shape index: {}]
  %s6 = inlined_call_operand.vmem [shape: f32[1,32], index: 6, kind: input, shape index: {}]
  %s7 = inlined_call_operand.vmem [shape: f32[8,32], index: 7, kind: input, shape index: {}]
  %s8 = inlined_call_operand.vmem [shape: bf16[2,4,32,8], index: 8, kind: input, shape index: {}]
  %s9 = inlined_call_operand.vmem [shape: f32[2,4,1,8], index: 9, kind: input, shape index: {}]
  %s10 = inlined_call_operand.vmem [shape: bf16[2,4,32,8], index: 10, kind: input, shape index: {}]
  %s11 = inlined_call_operand.vmem [shape: f32[2,4,1,8], index: 11, kind: input, shape index: {}]
  %s12 = inlined_call_operand.vmem [shape: bf16[2,4,32,8], index: 12, kind: input, shape index: {}]
  %s13 = inlined_call_operand.vmem [shape: f32[2,4,1,8], index: 13, kind: input, shape index: {}]
  %s14 = inlined_call_operand.vmem [shape: bf16[2,4,8,32], index: 14, kind: input, shape index: {}]
  %s15 = inlined_call_operand.vmem [shape: f32[2,1,32], index: 15, kind: input, shape index: {}]
  %s16 = inlined_call_operand.vmem [shape: f32[2,1,32], index: 16, kind: input, shape index: {}]
  %s17 = inlined_call_operand.vmem [shape: f32[2,1,32], index: 17, kind: input, shape index: {}]
  %s18 = inlined_call_operand.vmem [shape: f32[1,32], index: 18, kind: input, shape index: {}]
  %s19 = inlined_call_operand.<no memory space> [shape: f32[1], index: 19, kind: input, shape index: {}]
  %s20 = inlined_call_operand.vmem [shape: f32[8,1,128], index: 20, kind: output, shape index: {}]
  %s21 = sld [smem:[#allocation0]]
  $region113: #{tcr_epitope_transformer.1} parent=0
    _
  %s23 = ssub.s32 1, %s21
  %s24 = scalar_select 0, %s23, %s21
  %25 = sst [smem:[#allocation2]] %s19
  loop: start=0, step=1, limit=4
  $region2: #{tcr_epitope_transformer.1} parent=0 // loop_pre_header
    _
  $region3: #{tcr_epitope_transformer.1} parent=0 // loop_header
    %s27 = sphi 0, %s31
    %p28 = scmp.ge.s32.totalorder %s27, 4
    %s37 = sphi 0, %s39
    %s40 = sphi 0, %s37
    %s41 = sphi 0, %s40
    %s57 = sphi 0, %s41
    %s63 = sphi 0, %s65
    %s66 = sphi 0, %s63
    %s67 = sphi 0, %s66
    %s83 = sphi 0, %s67
    %s87 = sphi 0, %s87
    %s89 = sphi 0, %s87
    %s90 = sphi 0, %s89
    %s104 = sphi 0, %s90
    %s108 = sphi 0, %s108
    %s110 = sphi 0, %s108
    %s111 = sphi 0, %s110
    %s125 = sphi 0, %s111
    %s129 = sphi 0, %s129
    %s131 = sphi 0, %s129
    %s132 = sphi 0, %s131
    %s146 = sphi 0, %s132
    %s150 = sphi 0, %s150
    %s152 = sphi 0, %s150
    %s153 = sphi 0, %s152
    %s167 = sphi 0, %s153
    %s171 = sphi 0, %s171
    %s173 = sphi 0, %s171
    %s174 = sphi 0, %s173
    %s188 = sphi 0, %s174
    %s192 = sphi 0, %s192
    %s194 = sphi 0, %s192
    %s195 = sphi 0, %s194
    %s209 = sphi 0, %s195
    %s213 = sphi 0, %s213
    %s215 = sphi 0, %s213
    %s216 = sphi 0, %s215
    %s230 = sphi 0, %s216
    %s234 = sphi 0, %s234
    %s236 = sphi 0, %s234
    %s237 = sphi 0, %s236
    %s251 = sphi 0, %s237
    %s255 = sphi 0, %s255
    %s257 = sphi 0, %s255
    %s258 = sphi 0, %s257
    %s272 = sphi 0, %s258
    %s276 = sphi 0, %s276
    %s278 = sphi 0, %s276
    %s279 = sphi 0, %s278
    %s293 = sphi 0, %s279
    %s297 = sphi 0, %s297
    %s299 = sphi 0, %s297
    %s300 = sphi 0, %s299
    %s314 = sphi 0, %s300
    %s318 = sphi 0, %s318
    %s320 = sphi 0, %s318
    %s321 = sphi 0, %s320
    %s335 = sphi 0, %s321
    %s339 = sphi 0, %s339
    %s341 = sphi 0, %s339
    %s342 = sphi 0, %s341
    %s356 = sphi 0, %s342
    %s360 = sphi 0, %s360
    %s362 = sphi 0, %s360
    %s363 = sphi 0, %s362
    %s377 = sphi 0, %s363
    %s381 = sphi 0, %s381
    %s383 = sphi 0, %s381
    %s384 = sphi 0, %s383
    %s398 = sphi 0, %s384
    %s402 = sphi 0, %s402
    %s404 = sphi 0, %s402
    %s405 = sphi 0, %s404
    %s419 = sphi 0, %s405
    %s423 = sphi 0, %s423
    %s425 = sphi 0, %s423
    %s426 = sphi 0, %s425
    %s440 = sphi 0, %s426
    %s444 = sphi 0, %s444
    %s446 = sphi 0, %s444
    %s447 = sphi 0, %s446
    %s461 = sphi 0, %s447
    %s467 = sphi 0, %s469
    %s470 = sphi 0, %s467
    %s471 = sphi 0, %s470
    %s487 = sphi 0, %s471
  $region4: #{tcr_epitope_transformer.1} parent=0 // loop_header_branch
    %30 = sbr.rel (%p28) target = $region8
  $region5: #{tcr_epitope_transformer.1} parent=0 // loop_body
    %s32 = ssub.s32 %s27, 1
    %s33 = ssub.s32 %s27, 2
    %s34 = sadd.s32 %s27, 1
    %s35 = ssub.s32 %s27, %s34
    %p36 = scmp.eq.s32.totalorder %s35, 0
    %s38 = sadd.s32 %s37, 1
    %s39 = scalar_select %p36, %s37, %s38
    %p42 = pneg %p36
    %p43 = scmp.eq.s32.totalorder %s27, 1
    %p44 = por %p42, %p43
    %p45 = scmp.ne.s32.totalorder %s37, %s40
    %p46 = scmp.eq.s32.totalorder %s27, 0
    %p47 = por %p45, %p46
    %p48 = scmp.ne.s32.totalorder %s37, %s40
    %p49 = scmp.eq.s32.totalorder %s32, 1
    %p50 = por %p48, %p49
    %p51 = scmp.ne.s32.totalorder %s40, %s41
    %p52 = scmp.eq.s32.totalorder %s32, 0
    %p53 = por %p51, %p52
    %p54 = scmp.ne.s32.totalorder %s40, %s41
    %p55 = scmp.eq.s32.totalorder %s33, 1
    %p56 = por %p54, %p55
    %p58 = scmp.ne.s32.totalorder %s41, %s57
    %p59 = scmp.eq.s32.totalorder %s33, 0
    %p60 = por %p58, %p59
    %s61 = ssub.s32 %s27, %s34
    %p62 = scmp.eq.s32.totalorder %s61, 0
    %s64 = sadd.s32 %s63, 1
    %s65 = scalar_select %p62, %s63, %s64
    %p68 = pneg %p62
    %p69 = scmp.eq.s32.totalorder %s27, 1
    %p70 = por %p68, %p69
    %p71 = scmp.ne.s32.totalorder %s63, %s66
    %p72 = scmp.eq.s32.totalorder %s27, 0
    %p73 = por %p71, %p72
    %p74 = scmp.ne.s32.totalorder %s63, %s66
    %p75 = scmp.eq.s32.totalorder %s32, 1
    %p76 = por %p74, %p75
    %p77 = scmp.ne.s32.totalorder %s66, %s67
    %p78 = scmp.eq.s32.totalorder %s32, 0
    %p79 = por %p77, %p78
    %p80 = scmp.ne.s32.totalorder %s66, %s67
    %p81 = scmp.eq.s32.totalorder %s33, 1
    %p82 = por %p80, %p81
    %p84 = scmp.ne.s32.totalorder %s67, %s83
    %p85 = scmp.eq.s32.totalorder %s33, 0
    %p86 = por %p84, %p85
    %s88 = sadd.s32 %s87, 1
    %p91 = scmp.eq.s32.totalorder %s27, 1
    %p92 = scmp.ne.s32.totalorder %s87, %s89
    %p93 = scmp.eq.s32.totalorder %s27, 0
    %p94 = por %p92, %p93
    %p95 = scmp.ne.s32.totalorder %s87, %s89
    %p96 = scmp.eq.s32.totalorder %s32, 1
    %p97 = por %p95, %p96
    %p98 = scmp.ne.s32.totalorder %s89, %s90
    %p99 = scmp.eq.s32.totalorder %s32, 0
    %p100 = por %p98, %p99
    %p101 = scmp.ne.s32.totalorder %s89, %s90
    %p102 = scmp.eq.s32.totalorder %s33, 1
    %p103 = por %p101, %p102
    %p105 = scmp.ne.s32.totalorder %s90, %s104
    %p106 = scmp.eq.s32.totalorder %s33, 0
    %p107 = por %p105, %p106
    %s109 = sadd.s32 %s108, 1
    %p112 = scmp.eq.s32.totalorder %s27, 1
    %p113 = scmp.ne.s32.totalorder %s108, %s110
    %p114 = scmp.eq.s32.totalorder %s27, 0
    %p115 = por %p113, %p114
    %p116 = scmp.ne.s32.totalorder %s108, %s110
    %p117 = scmp.eq.s32.totalorder %s32, 1
    %p118 = por %p116, %p117
    %p119 = scmp.ne.s32.totalorder %s110, %s111
    %p120 = scmp.eq.s32.totalorder %s32, 0
    %p121 = por %p119, %p120
    %p122 = scmp.ne.s32.totalorder %s110, %s111
    %p123 = scmp.eq.s32.totalorder %s33, 1
    %p124 = por %p122, %p123
    %p126 = scmp.ne.s32.totalorder %s111, %s125
    %p127 = scmp.eq.s32.totalorder %s33, 0
    %p128 = por %p126, %p127
    %s130 = sadd.s32 %s129, 1
    %p133 = scmp.eq.s32.totalorder %s27, 1
    %p134 = scmp.ne.s32.totalorder %s129, %s131
    %p135 = scmp.eq.s32.totalorder %s27, 0
    %p136 = por %p134, %p135
    %p137 = scmp.ne.s32.totalorder %s129, %s131
    %p138 = scmp.eq.s32.totalorder %s32, 1
    %p139 = por %p137, %p138
    %p140 = scmp.ne.s32.totalorder %s131, %s132
    %p141 = scmp.eq.s32.totalorder %s32, 0
    %p142 = por %p140, %p141
    %p143 = scmp.ne.s32.totalorder %s131, %s132
    %p144 = scmp.eq.s32.totalorder %s33, 1
    %p145 = por %p143, %p144
    %p147 = scmp.ne.s32.totalorder %s132, %s146
    %p148 = scmp.eq.s32.totalorder %s33, 0
    %p149 = por %p147, %p148
    %s151 = sadd.s32 %s150, 1
    %p154 = scmp.eq.s32.totalorder %s27, 1
    %p155 = scmp.ne.s32.totalorder %s150, %s152
    %p156 = scmp.eq.s32.totalorder %s27, 0
    %p157 = por %p155, %p156
    %p158 = scmp.ne.s32.totalorder %s150, %s152
    %p159 = scmp.eq.s32.totalorder %s32, 1
    %p160 = por %p158, %p159
    %p161 = scmp.ne.s32.totalorder %s152, %s153
    %p162 = scmp.eq.s32.totalorder %s32, 0
    %p163 = por %p161, %p162
    %p164 = scmp.ne.s32.totalorder %s152, %s153
    %p165 = scmp.eq.s32.totalorder %s33, 1
    %p166 = por %p164, %p165
    %p168 = scmp.ne.s32.totalorder %s153, %s167
    %p169 = scmp.eq.s32.totalorder %s33, 0
    %p170 = por %p168, %p169
    %s172 = sadd.s32 %s171, 1
    %p175 = scmp.eq.s32.totalorder %s27, 1
    %p176 = scmp.ne.s32.totalorder %s171, %s173
    %p177 = scmp.eq.s32.totalorder %s27, 0
    %p178 = por %p176, %p177
    %p179 = scmp.ne.s32.totalorder %s171, %s173
    %p180 = scmp.eq.s32.totalorder %s32, 1
    %p181 = por %p179, %p180
    %p182 = scmp.ne.s32.totalorder %s173, %s174
    %p183 = scmp.eq.s32.totalorder %s32, 0
    %p184 = por %p182, %p183
    %p185 = scmp.ne.s32.totalorder %s173, %s174
    %p186 = scmp.eq.s32.totalorder %s33, 1
    %p187 = por %p185, %p186
    %p189 = scmp.ne.s32.totalorder %s174, %s188
    %p190 = scmp.eq.s32.totalorder %s33, 0
    %p191 = por %p189, %p190
    %s193 = sadd.s32 %s192, 1
    %p196 = scmp.eq.s32.totalorder %s27, 1
    %p197 = scmp.ne.s32.totalorder %s192, %s194
    %p198 = scmp.eq.s32.totalorder %s27, 0
    %p199 = por %p197, %p198
    %p200 = scmp.ne.s32.totalorder %s192, %s194
    %p201 = scmp.eq.s32.totalorder %s32, 1
    %p202 = por %p200, %p201
    %p203 = scmp.ne.s32.totalorder %s194, %s195
    %p204 = scmp.eq.s32.totalorder %s32, 0
    %p205 = por %p203, %p204
    %p206 = scmp.ne.s32.totalorder %s194, %s195
    %p207 = scmp.eq.s32.totalorder %s33, 1
    %p208 = por %p206, %p207
    %p210 = scmp.ne.s32.totalorder %s195, %s209
    %p211 = scmp.eq.s32.totalorder %s33, 0
    %p212 = por %p210, %p211
    %s214 = sadd.s32 %s213, 1
    %p217 = scmp.eq.s32.totalorder %s27, 1
    %p218 = scmp.ne.s32.totalorder %s213, %s215
    %p219 = scmp.eq.s32.totalorder %s27, 0
    %p220 = por %p218, %p219
    %p221 = scmp.ne.s32.totalorder %s213, %s215
    %p222 = scmp.eq.s32.totalorder %s32, 1
    %p223 = por %p221, %p222
    %p224 = scmp.ne.s32.totalorder %s215, %s216
    %p225 = scmp.eq.s32.totalorder %s32, 0
    %p226 = por %p224, %p225
    %p227 = scmp.ne.s32.totalorder %s215, %s216
    %p228 = scmp.eq.s32.totalorder %s33, 1
    %p229 = por %p227, %p228
    %p231 = scmp.ne.s32.totalorder %s216, %s230
    %p232 = scmp.eq.s32.totalorder %s33, 0
    %p233 = por %p231, %p232
    %s235 = sadd.s32 %s234, 1
    %p238 = scmp.eq.s32.totalorder %s27, 1
    %p239 = scmp.ne.s32.totalorder %s234, %s236
    %p240 = scmp.eq.s32.totalorder %s27, 0
    %p241 = por %p239, %p240
    %p242 = scmp.ne.s32.totalorder %s234, %s236
    %p243 = scmp.eq.s32.totalorder %s32, 1
    %p244 = por %p242, %p243
    %p245 = scmp.ne.s32.totalorder %s236, %s237
    %p246 = scmp.eq.s32.totalorder %s32, 0
    %p247 = por %p245, %p246
    %p248 = scmp.ne.s32.totalorder %s236, %s237
    %p249 = scmp.eq.s32.totalorder %s33, 1
    %p250 = por %p248, %p249
    %p252 = scmp.ne.s32.totalorder %s237, %s251
    %p253 = scmp.eq.s32.totalorder %s33, 0
    %p254 = por %p252, %p253
    %s256 = sadd.s32 %s255, 1
    %p259 = scmp.eq.s32.totalorder %s27, 1
    %p260 = scmp.ne.s32.totalorder %s255, %s257
    %p261 = scmp.eq.s32.totalorder %s27, 0
    %p262 = por %p260, %p261
    %p263 = scmp.ne.s32.totalorder %s255, %s257
    %p264 = scmp.eq.s32.totalorder %s32, 1
    %p265 = por %p263, %p264
    %p266 = scmp.ne.s32.totalorder %s257, %s258
    %p267 = scmp.eq.s32.totalorder %s32, 0
    %p268 = por %p266, %p267
    %p269 = scmp.ne.s32.totalorder %s257, %s258
    %p270 = scmp.eq.s32.totalorder %s33, 1
    %p271 = por %p269, %p270
    %p273 = scmp.ne.s32.totalorder %s258, %s272
    %p274 = scmp.eq.s32.totalorder %s33, 0
    %p275 = por %p273, %p274
    %s277 = sadd.s32 %s276, 1
    %p280 = scmp.eq.s32.totalorder %s27, 1
    %p281 = scmp.ne.s32.totalorder %s276, %s278
    %p282 = scmp.eq.s32.totalorder %s27, 0
    %p283 = por %p281, %p282
    %p284 = scmp.ne.s32.totalorder %s276, %s278
    %p285 = scmp.eq.s32.totalorder %s32, 1
    %p286 = por %p284, %p285
    %p287 = scmp.ne.s32.totalorder %s278, %s279
    %p288 = scmp.eq.s32.totalorder %s32, 0
    %p289 = por %p287, %p288
    %p290 = scmp.ne.s32.totalorder %s278, %s279
    %p291 = scmp.eq.s32.totalorder %s33, 1
    %p292 = por %p290, %p291
    %p294 = scmp.ne.s32.totalorder %s279, %s293
    %p295 = scmp.eq.s32.totalorder %s33, 0
    %p296 = por %p294, %p295
    %s298 = sadd.s32 %s297, 1
    %p301 = scmp.eq.s32.totalorder %s27, 1
    %p302 = scmp.ne.s32.totalorder %s297, %s299
    %p303 = scmp.eq.s32.totalorder %s27, 0
    %p304 = por %p302, %p303
    %p305 = scmp.ne.s32.totalorder %s297, %s299
    %p306 = scmp.eq.s32.totalorder %s32, 1
    %p307 = por %p305, %p306
    %p308 = scmp.ne.s32.totalorder %s299, %s300
    %p309 = scmp.eq.s32.totalorder %s32, 0
    %p310 = por %p308, %p309
    %p311 = scmp.ne.s32.totalorder %s299, %s300
    %p312 = scmp.eq.s32.totalorder %s33, 1
    %p313 = por %p311, %p312
    %p315 = scmp.ne.s32.totalorder %s300, %s314
    %p316 = scmp.eq.s32.totalorder %s33, 0
    %p317 = por %p315, %p316
    %s319 = sadd.s32 %s318, 1
    %p322 = scmp.eq.s32.totalorder %s27, 1
    %p323 = scmp.ne.s32.totalorder %s318, %s320
    %p324 = scmp.eq.s32.totalorder %s27, 0
    %p325 = por %p323, %p324
    %p326 = scmp.ne.s32.totalorder %s318, %s320
    %p327 = scmp.eq.s32.totalorder %s32, 1
    %p328 = por %p326, %p327
    %p329 = scmp.ne.s32.totalorder %s320, %s321
    %p330 = scmp.eq.s32.totalorder %s32, 0
    %p331 = por %p329, %p330
    %p332 = scmp.ne.s32.totalorder %s320, %s321
    %p333 = scmp.eq.s32.totalorder %s33, 1
    %p334 = por %p332, %p333
    %p336 = scmp.ne.s32.totalorder %s321, %s335
    %p337 = scmp.eq.s32.totalorder %s33, 0
    %p338 = por %p336, %p337
    %s340 = sadd.s32 %s339, 1
    %p343 = scmp.eq.s32.totalorder %s27, 1
    %p344 = scmp.ne.s32.totalorder %s339, %s341
    %p345 = scmp.eq.s32.totalorder %s27, 0
    %p346 = por %p344, %p345
    %p347 = scmp.ne.s32.totalorder %s339, %s341
    %p348 = scmp.eq.s32.totalorder %s32, 1
    %p349 = por %p347, %p348
    %p350 = scmp.ne.s32.totalorder %s341, %s342
    %p351 = scmp.eq.s32.totalorder %s32, 0
    %p352 = por %p350, %p351
    %p353 = scmp.ne.s32.totalorder %s341, %s342
    %p354 = scmp.eq.s32.totalorder %s33, 1
    %p355 = por %p353, %p354
    %p357 = scmp.ne.s32.totalorder %s342, %s356
    %p358 = scmp.eq.s32.totalorder %s33, 0
    %p359 = por %p357, %p358
    %s361 = sadd.s32 %s360, 1
    %p364 = scmp.eq.s32.totalorder %s27, 1
    %p365 = scmp.ne.s32.totalorder %s360, %s362
    %p366 = scmp.eq.s32.totalorder %s27, 0
    %p367 = por %p365, %p366
    %p368 = scmp.ne.s32.totalorder %s360, %s362
    %p369 = scmp.eq.s32.totalorder %s32, 1
    %p370 = por %p368, %p369
    %p371 = scmp.ne.s32.totalorder %s362, %s363
    %p372 = scmp.eq.s32.totalorder %s32, 0
    %p373 = por %p371, %p372
    %p374 = scmp.ne.s32.totalorder %s362, %s363
    %p375 = scmp.eq.s32.totalorder %s33, 1
    %p376 = por %p374, %p375
    %p378 = scmp.ne.s32.totalorder %s363, %s377
    %p379 = scmp.eq.s32.totalorder %s33, 0
    %p380 = por %p378, %p379
    %s382 = sadd.s32 %s381, 1
    %p385 = scmp.eq.s32.totalorder %s27, 1
    %p386 = scmp.ne.s32.totalorder %s381, %s383
    %p387 = scmp.eq.s32.totalorder %s27, 0
    %p388 = por %p386, %p387
    %p389 = scmp.ne.s32.totalorder %s381, %s383
    %p390 = scmp.eq.s32.totalorder %s32, 1
    %p391 = por %p389, %p390
    %p392 = scmp.ne.s32.totalorder %s383, %s384
    %p393 = scmp.eq.s32.totalorder %s32, 0
    %p394 = por %p392, %p393
    %p395 = scmp.ne.s32.totalorder %s383, %s384
    %p396 = scmp.eq.s32.totalorder %s33, 1
    %p397 = por %p395, %p396
    %p399 = scmp.ne.s32.totalorder %s384, %s398
    %p400 = scmp.eq.s32.totalorder %s33, 0
    %p401 = por %p399, %p400
    %s403 = sadd.s32 %s402, 1
    %p406 = scmp.eq.s32.totalorder %s27, 1
    %p407 = scmp.ne.s32.totalorder %s402, %s404
    %p408 = scmp.eq.s32.totalorder %s27, 0
    %p409 = por %p407, %p408
    %p410 = scmp.ne.s32.totalorder %s402, %s404
    %p411 = scmp.eq.s32.totalorder %s32, 1
    %p412 = por %p410, %p411
    %p413 = scmp.ne.s32.totalorder %s404, %s405
    %p414 = scmp.eq.s32.totalorder %s32, 0
    %p415 = por %p413, %p414
    %p416 = scmp.ne.s32.totalorder %s404, %s405
    %p417 = scmp.eq.s32.totalorder %s33, 1
    %p418 = por %p416, %p417
    %p420 = scmp.ne.s32.totalorder %s405, %s419
    %p421 = scmp.eq.s32.totalorder %s33, 0
    %p422 = por %p420, %p421
    %s424 = sadd.s32 %s423, 1
    %p427 = scmp.eq.s32.totalorder %s27, 1
    %p428 = scmp.ne.s32.totalorder %s423, %s425
    %p429 = scmp.eq.s32.totalorder %s27, 0
    %p430 = por %p428, %p429
    %p431 = scmp.ne.s32.totalorder %s423, %s425
    %p432 = scmp.eq.s32.totalorder %s32, 1
    %p433 = por %p431, %p432
    %p434 = scmp.ne.s32.totalorder %s425, %s426
    %p435 = scmp.eq.s32.totalorder %s32, 0
    %p436 = por %p434, %p435
    %p437 = scmp.ne.s32.totalorder %s425, %s426
    %p438 = scmp.eq.s32.totalorder %s33, 1
    %p439 = por %p437, %p438
    %p441 = scmp.ne.s32.totalorder %s426, %s440
    %p442 = scmp.eq.s32.totalorder %s33, 0
    %p443 = por %p441, %p442
    %s445 = sadd.s32 %s444, 1
    %p448 = scmp.eq.s32.totalorder %s27, 1
    %p449 = scmp.ne.s32.totalorder %s444, %s446
    %p450 = scmp.eq.s32.totalorder %s27, 0
    %p451 = por %p449, %p450
    %p452 = scmp.ne.s32.totalorder %s444, %s446
    %p453 = scmp.eq.s32.totalorder %s32, 1
    %p454 = por %p452, %p453
    %p455 = scmp.ne.s32.totalorder %s446, %s447
    %p456 = scmp.eq.s32.totalorder %s32, 0
    %p457 = por %p455, %p456
    %p458 = scmp.ne.s32.totalorder %s446, %s447
    %p459 = scmp.eq.s32.totalorder %s33, 1
    %p460 = por %p458, %p459
    %p462 = scmp.ne.s32.totalorder %s447, %s461
    %p463 = scmp.eq.s32.totalorder %s33, 0
    %p464 = por %p462, %p463
    %s465 = ssub.s32 %s27, %s34
    %p466 = scmp.eq.s32.totalorder %s465, 0
    %s468 = sadd.s32 %s467, 1
    %s469 = scalar_select %p466, %s467, %s468
    %p472 = pneg %p466
    %p473 = scmp.eq.s32.totalorder %s27, 1
    %p474 = por %p472, %p473
    %p475 = scmp.ne.s32.totalorder %s467, %s470
    %p476 = scmp.eq.s32.totalorder %s27, 0
    %p477 = por %p475, %p476
    %p478 = scmp.ne.s32.totalorder %s467, %s470
    %p479 = scmp.eq.s32.totalorder %s32, 1
    %p480 = por %p478, %p479
    %p481 = scmp.ne.s32.totalorder %s470, %s471
    %p482 = scmp.eq.s32.totalorder %s32, 0
    %p483 = por %p481, %p482
    %p484 = scmp.ne.s32.totalorder %s470, %s471
    %p485 = scmp.eq.s32.totalorder %s33, 1
    %p486 = por %p484, %p485
    %p488 = scmp.ne.s32.totalorder %s471, %s487
    %p489 = scmp.eq.s32.totalorder %s33, 0
    %p490 = por %p488, %p489
    %p491 = scmp.le.s32.totalorder 1, %s27
    %p492 = scmp.lt.s32.totalorder %s27, 3
    %p493 = pnand %p491, %p492
    %p494 = pneg %p493
    // Predicated region
    $region9: #{tcr_epitope_transformer.1} parent=5 // pred_check
      _
    $region10: #{tcr_epitope_transformer.1} parent=5 // pred_check_branch
      %496 = sbr.rel (%p493) target = $region12
    $region11: #{tcr_epitope_transformer.1} parent=5 // pred_region
      %s497 = ssub.s32 %s27, 1
      // Predicated region
      $region13: #{tcr_epitope_transformer.1} parent=11 // pred_check
        %p498 = pneg %p100
      $region14: #{tcr_epitope_transformer.1} parent=11 // pred_check_branch
        %500 = sbr.rel (%p498) target = $region16
      $region15: #{tcr_epitope_transformer.1} parent=11 // pred_region
        _
      $region16: #{tcr_epitope_transformer.1} parent=11 // pred_fallthru
        _
      // Predicated region
      $region17: #{tcr_epitope_transformer.1} parent=11 // pred_check
        %p501 = pneg %p121
      $region18: #{tcr_epitope_transformer.1} parent=11 // pred_check_branch
        %503 = sbr.rel (%p501) target = $region20
      $region19: #{tcr_epitope_transformer.1} parent=11 // pred_region
        _
      $region20: #{tcr_epitope_transformer.1} parent=11 // pred_fallthru
        _
      // Predicated region
      $region21: #{tcr_epitope_transformer.1} parent=11 // pred_check
        %p504 = pneg %p142
      $region22: #{tcr_epitope_transformer.1} parent=11 // pred_check_branch
        %506 = sbr.rel (%p504) target = $region24
      $region23: #{tcr_epitope_transformer.1} parent=11 // pred_region
        _
      $region24: #{tcr_epitope_transformer.1} parent=11 // pred_fallthru
        _
      // Predicated region
      $region25: #{tcr_epitope_transformer.1} parent=11 // pred_check
        %p507 = pneg %p163
      $region26: #{tcr_epitope_transformer.1} parent=11 // pred_check_branch
        %509 = sbr.rel (%p507) target = $region28
      $region27: #{tcr_epitope_transformer.1} parent=11 // pred_region
        _
      $region28: #{tcr_epitope_transformer.1} parent=11 // pred_fallthru
        _
      // Predicated region
      $region29: #{tcr_epitope_transformer.1} parent=11 // pred_check
        %p510 = pneg %p184
      $region30: #{tcr_epitope_transformer.1} parent=11 // pred_check_branch
        %512 = sbr.rel (%p510) target = $region32
      $region31: #{tcr_epitope_transformer.1} parent=11 // pred_region
        _
      $region32: #{tcr_epitope_transformer.1} parent=11 // pred_fallthru
        _
      // Predicated region
      $region33: #{tcr_epitope_transformer.1} parent=11 // pred_check
        %p513 = pneg %p205
      $region34: #{tcr_epitope_transformer.1} parent=11 // pred_check_branch
        %515 = sbr.rel (%p513) target = $region36
      $region35: #{tcr_epitope_transformer.1} parent=11 // pred_region
        _
      $region36: #{tcr_epitope_transformer.1} parent=11 // pred_fallthru
        _
      // Predicated region
      $region37: #{tcr_epitope_transformer.1} parent=11 // pred_check
        %p516 = pneg %p226
      $region38: #{tcr_epitope_transformer.1} parent=11 // pred_check_branch
        %518 = sbr.rel (%p516) target = $region40
      $region39: #{tcr_epitope_transformer.1} parent=11 // pred_region
        _
      $region40: #{tcr_epitope_transformer.1} parent=11 // pred_fallthru
        _
      // Predicated region
      $region41: #{tcr_epitope_transformer.1} parent=11 // pred_check
        %p519 = pneg %p247
      $region42: #{tcr_epitope_transformer.1} parent=11 // pred_check_branch
        %521 = sbr.rel (%p519) target = $region44
      $region43: #{tcr_epitope_transformer.1} parent=11 // pred_region
        _
      $region44: #{tcr_epitope_transformer.1} parent=11 // pred_fallthru
        _
      // Predicated region
      $region45: #{tcr_epitope_transformer.1} parent=11 // pred_check
        %p522 = pneg %p268
      $region46: #{tcr_epitope_transformer.1} parent=11 // pred_check_branch
        %524 = sbr.rel (%p522) target = $region48
      $region47: #{tcr_epitope_transformer.1} parent=11 // pred_region
        _
      $region48: #{tcr_epitope_transformer.1} parent=11 // pred_fallthru
        _
      // Predicated region
      $region49: #{tcr_epitope_transformer.1} parent=11 // pred_check
        %p525 = pneg %p289
      $region50: #{tcr_epitope_transformer.1} parent=11 // pred_check_branch
        %527 = sbr.rel (%p525) target = $region52
      $region51: #{tcr_epitope_transformer.1} parent=11 // pred_region
        _
      $region52: #{tcr_epitope_transformer.1} parent=11 // pred_fallthru
        _
      // Predicated region
      $region53: #{tcr_epitope_transformer.1} parent=11 // pred_check
        %p528 = pneg %p310
      $region54: #{tcr_epitope_transformer.1} parent=11 // pred_check_branch
        %530 = sbr.rel (%p528) target = $region56
      $region55: #{tcr_epitope_transformer.1} parent=11 // pred_region
        _
      $region56: #{tcr_epitope_transformer.1} parent=11 // pred_fallthru
        _
      // Predicated region
      $region57: #{tcr_epitope_transformer.1} parent=11 // pred_check
        %p531 = pneg %p331
      $region58: #{tcr_epitope_transformer.1} parent=11 // pred_check_branch
        %533 = sbr.rel (%p531) target = $region60
      $region59: #{tcr_epitope_transformer.1} parent=11 // pred_region
        _
      $region60: #{tcr_epitope_transformer.1} parent=11 // pred_fallthru
        _
      // Predicated region
      $region61: #{tcr_epitope_transformer.1} parent=11 // pred_check
        %p534 = pneg %p352
      $region62: #{tcr_epitope_transformer.1} parent=11 // pred_check_branch
        %536 = sbr.rel (%p534) target = $region64
      $region63: #{tcr_epitope_transformer.1} parent=11 // pred_region
        _
      $region64: #{tcr_epitope_transformer.1} parent=11 // pred_fallthru
        _
      // Predicated region
      $region65: #{tcr_epitope_transformer.1} parent=11 // pred_check
        %p537 = pneg %p373
      $region66: #{tcr_epitope_transformer.1} parent=11 // pred_check_branch
        %539 = sbr.rel (%p537) target = $region68
      $region67: #{tcr_epitope_transformer.1} parent=11 // pred_region
        _
      $region68: #{tcr_epitope_transformer.1} parent=11 // pred_fallthru
        _
      // Predicated region
      $region69: #{tcr_epitope_transformer.1} parent=11 // pred_check
        %p540 = pneg %p394
      $region70: #{tcr_epitope_transformer.1} parent=11 // pred_check_branch
        %542 = sbr.rel (%p540) target = $region72
      $region71: #{tcr_epitope_transformer.1} parent=11 // pred_region
        _
      $region72: #{tcr_epitope_transformer.1} parent=11 // pred_fallthru
        _
      // Predicated region
      $region73: #{tcr_epitope_transformer.1} parent=11 // pred_check
        %p543 = pneg %p415
      $region74: #{tcr_epitope_transformer.1} parent=11 // pred_check_branch
        %545 = sbr.rel (%p543) target = $region76
      $region75: #{tcr_epitope_transformer.1} parent=11 // pred_region
        _
      $region76: #{tcr_epitope_transformer.1} parent=11 // pred_fallthru
        _
      // Predicated region
      $region77: #{tcr_epitope_transformer.1} parent=11 // pred_check
        %p546 = pneg %p436
      $region78: #{tcr_epitope_transformer.1} parent=11 // pred_check_branch
        %548 = sbr.rel (%p546) target = $region80
      $region79: #{tcr_epitope_transformer.1} parent=11 // pred_region
        _
      $region80: #{tcr_epitope_transformer.1} parent=11 // pred_fallthru
        _
      // Predicated region
      $region81: #{tcr_epitope_transformer.1} parent=11 // pred_check
        %p549 = pneg %p457
      $region82: #{tcr_epitope_transformer.1} parent=11 // pred_check_branch
        %551 = sbr.rel (%p549) target = $region84
      $region83: #{tcr_epitope_transformer.1} parent=11 // pred_region
        _
      $region84: #{tcr_epitope_transformer.1} parent=11 // pred_fallthru
        _
    $region12: #{tcr_epitope_transformer.1} parent=5 // pred_fallthru
      _
    %p552 = scmp.lt.s32.totalorder %s27, 2
    // Predicated region
    $region85: #{tcr_epitope_transformer.1} parent=5 // pred_check
      %p553 = pneg %p552
    $region86: #{tcr_epitope_transformer.1} parent=5 // pred_check_branch
      %555 = sbr.rel (%p553) target = $region88
    $region87: #{tcr_epitope_transformer.1} parent=5 // pred_region
      // Predicated region
      $region89: #{tcr_epitope_transformer.1} parent=87 // pred_check
        %p556 = pneg %p47
      $region90: #{tcr_epitope_transformer.1} parent=87 // pred_check_branch
        %558 = sbr.rel (%p556) target = $region92
      $region91: #{tcr_epitope_transformer.1} parent=87 // pred_region
        %s559 = smul.u32 4, %s27
        %p560 = scmp.lt.s32.totalorder %s559, 7
        %s561 = scalar_select %p560, %s559, 7
        %s562 = smul.addr %s561, 8
        %s563 = smul.addr %s562, 4
        %s564 = scalar_lea.vmem %s0, %s563
        %s565 = smul.u32 4, %s27
      $region92: #{tcr_epitope_transformer.1} parent=87 // pred_fallthru
        _
      // Predicated region
      $region93: #{tcr_epitope_transformer.1} parent=87 // pred_check
        %p566 = pneg %p73
      $region94: #{tcr_epitope_transformer.1} parent=87 // pred_check_branch
        %568 = sbr.rel (%p566) target = $region96
      $region95: #{tcr_epitope_transformer.1} parent=87 // pred_region
        %s569 = smul.u32 4, %s27
        %p570 = scmp.lt.s32.totalorder %s569, 7
        %s571 = scalar_select %p570, %s569, 7
        %s572 = smul.addr %s571, 8
        %s573 = smul.addr %s572, 4
        %s574 = scalar_lea.vmem %s1, %s573
        %s575 = smul.u32 4, %s27
      $region96: #{tcr_epitope_transformer.1} parent=87 // pred_fallthru
        _
    $region88: #{tcr_epitope_transformer.1} parent=5 // pred_fallthru
      _
    %p576 = scmp.le.s32.totalorder 1, %s27
    %p577 = scmp.lt.s32.totalorder %s27, 3
    %p578 = pnand %p576, %p577
    %p579 = pneg %p578
    // Predicated region
    $region97: #{tcr_epitope_transformer.1} parent=5 // pred_check
      _
    $region98: #{tcr_epitope_transformer.1} parent=5 // pred_check_branch
      %581 = sbr.rel (%p578) target = $region100
    $region99: #{tcr_epitope_transformer.1} parent=5 // pred_region
      %s582 = ssub.s32 %s27, 1
      %s583 = smul.u32 4, %s32
      %p584 = scmp.lt.s32.totalorder %s583, 7
      %s585 = scalar_select %p584, %s583, 7
      %s586 = smul.addr %s585, 8
      %s587 = smul.addr %s586, 4
      %s588 = scalar_lea.vmem %s0, %s587
      %p589 = pneg %p53
      %p590 = pneg %p50
      %s591 = smul.u32 4, %s32
      %p592 = scmp.lt.s32.totalorder %s591, 7
      %s593 = scalar_select %p592, %s591, 7
      %s594 = smul.addr %s593, 8
      %s595 = smul.addr %s594, 4
      %s596 = scalar_lea.vmem %s1, %s595
      %p597 = pneg %p79
      %p598 = pneg %p76
      %p599 = pneg %p100
      %p600 = pneg %p97
      %p601 = pneg %p121
      %p602 = pneg %p118
      %p603 = pneg %p142
      %p604 = pneg %p139
      %p605 = pneg %p163
      %p606 = pneg %p160
      %p607 = pneg %p184
      %p608 = pneg %p181
      %p609 = pneg %p205
      %p610 = pneg %p202
      %p611 = pneg %p226
      %p612 = pneg %p223
      %p613 = pneg %p247
      %p614 = pneg %p244
      %p615 = pneg %p268
      %p616 = pneg %p265
      %p617 = pneg %p289
      %p618 = pneg %p286
      %p619 = pneg %p310
      %p620 = pneg %p307
      %p621 = pneg %p331
      %p622 = pneg %p328
      %p623 = pneg %p352
      %p624 = pneg %p349
      %p625 = pneg %p373
      %p626 = pneg %p370
      %p627 = pneg %p394
      %p628 = pneg %p391
      %p629 = pneg %p415
      %p630 = pneg %p412
      %p631 = pneg %p436
      %p632 = pneg %p433
      %p633 = pneg %p457
      %p634 = pneg %p454
      %p635 = pneg %p483
      %p636 = pneg %p480
      %s637 = smul.u32 4, %s32
      %p638 = scmp.lt.s32.totalorder %s637, 7
      %s639 = scalar_select %p638, %s637, 7
      %s640 = scalar_lea.vmem %s20, %s639
      %s641 = smul.u32 4, %s32
      %p642 = scmp.lt.s32.totalorder %s641, 7
      %s643 = scalar_select %p642, %s641, 7
      %s644 = smul.addr %s643, 8
      %s645 = smul.addr %s644, 4
      %s646 = scalar_lea.vmem %s0, %s645
      %s647 = smul.u32 4, %s32
      %s648 = smul.u32 4, %s32
      %p649 = scmp.lt.s32.totalorder %s648, 7
      %s650 = scalar_select %p649, %s648, 7
      %s651 = smul.addr %s650, 8
      %s652 = smul.addr %s651, 4
      %s653 = scalar_lea.vmem %s1, %s652
      %s654 = smul.u32 4, %s32
      %s655 = smul.u32 4, %s32
      %p656 = scmp.lt.s32.totalorder %s655, 7
      %s657 = scalar_select %p656, %s655, 7
      %s658 = scalar_lea.vmem %s20, %s657
      %s659 = smul.u32 4, %s32
      %v661 = vld [vmem:[%s646] sm:$0xff]
      %v662 = vld [vmem:[%s646 + $0x8] sm:$0xff]
      %v663 = vld [vmem:[%s646 + $0x10] sm:$0xff]
      %v664 = vld [vmem:[%s646 + $0x18] sm:$0xff]
      %v665 = vld [vmem:[%s646 + $0x20] sm:$0xff]
      %v666 = vld [vmem:[%s646 + $0x28] sm:$0xff]
      %v667 = vld [vmem:[%s646 + $0x30] sm:$0xff]
      %v668 = vld [vmem:[%s646 + $0x38] sm:$0xff]
      %v669 = vld [vmem:[%s646 + $0x40] sm:$0xff]
      %v670 = vld [vmem:[%s646 + $0x48] sm:$0xff]
      %v671 = vld [vmem:[%s646 + $0x50] sm:$0xff]
      %v672 = vld [vmem:[%s646 + $0x58] sm:$0xff]
      %v673 = vld [vmem:[%s646 + $0x60] sm:$0xff]
      %v674 = vld [vmem:[%s646 + $0x68] sm:$0xff]
      %v675 = vld [vmem:[%s646 + $0x70] sm:$0xff]
      %v676 = vld [vmem:[%s646 + $0x78] sm:$0xff]
      %v677 = vld [vmem:[%s2] sm:$0xf]
      %v678 = vld [vmem:[%s2 + $0x4] sm:$0xf]
      %v679 = vld [vmem:[%s2 + $0x8] sm:$0xf]
      %v680 = vld [vmem:[%s2 + $0xc] sm:$0xf]
      %v681 = vld [vmem:[%s2 + $0x10] sm:$0xf]
      %v682 = vld [vmem:[%s2 + $0x14] sm:$0xf]
      %v683 = vld [vmem:[%s2 + $0x18] sm:$0xf]
      %v684 = vld [vmem:[%s2 + $0x1c] sm:$0xf]
      %v685 = vld [vmem:[%s2 + $0x20] sm:$0xf]
      %v686 = vld [vmem:[%s2 + $0x24] sm:$0xf]
      %v687 = vld [vmem:[%s2 + $0x28] sm:$0xf]
      %v688 = vld [vmem:[%s2 + $0x2c] sm:$0xf]
      %v689 = vld [vmem:[%s2 + $0x30] sm:$0xf]
      %v690 = vld [vmem:[%s2 + $0x34] sm:$0xf]
      %v691 = vld [vmem:[%s2 + $0x38] sm:$0xf]
      %v692 = vld [vmem:[%s2 + $0x3c] sm:$0xf]
      %v693 = vld [vmem:[%s2 + $0x40] sm:$0xf]
      %v694 = vld [vmem:[%s2 + $0x44] sm:$0xf]
      %v695 = vld [vmem:[%s2 + $0x48] sm:$0xf]
      %v696 = vld [vmem:[%s2 + $0x4c] sm:$0xf]
      %v697 = vld [vmem:[%s2 + $0x50] sm:$0xf]
      %v698 = vld [vmem:[%s2 + $0x54] sm:$0xf]
      %v699 = vld [vmem:[%s2 + $0x58] sm:$0xf]
      %v700 = vld [vmem:[%s2 + $0x5c] sm:$0xf]
      %v701 = vld [vmem:[%s2 + $0x60] sm:$0xf]
      %v702 = vld [vmem:[%s2 + $0x64] sm:$0xf]
      %v703 = vld [vmem:[%s2 + $0x68] sm:$0xf]
      %v704 = vld [vmem:[%s2 + $0x6c] sm:$0xf]
      %v705 = vld [vmem:[%s2 + $0x70] sm:$0xf]
      %v706 = vld [vmem:[%s2 + $0x74] sm:$0xf]
      %v707 = vld [vmem:[%s2 + $0x78] sm:$0xf]
      %v708 = vld [vmem:[%s2 + $0x7c] sm:$0xf]
      %v709 = vld [vmem:[%s2 + $0x80] sm:$0xf]
      %v710 = vld [vmem:[%s2 + $0x84] sm:$0xf]
      %v711 = vld [vmem:[%s2 + $0x88] sm:$0xf]
      %v712 = vld [vmem:[%s2 + $0x8c] sm:$0xf]
      %v713 = vld [vmem:[%s2 + $0x90] sm:$0xf]
      %v714 = vld [vmem:[%s2 + $0x94] sm:$0xf]
      %v715 = vld [vmem:[%s2 + $0x98] sm:$0xf]
      %v716 = vld [vmem:[%s2 + $0x9c] sm:$0xf]
      %v717 = vld [vmem:[%s2 + $0xa0] sm:$0xf]
      %v718 = vld [vmem:[%s2 + $0xa4] sm:$0xf]
      %v719 = vld [vmem:[%s2 + $0xa8] sm:$0xf]
      %v720 = vld [vmem:[%s2 + $0xac] sm:$0xf]
      %v721 = vld [vmem:[%s2 + $0xb0] sm:$0xf]
      %v722 = vld [vmem:[%s2 + $0xb4] sm:$0xf]
      %v723 = vld [vmem:[%s2 + $0xb8] sm:$0xf]
      %v724 = vld [vmem:[%s2 + $0xbc] sm:$0xf]
      %v725 = vld [vmem:[%s2 + $0xc0] sm:$0xf]
      %v726 = vld [vmem:[%s2 + $0xc4] sm:$0xf]
      %v727 = vld [vmem:[%s2 + $0xc8] sm:$0xf]
      %v728 = vld [vmem:[%s2 + $0xcc] sm:$0xf]
      %v729 = vld [vmem:[%s2 + $0xd0] sm:$0xf]
      %v730 = vld [vmem:[%s2 + $0xd4] sm:$0xf]
      %v731 = vld [vmem:[%s2 + $0xd8] sm:$0xf]
      %v732 = vld [vmem:[%s2 + $0xdc] sm:$0xf]
      %v733 = vld [vmem:[%s2 + $0xe0] sm:$0xf]
      %v734 = vld [vmem:[%s2 + $0xe4] sm:$0xf]
      %v735 = vld [vmem:[%s2 + $0xe8] sm:$0xf]
      %v736 = vld [vmem:[%s2 + $0xec] sm:$0xf]
      %v737 = vld [vmem:[%s2 + $0xf0] sm:$0xf]
      %v738 = vld [vmem:[%s2 + $0xf4] sm:$0xf]
      %v739 = vld [vmem:[%s2 + $0xf8] sm:$0xf]
      %v740 = vld [vmem:[%s2 + $0xfc] sm:$0xf]
      %v741 = vld [vmem:[%s2 + $0x100] sm:$0xf]
      %v742 = vld [vmem:[%s2 + $0x104] sm:$0xf]
      %v743 = vld [vmem:[%s2 + $0x108] sm:$0xf]
      %v744 = vld [vmem:[%s2 + $0x10c] sm:$0xf]
      %v745 = vld [vmem:[%s2 + $0x110] sm:$0xf]
      %v746 = vld [vmem:[%s2 + $0x114] sm:$0xf]
      %v747 = vld [vmem:[%s2 + $0x118] sm:$0xf]
      %v748 = vld [vmem:[%s2 + $0x11c] sm:$0xf]
      %v749 = vld [vmem:[%s2 + $0x120] sm:$0xf]
      %v750 = vld [vmem:[%s2 + $0x124] sm:$0xf]
      %v751 = vld [vmem:[%s2 + $0x128] sm:$0xf]
      %v752 = vld [vmem:[%s2 + $0x12c] sm:$0xf]
      %v753 = vld [vmem:[%s2 + $0x130] sm:$0xf]
      %v754 = vld [vmem:[%s2 + $0x134] sm:$0xf]
      %v755 = vld [vmem:[%s2 + $0x138] sm:$0xf]
      %v756 = vld [vmem:[%s2 + $0x13c] sm:$0xf]
      %v757 = vld [vmem:[%s2 + $0x140] sm:$0xf]
      %v758 = vld [vmem:[%s2 + $0x144] sm:$0xf]
      %v759 = vld [vmem:[%s2 + $0x148] sm:$0xf]
      %v760 = vld [vmem:[%s2 + $0x14c] sm:$0xf]
      %v761 = vld [vmem:[%s2 + $0x150] sm:$0xf]
      %v762 = vld [vmem:[%s2 + $0x154] sm:$0xf]
      %v763 = vld [vmem:[%s2 + $0x158] sm:$0xf]
      %v764 = vld [vmem:[%s2 + $0x15c] sm:$0xf]
      %v765 = vld [vmem:[%s2 + $0x160] sm:$0xf]
      %v766 = vld [vmem:[%s2 + $0x164] sm:$0xf]
      %v767 = vld [vmem:[%s2 + $0x168] sm:$0xf]
      %v768 = vld [vmem:[%s2 + $0x16c] sm:$0xf]
      %v769 = vld [vmem:[%s2 + $0x170] sm:$0xf]
      %v770 = vld [vmem:[%s2 + $0x174] sm:$0xf]
      %v771 = vld [vmem:[%s2 + $0x178] sm:$0xf]
      %v772 = vld [vmem:[%s2 + $0x17c] sm:$0xf]
      %v773 = vld [vmem:[%s2 + $0x180] sm:$0xf]
      %v774 = vld [vmem:[%s2 + $0x184] sm:$0xf]
      %v775 = vld [vmem:[%s2 + $0x188] sm:$0xf]
      %v776 = vld [vmem:[%s2 + $0x18c] sm:$0xf]
      %v777 = vld [vmem:[%s2 + $0x190] sm:$0xf]
      %v778 = vld [vmem:[%s2 + $0x194] sm:$0xf]
      %v779 = vld [vmem:[%s2 + $0x198] sm:$0xf]
      %v780 = vld [vmem:[%s2 + $0x19c] sm:$0xf]
      %v781 = vld [vmem:[%s2 + $0x1a0] sm:$0xf]
      %v782 = vld [vmem:[%s2 + $0x1a4] sm:$0xf]
      %v783 = vld [vmem:[%s2 + $0x1a8] sm:$0xf]
      %v784 = vld [vmem:[%s2 + $0x1ac] sm:$0xf]
      %v785 = vld [vmem:[%s2 + $0x1b0] sm:$0xf]
      %v786 = vld [vmem:[%s2 + $0x1b4] sm:$0xf]
      %v787 = vld [vmem:[%s2 + $0x1b8] sm:$0xf]
      %v788 = vld [vmem:[%s2 + $0x1bc] sm:$0xf]
      %v789 = vld [vmem:[%s2 + $0x1c0] sm:$0xf]
      %v790 = vld [vmem:[%s2 + $0x1c4] sm:$0xf]
      %v791 = vld [vmem:[%s2 + $0x1c8] sm:$0xf]
      %v792 = vld [vmem:[%s2 + $0x1cc] sm:$0xf]
      %v793 = vld [vmem:[%s2 + $0x1d0] sm:$0xf]
      %v794 = vld [vmem:[%s2 + $0x1d4] sm:$0xf]
      %v795 = vld [vmem:[%s2 + $0x1d8] sm:$0xf]
      %v796 = vld [vmem:[%s2 + $0x1dc] sm:$0xf]
      %v797 = vld [vmem:[%s2 + $0x1e0] sm:$0xf]
      %v798 = vld [vmem:[%s2 + $0x1e4] sm:$0xf]
      %v799 = vld [vmem:[%s2 + $0x1e8] sm:$0xf]
      %v800 = vld [vmem:[%s2 + $0x1ec] sm:$0xf]
      %v801 = vld [vmem:[%s2 + $0x1f0] sm:$0xf]
      %v802 = vld [vmem:[%s2 + $0x1f4] sm:$0xf]
      %v803 = vld [vmem:[%s2 + $0x1f8] sm:$0xf]
      %v804 = vld [vmem:[%s2 + $0x1fc] sm:$0xf]
      %v821 = vunpack.c.l.b16 %v661
      %v822 = vunpack.c.h.b16 %v661
      %v823 = vunpack.c.l.b16 %v662
      %v824 = vunpack.c.h.b16 %v662
      %v825 = vunpack.c.l.b16 %v663
      %v826 = vunpack.c.h.b16 %v663
      %v827 = vunpack.c.l.b16 %v664
      %v828 = vunpack.c.h.b16 %v664
      %v829 = vunpack.c.l.b16 %v665
      %v830 = vunpack.c.h.b16 %v665
      %v831 = vunpack.c.l.b16 %v666
      %v832 = vunpack.c.h.b16 %v666
      %v833 = vunpack.c.l.b16 %v667
      %v834 = vunpack.c.h.b16 %v667
      %v835 = vunpack.c.l.b16 %v668
      %v836 = vunpack.c.h.b16 %v668
      %v837 = vunpack.c.l.b16 %v669
      %v838 = vunpack.c.h.b16 %v669
      %v839 = vunpack.c.l.b16 %v670
      %v840 = vunpack.c.h.b16 %v670
      %v841 = vunpack.c.l.b16 %v671
      %v842 = vunpack.c.h.b16 %v671
      %v843 = vunpack.c.l.b16 %v672
      %v844 = vunpack.c.h.b16 %v672
      %v845 = vunpack.c.l.b16 %v673
      %v846 = vunpack.c.h.b16 %v673
      %v847 = vunpack.c.l.b16 %v674
      %v848 = vunpack.c.h.b16 %v674
      %v849 = vunpack.c.l.b16 %v675
      %v850 = vunpack.c.h.b16 %v675
      %v851 = vunpack.c.l.b16 %v676
      %v852 = vunpack.c.h.b16 %v676
      %v853 = vpack.c.b16 %v829, %v821
      %v854 = vpack.c.b16 %v830, %v822
      %v855 = vpack.c.b16 %v831, %v823
      %v856 = vpack.c.b16 %v832, %v824
      %v857 = vpack.c.b16 %v833, %v825
      %v858 = vpack.c.b16 %v834, %v826
      %v859 = vpack.c.b16 %v835, %v827
      %v860 = vpack.c.b16 %v836, %v828
      %v861 = vpack.c.b16 %v845, %v837
      %v862 = vpack.c.b16 %v846, %v838
      %v863 = vpack.c.b16 %v847, %v839
      %v864 = vpack.c.b16 %v848, %v840
      %v865 = vpack.c.b16 %v849, %v841
      %v866 = vpack.c.b16 %v850, %v842
      %v867 = vpack.c.b16 %v851, %v843
      %v868 = vpack.c.b16 %v852, %v844
      %v1013 = vunpack.c.l.b16 %v677
      %v1014 = vunpack.c.l.b16 %v678
      %v1015 = vunpack.c.l.b16 %v679
      %v1016 = vunpack.c.l.b16 %v680
      %v1017 = vunpack.c.l.b16 %v681
      %v1018 = vunpack.c.l.b16 %v682
      %v1019 = vunpack.c.l.b16 %v683
      %v1020 = vunpack.c.l.b16 %v684
      %v1021 = vunpack.c.l.b16 %v685
      %v1022 = vunpack.c.l.b16 %v686
      %v1023 = vunpack.c.l.b16 %v687
      %v1024 = vunpack.c.l.b16 %v688
      %v1025 = vunpack.c.l.b16 %v689
      %v1026 = vunpack.c.l.b16 %v690
      %v1027 = vunpack.c.l.b16 %v691
      %v1028 = vunpack.c.l.b16 %v692
      %v1029 = vunpack.c.l.b16 %v693
      %v1030 = vunpack.c.l.b16 %v694
      %v1031 = vunpack.c.l.b16 %v695
      %v1032 = vunpack.c.l.b16 %v696
      %v1033 = vunpack.c.l.b16 %v697
      %v1034 = vunpack.c.l.b16 %v698
      %v1035 = vunpack.c.l.b16 %v699
      %v1036 = vunpack.c.l.b16 %v700
      %v1037 = vunpack.c.l.b16 %v701
      %v1038 = vunpack.c.l.b16 %v702
      %v1039 = vunpack.c.l.b16 %v703
      %v1040 = vunpack.c.l.b16 %v704
      %v1041 = vunpack.c.l.b16 %v705
      %v1042 = vunpack.c.l.b16 %v706
      %v1043 = vunpack.c.l.b16 %v707
      %v1044 = vunpack.c.l.b16 %v708
      %v1045 = vunpack.c.l.b16 %v709
      %v1046 = vunpack.c.l.b16 %v710
      %v1047 = vunpack.c.l.b16 %v711
      %v1048 = vunpack.c.l.b16 %v712
      %v1049 = vunpack.c.l.b16 %v713
      %v1050 = vunpack.c.l.b16 %v714
      %v1051 = vunpack.c.l.b16 %v715
      %v1052 = vunpack.c.l.b16 %v716
      %v1053 = vunpack.c.l.b16 %v717
      %v1054 = vunpack.c.l.b16 %v718
      %v1055 = vunpack.c.l.b16 %v719
      %v1056 = vunpack.c.l.b16 %v720
      %v1057 = vunpack.c.l.b16 %v721
      %v1058 = vunpack.c.l.b16 %v722
      %v1059 = vunpack.c.l.b16 %v723
      %v1060 = vunpack.c.l.b16 %v724
      %v1061 = vunpack.c.l.b16 %v725
      %v1062 = vunpack.c.l.b16 %v726
      %v1063 = vunpack.c.l.b16 %v727
      %v1064 = vunpack.c.l.b16 %v728
      %v1065 = vunpack.c.l.b16 %v729
      %v1066 = vunpack.c.l.b16 %v730
      %v1067 = vunpack.c.l.b16 %v731
      %v1068 = vunpack.c.l.b16 %v732
      %v1069 = vunpack.c.l.b16 %v733
      %v1070 = vunpack.c.l.b16 %v734
      %v1071 = vunpack.c.l.b16 %v735
      %v1072 = vunpack.c.l.b16 %v736
      %v1073 = vunpack.c.l.b16 %v737
      %v1074 = vunpack.c.l.b16 %v738
      %v1075 = vunpack.c.l.b16 %v739
      %v1076 = vunpack.c.l.b16 %v740
      %v1077 = vunpack.c.l.b16 %v741
      %v1078 = vunpack.c.l.b16 %v742
      %v1079 = vunpack.c.l.b16 %v743
      %v1080 = vunpack.c.l.b16 %v744
      %v1081 = vunpack.c.l.b16 %v745
      %v1082 = vunpack.c.l.b16 %v746
      %v1083 = vunpack.c.l.b16 %v747
      %v1084 = vunpack.c.l.b16 %v748
      %v1085 = vunpack.c.l.b16 %v749
      %v1086 = vunpack.c.l.b16 %v750
      %v1087 = vunpack.c.l.b16 %v751
      %v1088 = vunpack.c.l.b16 %v752
      %v1089 = vunpack.c.l.b16 %v753
      %v1090 = vunpack.c.l.b16 %v754
      %v1091 = vunpack.c.l.b16 %v755
      %v1092 = vunpack.c.l.b16 %v756
      %v1093 = vunpack.c.l.b16 %v757
      %v1094 = vunpack.c.l.b16 %v758
      %v1095 = vunpack.c.l.b16 %v759
      %v1096 = vunpack.c.l.b16 %v760
      %v1097 = vunpack.c.l.b16 %v761
      %v1098 = vunpack.c.l.b16 %v762
      %v1099 = vunpack.c.l.b16 %v763
      %v1100 = vunpack.c.l.b16 %v764
      %v1101 = vunpack.c.l.b16 %v765
      %v1102 = vunpack.c.l.b16 %v766
      %v1103 = vunpack.c.l.b16 %v767
      %v1104 = vunpack.c.l.b16 %v768
      %v1105 = vunpack.c.l.b16 %v769
      %v1106 = vunpack.c.l.b16 %v770
      %v1107 = vunpack.c.l.b16 %v771
      %v1108 = vunpack.c.l.b16 %v772
      %v1109 = vunpack.c.l.b16 %v773
      %v1110 = vunpack.c.l.b16 %v774
      %v1111 = vunpack.c.l.b16 %v775
      %v1112 = vunpack.c.l.b16 %v776
      %v1113 = vunpack.c.l.b16 %v777
      %v1114 = vunpack.c.l.b16 %v778
      %v1115 = vunpack.c.l.b16 %v779
      %v1116 = vunpack.c.l.b16 %v780
      %v1117 = vunpack.c.l.b16 %v781
      %v1118 = vunpack.c.l.b16 %v782
      %v1119 = vunpack.c.l.b16 %v783
      %v1120 = vunpack.c.l.b16 %v784
      %v1121 = vunpack.c.l.b16 %v785
      %v1122 = vunpack.c.l.b16 %v786
      %v1123 = vunpack.c.l.b16 %v787
      %v1124 = vunpack.c.l.b16 %v788
      %v1125 = vunpack.c.l.b16 %v789
      %v1126 = vunpack.c.l.b16 %v790
      %v1127 = vunpack.c.l.b16 %v791
      %v1128 = vunpack.c.l.b16 %v792
      %v1129 = vunpack.c.l.b16 %v793
      %v1130 = vunpack.c.l.b16 %v794
      %v1131 = vunpack.c.l.b16 %v795
      %v1132 = vunpack.c.l.b16 %v796
      %v1133 = vunpack.c.l.b16 %v797
      %v1134 = vunpack.c.l.b16 %v798
      %v1135 = vunpack.c.l.b16 %v799
      %v1136 = vunpack.c.l.b16 %v800
      %v1137 = vunpack.c.l.b16 %v801
      %v1138 = vunpack.c.l.b16 %v802
      %v1139 = vunpack.c.l.b16 %v803
      %v1140 = vunpack.c.l.b16 %v804
      %v1141 = vpack.c.b16 %v1014, %v1013
      %v1142 = vpack.c.b16 %v1016, %v1015
      %v1143 = vpack.c.b16 %v1018, %v1017
      %v1144 = vpack.c.b16 %v1020, %v1019
      %v1145 = vpack.c.b16 %v1022, %v1021
      %v1146 = vpack.c.b16 %v1024, %v1023
      %v1147 = vpack.c.b16 %v1026, %v1025
      %v1148 = vpack.c.b16 %v1028, %v1027
      %v1149 = vpack.c.b16 %v1030, %v1029
      %v1150 = vpack.c.b16 %v1032, %v1031
      %v1151 = vpack.c.b16 %v1034, %v1033
      %v1152 = vpack.c.b16 %v1036, %v1035
      %v1153 = vpack.c.b16 %v1038, %v1037
      %v1154 = vpack.c.b16 %v1040, %v1039
      %v1155 = vpack.c.b16 %v1042, %v1041
      %v1156 = vpack.c.b16 %v1044, %v1043
      %v1157 = vpack.c.b16 %v1046, %v1045
      %v1158 = vpack.c.b16 %v1048, %v1047
      %v1159 = vpack.c.b16 %v1050, %v1049
      %v1160 = vpack.c.b16 %v1052, %v1051
      %v1161 = vpack.c.b16 %v1054, %v1053
      %v1162 = vpack.c.b16 %v1056, %v1055
      %v1163 = vpack.c.b16 %v1058, %v1057
      %v1164 = vpack.c.b16 %v1060, %v1059
      %v1165 = vpack.c.b16 %v1062, %v1061
      %v1166 = vpack.c.b16 %v1064, %v1063
      %v1167 = vpack.c.b16 %v1066, %v1065
      %v1168 = vpack.c.b16 %v1068, %v1067
      %v1169 = vpack.c.b16 %v1070, %v1069
      %v1170 = vpack.c.b16 %v1072, %v1071
      %v1171 = vpack.c.b16 %v1074, %v1073
      %v1172 = vpack.c.b16 %v1076, %v1075
      %v1173 = vpack.c.b16 %v1078, %v1077
      %v1174 = vpack.c.b16 %v1080, %v1079
      %v1175 = vpack.c.b16 %v1082, %v1081
      %v1176 = vpack.c.b16 %v1084, %v1083
      %v1177 = vpack.c.b16 %v1086, %v1085
      %v1178 = vpack.c.b16 %v1088, %v1087
      %v1179 = vpack.c.b16 %v1090, %v1089
      %v1180 = vpack.c.b16 %v1092, %v1091
      %v1181 = vpack.c.b16 %v1094, %v1093
      %v1182 = vpack.c.b16 %v1096, %v1095
      %v1183 = vpack.c.b16 %v1098, %v1097
      %v1184 = vpack.c.b16 %v1100, %v1099
      %v1185 = vpack.c.b16 %v1102, %v1101
      %v1186 = vpack.c.b16 %v1104, %v1103
      %v1187 = vpack.c.b16 %v1106, %v1105
      %v1188 = vpack.c.b16 %v1108, %v1107
      %v1189 = vpack.c.b16 %v1110, %v1109
      %v1190 = vpack.c.b16 %v1112, %v1111
      %v1191 = vpack.c.b16 %v1114, %v1113
      %v1192 = vpack.c.b16 %v1116, %v1115
      %v1193 = vpack.c.b16 %v1118, %v1117
      %v1194 = vpack.c.b16 %v1120, %v1119
      %v1195 = vpack.c.b16 %v1122, %v1121
      %v1196 = vpack.c.b16 %v1124, %v1123
      %v1197 = vpack.c.b16 %v1126, %v1125
      %v1198 = vpack.c.b16 %v1128, %v1127
      %v1199 = vpack.c.b16 %v1130, %v1129
      %v1200 = vpack.c.b16 %v1132, %v1131
      %v1201 = vpack.c.b16 %v1134, %v1133
      %v1202 = vpack.c.b16 %v1136, %v1135
      %v1203 = vpack.c.b16 %v1138, %v1137
      %v1204 = vpack.c.b16 %v1140, %v1139
      %1269 = vmatpush.bf16.msra.mxu0 %v1148
      %1270 = vmatpush.bf16.msra.mxu0 %v1147
      %1271 = vmatpush.bf16.msra.mxu0 %v1146
      %1272 = vmatpush.bf16.msra.mxu0 %v1145
      %1273 = vmatpush.bf16.msra.mxu0 %v1144
      %1274 = vmatpush.bf16.msra.mxu0 %v1143
      %1275 = vmatpush.bf16.msra.mxu0 %v1142
      %1276 = vmatpush.bf16.msra.mxu0 %v1141
      %1277 = vmatmul.bf16.gmra.mxu0 %v853
      %v1278 = vpop.f32.mrf.mxu0
      %v1279 = vadd.f32 0.0, %v1278
      %v1280 = vpop.f32.mrf.mxu0
      %v1281 = vadd.f32 0.0, %v1280
      %1282 = vmatmul.bf16.gmra.mxu0 %v861
      %v1283 = vpop.f32.mrf.mxu0
      %v1284 = vadd.f32 0.0, %v1283
      %v1285 = vpop.f32.mrf.mxu0
      %v1286 = vadd.f32 0.0, %v1285
      %1287 = vdwg.mxu0
      %1288 = vmatpush.bf16.msra.mxu0 %v1156
      %1289 = vmatpush.bf16.msra.mxu0 %v1155
      %1290 = vmatpush.bf16.msra.mxu0 %v1154
      %1291 = vmatpush.bf16.msra.mxu0 %v1153
      %1292 = vmatpush.bf16.msra.mxu0 %v1152
      %1293 = vmatpush.bf16.msra.mxu0 %v1151
      %1294 = vmatpush.bf16.msra.mxu0 %v1150
      %1295 = vmatpush.bf16.msra.mxu0 %v1149
      %1296 = vmatmul.bf16.gmra.mxu0 %v854
      %v1297 = vpop.f32.mrf.mxu0
      %v1298 = vadd.f32 %v1279, %v1297
      %v1299 = vpop.f32.mrf.mxu0
      %v1300 = vadd.f32 %v1281, %v1299
      %1301 = vmatmul.bf16.gmra.mxu0 %v862
      %v1302 = vpop.f32.mrf.mxu0
      %v1303 = vadd.f32 %v1284, %v1302
      %v1304 = vpop.f32.mrf.mxu0
      %v1305 = vadd.f32 %v1286, %v1304
      %1306 = vdwg.mxu0
      %1307 = vmatpush.bf16.msra.mxu0 %v1164
      %1308 = vmatpush.bf16.msra.mxu0 %v1163
      %1309 = vmatpush.bf16.msra.mxu0 %v1162
      %1310 = vmatpush.bf16.msra.mxu0 %v1161
      %1311 = vmatpush.bf16.msra.mxu0 %v1160
      %1312 = vmatpush.bf16.msra.mxu0 %v1159
      %1313 = vmatpush.bf16.msra.mxu0 %v1158
      %1314 = vmatpush.bf16.msra.mxu0 %v1157
      %1315 = vmatmul.bf16.gmra.mxu0 %v855
      %v1316 = vpop.f32.mrf.mxu0
      %v1317 = vadd.f32 %v1298, %v1316
      %v1318 = vpop.f32.mrf.mxu0
      %v1319 = vadd.f32 %v1300, %v1318
      %1320 = vmatmul.bf16.gmra.mxu0 %v863
      %v1321 = vpop.f32.mrf.mxu0
      %v1322 = vadd.f32 %v1303, %v1321
      %v1323 = vpop.f32.mrf.mxu0
      %v1324 = vadd.f32 %v1305, %v1323
      %1325 = vdwg.mxu0
      %1326 = vmatpush.bf16.msra.mxu0 %v1172
      %1327 = vmatpush.bf16.msra.mxu0 %v1171
      %1328 = vmatpush.bf16.msra.mxu0 %v1170
      %1329 = vmatpush.bf16.msra.mxu0 %v1169
      %1330 = vmatpush.bf16.msra.mxu0 %v1168
      %1331 = vmatpush.bf16.msra.mxu0 %v1167
      %1332 = vmatpush.bf16.msra.mxu0 %v1166
      %1333 = vmatpush.bf16.msra.mxu0 %v1165
      %1334 = vmatmul.bf16.gmra.mxu0 %v856
      %v1335 = vpop.f32.mrf.mxu0
      %v1336 = vadd.f32 %v1317, %v1335
      %v1337 = vpop.f32.mrf.mxu0
      %v1338 = vadd.f32 %v1319, %v1337
      %1339 = vmatmul.bf16.gmra.mxu0 %v864
      %v1340 = vpop.f32.mrf.mxu0
      %v1341 = vadd.f32 %v1322, %v1340
      %v1342 = vpop.f32.mrf.mxu0
      %v1343 = vadd.f32 %v1324, %v1342
      %1344 = vdwg.mxu0
      %1345 = vmatpush.bf16.msra.mxu0 %v1180
      %1346 = vmatpush.bf16.msra.mxu0 %v1179
      %1347 = vmatpush.bf16.msra.mxu0 %v1178
      %1348 = vmatpush.bf16.msra.mxu0 %v1177
      %1349 = vmatpush.bf16.msra.mxu0 %v1176
      %1350 = vmatpush.bf16.msra.mxu0 %v1175
      %1351 = vmatpush.bf16.msra.mxu0 %v1174
      %1352 = vmatpush.bf16.msra.mxu0 %v1173
      %1353 = vmatmul.bf16.gmra.mxu0 %v857
      %v1354 = vpop.f32.mrf.mxu0
      %v1355 = vadd.f32 %v1336, %v1354
      %v1356 = vpop.f32.mrf.mxu0
      %v1357 = vadd.f32 %v1338, %v1356
      %1358 = vmatmul.bf16.gmra.mxu0 %v865
      %v1359 = vpop.f32.mrf.mxu0
      %v1360 = vadd.f32 %v1341, %v1359
      %v1361 = vpop.f32.mrf.mxu0
      %v1362 = vadd.f32 %v1343, %v1361
      %1363 = vdwg.mxu0
      %1364 = vmatpush.bf16.msra.mxu0 %v1188
      %1365 = vmatpush.bf16.msra.mxu0 %v1187
      %1366 = vmatpush.bf16.msra.mxu0 %v1186
      %1367 = vmatpush.bf16.msra.mxu0 %v1185
      %1368 = vmatpush.bf16.msra.mxu0 %v1184
      %1369 = vmatpush.bf16.msra.mxu0 %v1183
      %1370 = vmatpush.bf16.msra.mxu0 %v1182
      %1371 = vmatpush.bf16.msra.mxu0 %v1181
      %1372 = vmatmul.bf16.gmra.mxu0 %v858
      %v1373 = vpop.f32.mrf.mxu0
      %v1374 = vadd.f32 %v1355, %v1373
      %v1375 = vpop.f32.mrf.mxu0
      %v1376 = vadd.f32 %v1357, %v1375
      %1377 = vmatmul.bf16.gmra.mxu0 %v866
      %v1378 = vpop.f32.mrf.mxu0
      %v1379 = vadd.f32 %v1360, %v1378
      %v1380 = vpop.f32.mrf.mxu0
      %v1381 = vadd.f32 %v1362, %v1380
      %1382 = vdwg.mxu0
      %1383 = vmatpush.bf16.msra.mxu0 %v1196
      %1384 = vmatpush.bf16.msra.mxu0 %v1195
      %1385 = vmatpush.bf16.msra.mxu0 %v1194
      %1386 = vmatpush.bf16.msra.mxu0 %v1193
      %1387 = vmatpush.bf16.msra.mxu0 %v1192
      %1388 = vmatpush.bf16.msra.mxu0 %v1191
      %1389 = vmatpush.bf16.msra.mxu0 %v1190
      %1390 = vmatpush.bf16.msra.mxu0 %v1189
      %1391 = vmatmul.bf16.gmra.mxu0 %v859
      %v1392 = vpop.f32.mrf.mxu0
      %v1393 = vadd.f32 %v1374, %v1392
      %v1394 = vpop.f32.mrf.mxu0
      %v1395 = vadd.f32 %v1376, %v1394
      %1396 = vmatmul.bf16.gmra.mxu0 %v867
      %v1397 = vpop.f32.mrf.mxu0
      %v1398 = vadd.f32 %v1379, %v1397
      %v1399 = vpop.f32.mrf.mxu0
      %v1400 = vadd.f32 %v1381, %v1399
      %1401 = vdwg.mxu0
      %1402 = vmatpush.bf16.msra.mxu0 %v1204
      %1403 = vmatpush.bf16.msra.mxu0 %v1203
      %1404 = vmatpush.bf16.msra.mxu0 %v1202
      %1405 = vmatpush.bf16.msra.mxu0 %v1201
      %1406 = vmatpush.bf16.msra.mxu0 %v1200
      %1407 = vmatpush.bf16.msra.mxu0 %v1199
      %1408 = vmatpush.bf16.msra.mxu0 %v1198
      %1409 = vmatpush.bf16.msra.mxu0 %v1197
      %1410 = vmatmul.bf16.gmra.mxu0 %v860
      %v1411 = vpop.f32.mrf.mxu0
      %v1412 = vadd.f32 %v1393, %v1411
      %v1413 = vpop.f32.mrf.mxu0
      %v1414 = vadd.f32 %v1395, %v1413
      %1415 = vmatmul.bf16.gmra.mxu0 %v868
      %v1416 = vpop.f32.mrf.mxu0
      %v1417 = vadd.f32 %v1398, %v1416
      %v1418 = vpop.f32.mrf.mxu0
      %v1419 = vadd.f32 %v1400, %v1418
      %1420 = vdwg.mxu0
      %v1421 = vld [vmem:[%s3] sm:$0x1]
      %v1423 = vperm.slane %v1421, 0
      %v1425 = vadd.f32 %v1412, %v1423
      %v1426 = vadd.f32 %v1414, %v1423
      %v1427 = vadd.f32 %v1417, %v1423
      %v1428 = vadd.f32 %v1419, %v1423
      %v1429 = vld [vmem:[%s4] sm:$0xff]
      %v1430 = vadd.f32 %v1425, %v1429
      %v1431 = vadd.f32 %v1426, %v1429
      %v1432 = vadd.f32 %v1427, %v1429
      %v1433 = vadd.f32 %v1428, %v1429
      %v1434 = vld [vmem:[%s653] sm:$0xff]
      %v1435 = vld [vmem:[%s653 + $0x8] sm:$0xff]
      %v1436 = vld [vmem:[%s653 + $0x10] sm:$0xff]
      %v1437 = vld [vmem:[%s653 + $0x18] sm:$0xff]
      %v1438 = vld [vmem:[%s653 + $0x20] sm:$0xff]
      %v1439 = vld [vmem:[%s653 + $0x28] sm:$0xff]
      %v1440 = vld [vmem:[%s653 + $0x30] sm:$0xff]
      %v1441 = vld [vmem:[%s653 + $0x38] sm:$0xff]
      %v1442 = vld [vmem:[%s653 + $0x40] sm:$0xff]
      %v1443 = vld [vmem:[%s653 + $0x48] sm:$0xff]
      %v1444 = vld [vmem:[%s653 + $0x50] sm:$0xff]
      %v1445 = vld [vmem:[%s653 + $0x58] sm:$0xff]
      %v1446 = vld [vmem:[%s653 + $0x60] sm:$0xff]
      %v1447 = vld [vmem:[%s653 + $0x68] sm:$0xff]
      %v1448 = vld [vmem:[%s653 + $0x70] sm:$0xff]
      %v1449 = vld [vmem:[%s653 + $0x78] sm:$0xff]
      %v1450 = vld [vmem:[%s5] sm:$0xf]
      %v1451 = vld [vmem:[%s5 + $0x4] sm:$0xf]
      %v1452 = vld [vmem:[%s5 + $0x8] sm:$0xf]
      %v1453 = vld [vmem:[%s5 + $0xc] sm:$0xf]
      %v1454 = vld [vmem:[%s5 + $0x10] sm:$0xf]
      %v1455 = vld [vmem:[%s5 + $0x14] sm:$0xf]
      %v1456 = vld [vmem:[%s5 + $0x18] sm:$0xf]
      %v1457 = vld [vmem:[%s5 + $0x1c] sm:$0xf]
      %v1458 = vld [vmem:[%s5 + $0x20] sm:$0xf]
      %v1459 = vld [vmem:[%s5 + $0x24] sm:$0xf]
      %v1460 = vld [vmem:[%s5 + $0x28] sm:$0xf]
      %v1461 = vld [vmem:[%s5 + $0x2c] sm:$0xf]
      %v1462 = vld [vmem:[%s5 + $0x30] sm:$0xf]
      %v1463 = vld [vmem:[%s5 + $0x34] sm:$0xf]
      %v1464 = vld [vmem:[%s5 + $0x38] sm:$0xf]
      %v1465 = vld [vmem:[%s5 + $0x3c] sm:$0xf]
      %v1466 = vld [vmem:[%s5 + $0x40] sm:$0xf]
      %v1467 = vld [vmem:[%s5 + $0x44] sm:$0xf]
      %v1468 = vld [vmem:[%s5 + $0x48] sm:$0xf]
      %v1469 = vld [vmem:[%s5 + $0x4c] sm:$0xf]
      %v1470 = vld [vmem:[%s5 + $0x50] sm:$0xf]
      %v1471 = vld [vmem:[%s5 + $0x54] sm:$0xf]
      %v1472 = vld [vmem:[%s5 + $0x58] sm:$0xf]
      %v1473 = vld [vmem:[%s5 + $0x5c] sm:$0xf]
      %v1474 = vld [vmem:[%s5 + $0x60] sm:$0xf]
      %v1475 = vld [vmem:[%s5 + $0x64] sm:$0xf]
      %v1476 = vld [vmem:[%s5 + $0x68] sm:$0xf]
      %v1477 = vld [vmem:[%s5 + $0x6c] sm:$0xf]
      %v1478 = vld [vmem:[%s5 + $0x70] sm:$0xf]
      %v1479 = vld [vmem:[%s5 + $0x74] sm:$0xf]
      %v1480 = vld [vmem:[%s5 + $0x78] sm:$0xf]
      %v1481 = vld [vmem:[%s5 + $0x7c] sm:$0xf]
      %v1482 = vld [vmem:[%s5 + $0x80] sm:$0xf]
      %v1483 = vld [vmem:[%s5 + $0x84] sm:$0xf]
      %v1484 = vld [vmem:[%s5 + $0x88] sm:$0xf]
      %v1485 = vld [vmem:[%s5 + $0x8c] sm:$0xf]
      %v1486 = vld [vmem:[%s5 + $0x90] sm:$0xf]
      %v1487 = vld [vmem:[%s5 + $0x94] sm:$0xf]
      %v1488 = vld [vmem:[%s5 + $0x98] sm:$0xf]
      %v1489 = vld [vmem:[%s5 + $0x9c] sm:$0xf]
      %v1490 = vld [vmem:[%s5 + $0xa0] sm:$0xf]
      %v1491 = vld [vmem:[%s5 + $0xa4] sm:$0xf]
      %v1492 = vld [vmem:[%s5 + $0xa8] sm:$0xf]
      %v1493 = vld [vmem:[%s5 + $0xac] sm:$0xf]
      %v1494 = vld [vmem:[%s5 + $0xb0] sm:$0xf]
      %v1495 = vld [vmem:[%s5 + $0xb4] sm:$0xf]
      %v1496 = vld [vmem:[%s5 + $0xb8] sm:$0xf]
      %v1497 = vld [vmem:[%s5 + $0xbc] sm:$0xf]
      %v1498 = vld [vmem:[%s5 + $0xc0] sm:$0xf]
      %v1499 = vld [vmem:[%s5 + $0xc4] sm:$0xf]
      %v1500 = vld [vmem:[%s5 + $0xc8] sm:$0xf]
      %v1501 = vld [vmem:[%s5 + $0xcc] sm:$0xf]
      %v1502 = vld [vmem:[%s5 + $0xd0] sm:$0xf]
      %v1503 = vld [vmem:[%s5 + $0xd4] sm:$0xf]
      %v1504 = vld [vmem:[%s5 + $0xd8] sm:$0xf]
      %v1505 = vld [vmem:[%s5 + $0xdc] sm:$0xf]
      %v1506 = vld [vmem:[%s5 + $0xe0] sm:$0xf]
      %v1507 = vld [vmem:[%s5 + $0xe4] sm:$0xf]
      %v1508 = vld [vmem:[%s5 + $0xe8] sm:$0xf]
      %v1509 = vld [vmem:[%s5 + $0xec] sm:$0xf]
      %v1510 = vld [vmem:[%s5 + $0xf0] sm:$0xf]
      %v1511 = vld [vmem:[%s5 + $0xf4] sm:$0xf]
      %v1512 = vld [vmem:[%s5 + $0xf8] sm:$0xf]
      %v1513 = vld [vmem:[%s5 + $0xfc] sm:$0xf]
      %v1514 = vld [vmem:[%s5 + $0x100] sm:$0xf]
      %v1515 = vld [vmem:[%s5 + $0x104] sm:$0xf]
      %v1516 = vld [vmem:[%s5 + $0x108] sm:$0xf]
      %v1517 = vld [vmem:[%s5 + $0x10c] sm:$0xf]
      %v1518 = vld [vmem:[%s5 + $0x110] sm:$0xf]
      %v1519 = vld [vmem:[%s5 + $0x114] sm:$0xf]
      %v1520 = vld [vmem:[%s5 + $0x118] sm:$0xf]
      %v1521 = vld [vmem:[%s5 + $0x11c] sm:$0xf]
      %v1522 = vld [vmem:[%s5 + $0x120] sm:$0xf]
      %v1523 = vld [vmem:[%s5 + $0x124] sm:$0xf]
      %v1524 = vld [vmem:[%s5 + $0x128] sm:$0xf]
      %v1525 = vld [vmem:[%s5 + $0x12c] sm:$0xf]
      %v1526 = vld [vmem:[%s5 + $0x130] sm:$0xf]
      %v1527 = vld [vmem:[%s5 + $0x134] sm:$0xf]
      %v1528 = vld [vmem:[%s5 + $0x138] sm:$0xf]
      %v1529 = vld [vmem:[%s5 + $0x13c] sm:$0xf]
      %v1530 = vld [vmem:[%s5 + $0x140] sm:$0xf]
      %v1531 = vld [vmem:[%s5 + $0x144] sm:$0xf]
      %v1532 = vld [vmem:[%s5 + $0x148] sm:$0xf]
      %v1533 = vld [vmem:[%s5 + $0x14c] sm:$0xf]
      %v1534 = vld [vmem:[%s5 + $0x150] sm:$0xf]
      %v1535 = vld [vmem:[%s5 + $0x154] sm:$0xf]
      %v1536 = vld [vmem:[%s5 + $0x158] sm:$0xf]
      %v1537 = vld [vmem:[%s5 + $0x15c] sm:$0xf]
      %v1538 = vld [vmem:[%s5 + $0x160] sm:$0xf]
      %v1539 = vld [vmem:[%s5 + $0x164] sm:$0xf]
      %v1540 = vld [vmem:[%s5 + $0x168] sm:$0xf]
      %v1541 = vld [vmem:[%s5 + $0x16c] sm:$0xf]
      %v1542 = vld [vmem:[%s5 + $0x170] sm:$0xf]
      %v1543 = vld [vmem:[%s5 + $0x174] sm:$0xf]
      %v1544 = vld [vmem:[%s5 + $0x178] sm:$0xf]
      %v1545 = vld [vmem:[%s5 + $0x17c] sm:$0xf]
      %v1546 = vld [vmem:[%s5 + $0x180] sm:$0xf]
      %v1547 = vld [vmem:[%s5 + $0x184] sm:$0xf]
      %v1548 = vld [vmem:[%s5 + $0x188] sm:$0xf]
      %v1549 = vld [vmem:[%s5 + $0x18c] sm:$0xf]
      %v1550 = vld [vmem:[%s5 + $0x190] sm:$0xf]
      %v1551 = vld [vmem:[%s5 + $0x194] sm:$0xf]
      %v1552 = vld [vmem:[%s5 + $0x198] sm:$0xf]
      %v1553 = vld [vmem:[%s5 + $0x19c] sm:$0xf]
      %v1554 = vld [vmem:[%s5 + $0x1a0] sm:$0xf]
      %v1555 = vld [vmem:[%s5 + $0x1a4] sm:$0xf]
      %v1556 = vld [vmem:[%s5 + $0x1a8] sm:$0xf]
      %v1557 = vld [vmem:[%s5 + $0x1ac] sm:$0xf]
      %v1558 = vld [vmem:[%s5 + $0x1b0] sm:$0xf]
      %v1559 = vld [vmem:[%s5 + $0x1b4] sm:$0xf]
      %v1560 = vld [vmem:[%s5 + $0x1b8] sm:$0xf]
      %v1561 = vld [vmem:[%s5 + $0x1bc] sm:$0xf]
      %v1562 = vld [vmem:[%s5 + $0x1c0] sm:$0xf]
      %v1563 = vld [vmem:[%s5 + $0x1c4] sm:$0xf]
      %v1564 = vld [vmem:[%s5 + $0x1c8] sm:$0xf]
      %v1565 = vld [vmem:[%s5 + $0x1cc] sm:$0xf]
      %v1566 = vld [vmem:[%s5 + $0x1d0] sm:$0xf]
      %v1567 = vld [vmem:[%s5 + $0x1d4] sm:$0xf]
      %v1568 = vld [vmem:[%s5 + $0x1d8] sm:$0xf]
      %v1569 = vld [vmem:[%s5 + $0x1dc] sm:$0xf]
      %v1570 = vld [vmem:[%s5 + $0x1e0] sm:$0xf]
      %v1571 = vld [vmem:[%s5 + $0x1e4] sm:$0xf]
      %v1572 = vld [vmem:[%s5 + $0x1e8] sm:$0xf]
      %v1573 = vld [vmem:[%s5 + $0x1ec] sm:$0xf]
      %v1574 = vld [vmem:[%s5 + $0x1f0] sm:$0xf]
      %v1575 = vld [vmem:[%s5 + $0x1f4] sm:$0xf]
      %v1576 = vld [vmem:[%s5 + $0x1f8] sm:$0xf]
      %v1577 = vld [vmem:[%s5 + $0x1fc] sm:$0xf]
      %v1594 = vunpack.c.l.b16 %v1434
      %v1595 = vunpack.c.h.b16 %v1434
      %v1596 = vunpack.c.l.b16 %v1435
      %v1597 = vunpack.c.h.b16 %v1435
      %v1598 = vunpack.c.l.b16 %v1436
      %v1599 = vunpack.c.h.b16 %v1436
      %v1600 = vunpack.c.l.b16 %v1437
      %v1601 = vunpack.c.h.b16 %v1437
      %v1602 = vunpack.c.l.b16 %v1438
      %v1603 = vunpack.c.h.b16 %v1438
      %v1604 = vunpack.c.l.b16 %v1439
      %v1605 = vunpack.c.h.b16 %v1439
      %v1606 = vunpack.c.l.b16 %v1440
      %v1607 = vunpack.c.h.b16 %v1440
      %v1608 = vunpack.c.l.b16 %v1441
      %v1609 = vunpack.c.h.b16 %v1441
      %v1610 = vunpack.c.l.b16 %v1442
      %v1611 = vunpack.c.h.b16 %v1442
      %v1612 = vunpack.c.l.b16 %v1443
      %v1613 = vunpack.c.h.b16 %v1443
      %v1614 = vunpack.c.l.b16 %v1444
      %v1615 = vunpack.c.h.b16 %v1444
      %v1616 = vunpack.c.l.b16 %v1445
      %v1617 = vunpack.c.h.b16 %v1445
      %v1618 = vunpack.c.l.b16 %v1446
      %v1619 = vunpack.c.h.b16 %v1446
      %v1620 = vunpack.c.l.b16 %v1447
      %v1621 = vunpack.c.h.b16 %v1447
      %v1622 = vunpack.c.l.b16 %v1448
      %v1623 = vunpack.c.h.b16 %v1448
      %v1624 = vunpack.c.l.b16 %v1449
      %v1625 = vunpack.c.h.b16 %v1449
      %v1626 = vpack.c.b16 %v1602, %v1594
      %v1627 = vpack.c.b16 %v1603, %v1595
      %v1628 = vpack.c.b16 %v1604, %v1596
      %v1629 = vpack.c.b16 %v1605, %v1597
      %v1630 = vpack.c.b16 %v1606, %v1598
      %v1631 = vpack.c.b16 %v1607, %v1599
      %v1632 = vpack.c.b16 %v1608, %v1600
      %v1633 = vpack.c.b16 %v1609, %v1601
      %v1634 = vpack.c.b16 %v1618, %v1610
      %v1635 = vpack.c.b16 %v1619, %v1611
      %v1636 = vpack.c.b16 %v1620, %v1612
      %v1637 = vpack.c.b16 %v1621, %v1613
      %v1638 = vpack.c.b16 %v1622, %v1614
      %v1639 = vpack.c.b16 %v1623, %v1615
      %v1640 = vpack.c.b16 %v1624, %v1616
      %v1641 = vpack.c.b16 %v1625, %v1617
      %v1786 = vunpack.c.l.b16 %v1450
      %v1787 = vunpack.c.l.b16 %v1451
      %v1788 = vunpack.c.l.b16 %v1452
      %v1789 = vunpack.c.l.b16 %v1453
      %v1790 = vunpack.c.l.b16 %v1454
      %v1791 = vunpack.c.l.b16 %v1455
      %v1792 = vunpack.c.l.b16 %v1456
      %v1793 = vunpack.c.l.b16 %v1457
      %v1794 = vunpack.c.l.b16 %v1458
      %v1795 = vunpack.c.l.b16 %v1459
      %v1796 = vunpack.c.l.b16 %v1460
      %v1797 = vunpack.c.l.b16 %v1461
      %v1798 = vunpack.c.l.b16 %v1462
      %v1799 = vunpack.c.l.b16 %v1463
      %v1800 = vunpack.c.l.b16 %v1464
      %v1801 = vunpack.c.l.b16 %v1465
      %v1802 = vunpack.c.l.b16 %v1466
      %v1803 = vunpack.c.l.b16 %v1467
      %v1804 = vunpack.c.l.b16 %v1468
      %v1805 = vunpack.c.l.b16 %v1469
      %v1806 = vunpack.c.l.b16 %v1470
      %v1807 = vunpack.c.l.b16 %v1471
      %v1808 = vunpack.c.l.b16 %v1472
      %v1809 = vunpack.c.l.b16 %v1473
      %v1810 = vunpack.c.l.b16 %v1474
      %v1811 = vunpack.c.l.b16 %v1475
      %v1812 = vunpack.c.l.b16 %v1476
      %v1813 = vunpack.c.l.b16 %v1477
      %v1814 = vunpack.c.l.b16 %v1478
      %v1815 = vunpack.c.l.b16 %v1479
      %v1816 = vunpack.c.l.b16 %v1480
      %v1817 = vunpack.c.l.b16 %v1481
      %v1818 = vunpack.c.l.b16 %v1482
      %v1819 = vunpack.c.l.b16 %v1483
      %v1820 = vunpack.c.l.b16 %v1484
      %v1821 = vunpack.c.l.b16 %v1485
      %v1822 = vunpack.c.l.b16 %v1486
      %v1823 = vunpack.c.l.b16 %v1487
      %v1824 = vunpack.c.l.b16 %v1488
      %v1825 = vunpack.c.l.b16 %v1489
      %v1826 = vunpack.c.l.b16 %v1490
      %v1827 = vunpack.c.l.b16 %v1491
      %v1828 = vunpack.c.l.b16 %v1492
      %v1829 = vunpack.c.l.b16 %v1493
      %v1830 = vunpack.c.l.b16 %v1494
      %v1831 = vunpack.c.l.b16 %v1495
      %v1832 = vunpack.c.l.b16 %v1496
      %v1833 = vunpack.c.l.b16 %v1497
      %v1834 = vunpack.c.l.b16 %v1498
      %v1835 = vunpack.c.l.b16 %v1499
      %v1836 = vunpack.c.l.b16 %v1500
      %v1837 = vunpack.c.l.b16 %v1501
      %v1838 = vunpack.c.l.b16 %v1502
      %v1839 = vunpack.c.l.b16 %v1503
      %v1840 = vunpack.c.l.b16 %v1504
      %v1841 = vunpack.c.l.b16 %v1505
      %v1842 = vunpack.c.l.b16 %v1506
      %v1843 = vunpack.c.l.b16 %v1507
      %v1844 = vunpack.c.l.b16 %v1508
      %v1845 = vunpack.c.l.b16 %v1509
      %v1846 = vunpack.c.l.b16 %v1510
      %v1847 = vunpack.c.l.b16 %v1511
      %v1848 = vunpack.c.l.b16 %v1512
      %v1849 = vunpack.c.l.b16 %v1513
      %v1850 = vunpack.c.l.b16 %v1514
      %v1851 = vunpack.c.l.b16 %v1515
      %v1852 = vunpack.c.l.b16 %v1516
      %v1853 = vunpack.c.l.b16 %v1517
      %v1854 = vunpack.c.l.b16 %v1518
      %v1855 = vunpack.c.l.b16 %v1519
      %v1856 = vunpack.c.l.b16 %v1520
      %v1857 = vunpack.c.l.b16 %v1521
      %v1858 = vunpack.c.l.b16 %v1522
      %v1859 = vunpack.c.l.b16 %v1523
      %v1860 = vunpack.c.l.b16 %v1524
      %v1861 = vunpack.c.l.b16 %v1525
      %v1862 = vunpack.c.l.b16 %v1526
      %v1863 = vunpack.c.l.b16 %v1527
      %v1864 = vunpack.c.l.b16 %v1528
      %v1865 = vunpack.c.l.b16 %v1529
      %v1866 = vunpack.c.l.b16 %v1530
      %v1867 = vunpack.c.l.b16 %v1531
      %v1868 = vunpack.c.l.b16 %v1532
      %v1869 = vunpack.c.l.b16 %v1533
      %v1870 = vunpack.c.l.b16 %v1534
      %v1871 = vunpack.c.l.b16 %v1535
      %v1872 = vunpack.c.l.b16 %v1536
      %v1873 = vunpack.c.l.b16 %v1537
      %v1874 = vunpack.c.l.b16 %v1538
      %v1875 = vunpack.c.l.b16 %v1539
      %v1876 = vunpack.c.l.b16 %v1540
      %v1877 = vunpack.c.l.b16 %v1541
      %v1878 = vunpack.c.l.b16 %v1542
      %v1879 = vunpack.c.l.b16 %v1543
      %v1880 = vunpack.c.l.b16 %v1544
      %v1881 = vunpack.c.l.b16 %v1545
      %v1882 = vunpack.c.l.b16 %v1546
      %v1883 = vunpack.c.l.b16 %v1547
      %v1884 = vunpack.c.l.b16 %v1548
      %v1885 = vunpack.c.l.b16 %v1549
      %v1886 = vunpack.c.l.b16 %v1550
      %v1887 = vunpack.c.l.b16 %v1551
      %v1888 = vunpack.c.l.b16 %v1552
      %v1889 = vunpack.c.l.b16 %v1553
      %v1890 = vunpack.c.l.b16 %v1554
      %v1891 = vunpack.c.l.b16 %v1555
      %v1892 = vunpack.c.l.b16 %v1556
      %v1893 = vunpack.c.l.b16 %v1557
      %v1894 = vunpack.c.l.b16 %v1558
      %v1895 = vunpack.c.l.b16 %v1559
      %v1896 = vunpack.c.l.b16 %v1560
      %v1897 = vunpack.c.l.b16 %v1561
      %v1898 = vunpack.c.l.b16 %v1562
      %v1899 = vunpack.c.l.b16 %v1563
      %v1900 = vunpack.c.l.b16 %v1564
      %v1901 = vunpack.c.l.b16 %v1565
      %v1902 = vunpack.c.l.b16 %v1566
      %v1903 = vunpack.c.l.b16 %v1567
      %v1904 = vunpack.c.l.b16 %v1568
      %v1905 = vunpack.c.l.b16 %v1569
      %v1906 = vunpack.c.l.b16 %v1570
      %v1907 = vunpack.c.l.b16 %v1571
      %v1908 = vunpack.c.l.b16 %v1572
      %v1909 = vunpack.c.l.b16 %v1573
      %v1910 = vunpack.c.l.b16 %v1574
      %v1911 = vunpack.c.l.b16 %v1575
      %v1912 = vunpack.c.l.b16 %v1576
      %v1913 = vunpack.c.l.b16 %v1577
      %v1914 = vpack.c.b16 %v1787, %v1786
      %v1915 = vpack.c.b16 %v1789, %v1788
      %v1916 = vpack.c.b16 %v1791, %v1790
      %v1917 = vpack.c.b16 %v1793, %v1792
      %v1918 = vpack.c.b16 %v1795, %v1794
      %v1919 = vpack.c.b16 %v1797, %v1796
      %v1920 = vpack.c.b16 %v1799, %v1798
      %v1921 = vpack.c.b16 %v1801, %v1800
      %v1922 = vpack.c.b16 %v1803, %v1802
      %v1923 = vpack.c.b16 %v1805, %v1804
      %v1924 = vpack.c.b16 %v1807, %v1806
      %v1925 = vpack.c.b16 %v1809, %v1808
      %v1926 = vpack.c.b16 %v1811, %v1810
      %v1927 = vpack.c.b16 %v1813, %v1812
      %v1928 = vpack.c.b16 %v1815, %v1814
      %v1929 = vpack.c.b16 %v1817, %v1816
      %v1930 = vpack.c.b16 %v1819, %v1818
      %v1931 = vpack.c.b16 %v1821, %v1820
      %v1932 = vpack.c.b16 %v1823, %v1822
      %v1933 = vpack.c.b16 %v1825, %v1824
      %v1934 = vpack.c.b16 %v1827, %v1826
      %v1935 = vpack.c.b16 %v1829, %v1828
      %v1936 = vpack.c.b16 %v1831, %v1830
      %v1937 = vpack.c.b16 %v1833, %v1832
      %v1938 = vpack.c.b16 %v1835, %v1834
      %v1939 = vpack.c.b16 %v1837, %v1836
      %v1940 = vpack.c.b16 %v1839, %v1838
      %v1941 = vpack.c.b16 %v1841, %v1840
      %v1942 = vpack.c.b16 %v1843, %v1842
      %v1943 = vpack.c.b16 %v1845, %v1844
      %v1944 = vpack.c.b16 %v1847, %v1846
      %v1945 = vpack.c.b16 %v1849, %v1848
      %v1946 = vpack.c.b16 %v1851, %v1850
      %v1947 = vpack.c.b16 %v1853, %v1852
      %v1948 = vpack.c.b16 %v1855, %v1854
      %v1949 = vpack.c.b16 %v1857, %v1856
      %v1950 = vpack.c.b16 %v1859, %v1858
      %v1951 = vpack.c.b16 %v1861, %v1860
      %v1952 = vpack.c.b16 %v1863, %v1862
      %v1953 = vpack.c.b16 %v1865, %v1864
      %v1954 = vpack.c.b16 %v1867, %v1866
      %v1955 = vpack.c.b16 %v1869, %v1868
      %v1956 = vpack.c.b16 %v1871, %v1870
      %v1957 = vpack.c.b16 %v1873, %v1872
      %v1958 = vpack.c.b16 %v1875, %v1874
      %v1959 = vpack.c.b16 %v1877, %v1876
      %v1960 = vpack.c.b16 %v1879, %v1878
      %v1961 = vpack.c.b16 %v1881, %v1880
      %v1962 = vpack.c.b16 %v1883, %v1882
      %v1963 = vpack.c.b16 %v1885, %v1884
      %v1964 = vpack.c.b16 %v1887, %v1886
      %v1965 = vpack.c.b16 %v1889, %v1888
      %v1966 = vpack.c.b16 %v1891, %v1890
      %v1967 = vpack.c.b16 %v1893, %v1892
      %v1968 = vpack.c.b16 %v1895, %v1894
      %v1969 = vpack.c.b16 %v1897, %v1896
      %v1970 = vpack.c.b16 %v1899, %v1898
      %v1971 = vpack.c.b16 %v1901, %v1900
      %v1972 = vpack.c.b16 %v1903, %v1902
      %v1973 = vpack.c.b16 %v1905, %v1904
      %v1974 = vpack.c.b16 %v1907, %v1906
      %v1975 = vpack.c.b16 %v1909, %v1908
      %v1976 = vpack.c.b16 %v1911, %v1910
      %v1977 = vpack.c.b16 %v1913, %v1912
      %2042 = vmatpush.bf16.msra.mxu0 %v1921
      %2043 = vmatpush.bf16.msra.mxu0 %v1920
      %2044 = vmatpush.bf16.msra.mxu0 %v1919
      %2045 = vmatpush.bf16.msra.mxu0 %v1918
      %2046 = vmatpush.bf16.msra.mxu0 %v1917
      %2047 = vmatpush.bf16.msra.mxu0 %v1916
      %2048 = vmatpush.bf16.msra.mxu0 %v1915
      %2049 = vmatpush.bf16.msra.mxu0 %v1914
      %2050 = vmatmul.bf16.gmra.mxu0 %v1626
      %v2051 = vpop.f32.mrf.mxu0
      %v2052 = vadd.f32 0.0, %v2051
      %v2053 = vpop.f32.mrf.mxu0
      %v2054 = vadd.f32 0.0, %v2053
      %2055 = vmatmul.bf16.gmra.mxu0 %v1634
      %v2056 = vpop.f32.mrf.mxu0
      %v2057 = vadd.f32 0.0, %v2056
      %v2058 = vpop.f32.mrf.mxu0
      %v2059 = vadd.f32 0.0, %v2058
      %2060 = vdwg.mxu0
      %2061 = vmatpush.bf16.msra.mxu0 %v1929
      %2062 = vmatpush.bf16.msra.mxu0 %v1928
      %2063 = vmatpush.bf16.msra.mxu0 %v1927
      %2064 = vmatpush.bf16.msra.mxu0 %v1926
      %2065 = vmatpush.bf16.msra.mxu0 %v1925
      %2066 = vmatpush.bf16.msra.mxu0 %v1924
      %2067 = vmatpush.bf16.msra.mxu0 %v1923
      %2068 = vmatpush.bf16.msra.mxu0 %v1922
      %2069 = vmatmul.bf16.gmra.mxu0 %v1627
      %v2070 = vpop.f32.mrf.mxu0
      %v2071 = vadd.f32 %v2052, %v2070
      %v2072 = vpop.f32.mrf.mxu0
      %v2073 = vadd.f32 %v2054, %v2072
      %2074 = vmatmul.bf16.gmra.mxu0 %v1635
      %v2075 = vpop.f32.mrf.mxu0
      %v2076 = vadd.f32 %v2057, %v2075
      %v2077 = vpop.f32.mrf.mxu0
      %v2078 = vadd.f32 %v2059, %v2077
      %2079 = vdwg.mxu0
      %2080 = vmatpush.bf16.msra.mxu0 %v1937
      %2081 = vmatpush.bf16.msra.mxu0 %v1936
      %2082 = vmatpush.bf16.msra.mxu0 %v1935
      %2083 = vmatpush.bf16.msra.mxu0 %v1934
      %2084 = vmatpush.bf16.msra.mxu0 %v1933
      %2085 = vmatpush.bf16.msra.mxu0 %v1932
      %2086 = vmatpush.bf16.msra.mxu0 %v1931
      %2087 = vmatpush.bf16.msra.mxu0 %v1930
      %2088 = vmatmul.bf16.gmra.mxu0 %v1628
      %v2089 = vpop.f32.mrf.mxu0
      %v2090 = vadd.f32 %v2071, %v2089
      %v2091 = vpop.f32.mrf.mxu0
      %v2092 = vadd.f32 %v2073, %v2091
      %2093 = vmatmul.bf16.gmra.mxu0 %v1636
      %v2094 = vpop.f32.mrf.mxu0
      %v2095 = vadd.f32 %v2076, %v2094
      %v2096 = vpop.f32.mrf.mxu0
      %v2097 = vadd.f32 %v2078, %v2096
      %2098 = vdwg.mxu0
      %2099 = vmatpush.bf16.msra.mxu0 %v1945
      %2100 = vmatpush.bf16.msra.mxu0 %v1944
      %2101 = vmatpush.bf16.msra.mxu0 %v1943
      %2102 = vmatpush.bf16.msra.mxu0 %v1942
      %2103 = vmatpush.bf16.msra.mxu0 %v1941
      %2104 = vmatpush.bf16.msra.mxu0 %v1940
      %2105 = vmatpush.bf16.msra.mxu0 %v1939
      %2106 = vmatpush.bf16.msra.mxu0 %v1938
      %2107 = vmatmul.bf16.gmra.mxu0 %v1629
      %v2108 = vpop.f32.mrf.mxu0
      %v2109 = vadd.f32 %v2090, %v2108
      %v2110 = vpop.f32.mrf.mxu0
      %v2111 = vadd.f32 %v2092, %v2110
      %2112 = vmatmul.bf16.gmra.mxu0 %v1637
      %v2113 = vpop.f32.mrf.mxu0
      %v2114 = vadd.f32 %v2095, %v2113
      %v2115 = vpop.f32.mrf.mxu0
      %v2116 = vadd.f32 %v2097, %v2115
      %2117 = vdwg.mxu0
      %2118 = vmatpush.bf16.msra.mxu0 %v1953
      %2119 = vmatpush.bf16.msra.mxu0 %v1952
      %2120 = vmatpush.bf16.msra.mxu0 %v1951
      %2121 = vmatpush.bf16.msra.mxu0 %v1950
      %2122 = vmatpush.bf16.msra.mxu0 %v1949
      %2123 = vmatpush.bf16.msra.mxu0 %v1948
      %2124 = vmatpush.bf16.msra.mxu0 %v1947
      %2125 = vmatpush.bf16.msra.mxu0 %v1946
      %2126 = vmatmul.bf16.gmra.mxu0 %v1630
      %v2127 = vpop.f32.mrf.mxu0
      %v2128 = vadd.f32 %v2109, %v2127
      %v2129 = vpop.f32.mrf.mxu0
      %v2130 = vadd.f32 %v2111, %v2129
      %2131 = vmatmul.bf16.gmra.mxu0 %v1638
      %v2132 = vpop.f32.mrf.mxu0
      %v2133 = vadd.f32 %v2114, %v2132
      %v2134 = vpop.f32.mrf.mxu0
      %v2135 = vadd.f32 %v2116, %v2134
      %2136 = vdwg.mxu0
      %2137 = vmatpush.bf16.msra.mxu0 %v1961
      %2138 = vmatpush.bf16.msra.mxu0 %v1960
      %2139 = vmatpush.bf16.msra.mxu0 %v1959
      %2140 = vmatpush.bf16.msra.mxu0 %v1958
      %2141 = vmatpush.bf16.msra.mxu0 %v1957
      %2142 = vmatpush.bf16.msra.mxu0 %v1956
      %2143 = vmatpush.bf16.msra.mxu0 %v1955
      %2144 = vmatpush.bf16.msra.mxu0 %v1954
      %2145 = vmatmul.bf16.gmra.mxu0 %v1631
      %v2146 = vpop.f32.mrf.mxu0
      %v2147 = vadd.f32 %v2128, %v2146
      %v2148 = vpop.f32.mrf.mxu0
      %v2149 = vadd.f32 %v2130, %v2148
      %2150 = vmatmul.bf16.gmra.mxu0 %v1639
      %v2151 = vpop.f32.mrf.mxu0
      %v2152 = vadd.f32 %v2133, %v2151
      %v2153 = vpop.f32.mrf.mxu0
      %v2154 = vadd.f32 %v2135, %v2153
      %2155 = vdwg.mxu0
      %2156 = vmatpush.bf16.msra.mxu0 %v1969
      %2157 = vmatpush.bf16.msra.mxu0 %v1968
      %2158 = vmatpush.bf16.msra.mxu0 %v1967
      %2159 = vmatpush.bf16.msra.mxu0 %v1966
      %2160 = vmatpush.bf16.msra.mxu0 %v1965
      %2161 = vmatpush.bf16.msra.mxu0 %v1964
      %2162 = vmatpush.bf16.msra.mxu0 %v1963
      %2163 = vmatpush.bf16.msra.mxu0 %v1962
      %2164 = vmatmul.bf16.gmra.mxu0 %v1632
      %v2165 = vpop.f32.mrf.mxu0
      %v2166 = vadd.f32 %v2147, %v2165
      %v2167 = vpop.f32.mrf.mxu0
      %v2168 = vadd.f32 %v2149, %v2167
      %2169 = vmatmul.bf16.gmra.mxu0 %v1640
      %v2170 = vpop.f32.mrf.mxu0
      %v2171 = vadd.f32 %v2152, %v2170
      %v2172 = vpop.f32.mrf.mxu0
      %v2173 = vadd.f32 %v2154, %v2172
      %2174 = vdwg.mxu0
      %2175 = vmatpush.bf16.msra.mxu0 %v1977
      %2176 = vmatpush.bf16.msra.mxu0 %v1976
      %2177 = vmatpush.bf16.msra.mxu0 %v1975
      %2178 = vmatpush.bf16.msra.mxu0 %v1974
      %2179 = vmatpush.bf16.msra.mxu0 %v1973
      %2180 = vmatpush.bf16.msra.mxu0 %v1972
      %2181 = vmatpush.bf16.msra.mxu0 %v1971
      %2182 = vmatpush.bf16.msra.mxu0 %v1970
      %2183 = vmatmul.bf16.gmra.mxu0 %v1633
      %v2184 = vpop.f32.mrf.mxu0
      %v2185 = vadd.f32 %v2166, %v2184
      %v2186 = vpop.f32.mrf.mxu0
      %v2187 = vadd.f32 %v2168, %v2186
      %2188 = vmatmul.bf16.gmra.mxu0 %v1641
      %v2189 = vpop.f32.mrf.mxu0
      %v2190 = vadd.f32 %v2171, %v2189
      %v2191 = vpop.f32.mrf.mxu0
      %v2192 = vadd.f32 %v2173, %v2191
      %2193 = vdwg.mxu0
      %v2194 = vld [vmem:[%s6] sm:$0x1]
      %v2196 = vperm.slane %v2194, 0
      %v2198 = vadd.f32 %v2185, %v2196
      %v2199 = vadd.f32 %v2187, %v2196
      %v2200 = vadd.f32 %v2190, %v2196
      %v2201 = vadd.f32 %v2192, %v2196
      %v2202 = vld [vmem:[%s7] sm:$0xff]
      %v2203 = vadd.f32 %v2198, %v2202
      %v2204 = vadd.f32 %v2199, %v2202
      %v2205 = vadd.f32 %v2200, %v2202
      %v2206 = vadd.f32 %v2201, %v2202
      %v2207 = vpack.c.bf16 %v2203, %v1430
      %v2208 = vpack.c.bf16 %v2204, %v1431
      %v2209 = vpack.c.bf16 %v2205, %v1432
      %v2210 = vpack.c.bf16 %v2206, %v1433
      %v2211 = vld [vmem:[%s8] sm:$0xf]
      %v2212 = vld [vmem:[%s8 + $0x4] sm:$0xf]
      %v2213 = vld [vmem:[%s8 + $0x8] sm:$0xf]
      %v2214 = vld [vmem:[%s8 + $0xc] sm:$0xf]
      %v2215 = vld [vmem:[%s9] sm:$0x1]
      %v2217 = vperm.slane %v2215, 0
      %v2223 = vunpack.c.l.b16 %v2211
      %v2224 = vunpack.c.l.b16 %v2212
      %v2225 = vunpack.c.l.b16 %v2213
      %v2226 = vunpack.c.l.b16 %v2214
      %v2227 = vpack.c.b16 %v2224, %v2223
      %v2228 = vpack.c.b16 %v2226, %v2225
      %vm2231 = vcmask 261120
      %v2233 = vsel %vm2231, %v2207, 0
      %v2236 = vsel %vm2231, %v2208, 0
      %v2239 = vsel %vm2231, %v2209, 0
      %v2242 = vsel %vm2231, %v2210, 0
      %2244 = vmatpush.bf16.msra.mxu0 0
      %2245 = vmatpush.bf16.msra.mxu0 0
      %2246 = vmatpush.bf16.msra.mxu0 0
      %2247 = vmatpush.bf16.msra.mxu0 0
      %2248 = vmatpush.bf16.msra.mxu0 0
      %2249 = vmatpush.bf16.msra.mxu0 0
      %2250 = vmatpush.bf16.msra.mxu0 %v2228
      %2251 = vmatpush.bf16.msra.mxu0 %v2227
      %2252 = vmatmul.bf16.gmra.mxu0 %v2233
      %v2253 = vpop.f32.mrf.mxu0
      %v2254 = vadd.f32 %v2217, %v2253
      %v2255 = vpop.f32.mrf.mxu0
      %v2256 = vadd.f32 %v2217, %v2255
      %2257 = vmatmul.bf16.gmra.mxu0 %v2236
      %v2258 = vpop.f32.mrf.mxu0
      %v2259 = vadd.f32 %v2217, %v2258
      %v2260 = vpop.f32.mrf.mxu0
      %v2261 = vadd.f32 %v2217, %v2260
      %2262 = vmatmul.bf16.gmra.mxu0 %v2239
      %v2263 = vpop.f32.mrf.mxu0
      %v2264 = vadd.f32 %v2217, %v2263
      %v2265 = vpop.f32.mrf.mxu0
      %v2266 = vadd.f32 %v2217, %v2265
      %2267 = vmatmul.bf16.gmra.mxu0 %v2242
      %v2268 = vpop.f32.mrf.mxu0
      %v2269 = vadd.f32 %v2217, %v2268
      %v2270 = vpop.f32.mrf.mxu0
      %v2271 = vadd.f32 %v2217, %v2270
      %2272 = vdwg.mxu0
      %v2273 = vld [vmem:[%s10] sm:$0xf]
      %v2274 = vld [vmem:[%s10 + $0x4] sm:$0xf]
      %v2275 = vld [vmem:[%s10 + $0x8] sm:$0xf]
      %v2276 = vld [vmem:[%s10 + $0xc] sm:$0xf]
      %v2277 = vld [vmem:[%s11] sm:$0x1]
      %v2279 = vperm.slane %v2277, 0
      %v2285 = vunpack.c.l.b16 %v2273
      %v2286 = vunpack.c.l.b16 %v2274
      %v2287 = vunpack.c.l.b16 %v2275
      %v2288 = vunpack.c.l.b16 %v2276
      %v2289 = vpack.c.b16 %v2286, %v2285
      %v2290 = vpack.c.b16 %v2288, %v2287
      %2293 = vmatpush.bf16.msra.mxu0 0
      %2294 = vmatpush.bf16.msra.mxu0 0
      %2295 = vmatpush.bf16.msra.mxu0 0
      %2296 = vmatpush.bf16.msra.mxu0 0
      %2297 = vmatpush.bf16.msra.mxu0 0
      %2298 = vmatpush.bf16.msra.mxu0 0
      %2299 = vmatpush.bf16.msra.mxu0 %v2290
      %2300 = vmatpush.bf16.msra.mxu0 %v2289
      %2301 = vmatmul.bf16.gmra.mxu0 %v2233
      %v2302 = vpop.f32.mrf.mxu0
      %v2303 = vadd.f32 %v2279, %v2302
      %v2304 = vpop.f32.mrf.mxu0
      %v2305 = vadd.f32 %v2279, %v2304
      %2306 = vmatmul.bf16.gmra.mxu0 %v2236
      %v2307 = vpop.f32.mrf.mxu0
      %v2308 = vadd.f32 %v2279, %v2307
      %v2309 = vpop.f32.mrf.mxu0
      %v2310 = vadd.f32 %v2279, %v2309
      %2311 = vmatmul.bf16.gmra.mxu0 %v2239
      %v2312 = vpop.f32.mrf.mxu0
      %v2313 = vadd.f32 %v2279, %v2312
      %v2314 = vpop.f32.mrf.mxu0
      %v2315 = vadd.f32 %v2279, %v2314
      %2316 = vmatmul.bf16.gmra.mxu0 %v2242
      %v2317 = vpop.f32.mrf.mxu0
      %v2318 = vadd.f32 %v2279, %v2317
      %v2319 = vpop.f32.mrf.mxu0
      %v2320 = vadd.f32 %v2279, %v2319
      %2321 = vdwg.mxu0
      %v2322 = vld [vmem:[%s12] sm:$0xf]
      %v2323 = vld [vmem:[%s12 + $0x4] sm:$0xf]
      %v2324 = vld [vmem:[%s12 + $0x8] sm:$0xf]
      %v2325 = vld [vmem:[%s12 + $0xc] sm:$0xf]
      %v2326 = vld [vmem:[%s13] sm:$0x1]
      %v2328 = vperm.slane %v2326, 0
      %v2334 = vunpack.c.l.b16 %v2322
      %v2335 = vunpack.c.l.b16 %v2323
      %v2336 = vunpack.c.l.b16 %v2324
      %v2337 = vunpack.c.l.b16 %v2325
      %v2338 = vpack.c.b16 %v2335, %v2334
      %v2339 = vpack.c.b16 %v2337, %v2336
      %2342 = vmatpush.bf16.msra.mxu0 0
      %2343 = vmatpush.bf16.msra.mxu0 0
      %2344 = vmatpush.bf16.msra.mxu0 0
      %2345 = vmatpush.bf16.msra.mxu0 0
      %2346 = vmatpush.bf16.msra.mxu0 0
      %2347 = vmatpush.bf16.msra.mxu0 0
      %2348 = vmatpush.bf16.msra.mxu0 %v2339
      %2349 = vmatpush.bf16.msra.mxu0 %v2338
      %2350 = vmatmul.bf16.gmra.mxu0 %v2233
      %v2351 = vpop.f32.mrf.mxu0
      %v2352 = vadd.f32 %v2328, %v2351
      %v2353 = vpop.f32.mrf.mxu0
      %v2354 = vadd.f32 %v2328, %v2353
      %2355 = vmatmul.bf16.gmra.mxu0 %v2236
      %v2356 = vpop.f32.mrf.mxu0
      %v2357 = vadd.f32 %v2328, %v2356
      %v2358 = vpop.f32.mrf.mxu0
      %v2359 = vadd.f32 %v2328, %v2358
      %2360 = vmatmul.bf16.gmra.mxu0 %v2239
      %v2361 = vpop.f32.mrf.mxu0
      %v2362 = vadd.f32 %v2328, %v2361
      %v2363 = vpop.f32.mrf.mxu0
      %v2364 = vadd.f32 %v2328, %v2363
      %2365 = vmatmul.bf16.gmra.mxu0 %v2242
      %v2366 = vpop.f32.mrf.mxu0
      %v2367 = vadd.f32 %v2328, %v2366
      %v2368 = vpop.f32.mrf.mxu0
      %v2369 = vadd.f32 %v2328, %v2368
      %2370 = vdwg.mxu0
      %v2371 = vpack.c.bf16 %v2254, %v2254
      %v2372 = vpack.c.bf16 %v2256, %v2256
      %v2373 = vpack.c.bf16 %v2259, %v2259
      %v2374 = vpack.c.bf16 %v2261, %v2261
      %v2375 = vpack.c.bf16 %v2264, %v2264
      %v2376 = vpack.c.bf16 %v2266, %v2266
      %v2377 = vpack.c.bf16 %v2269, %v2269
      %v2378 = vpack.c.bf16 %v2271, %v2271
      %v2379 = vpack.c.bf16 %v2303, %v2303
      %v2380 = vpack.c.bf16 %v2305, %v2305
      %v2381 = vpack.c.bf16 %v2308, %v2308
      %v2382 = vpack.c.bf16 %v2310, %v2310
      %v2383 = vpack.c.bf16 %v2313, %v2313
      %v2384 = vpack.c.bf16 %v2315, %v2315
      %v2385 = vpack.c.bf16 %v2318, %v2318
      %v2386 = vpack.c.bf16 %v2320, %v2320
      %v2387 = vpack.c.bf16 %v2352, %v2352
      %v2388 = vpack.c.bf16 %v2354, %v2354
      %v2389 = vpack.c.bf16 %v2357, %v2357
      %v2390 = vpack.c.bf16 %v2359, %v2359
      %v2391 = vpack.c.bf16 %v2362, %v2362
      %v2392 = vpack.c.bf16 %v2364, %v2364
      %v2393 = vpack.c.bf16 %v2367, %v2367
      %v2394 = vpack.c.bf16 %v2369, %v2369
      %v2397 = vunpack.c.l.b16 %v2371
      %v2398 = vunpack.c.l.b16 %v2372
      %v2399 = vpack.c.b16 %v2398, %v2397
      %v2402 = vunpack.c.l.b16 %v2379
      %v2403 = vunpack.c.l.b16 %v2380
      %v2404 = vpack.c.b16 %v2403, %v2402
      %vm2405 = vcmask 64512
      %v2407 = vsel %vm2405, %v2399, 0
      %v2410 = vsel %vm2405, %v2404, 0
      %2412 = vmatpush.bf16.xpose.msra.mxu0 0
      %2413 = vmatpush.bf16.xpose.msra.mxu0 0
      %2414 = vmatpush.bf16.xpose.msra.mxu0 0
      %2415 = vmatpush.bf16.xpose.msra.mxu0 0
      %2416 = vmatpush.bf16.xpose.msra.mxu0 0
      %2417 = vmatpush.bf16.xpose.msra.mxu0 0
      %2418 = vmatpush.bf16.xpose.msra.mxu0 0
      %2419 = vmatpush.bf16.xpose.msra.mxu0 %v2410
      %2420 = vmatmul.bf16.gmra.mxu0 %v2407
      %v2421 = vpop.f32.mrf.mxu0
      %v2422 = vadd.f32 0.0, %v2421
      %v2423 = vpop.f32.mrf.mxu0
      %v2424 = vadd.f32 0.0, %v2423
      %2425 = vdwg.mxu0
      %v2428 = vunpack.c.l.b16 %v2373
      %v2429 = vunpack.c.l.b16 %v2374
      %v2430 = vpack.c.b16 %v2429, %v2428
      %v2433 = vunpack.c.l.b16 %v2381
      %v2434 = vunpack.c.l.b16 %v2382
      %v2435 = vpack.c.b16 %v2434, %v2433
      %v2437 = vsel %vm2405, %v2430, 0
      %v2440 = vsel %vm2405, %v2435, 0
      %2442 = vmatpush.bf16.xpose.msra.mxu0 0
      %2443 = vmatpush.bf16.xpose.msra.mxu0 0
      %2444 = vmatpush.bf16.xpose.msra.mxu0 0
      %2445 = vmatpush.bf16.xpose.msra.mxu0 0
      %2446 = vmatpush.bf16.xpose.msra.mxu0 0
      %2447 = vmatpush.bf16.xpose.msra.mxu0 0
      %2448 = vmatpush.bf16.xpose.msra.mxu0 0
      %2449 = vmatpush.bf16.xpose.msra.mxu0 %v2440
      %2450 = vmatmul.bf16.gmra.mxu0 %v2437
      %v2451 = vpop.f32.mrf.mxu0
      %v2452 = vadd.f32 0.0, %v2451
      %v2453 = vpop.f32.mrf.mxu0
      %v2454 = vadd.f32 0.0, %v2453
      %2455 = vdwg.mxu0
      %v2458 = vunpack.c.l.b16 %v2375
      %v2459 = vunpack.c.l.b16 %v2376
      %v2460 = vpack.c.b16 %v2459, %v2458
      %v2463 = vunpack.c.l.b16 %v2383
      %v2464 = vunpack.c.l.b16 %v2384
      %v2465 = vpack.c.b16 %v2464, %v2463
      %v2467 = vsel %vm2405, %v2460, 0
      %v2470 = vsel %vm2405, %v2465, 0
      %2472 = vmatpush.bf16.xpose.msra.mxu0 0
      %2473 = vmatpush.bf16.xpose.msra.mxu0 0
      %2474 = vmatpush.bf16.xpose.msra.mxu0 0
      %2475 = vmatpush.bf16.xpose.msra.mxu0 0
      %2476 = vmatpush.bf16.xpose.msra.mxu0 0
      %2477 = vmatpush.bf16.xpose.msra.mxu0 0
      %2478 = vmatpush.bf16.xpose.msra.mxu0 0
      %2479 = vmatpush.bf16.xpose.msra.mxu0 %v2470
      %2480 = vmatmul.bf16.gmra.mxu0 %v2467
      %v2481 = vpop.f32.mrf.mxu0
      %v2482 = vadd.f32 0.0, %v2481
      %v2483 = vpop.f32.mrf.mxu0
      %v2484 = vadd.f32 0.0, %v2483
      %2485 = vdwg.mxu0
      %v2488 = vunpack.c.l.b16 %v2377
      %v2489 = vunpack.c.l.b16 %v2378
      %v2490 = vpack.c.b16 %v2489, %v2488
      %v2493 = vunpack.c.l.b16 %v2385
      %v2494 = vunpack.c.l.b16 %v2386
      %v2495 = vpack.c.b16 %v2494, %v2493
      %v2497 = vsel %vm2405, %v2490, 0
      %v2500 = vsel %vm2405, %v2495, 0
      %2502 = vmatpush.bf16.xpose.msra.mxu0 0
      %2503 = vmatpush.bf16.xpose.msra.mxu0 0
      %2504 = vmatpush.bf16.xpose.msra.mxu0 0
      %2505 = vmatpush.bf16.xpose.msra.mxu0 0
      %2506 = vmatpush.bf16.xpose.msra.mxu0 0
      %2507 = vmatpush.bf16.xpose.msra.mxu0 0
      %2508 = vmatpush.bf16.xpose.msra.mxu0 0
      %2509 = vmatpush.bf16.xpose.msra.mxu0 %v2500
      %2510 = vmatmul.bf16.gmra.mxu0 %v2497
      %v2511 = vpop.f32.mrf.mxu0
      %v2512 = vadd.f32 0.0, %v2511
      %v2513 = vpop.f32.mrf.mxu0
      %v2514 = vadd.f32 0.0, %v2513
      %2515 = vdwg.mxu0
      %vm2516 = vcmask 130048
      %v2517 = vsel %vm2516, %v2422, -inf
      %2518 = vmax.xlane.f32.xlu0 %v2517
      %v2519 = vpop.xlane.xlu0 %2518
      %v2520 = vsel %vm2516, %v2424, -inf
      %2521 = vmax.xlane.f32.xlu0 %v2520
      %v2522 = vpop.xlane.xlu0 %2521
      %v2523 = vsel %vm2516, %v2452, -inf
      %2524 = vmax.xlane.f32.xlu0 %v2523
      %v2525 = vpop.xlane.xlu0 %2524
      %v2526 = vsel %vm2516, %v2454, -inf
      %2527 = vmax.xlane.f32.xlu0 %v2526
      %v2528 = vpop.xlane.xlu0 %2527
      %v2529 = vsel %vm2516, %v2482, -inf
      %2530 = vmax.xlane.f32.xlu0 %v2529
      %v2531 = vpop.xlane.xlu0 %2530
      %v2532 = vsel %vm2516, %v2484, -inf
      %2533 = vmax.xlane.f32.xlu0 %v2532
      %v2534 = vpop.xlane.xlu0 %2533
      %v2535 = vsel %vm2516, %v2512, -inf
      %2536 = vmax.xlane.f32.xlu0 %v2535
      %v2537 = vpop.xlane.xlu0 %2536
      %v2538 = vsel %vm2516, %v2514, -inf
      %2539 = vmax.xlane.f32.xlu0 %v2538
      %v2540 = vpop.xlane.xlu0 %2539
      %v2541 = vsub.f32 %v2422, %v2519
      %v2542 = vsub.f32 %v2424, %v2522
      %v2543 = vsub.f32 %v2452, %v2525
      %v2544 = vsub.f32 %v2454, %v2528
      %v2545 = vsub.f32 %v2482, %v2531
      %v2546 = vsub.f32 %v2484, %v2534
      %v2547 = vsub.f32 %v2512, %v2537
      %v2548 = vsub.f32 %v2514, %v2540
      %v2549 = vmul.f32 %v2541, 1.442695
      %v2550 = vpow.pop %v2549
      %v2551 = vmul.f32 %v2542, 1.442695
      %v2552 = vpow.pop %v2551
      %v2553 = vmul.f32 %v2543, 1.442695
      %v2554 = vpow.pop %v2553
      %v2555 = vmul.f32 %v2544, 1.442695
      %v2556 = vpow.pop %v2555
      %v2557 = vmul.f32 %v2545, 1.442695
      %v2558 = vpow.pop %v2557
      %v2559 = vmul.f32 %v2546, 1.442695
      %v2560 = vpow.pop %v2559
      %v2561 = vmul.f32 %v2547, 1.442695
      %v2562 = vpow.pop %v2561
      %v2563 = vmul.f32 %v2548, 1.442695
      %v2564 = vpow.pop %v2563
      %v2565 = vsel %vm2516, %v2550, 0.0
      %2566 = vadd.xlane.f32.xlu0 %v2565
      %v2567 = vpop.xlane.xlu0 %2566
      %v2568 = vsel %vm2516, %v2552, 0.0
      %2569 = vadd.xlane.f32.xlu0 %v2568
      %v2570 = vpop.xlane.xlu0 %2569
      %v2571 = vsel %vm2516, %v2554, 0.0
      %2572 = vadd.xlane.f32.xlu0 %v2571
      %v2573 = vpop.xlane.xlu0 %2572
      %v2574 = vsel %vm2516, %v2556, 0.0
      %2575 = vadd.xlane.f32.xlu0 %v2574
      %v2576 = vpop.xlane.xlu0 %2575
      %v2577 = vsel %vm2516, %v2558, 0.0
      %2578 = vadd.xlane.f32.xlu0 %v2577
      %v2579 = vpop.xlane.xlu0 %2578
      %v2580 = vsel %vm2516, %v2560, 0.0
      %2581 = vadd.xlane.f32.xlu0 %v2580
      %v2582 = vpop.xlane.xlu0 %2581
      %v2583 = vsel %vm2516, %v2562, 0.0
      %2584 = vadd.xlane.f32.xlu0 %v2583
      %v2585 = vpop.xlane.xlu0 %2584
      %v2586 = vsel %vm2516, %v2564, 0.0
      %2587 = vadd.xlane.f32.xlu0 %v2586
      %v2588 = vpop.xlane.xlu0 %2587
      %v2589 = vrcp.pop %v2567
      %v2590 = vrcp.pop %v2570
      %v2591 = vrcp.pop %v2573
      %v2592 = vrcp.pop %v2576
      %v2593 = vrcp.pop %v2579
      %v2594 = vrcp.pop %v2582
      %v2595 = vrcp.pop %v2585
      %v2596 = vrcp.pop %v2588
      %v2597 = vmul.f32 %v2550, %v2589
      %v2598 = vmul.f32 %v2552, %v2590
      %v2599 = vmul.f32 %v2554, %v2591
      %v2600 = vmul.f32 %v2556, %v2592
      %v2601 = vmul.f32 %v2558, %v2593
      %v2602 = vmul.f32 %v2560, %v2594
      %v2603 = vmul.f32 %v2562, %v2595
      %v2604 = vmul.f32 %v2564, %v2596
      %v2605 = vpack.c.bf16 %v2597, %v2597
      %v2606 = vpack.c.bf16 %v2598, %v2598
      %v2607 = vpack.c.bf16 %v2599, %v2599
      %v2608 = vpack.c.bf16 %v2600, %v2600
      %v2609 = vpack.c.bf16 %v2601, %v2601
      %v2610 = vpack.c.bf16 %v2602, %v2602
      %v2611 = vpack.c.bf16 %v2603, %v2603
      %v2612 = vpack.c.bf16 %v2604, %v2604
      %v2615 = vunpack.c.l.b16 %v2605
      %v2616 = vunpack.c.l.b16 %v2606
      %v2617 = vpack.c.b16 %v2616, %v2615
      %v2620 = vunpack.c.l.b16 %v2387
      %v2621 = vunpack.c.l.b16 %v2388
      %v2622 = vpack.c.b16 %v2621, %v2620
      %v2625 = vsel %vm2516, %v2617, 0
      %2627 = vmatpush.bf16.msra.mxu0 0
      %2628 = vmatpush.bf16.msra.mxu0 0
      %2629 = vmatpush.bf16.msra.mxu0 0
      %2630 = vmatpush.bf16.msra.mxu0 0
      %2631 = vmatpush.bf16.msra.mxu0 0
      %2632 = vmatpush.bf16.msra.mxu0 0
      %2633 = vmatpush.bf16.msra.mxu0 0
      %2634 = vmatpush.bf16.msra.mxu0 %v2622
      %2635 = vmatmul.bf16.gmra.mxu0 %v2625
      %v2636 = vpop.f32.mrf.mxu0
      %v2637 = vadd.f32 0.0, %v2636
      %v2638 = vpop.f32.mrf.mxu0
      %v2639 = vadd.f32 0.0, %v2638
      %2640 = vdwg.mxu0
      %v2643 = vunpack.c.l.b16 %v2607
      %v2644 = vunpack.c.l.b16 %v2608
      %v2645 = vpack.c.b16 %v2644, %v2643
      %v2648 = vunpack.c.l.b16 %v2389
      %v2649 = vunpack.c.l.b16 %v2390
      %v2650 = vpack.c.b16 %v2649, %v2648
      %v2653 = vsel %vm2516, %v2645, 0
      %2655 = vmatpush.bf16.msra.mxu0 0
      %2656 = vmatpush.bf16.msra.mxu0 0
      %2657 = vmatpush.bf16.msra.mxu0 0
      %2658 = vmatpush.bf16.msra.mxu0 0
      %2659 = vmatpush.bf16.msra.mxu0 0
      %2660 = vmatpush.bf16.msra.mxu0 0
      %2661 = vmatpush.bf16.msra.mxu0 0
      %2662 = vmatpush.bf16.msra.mxu0 %v2650
      %2663 = vmatmul.bf16.gmra.mxu0 %v2653
      %v2664 = vpop.f32.mrf.mxu0
      %v2665 = vadd.f32 0.0, %v2664
      %v2666 = vpop.f32.mrf.mxu0
      %v2667 = vadd.f32 0.0, %v2666
      %2668 = vdwg.mxu0
      %v2671 = vunpack.c.l.b16 %v2609
      %v2672 = vunpack.c.l.b16 %v2610
      %v2673 = vpack.c.b16 %v2672, %v2671
      %v2676 = vunpack.c.l.b16 %v2391
      %v2677 = vunpack.c.l.b16 %v2392
      %v2678 = vpack.c.b16 %v2677, %v2676
      %v2681 = vsel %vm2516, %v2673, 0
      %2683 = vmatpush.bf16.msra.mxu0 0
      %2684 = vmatpush.bf16.msra.mxu0 0
      %2685 = vmatpush.bf16.msra.mxu0 0
      %2686 = vmatpush.bf16.msra.mxu0 0
      %2687 = vmatpush.bf16.msra.mxu0 0
      %2688 = vmatpush.bf16.msra.mxu0 0
      %2689 = vmatpush.bf16.msra.mxu0 0
      %2690 = vmatpush.bf16.msra.mxu0 %v2678
      %2691 = vmatmul.bf16.gmra.mxu0 %v2681
      %v2692 = vpop.f32.mrf.mxu0
      %v2693 = vadd.f32 0.0, %v2692
      %v2694 = vpop.f32.mrf.mxu0
      %v2695 = vadd.f32 0.0, %v2694
      %2696 = vdwg.mxu0
      %v2699 = vunpack.c.l.b16 %v2611
      %v2700 = vunpack.c.l.b16 %v2612
      %v2701 = vpack.c.b16 %v2700, %v2699
      %v2704 = vunpack.c.l.b16 %v2393
      %v2705 = vunpack.c.l.b16 %v2394
      %v2706 = vpack.c.b16 %v2705, %v2704
      %v2709 = vsel %vm2516, %v2701, 0
      %2711 = vmatpush.bf16.msra.mxu0 0
      %2712 = vmatpush.bf16.msra.mxu0 0
      %2713 = vmatpush.bf16.msra.mxu0 0
      %2714 = vmatpush.bf16.msra.mxu0 0
      %2715 = vmatpush.bf16.msra.mxu0 0
      %2716 = vmatpush.bf16.msra.mxu0 0
      %2717 = vmatpush.bf16.msra.mxu0 0
      %2718 = vmatpush.bf16.msra.mxu0 %v2706
      %2719 = vmatmul.bf16.gmra.mxu0 %v2709
      %v2720 = vpop.f32.mrf.mxu0
      %v2721 = vadd.f32 0.0, %v2720
      %v2722 = vpop.f32.mrf.mxu0
      %v2723 = vadd.f32 0.0, %v2722
      %2724 = vdwg.mxu0
      %v2725 = vpack.c.bf16 %v2639, %v2637
      %v2726 = vpack.c.bf16 %v2667, %v2665
      %v2727 = vpack.c.bf16 %v2695, %v2693
      %v2728 = vpack.c.bf16 %v2723, %v2721
      %v2729 = vld [vmem:[%s14] sm:$0xf]
      %s2730 = scalar_lea.vmem %s8, 16
      %v2731 = vld [vmem:[%s2730] sm:$0xf]
      %v2732 = vld [vmem:[%s2730 + $0x4] sm:$0xf]
      %v2733 = vld [vmem:[%s2730 + $0x8] sm:$0xf]
      %v2734 = vld [vmem:[%s2730 + $0xc] sm:$0xf]
      %s2735 = scalar_lea.vmem %s9, 1
      %v2736 = vld [vmem:[%s2735] sm:$0x1]
      %v2738 = vperm.slane %v2736, 0
      %v2744 = vunpack.c.l.b16 %v2731
      %v2745 = vunpack.c.l.b16 %v2732
      %v2746 = vunpack.c.l.b16 %v2733
      %v2747 = vunpack.c.l.b16 %v2734
      %v2748 = vpack.c.b16 %v2745, %v2744
      %v2749 = vpack.c.b16 %v2747, %v2746
      %2752 = vmatpush.bf16.msra.mxu0 0
      %2753 = vmatpush.bf16.msra.mxu0 0
      %2754 = vmatpush.bf16.msra.mxu0 0
      %2755 = vmatpush.bf16.msra.mxu0 0
      %2756 = vmatpush.bf16.msra.mxu0 0
      %2757 = vmatpush.bf16.msra.mxu0 0
      %2758 = vmatpush.bf16.msra.mxu0 %v2749
      %2759 = vmatpush.bf16.msra.mxu0 %v2748
      %2760 = vmatmul.bf16.gmra.mxu0 %v2233
      %v2761 = vpop.f32.mrf.mxu0
      %v2762 = vadd.f32 %v2738, %v2761
      %v2763 = vpop.f32.mrf.mxu0
      %v2764 = vadd.f32 %v2738, %v2763
      %2765 = vmatmul.bf16.gmra.mxu0 %v2236
      %v2766 = vpop.f32.mrf.mxu0
      %v2767 = vadd.f32 %v2738, %v2766
      %v2768 = vpop.f32.mrf.mxu0
      %v2769 = vadd.f32 %v2738, %v2768
      %2770 = vmatmul.bf16.gmra.mxu0 %v2239
      %v2771 = vpop.f32.mrf.mxu0
      %v2772 = vadd.f32 %v2738, %v2771
      %v2773 = vpop.f32.mrf.mxu0
      %v2774 = vadd.f32 %v2738, %v2773
      %2775 = vmatmul.bf16.gmra.mxu0 %v2242
      %v2776 = vpop.f32.mrf.mxu0
      %v2777 = vadd.f32 %v2738, %v2776
      %v2778 = vpop.f32.mrf.mxu0
      %v2779 = vadd.f32 %v2738, %v2778
      %2780 = vdwg.mxu0
      %s2781 = scalar_lea.vmem %s10, 16
      %v2782 = vld [vmem:[%s2781] sm:$0xf]
      %v2783 = vld [vmem:[%s2781 + $0x4] sm:$0xf]
      %v2784 = vld [vmem:[%s2781 + $0x8] sm:$0xf]
      %v2785 = vld [vmem:[%s2781 + $0xc] sm:$0xf]
      %s2786 = scalar_lea.vmem %s11, 1
      %v2787 = vld [vmem:[%s2786] sm:$0x1]
      %v2789 = vperm.slane %v2787, 0
      %v2795 = vunpack.c.l.b16 %v2782
      %v2796 = vunpack.c.l.b16 %v2783
      %v2797 = vunpack.c.l.b16 %v2784
      %v2798 = vunpack.c.l.b16 %v2785
      %v2799 = vpack.c.b16 %v2796, %v2795
      %v2800 = vpack.c.b16 %v2798, %v2797
      %2803 = vmatpush.bf16.msra.mxu0 0
      %2804 = vmatpush.bf16.msra.mxu0 0
      %2805 = vmatpush.bf16.msra.mxu0 0
      %2806 = vmatpush.bf16.msra.mxu0 0
      %2807 = vmatpush.bf16.msra.mxu0 0
      %2808 = vmatpush.bf16.msra.mxu0 0
      %2809 = vmatpush.bf16.msra.mxu0 %v2800
      %2810 = vmatpush.bf16.msra.mxu0 %v2799
      %2811 = vmatmul.bf16.gmra.mxu0 %v2233
      %v2812 = vpop.f32.mrf.mxu0
      %v2813 = vadd.f32 %v2789, %v2812
      %v2814 = vpop.f32.mrf.mxu0
      %v2815 = vadd.f32 %v2789, %v2814
      %2816 = vmatmul.bf16.gmra.mxu0 %v2236
      %v2817 = vpop.f32.mrf.mxu0
      %v2818 = vadd.f32 %v2789, %v2817
      %v2819 = vpop.f32.mrf.mxu0
      %v2820 = vadd.f32 %v2789, %v2819
      %2821 = vmatmul.bf16.gmra.mxu0 %v2239
      %v2822 = vpop.f32.mrf.mxu0
      %v2823 = vadd.f32 %v2789, %v2822
      %v2824 = vpop.f32.mrf.mxu0
      %v2825 = vadd.f32 %v2789, %v2824
      %2826 = vmatmul.bf16.gmra.mxu0 %v2242
      %v2827 = vpop.f32.mrf.mxu0
      %v2828 = vadd.f32 %v2789, %v2827
      %v2829 = vpop.f32.mrf.mxu0
      %v2830 = vadd.f32 %v2789, %v2829
      %2831 = vdwg.mxu0
      %s2832 = scalar_lea.vmem %s12, 16
      %v2833 = vld [vmem:[%s2832] sm:$0xf]
      %v2834 = vld [vmem:[%s2832 + $0x4] sm:$0xf]
      %v2835 = vld [vmem:[%s2832 + $0x8] sm:$0xf]
      %v2836 = vld [vmem:[%s2832 + $0xc] sm:$0xf]
      %s2837 = scalar_lea.vmem %s13, 1
      %v2838 = vld [vmem:[%s2837] sm:$0x1]
      %v2840 = vperm.slane %v2838, 0
      %v2846 = vunpack.c.l.b16 %v2833
      %v2847 = vunpack.c.l.b16 %v2834
      %v2848 = vunpack.c.l.b16 %v2835
      %v2849 = vunpack.c.l.b16 %v2836
      %v2850 = vpack.c.b16 %v2847, %v2846
      %v2851 = vpack.c.b16 %v2849, %v2848
      %2854 = vmatpush.bf16.msra.mxu0 0
      %2855 = vmatpush.bf16.msra.mxu0 0
      %2856 = vmatpush.bf16.msra.mxu0 0
      %2857 = vmatpush.bf16.msra.mxu0 0
      %2858 = vmatpush.bf16.msra.mxu0 0
      %2859 = vmatpush.bf16.msra.mxu0 0
      %2860 = vmatpush.bf16.msra.mxu0 %v2851
      %2861 = vmatpush.bf16.msra.mxu0 %v2850
      %2862 = vmatmul.bf16.gmra.mxu0 %v2233
      %v2863 = vpop.f32.mrf.mxu0
      %v2864 = vadd.f32 %v2840, %v2863
      %v2865 = vpop.f32.mrf.mxu0
      %v2866 = vadd.f32 %v2840, %v2865
      %2867 = vmatmul.bf16.gmra.mxu0 %v2236
      %v2868 = vpop.f32.mrf.mxu0
      %v2869 = vadd.f32 %v2840, %v2868
      %v2870 = vpop.f32.mrf.mxu0
      %v2871 = vadd.f32 %v2840, %v2870
      %2872 = vmatmul.bf16.gmra.mxu0 %v2239
      %v2873 = vpop.f32.mrf.mxu0
      %v2874 = vadd.f32 %v2840, %v2873
      %v2875 = vpop.f32.mrf.mxu0
      %v2876 = vadd.f32 %v2840, %v2875
      %2877 = vmatmul.bf16.gmra.mxu0 %v2242
      %v2878 = vpop.f32.mrf.mxu0
      %v2879 = vadd.f32 %v2840, %v2878
      %v2880 = vpop.f32.mrf.mxu0
      %v2881 = vadd.f32 %v2840, %v2880
      %2882 = vdwg.mxu0
      %v2883 = vpack.c.bf16 %v2762, %v2762
      %v2884 = vpack.c.bf16 %v2764, %v2764
      %v2885 = vpack.c.bf16 %v2767, %v2767
      %v2886 = vpack.c.bf16 %v2769, %v2769
      %v2887 = vpack.c.bf16 %v2772, %v2772
      %v2888 = vpack.c.bf16 %v2774, %v2774
      %v2889 = vpack.c.bf16 %v2777, %v2777
      %v2890 = vpack.c.bf16 %v2779, %v2779
      %v2891 = vpack.c.bf16 %v2813, %v2813
      %v2892 = vpack.c.bf16 %v2815, %v2815
      %v2893 = vpack.c.bf16 %v2818, %v2818
      %v2894 = vpack.c.bf16 %v2820, %v2820
      %v2895 = vpack.c.bf16 %v2823, %v2823
      %v2896 = vpack.c.bf16 %v2825, %v2825
      %v2897 = vpack.c.bf16 %v2828, %v2828
      %v2898 = vpack.c.bf16 %v2830, %v2830
      %v2899 = vpack.c.bf16 %v2864, %v2864
      %v2900 = vpack.c.bf16 %v2866, %v2866
      %v2901 = vpack.c.bf16 %v2869, %v2869
      %v2902 = vpack.c.bf16 %v2871, %v2871
      %v2903 = vpack.c.bf16 %v2874, %v2874
      %v2904 = vpack.c.bf16 %v2876, %v2876
      %v2905 = vpack.c.bf16 %v2879, %v2879
      %v2906 = vpack.c.bf16 %v2881, %v2881
      %v2909 = vunpack.c.l.b16 %v2883
      %v2910 = vunpack.c.l.b16 %v2884
      %v2911 = vpack.c.b16 %v2910, %v2909
      %v2914 = vunpack.c.l.b16 %v2891
      %v2915 = vunpack.c.l.b16 %v2892
      %v2916 = vpack.c.b16 %v2915, %v2914
      %v2918 = vsel %vm2405, %v2911, 0
      %v2921 = vsel %vm2405, %v2916, 0
      %2923 = vmatpush.bf16.xpose.msra.mxu0 0
      %2924 = vmatpush.bf16.xpose.msra.mxu0 0
      %2925 = vmatpush.bf16.xpose.msra.mxu0 0
      %2926 = vmatpush.bf16.xpose.msra.mxu0 0
      %2927 = vmatpush.bf16.xpose.msra.mxu0 0
      %2928 = vmatpush.bf16.xpose.msra.mxu0 0
      %2929 = vmatpush.bf16.xpose.msra.mxu0 0
      %2930 = vmatpush.bf16.xpose.msra.mxu0 %v2921
      %2931 = vmatmul.bf16.gmra.mxu0 %v2918
      %v2932 = vpop.f32.mrf.mxu0
      %v2933 = vadd.f32 0.0, %v2932
      %v2934 = vpop.f32.mrf.mxu0
      %v2935 = vadd.f32 0.0, %v2934
      %2936 = vdwg.mxu0
      %v2939 = vunpack.c.l.b16 %v2885
      %v2940 = vunpack.c.l.b16 %v2886
      %v2941 = vpack.c.b16 %v2940, %v2939
      %v2944 = vunpack.c.l.b16 %v2893
      %v2945 = vunpack.c.l.b16 %v2894
      %v2946 = vpack.c.b16 %v2945, %v2944
      %v2948 = vsel %vm2405, %v2941, 0
      %v2951 = vsel %vm2405, %v2946, 0
      %2953 = vmatpush.bf16.xpose.msra.mxu0 0
      %2954 = vmatpush.bf16.xpose.msra.mxu0 0
      %2955 = vmatpush.bf16.xpose.msra.mxu0 0
      %2956 = vmatpush.bf16.xpose.msra.mxu0 0
      %2957 = vmatpush.bf16.xpose.msra.mxu0 0
      %2958 = vmatpush.bf16.xpose.msra.mxu0 0
      %2959 = vmatpush.bf16.xpose.msra.mxu0 0
      %2960 = vmatpush.bf16.xpose.msra.mxu0 %v2951
      %2961 = vmatmul.bf16.gmra.mxu0 %v2948
      %v2962 = vpop.f32.mrf.mxu0
      %v2963 = vadd.f32 0.0, %v2962
      %v2964 = vpop.f32.mrf.mxu0
      %v2965 = vadd.f32 0.0, %v2964
      %2966 = vdwg.mxu0
      %v2969 = vunpack.c.l.b16 %v2887
      %v2970 = vunpack.c.l.b16 %v2888
      %v2971 = vpack.c.b16 %v2970, %v2969
      %v2974 = vunpack.c.l.b16 %v2895
      %v2975 = vunpack.c.l.b16 %v2896
      %v2976 = vpack.c.b16 %v2975, %v2974
      %v2978 = vsel %vm2405, %v2971, 0
      %v2981 = vsel %vm2405, %v2976, 0
      %2983 = vmatpush.bf16.xpose.msra.mxu0 0
      %2984 = vmatpush.bf16.xpose.msra.mxu0 0
      %2985 = vmatpush.bf16.xpose.msra.mxu0 0
      %2986 = vmatpush.bf16.xpose.msra.mxu0 0
      %2987 = vmatpush.bf16.xpose.msra.mxu0 0
      %2988 = vmatpush.bf16.xpose.msra.mxu0 0
      %2989 = vmatpush.bf16.xpose.msra.mxu0 0
      %2990 = vmatpush.bf16.xpose.msra.mxu0 %v2981
      %2991 = vmatmul.bf16.gmra.mxu0 %v2978
      %v2992 = vpop.f32.mrf.mxu0
      %v2993 = vadd.f32 0.0, %v2992
      %v2994 = vpop.f32.mrf.mxu0
      %v2995 = vadd.f32 0.0, %v2994
      %2996 = vdwg.mxu0
      %v2999 = vunpack.c.l.b16 %v2889
      %v3000 = vunpack.c.l.b16 %v2890
      %v3001 = vpack.c.b16 %v3000, %v2999
      %v3004 = vunpack.c.l.b16 %v2897
      %v3005 = vunpack.c.l.b16 %v2898
      %v3006 = vpack.c.b16 %v3005, %v3004
      %v3008 = vsel %vm2405, %v3001, 0
      %v3011 = vsel %vm2405, %v3006, 0
      %3013 = vmatpush.bf16.xpose.msra.mxu0 0
      %3014 = vmatpush.bf16.xpose.msra.mxu0 0
      %3015 = vmatpush.bf16.xpose.msra.mxu0 0
      %3016 = vmatpush.bf16.xpose.msra.mxu0 0
      %3017 = vmatpush.bf16.xpose.msra.mxu0 0
      %3018 = vmatpush.bf16.xpose.msra.mxu0 0
      %3019 = vmatpush.bf16.xpose.msra.mxu0 0
      %3020 = vmatpush.bf16.xpose.msra.mxu0 %v3011
      %3021 = vmatmul.bf16.gmra.mxu0 %v3008
      %v3022 = vpop.f32.mrf.mxu0
      %v3023 = vadd.f32 0.0, %v3022
      %v3024 = vpop.f32.mrf.mxu0
      %v3025 = vadd.f32 0.0, %v3024
      %3026 = vdwg.mxu0
      %v3027 = vsel %vm2516, %v2933, -inf
      %3028 = vmax.xlane.f32.xlu0 %v3027
      %v3029 = vpop.xlane.xlu0 %3028
      %v3030 = vsel %vm2516, %v2935, -inf
      %3031 = vmax.xlane.f32.xlu0 %v3030
      %v3032 = vpop.xlane.xlu0 %3031
      %v3033 = vsel %vm2516, %v2963, -inf
      %3034 = vmax.xlane.f32.xlu0 %v3033
      %v3035 = vpop.xlane.xlu0 %3034
      %v3036 = vsel %vm2516, %v2965, -inf
      %3037 = vmax.xlane.f32.xlu0 %v3036
      %v3038 = vpop.xlane.xlu0 %3037
      %v3039 = vsel %vm2516, %v2993, -inf
      %3040 = vmax.xlane.f32.xlu0 %v3039
      %v3041 = vpop.xlane.xlu0 %3040
      %v3042 = vsel %vm2516, %v2995, -inf
      %3043 = vmax.xlane.f32.xlu0 %v3042
      %v3044 = vpop.xlane.xlu0 %3043
      %v3045 = vsel %vm2516, %v3023, -inf
      %3046 = vmax.xlane.f32.xlu0 %v3045
      %v3047 = vpop.xlane.xlu0 %3046
      %v3048 = vsel %vm2516, %v3025, -inf
      %3049 = vmax.xlane.f32.xlu0 %v3048
      %v3050 = vpop.xlane.xlu0 %3049
      %v3051 = vsub.f32 %v2933, %v3029
      %v3052 = vsub.f32 %v2935, %v3032
      %v3053 = vsub.f32 %v2963, %v3035
      %v3054 = vsub.f32 %v2965, %v3038
      %v3055 = vsub.f32 %v2993, %v3041
      %v3056 = vsub.f32 %v2995, %v3044
      %v3057 = vsub.f32 %v3023, %v3047
      %v3058 = vsub.f32 %v3025, %v3050
      %v3059 = vmul.f32 %v3051, 1.442695
      %v3060 = vpow.pop %v3059
      %v3061 = vmul.f32 %v3052, 1.442695
      %v3062 = vpow.pop %v3061
      %v3063 = vmul.f32 %v3053, 1.442695
      %v3064 = vpow.pop %v3063
      %v3065 = vmul.f32 %v3054, 1.442695
      %v3066 = vpow.pop %v3065
      %v3067 = vmul.f32 %v3055, 1.442695
      %v3068 = vpow.pop %v3067
      %v3069 = vmul.f32 %v3056, 1.442695
      %v3070 = vpow.pop %v3069
      %v3071 = vmul.f32 %v3057, 1.442695
      %v3072 = vpow.pop %v3071
      %v3073 = vmul.f32 %v3058, 1.442695
      %v3074 = vpow.pop %v3073
      %v3075 = vsel %vm2516, %v3060, 0.0
      %3076 = vadd.xlane.f32.xlu0 %v3075
      %v3077 = vpop.xlane.xlu0 %3076
      %v3078 = vsel %vm2516, %v3062, 0.0
      %3079 = vadd.xlane.f32.xlu0 %v3078
      %v3080 = vpop.xlane.xlu0 %3079
      %v3081 = vsel %vm2516, %v3064, 0.0
      %3082 = vadd.xlane.f32.xlu0 %v3081
      %v3083 = vpop.xlane.xlu0 %3082
      %v3084 = vsel %vm2516, %v3066, 0.0
      %3085 = vadd.xlane.f32.xlu0 %v3084
      %v3086 = vpop.xlane.xlu0 %3085
      %v3087 = vsel %vm2516, %v3068, 0.0
      %3088 = vadd.xlane.f32.xlu0 %v3087
      %v3089 = vpop.xlane.xlu0 %3088
      %v3090 = vsel %vm2516, %v3070, 0.0
      %3091 = vadd.xlane.f32.xlu0 %v3090
      %v3092 = vpop.xlane.xlu0 %3091
      %v3093 = vsel %vm2516, %v3072, 0.0
      %3094 = vadd.xlane.f32.xlu0 %v3093
      %v3095 = vpop.xlane.xlu0 %3094
      %v3096 = vsel %vm2516, %v3074, 0.0
      %3097 = vadd.xlane.f32.xlu0 %v3096
      %v3098 = vpop.xlane.xlu0 %3097
      %v3099 = vrcp.pop %v3077
      %v3100 = vrcp.pop %v3080
      %v3101 = vrcp.pop %v3083
      %v3102 = vrcp.pop %v3086
      %v3103 = vrcp.pop %v3089
      %v3104 = vrcp.pop %v3092
      %v3105 = vrcp.pop %v3095
      %v3106 = vrcp.pop %v3098
      %v3107 = vmul.f32 %v3060, %v3099
      %v3108 = vmul.f32 %v3062, %v3100
      %v3109 = vmul.f32 %v3064, %v3101
      %v3110 = vmul.f32 %v3066, %v3102
      %v3111 = vmul.f32 %v3068, %v3103
      %v3112 = vmul.f32 %v3070, %v3104
      %v3113 = vmul.f32 %v3072, %v3105
      %v3114 = vmul.f32 %v3074, %v3106
      %v3115 = vpack.c.bf16 %v3107, %v3107
      %v3116 = vpack.c.bf16 %v3108, %v3108
      %v3117 = vpack.c.bf16 %v3109, %v3109
      %v3118 = vpack.c.bf16 %v3110, %v3110
      %v3119 = vpack.c.bf16 %v3111, %v3111
      %v3120 = vpack.c.bf16 %v3112, %v3112
      %v3121 = vpack.c.bf16 %v3113, %v3113
      %v3122 = vpack.c.bf16 %v3114, %v3114
      %v3125 = vunpack.c.l.b16 %v3115
      %v3126 = vunpack.c.l.b16 %v3116
      %v3127 = vpack.c.b16 %v3126, %v3125
      %v3130 = vunpack.c.l.b16 %v2899
      %v3131 = vunpack.c.l.b16 %v2900
      %v3132 = vpack.c.b16 %v3131, %v3130
      %v3135 = vsel %vm2516, %v3127, 0
      %3137 = vmatpush.bf16.msra.mxu0 0
      %3138 = vmatpush.bf16.msra.mxu0 0
      %3139 = vmatpush.bf16.msra.mxu0 0
      %3140 = vmatpush.bf16.msra.mxu0 0
      %3141 = vmatpush.bf16.msra.mxu0 0
      %3142 = vmatpush.bf16.msra.mxu0 0
      %3143 = vmatpush.bf16.msra.mxu0 0
      %3144 = vmatpush.bf16.msra.mxu0 %v3132
      %3145 = vmatmul.bf16.gmra.mxu0 %v3135
      %v3146 = vpop.f32.mrf.mxu0
      %v3147 = vadd.f32 0.0, %v3146
      %v3148 = vpop.f32.mrf.mxu0
      %v3149 = vadd.f32 0.0, %v3148
      %3150 = vdwg.mxu0
      %v3153 = vunpack.c.l.b16 %v3117
      %v3154 = vunpack.c.l.b16 %v3118
      %v3155 = vpack.c.b16 %v3154, %v3153
      %v3158 = vunpack.c.l.b16 %v2901
      %v3159 = vunpack.c.l.b16 %v2902
      %v3160 = vpack.c.b16 %v3159, %v3158
      %v3163 = vsel %vm2516, %v3155, 0
      %3165 = vmatpush.bf16.msra.mxu0 0
      %3166 = vmatpush.bf16.msra.mxu0 0
      %3167 = vmatpush.bf16.msra.mxu0 0
      %3168 = vmatpush.bf16.msra.mxu0 0
      %3169 = vmatpush.bf16.msra.mxu0 0
      %3170 = vmatpush.bf16.msra.mxu0 0
      %3171 = vmatpush.bf16.msra.mxu0 0
      %3172 = vmatpush.bf16.msra.mxu0 %v3160
      %3173 = vmatmul.bf16.gmra.mxu0 %v3163
      %v3174 = vpop.f32.mrf.mxu0
      %v3175 = vadd.f32 0.0, %v3174
      %v3176 = vpop.f32.mrf.mxu0
      %v3177 = vadd.f32 0.0, %v3176
      %3178 = vdwg.mxu0
      %v3181 = vunpack.c.l.b16 %v3119
      %v3182 = vunpack.c.l.b16 %v3120
      %v3183 = vpack.c.b16 %v3182, %v3181
      %v3186 = vunpack.c.l.b16 %v2903
      %v3187 = vunpack.c.l.b16 %v2904
      %v3188 = vpack.c.b16 %v3187, %v3186
      %v3191 = vsel %vm2516, %v3183, 0
      %3193 = vmatpush.bf16.msra.mxu0 0
      %3194 = vmatpush.bf16.msra.mxu0 0
      %3195 = vmatpush.bf16.msra.mxu0 0
      %3196 = vmatpush.bf16.msra.mxu0 0
      %3197 = vmatpush.bf16.msra.mxu0 0
      %3198 = vmatpush.bf16.msra.mxu0 0
      %3199 = vmatpush.bf16.msra.mxu0 0
      %3200 = vmatpush.bf16.msra.mxu0 %v3188
      %3201 = vmatmul.bf16.gmra.mxu0 %v3191
      %v3202 = vpop.f32.mrf.mxu0
      %v3203 = vadd.f32 0.0, %v3202
      %v3204 = vpop.f32.mrf.mxu0
      %v3205 = vadd.f32 0.0, %v3204
      %3206 = vdwg.mxu0
      %v3209 = vunpack.c.l.b16 %v3121
      %v3210 = vunpack.c.l.b16 %v3122
      %v3211 = vpack.c.b16 %v3210, %v3209
      %v3214 = vunpack.c.l.b16 %v2905
      %v3215 = vunpack.c.l.b16 %v2906
      %v3216 = vpack.c.b16 %v3215, %v3214
      %v3219 = vsel %vm2516, %v3211, 0
      %3221 = vmatpush.bf16.msra.mxu0 0
      %3222 = vmatpush.bf16.msra.mxu0 0
      %3223 = vmatpush.bf16.msra.mxu0 0
      %3224 = vmatpush.bf16.msra.mxu0 0
      %3225 = vmatpush.bf16.msra.mxu0 0
      %3226 = vmatpush.bf16.msra.mxu0 0
      %3227 = vmatpush.bf16.msra.mxu0 0
      %3228 = vmatpush.bf16.msra.mxu0 %v3216
      %3229 = vmatmul.bf16.gmra.mxu0 %v3219
      %v3230 = vpop.f32.mrf.mxu0
      %v3231 = vadd.f32 0.0, %v3230
      %v3232 = vpop.f32.mrf.mxu0
      %v3233 = vadd.f32 0.0, %v3232
      %3234 = vdwg.mxu0
      %v3235 = vpack.c.bf16 %v3149, %v3147
      %v3236 = vpack.c.bf16 %v3177, %v3175
      %v3237 = vpack.c.bf16 %v3205, %v3203
      %v3238 = vpack.c.bf16 %v3233, %v3231
      %s3239 = scalar_lea.vmem %s14, 4
      %v3240 = vld [vmem:[%s3239] sm:$0xf]
      %v3242 = vsel %vm2405, %v3235, 0
      %v3245 = vsel %vm2405, %v3236, 0
      %v3248 = vsel %vm2405, %v3237, 0
      %v3251 = vsel %vm2405, %v3238, 0
      %vm3253 = vcmask 1043456
      %v3255 = vsel %vm3253, %v3240, 0
      %3257 = vmatpush.bf16.msra.mxu0 0
      %3258 = vmatpush.bf16.msra.mxu0 0
      %3259 = vmatpush.bf16.msra.mxu0 0
      %3260 = vmatpush.bf16.msra.mxu0 0
      %3261 = vmatpush.bf16.msra.mxu0 0
      %3262 = vmatpush.bf16.msra.mxu0 0
      %3263 = vmatpush.bf16.msra.mxu0 0
      %3264 = vmatpush.bf16.msra.mxu0 %v3255
      %3265 = vmatmul.bf16.gmra.mxu0 %v3242
      %v3266 = vpop.f32.mrf.mxu0
      %v3267 = vadd.f32 0.0, %v3266
      %v3268 = vpop.f32.mrf.mxu0
      %v3269 = vadd.f32 0.0, %v3268
      %3270 = vmatmul.bf16.gmra.mxu0 %v3245
      %v3271 = vpop.f32.mrf.mxu0
      %v3272 = vadd.f32 0.0, %v3271
      %v3273 = vpop.f32.mrf.mxu0
      %v3274 = vadd.f32 0.0, %v3273
      %3275 = vmatmul.bf16.gmra.mxu0 %v3248
      %v3276 = vpop.f32.mrf.mxu0
      %v3277 = vadd.f32 0.0, %v3276
      %v3278 = vpop.f32.mrf.mxu0
      %v3279 = vadd.f32 0.0, %v3278
      %3280 = vmatmul.bf16.gmra.mxu0 %v3251
      %v3281 = vpop.f32.mrf.mxu0
      %v3282 = vadd.f32 0.0, %v3281
      %v3283 = vpop.f32.mrf.mxu0
      %v3284 = vadd.f32 0.0, %v3283
      %3285 = vdwg.mxu0
      %v3287 = vsel %vm2405, %v2725, 0
      %v3290 = vsel %vm2405, %v2726, 0
      %v3293 = vsel %vm2405, %v2727, 0
      %v3296 = vsel %vm2405, %v2728, 0
      %v3299 = vsel %vm3253, %v2729, 0
      %3301 = vmatpush.bf16.msra.mxu0 0
      %3302 = vmatpush.bf16.msra.mxu0 0
      %3303 = vmatpush.bf16.msra.mxu0 0
      %3304 = vmatpush.bf16.msra.mxu0 0
      %3305 = vmatpush.bf16.msra.mxu0 0
      %3306 = vmatpush.bf16.msra.mxu0 0
      %3307 = vmatpush.bf16.msra.mxu0 0
      %3308 = vmatpush.bf16.msra.mxu0 %v3299
      %3309 = vmatmul.bf16.gmra.mxu0 %v3287
      %v3310 = vpop.f32.mrf.mxu0
      %v3311 = vadd.f32 %v3267, %v3310
      %v3312 = vpop.f32.mrf.mxu0
      %v3313 = vadd.f32 %v3269, %v3312
      %3314 = vmatmul.bf16.gmra.mxu0 %v3290
      %v3315 = vpop.f32.mrf.mxu0
      %v3316 = vadd.f32 %v3272, %v3315
      %v3317 = vpop.f32.mrf.mxu0
      %v3318 = vadd.f32 %v3274, %v3317
      %3319 = vmatmul.bf16.gmra.mxu0 %v3293
      %v3320 = vpop.f32.mrf.mxu0
      %v3321 = vadd.f32 %v3277, %v3320
      %v3322 = vpop.f32.mrf.mxu0
      %v3323 = vadd.f32 %v3279, %v3322
      %3324 = vmatmul.bf16.gmra.mxu0 %v3296
      %v3325 = vpop.f32.mrf.mxu0
      %v3326 = vadd.f32 %v3282, %v3325
      %v3327 = vpop.f32.mrf.mxu0
      %v3328 = vadd.f32 %v3284, %v3327
      %3329 = vdwg.mxu0
      %s3330 = scalar_lea.vmem %s8, 32
      %v3331 = vld [vmem:[%s3330] sm:$0xf]
      %v3332 = vld [vmem:[%s3330 + $0x4] sm:$0xf]
      %v3333 = vld [vmem:[%s3330 + $0x8] sm:$0xf]
      %v3334 = vld [vmem:[%s3330 + $0xc] sm:$0xf]
      %s3335 = scalar_lea.vmem %s9, 2
      %v3336 = vld [vmem:[%s3335] sm:$0x1]
      %v3338 = vperm.slane %v3336, 0
      %v3344 = vunpack.c.l.b16 %v3331
      %v3345 = vunpack.c.l.b16 %v3332
      %v3346 = vunpack.c.l.b16 %v3333
      %v3347 = vunpack.c.l.b16 %v3334
      %v3348 = vpack.c.b16 %v3345, %v3344
      %v3349 = vpack.c.b16 %v3347, %v3346
      %3352 = vmatpush.bf16.msra.mxu0 0
      %3353 = vmatpush.bf16.msra.mxu0 0
      %3354 = vmatpush.bf16.msra.mxu0 0
      %3355 = vmatpush.bf16.msra.mxu0 0
      %3356 = vmatpush.bf16.msra.mxu0 0
      %3357 = vmatpush.bf16.msra.mxu0 0
      %3358 = vmatpush.bf16.msra.mxu0 %v3349
      %3359 = vmatpush.bf16.msra.mxu0 %v3348
      %3360 = vmatmul.bf16.gmra.mxu0 %v2233
      %v3361 = vpop.f32.mrf.mxu0
      %v3362 = vadd.f32 %v3338, %v3361
      %v3363 = vpop.f32.mrf.mxu0
      %v3364 = vadd.f32 %v3338, %v3363
      %3365 = vmatmul.bf16.gmra.mxu0 %v2236
      %v3366 = vpop.f32.mrf.mxu0
      %v3367 = vadd.f32 %v3338, %v3366
      %v3368 = vpop.f32.mrf.mxu0
      %v3369 = vadd.f32 %v3338, %v3368
      %3370 = vmatmul.bf16.gmra.mxu0 %v2239
      %v3371 = vpop.f32.mrf.mxu0
      %v3372 = vadd.f32 %v3338, %v3371
      %v3373 = vpop.f32.mrf.mxu0
      %v3374 = vadd.f32 %v3338, %v3373
      %3375 = vmatmul.bf16.gmra.mxu0 %v2242
      %v3376 = vpop.f32.mrf.mxu0
      %v3377 = vadd.f32 %v3338, %v3376
      %v3378 = vpop.f32.mrf.mxu0
      %v3379 = vadd.f32 %v3338, %v3378
      %3380 = vdwg.mxu0
      %s3381 = scalar_lea.vmem %s10, 32
      %v3382 = vld [vmem:[%s3381] sm:$0xf]
      %v3383 = vld [vmem:[%s3381 + $0x4] sm:$0xf]
      %v3384 = vld [vmem:[%s3381 + $0x8] sm:$0xf]
      %v3385 = vld [vmem:[%s3381 + $0xc] sm:$0xf]
      %s3386 = scalar_lea.vmem %s11, 2
      %v3387 = vld [vmem:[%s3386] sm:$0x1]
      %v3389 = vperm.slane %v3387, 0
      %v3395 = vunpack.c.l.b16 %v3382
      %v3396 = vunpack.c.l.b16 %v3383
      %v3397 = vunpack.c.l.b16 %v3384
      %v3398 = vunpack.c.l.b16 %v3385
      %v3399 = vpack.c.b16 %v3396, %v3395
      %v3400 = vpack.c.b16 %v3398, %v3397
      %3403 = vmatpush.bf16.msra.mxu0 0
      %3404 = vmatpush.bf16.msra.mxu0 0
      %3405 = vmatpush.bf16.msra.mxu0 0
      %3406 = vmatpush.bf16.msra.mxu0 0
      %3407 = vmatpush.bf16.msra.mxu0 0
      %3408 = vmatpush.bf16.msra.mxu0 0
      %3409 = vmatpush.bf16.msra.mxu0 %v3400
      %3410 = vmatpush.bf16.msra.mxu0 %v3399
      %3411 = vmatmul.bf16.gmra.mxu0 %v2233
      %v3412 = vpop.f32.mrf.mxu0
      %v3413 = vadd.f32 %v3389, %v3412
      %v3414 = vpop.f32.mrf.mxu0
      %v3415 = vadd.f32 %v3389, %v3414
      %3416 = vmatmul.bf16.gmra.mxu0 %v2236
      %v3417 = vpop.f32.mrf.mxu0
      %v3418 = vadd.f32 %v3389, %v3417
      %v3419 = vpop.f32.mrf.mxu0
      %v3420 = vadd.f32 %v3389, %v3419
      %3421 = vmatmul.bf16.gmra.mxu0 %v2239
      %v3422 = vpop.f32.mrf.mxu0
      %v3423 = vadd.f32 %v3389, %v3422
      %v3424 = vpop.f32.mrf.mxu0
      %v3425 = vadd.f32 %v3389, %v3424
      %3426 = vmatmul.bf16.gmra.mxu0 %v2242
      %v3427 = vpop.f32.mrf.mxu0
      %v3428 = vadd.f32 %v3389, %v3427
      %v3429 = vpop.f32.mrf.mxu0
      %v3430 = vadd.f32 %v3389, %v3429
      %3431 = vdwg.mxu0
      %s3432 = scalar_lea.vmem %s12, 32
      %v3433 = vld [vmem:[%s3432] sm:$0xf]
      %v3434 = vld [vmem:[%s3432 + $0x4] sm:$0xf]
      %v3435 = vld [vmem:[%s3432 + $0x8] sm:$0xf]
      %v3436 = vld [vmem:[%s3432 + $0xc] sm:$0xf]
      %s3437 = scalar_lea.vmem %s13, 2
      %v3438 = vld [vmem:[%s3437] sm:$0x1]
      %v3440 = vperm.slane %v3438, 0
      %v3446 = vunpack.c.l.b16 %v3433
      %v3447 = vunpack.c.l.b16 %v3434
      %v3448 = vunpack.c.l.b16 %v3435
      %v3449 = vunpack.c.l.b16 %v3436
      %v3450 = vpack.c.b16 %v3447, %v3446
      %v3451 = vpack.c.b16 %v3449, %v3448
      %3454 = vmatpush.bf16.msra.mxu0 0
      %3455 = vmatpush.bf16.msra.mxu0 0
      %3456 = vmatpush.bf16.msra.mxu0 0
      %3457 = vmatpush.bf16.msra.mxu0 0
      %3458 = vmatpush.bf16.msra.mxu0 0
      %3459 = vmatpush.bf16.msra.mxu0 0
      %3460 = vmatpush.bf16.msra.mxu0 %v3451
      %3461 = vmatpush.bf16.msra.mxu0 %v3450
      %3462 = vmatmul.bf16.gmra.mxu0 %v2233
      %v3463 = vpop.f32.mrf.mxu0
      %v3464 = vadd.f32 %v3440, %v3463
      %v3465 = vpop.f32.mrf.mxu0
      %v3466 = vadd.f32 %v3440, %v3465
      %3467 = vmatmul.bf16.gmra.mxu0 %v2236
      %v3468 = vpop.f32.mrf.mxu0
      %v3469 = vadd.f32 %v3440, %v3468
      %v3470 = vpop.f32.mrf.mxu0
      %v3471 = vadd.f32 %v3440, %v3470
      %3472 = vmatmul.bf16.gmra.mxu0 %v2239
      %v3473 = vpop.f32.mrf.mxu0
      %v3474 = vadd.f32 %v3440, %v3473
      %v3475 = vpop.f32.mrf.mxu0
      %v3476 = vadd.f32 %v3440, %v3475
      %3477 = vmatmul.bf16.gmra.mxu0 %v2242
      %v3478 = vpop.f32.mrf.mxu0
      %v3479 = vadd.f32 %v3440, %v3478
      %v3480 = vpop.f32.mrf.mxu0
      %v3481 = vadd.f32 %v3440, %v3480
      %3482 = vdwg.mxu0
      %v3483 = vpack.c.bf16 %v3362, %v3362
      %v3484 = vpack.c.bf16 %v3364, %v3364
      %v3485 = vpack.c.bf16 %v3367, %v3367
      %v3486 = vpack.c.bf16 %v3369, %v3369
      %v3487 = vpack.c.bf16 %v3372, %v3372
      %v3488 = vpack.c.bf16 %v3374, %v3374
      %v3489 = vpack.c.bf16 %v3377, %v3377
      %v3490 = vpack.c.bf16 %v3379, %v3379
      %v3491 = vpack.c.bf16 %v3413, %v3413
      %v3492 = vpack.c.bf16 %v3415, %v3415
      %v3493 = vpack.c.bf16 %v3418, %v3418
      %v3494 = vpack.c.bf16 %v3420, %v3420
      %v3495 = vpack.c.bf16 %v3423, %v3423
      %v3496 = vpack.c.bf16 %v3425, %v3425
      %v3497 = vpack.c.bf16 %v3428, %v3428
      %v3498 = vpack.c.bf16 %v3430, %v3430
      %v3499 = vpack.c.bf16 %v3464, %v3464
      %v3500 = vpack.c.bf16 %v3466, %v3466
      %v3501 = vpack.c.bf16 %v3469, %v3469
      %v3502 = vpack.c.bf16 %v3471, %v3471
      %v3503 = vpack.c.bf16 %v3474, %v3474
      %v3504 = vpack.c.bf16 %v3476, %v3476
      %v3505 = vpack.c.bf16 %v3479, %v3479
      %v3506 = vpack.c.bf16 %v3481, %v3481
      %v3509 = vunpack.c.l.b16 %v3483
      %v3510 = vunpack.c.l.b16 %v3484
      %v3511 = vpack.c.b16 %v3510, %v3509
      %v3514 = vunpack.c.l.b16 %v3491
      %v3515 = vunpack.c.l.b16 %v3492
      %v3516 = vpack.c.b16 %v3515, %v3514
      %v3518 = vsel %vm2405, %v3511, 0
      %v3521 = vsel %vm2405, %v3516, 0
      %3523 = vmatpush.bf16.xpose.msra.mxu0 0
      %3524 = vmatpush.bf16.xpose.msra.mxu0 0
      %3525 = vmatpush.bf16.xpose.msra.mxu0 0
      %3526 = vmatpush.bf16.xpose.msra.mxu0 0
      %3527 = vmatpush.bf16.xpose.msra.mxu0 0
      %3528 = vmatpush.bf16.xpose.msra.mxu0 0
      %3529 = vmatpush.bf16.xpose.msra.mxu0 0
      %3530 = vmatpush.bf16.xpose.msra.mxu0 %v3521
      %3531 = vmatmul.bf16.gmra.mxu0 %v3518
      %v3532 = vpop.f32.mrf.mxu0
      %v3533 = vadd.f32 0.0, %v3532
      %v3534 = vpop.f32.mrf.mxu0
      %v3535 = vadd.f32 0.0, %v3534
      %3536 = vdwg.mxu0
      %v3539 = vunpack.c.l.b16 %v3485
      %v3540 = vunpack.c.l.b16 %v3486
      %v3541 = vpack.c.b16 %v3540, %v3539
      %v3544 = vunpack.c.l.b16 %v3493
      %v3545 = vunpack.c.l.b16 %v3494
      %v3546 = vpack.c.b16 %v3545, %v3544
      %v3548 = vsel %vm2405, %v3541, 0
      %v3551 = vsel %vm2405, %v3546, 0
      %3553 = vmatpush.bf16.xpose.msra.mxu0 0
      %3554 = vmatpush.bf16.xpose.msra.mxu0 0
      %3555 = vmatpush.bf16.xpose.msra.mxu0 0
      %3556 = vmatpush.bf16.xpose.msra.mxu0 0
      %3557 = vmatpush.bf16.xpose.msra.mxu0 0
      %3558 = vmatpush.bf16.xpose.msra.mxu0 0
      %3559 = vmatpush.bf16.xpose.msra.mxu0 0
      %3560 = vmatpush.bf16.xpose.msra.mxu0 %v3551
      %3561 = vmatmul.bf16.gmra.mxu0 %v3548
      %v3562 = vpop.f32.mrf.mxu0
      %v3563 = vadd.f32 0.0, %v3562
      %v3564 = vpop.f32.mrf.mxu0
      %v3565 = vadd.f32 0.0, %v3564
      %3566 = vdwg.mxu0
      %v3569 = vunpack.c.l.b16 %v3487
      %v3570 = vunpack.c.l.b16 %v3488
      %v3571 = vpack.c.b16 %v3570, %v3569
      %v3574 = vunpack.c.l.b16 %v3495
      %v3575 = vunpack.c.l.b16 %v3496
      %v3576 = vpack.c.b16 %v3575, %v3574
      %v3578 = vsel %vm2405, %v3571, 0
      %v3581 = vsel %vm2405, %v3576, 0
      %3583 = vmatpush.bf16.xpose.msra.mxu0 0
      %3584 = vmatpush.bf16.xpose.msra.mxu0 0
      %3585 = vmatpush.bf16.xpose.msra.mxu0 0
      %3586 = vmatpush.bf16.xpose.msra.mxu0 0
      %3587 = vmatpush.bf16.xpose.msra.mxu0 0
      %3588 = vmatpush.bf16.xpose.msra.mxu0 0
      %3589 = vmatpush.bf16.xpose.msra.mxu0 0
      %3590 = vmatpush.bf16.xpose.msra.mxu0 %v3581
      %3591 = vmatmul.bf16.gmra.mxu0 %v3578
      %v3592 = vpop.f32.mrf.mxu0
      %v3593 = vadd.f32 0.0, %v3592
      %v3594 = vpop.f32.mrf.mxu0
      %v3595 = vadd.f32 0.0, %v3594
      %3596 = vdwg.mxu0
      %v3599 = vunpack.c.l.b16 %v3489
      %v3600 = vunpack.c.l.b16 %v3490
      %v3601 = vpack.c.b16 %v3600, %v3599
      %v3604 = vunpack.c.l.b16 %v3497
      %v3605 = vunpack.c.l.b16 %v3498
      %v3606 = vpack.c.b16 %v3605, %v3604
      %v3608 = vsel %vm2405, %v3601, 0
      %v3611 = vsel %vm2405, %v3606, 0
      %3613 = vmatpush.bf16.xpose.msra.mxu0 0
      %3614 = vmatpush.bf16.xpose.msra.mxu0 0
      %3615 = vmatpush.bf16.xpose.msra.mxu0 0
      %3616 = vmatpush.bf16.xpose.msra.mxu0 0
      %3617 = vmatpush.bf16.xpose.msra.mxu0 0
      %3618 = vmatpush.bf16.xpose.msra.mxu0 0
      %3619 = vmatpush.bf16.xpose.msra.mxu0 0
      %3620 = vmatpush.bf16.xpose.msra.mxu0 %v3611
      %3621 = vmatmul.bf16.gmra.mxu0 %v3608
      %v3622 = vpop.f32.mrf.mxu0
      %v3623 = vadd.f32 0.0, %v3622
      %v3624 = vpop.f32.mrf.mxu0
      %v3625 = vadd.f32 0.0, %v3624
      %3626 = vdwg.mxu0
      %v3627 = vsel %vm2516, %v3533, -inf
      %3628 = vmax.xlane.f32.xlu0 %v3627
      %v3629 = vpop.xlane.xlu0 %3628
      %v3630 = vsel %vm2516, %v3535, -inf
      %3631 = vmax.xlane.f32.xlu0 %v3630
      %v3632 = vpop.xlane.xlu0 %3631
      %v3633 = vsel %vm2516, %v3563, -inf
      %3634 = vmax.xlane.f32.xlu0 %v3633
      %v3635 = vpop.xlane.xlu0 %3634
      %v3636 = vsel %vm2516, %v3565, -inf
      %3637 = vmax.xlane.f32.xlu0 %v3636
      %v3638 = vpop.xlane.xlu0 %3637
      %v3639 = vsel %vm2516, %v3593, -inf
      %3640 = vmax.xlane.f32.xlu0 %v3639
      %v3641 = vpop.xlane.xlu0 %3640
      %v3642 = vsel %vm2516, %v3595, -inf
      %3643 = vmax.xlane.f32.xlu0 %v3642
      %v3644 = vpop.xlane.xlu0 %3643
      %v3645 = vsel %vm2516, %v3623, -inf
      %3646 = vmax.xlane.f32.xlu0 %v3645
      %v3647 = vpop.xlane.xlu0 %3646
      %v3648 = vsel %vm2516, %v3625, -inf
      %3649 = vmax.xlane.f32.xlu0 %v3648
      %v3650 = vpop.xlane.xlu0 %3649
      %v3651 = vsub.f32 %v3533, %v3629
      %v3652 = vsub.f32 %v3535, %v3632
      %v3653 = vsub.f32 %v3563, %v3635
      %v3654 = vsub.f32 %v3565, %v3638
      %v3655 = vsub.f32 %v3593, %v3641
      %v3656 = vsub.f32 %v3595, %v3644
      %v3657 = vsub.f32 %v3623, %v3647
      %v3658 = vsub.f32 %v3625, %v3650
      %v3659 = vmul.f32 %v3651, 1.442695
      %v3660 = vpow.pop %v3659
      %v3661 = vmul.f32 %v3652, 1.442695
      %v3662 = vpow.pop %v3661
      %v3663 = vmul.f32 %v3653, 1.442695
      %v3664 = vpow.pop %v3663
      %v3665 = vmul.f32 %v3654, 1.442695
      %v3666 = vpow.pop %v3665
      %v3667 = vmul.f32 %v3655, 1.442695
      %v3668 = vpow.pop %v3667
      %v3669 = vmul.f32 %v3656, 1.442695
      %v3670 = vpow.pop %v3669
      %v3671 = vmul.f32 %v3657, 1.442695
      %v3672 = vpow.pop %v3671
      %v3673 = vmul.f32 %v3658, 1.442695
      %v3674 = vpow.pop %v3673
      %v3675 = vsel %vm2516, %v3660, 0.0
      %3676 = vadd.xlane.f32.xlu0 %v3675
      %v3677 = vpop.xlane.xlu0 %3676
      %v3678 = vsel %vm2516, %v3662, 0.0
      %3679 = vadd.xlane.f32.xlu0 %v3678
      %v3680 = vpop.xlane.xlu0 %3679
      %v3681 = vsel %vm2516, %v3664, 0.0
      %3682 = vadd.xlane.f32.xlu0 %v3681
      %v3683 = vpop.xlane.xlu0 %3682
      %v3684 = vsel %vm2516, %v3666, 0.0
      %3685 = vadd.xlane.f32.xlu0 %v3684
      %v3686 = vpop.xlane.xlu0 %3685
      %v3687 = vsel %vm2516, %v3668, 0.0
      %3688 = vadd.xlane.f32.xlu0 %v3687
      %v3689 = vpop.xlane.xlu0 %3688
      %v3690 = vsel %vm2516, %v3670, 0.0
      %3691 = vadd.xlane.f32.xlu0 %v3690
      %v3692 = vpop.xlane.xlu0 %3691
      %v3693 = vsel %vm2516, %v3672, 0.0
      %3694 = vadd.xlane.f32.xlu0 %v3693
      %v3695 = vpop.xlane.xlu0 %3694
      %v3696 = vsel %vm2516, %v3674, 0.0
      %3697 = vadd.xlane.f32.xlu0 %v3696
      %v3698 = vpop.xlane.xlu0 %3697
      %v3699 = vrcp.pop %v3677
      %v3700 = vrcp.pop %v3680
      %v3701 = vrcp.pop %v3683
      %v3702 = vrcp.pop %v3686
      %v3703 = vrcp.pop %v3689
      %v3704 = vrcp.pop %v3692
      %v3705 = vrcp.pop %v3695
      %v3706 = vrcp.pop %v3698
      %v3707 = vmul.f32 %v3660, %v3699
      %v3708 = vmul.f32 %v3662, %v3700
      %v3709 = vmul.f32 %v3664, %v3701
      %v3710 = vmul.f32 %v3666, %v3702
      %v3711 = vmul.f32 %v3668, %v3703
      %v3712 = vmul.f32 %v3670, %v3704
      %v3713 = vmul.f32 %v3672, %v3705
      %v3714 = vmul.f32 %v3674, %v3706
      %v3715 = vpack.c.bf16 %v3707, %v3707
      %v3716 = vpack.c.bf16 %v3708, %v3708
      %v3717 = vpack.c.bf16 %v3709, %v3709
      %v3718 = vpack.c.bf16 %v3710, %v3710
      %v3719 = vpack.c.bf16 %v3711, %v3711
      %v3720 = vpack.c.bf16 %v3712, %v3712
      %v3721 = vpack.c.bf16 %v3713, %v3713
      %v3722 = vpack.c.bf16 %v3714, %v3714
      %v3725 = vunpack.c.l.b16 %v3715
      %v3726 = vunpack.c.l.b16 %v3716
      %v3727 = vpack.c.b16 %v3726, %v3725
      %v3730 = vunpack.c.l.b16 %v3499
      %v3731 = vunpack.c.l.b16 %v3500
      %v3732 = vpack.c.b16 %v3731, %v3730
      %v3735 = vsel %vm2516, %v3727, 0
      %3737 = vmatpush.bf16.msra.mxu0 0
      %3738 = vmatpush.bf16.msra.mxu0 0
      %3739 = vmatpush.bf16.msra.mxu0 0
      %3740 = vmatpush.bf16.msra.mxu0 0
      %3741 = vmatpush.bf16.msra.mxu0 0
      %3742 = vmatpush.bf16.msra.mxu0 0
      %3743 = vmatpush.bf16.msra.mxu0 0
      %3744 = vmatpush.bf16.msra.mxu0 %v3732
      %3745 = vmatmul.bf16.gmra.mxu0 %v3735
      %v3746 = vpop.f32.mrf.mxu0
      %v3747 = vadd.f32 0.0, %v3746
      %v3748 = vpop.f32.mrf.mxu0
      %v3749 = vadd.f32 0.0, %v3748
      %3750 = vdwg.mxu0
      %v3753 = vunpack.c.l.b16 %v3717
      %v3754 = vunpack.c.l.b16 %v3718
      %v3755 = vpack.c.b16 %v3754, %v3753
      %v3758 = vunpack.c.l.b16 %v3501
      %v3759 = vunpack.c.l.b16 %v3502
      %v3760 = vpack.c.b16 %v3759, %v3758
      %v3763 = vsel %vm2516, %v3755, 0
      %3765 = vmatpush.bf16.msra.mxu0 0
      %3766 = vmatpush.bf16.msra.mxu0 0
      %3767 = vmatpush.bf16.msra.mxu0 0
      %3768 = vmatpush.bf16.msra.mxu0 0
      %3769 = vmatpush.bf16.msra.mxu0 0
      %3770 = vmatpush.bf16.msra.mxu0 0
      %3771 = vmatpush.bf16.msra.mxu0 0
      %3772 = vmatpush.bf16.msra.mxu0 %v3760
      %3773 = vmatmul.bf16.gmra.mxu0 %v3763
      %v3774 = vpop.f32.mrf.mxu0
      %v3775 = vadd.f32 0.0, %v3774
      %v3776 = vpop.f32.mrf.mxu0
      %v3777 = vadd.f32 0.0, %v3776
      %3778 = vdwg.mxu0
      %v3781 = vunpack.c.l.b16 %v3719
      %v3782 = vunpack.c.l.b16 %v3720
      %v3783 = vpack.c.b16 %v3782, %v3781
      %v3786 = vunpack.c.l.b16 %v3503
      %v3787 = vunpack.c.l.b16 %v3504
      %v3788 = vpack.c.b16 %v3787, %v3786
      %v3791 = vsel %vm2516, %v3783, 0
      %3793 = vmatpush.bf16.msra.mxu0 0
      %3794 = vmatpush.bf16.msra.mxu0 0
      %3795 = vmatpush.bf16.msra.mxu0 0
      %3796 = vmatpush.bf16.msra.mxu0 0
      %3797 = vmatpush.bf16.msra.mxu0 0
      %3798 = vmatpush.bf16.msra.mxu0 0
      %3799 = vmatpush.bf16.msra.mxu0 0
      %3800 = vmatpush.bf16.msra.mxu0 %v3788
      %3801 = vmatmul.bf16.gmra.mxu0 %v3791
      %v3802 = vpop.f32.mrf.mxu0
      %v3803 = vadd.f32 0.0, %v3802
      %v3804 = vpop.f32.mrf.mxu0
      %v3805 = vadd.f32 0.0, %v3804
      %3806 = vdwg.mxu0
      %v3809 = vunpack.c.l.b16 %v3721
      %v3810 = vunpack.c.l.b16 %v3722
      %v3811 = vpack.c.b16 %v3810, %v3809
      %v3814 = vunpack.c.l.b16 %v3505
      %v3815 = vunpack.c.l.b16 %v3506
      %v3816 = vpack.c.b16 %v3815, %v3814
      %v3819 = vsel %vm2516, %v3811, 0
      %3821 = vmatpush.bf16.msra.mxu0 0
      %3822 = vmatpush.bf16.msra.mxu0 0
      %3823 = vmatpush.bf16.msra.mxu0 0
      %3824 = vmatpush.bf16.msra.mxu0 0
      %3825 = vmatpush.bf16.msra.mxu0 0
      %3826 = vmatpush.bf16.msra.mxu0 0
      %3827 = vmatpush.bf16.msra.mxu0 0
      %3828 = vmatpush.bf16.msra.mxu0 %v3816
      %3829 = vmatmul.bf16.gmra.mxu0 %v3819
      %v3830 = vpop.f32.mrf.mxu0
      %v3831 = vadd.f32 0.0, %v3830
      %v3832 = vpop.f32.mrf.mxu0
      %v3833 = vadd.f32 0.0, %v3832
      %3834 = vdwg.mxu0
      %v3835 = vpack.c.bf16 %v3749, %v3747
      %v3836 = vpack.c.bf16 %v3777, %v3775
      %v3837 = vpack.c.bf16 %v3805, %v3803
      %v3838 = vpack.c.bf16 %v3833, %v3831
      %s3839 = scalar_lea.vmem %s14, 8
      %v3840 = vld [vmem:[%s3839] sm:$0xf]
      %v3842 = vsel %vm2405, %v3835, 0
      %v3845 = vsel %vm2405, %v3836, 0
      %v3848 = vsel %vm2405, %v3837, 0
      %v3851 = vsel %vm2405, %v3838, 0
      %v3854 = vsel %vm3253, %v3840, 0
      %3856 = vmatpush.bf16.msra.mxu0 0
      %3857 = vmatpush.bf16.msra.mxu0 0
      %3858 = vmatpush.bf16.msra.mxu0 0
      %3859 = vmatpush.bf16.msra.mxu0 0
      %3860 = vmatpush.bf16.msra.mxu0 0
      %3861 = vmatpush.bf16.msra.mxu0 0
      %3862 = vmatpush.bf16.msra.mxu0 0
      %3863 = vmatpush.bf16.msra.mxu0 %v3854
      %3864 = vmatmul.bf16.gmra.mxu0 %v3842
      %v3865 = vpop.f32.mrf.mxu0
      %v3866 = vadd.f32 0.0, %v3865
      %v3867 = vpop.f32.mrf.mxu0
      %v3868 = vadd.f32 0.0, %v3867
      %3869 = vmatmul.bf16.gmra.mxu0 %v3845
      %v3870 = vpop.f32.mrf.mxu0
      %v3871 = vadd.f32 0.0, %v3870
      %v3872 = vpop.f32.mrf.mxu0
      %v3873 = vadd.f32 0.0, %v3872
      %3874 = vmatmul.bf16.gmra.mxu0 %v3848
      %v3875 = vpop.f32.mrf.mxu0
      %v3876 = vadd.f32 0.0, %v3875
      %v3877 = vpop.f32.mrf.mxu0
      %v3878 = vadd.f32 0.0, %v3877
      %3879 = vmatmul.bf16.gmra.mxu0 %v3851
      %v3880 = vpop.f32.mrf.mxu0
      %v3881 = vadd.f32 0.0, %v3880
      %v3882 = vpop.f32.mrf.mxu0
      %v3883 = vadd.f32 0.0, %v3882
      %3884 = vdwg.mxu0
      %v3885 = vadd.f32 %v3311, %v3866
      %v3886 = vadd.f32 %v3313, %v3868
      %v3887 = vadd.f32 %v3316, %v3871
      %v3888 = vadd.f32 %v3318, %v3873
      %v3889 = vadd.f32 %v3321, %v3876
      %v3890 = vadd.f32 %v3323, %v3878
      %v3891 = vadd.f32 %v3326, %v3881
      %v3892 = vadd.f32 %v3328, %v3883
      %s3893 = scalar_lea.vmem %s8, 48
      %v3894 = vld [vmem:[%s3893] sm:$0xf]
      %v3895 = vld [vmem:[%s3893 + $0x4] sm:$0xf]
      %v3896 = vld [vmem:[%s3893 + $0x8] sm:$0xf]
      %v3897 = vld [vmem:[%s3893 + $0xc] sm:$0xf]
      %s3898 = scalar_lea.vmem %s9, 3
      %v3899 = vld [vmem:[%s3898] sm:$0x1]
      %v3901 = vperm.slane %v3899, 0
      %v3907 = vunpack.c.l.b16 %v3894
      %v3908 = vunpack.c.l.b16 %v3895
      %v3909 = vunpack.c.l.b16 %v3896
      %v3910 = vunpack.c.l.b16 %v3897
      %v3911 = vpack.c.b16 %v3908, %v3907
      %v3912 = vpack.c.b16 %v3910, %v3909
      %3915 = vmatpush.bf16.msra.mxu0 0
      %3916 = vmatpush.bf16.msra.mxu0 0
      %3917 = vmatpush.bf16.msra.mxu0 0
      %3918 = vmatpush.bf16.msra.mxu0 0
      %3919 = vmatpush.bf16.msra.mxu0 0
      %3920 = vmatpush.bf16.msra.mxu0 0
      %3921 = vmatpush.bf16.msra.mxu0 %v3912
      %3922 = vmatpush.bf16.msra.mxu0 %v3911
      %3923 = vmatmul.bf16.gmra.mxu0 %v2233
      %v3924 = vpop.f32.mrf.mxu0
      %v3925 = vadd.f32 %v3901, %v3924
      %v3926 = vpop.f32.mrf.mxu0
      %v3927 = vadd.f32 %v3901, %v3926
      %3928 = vmatmul.bf16.gmra.mxu0 %v2236
      %v3929 = vpop.f32.mrf.mxu0
      %v3930 = vadd.f32 %v3901, %v3929
      %v3931 = vpop.f32.mrf.mxu0
      %v3932 = vadd.f32 %v3901, %v3931
      %3933 = vmatmul.bf16.gmra.mxu0 %v2239
      %v3934 = vpop.f32.mrf.mxu0
      %v3935 = vadd.f32 %v3901, %v3934
      %v3936 = vpop.f32.mrf.mxu0
      %v3937 = vadd.f32 %v3901, %v3936
      %3938 = vmatmul.bf16.gmra.mxu0 %v2242
      %v3939 = vpop.f32.mrf.mxu0
      %v3940 = vadd.f32 %v3901, %v3939
      %v3941 = vpop.f32.mrf.mxu0
      %v3942 = vadd.f32 %v3901, %v3941
      %3943 = vdwg.mxu0
      %s3944 = scalar_lea.vmem %s10, 48
      %v3945 = vld [vmem:[%s3944] sm:$0xf]
      %v3946 = vld [vmem:[%s3944 + $0x4] sm:$0xf]
      %v3947 = vld [vmem:[%s3944 + $0x8] sm:$0xf]
      %v3948 = vld [vmem:[%s3944 + $0xc] sm:$0xf]
      %s3949 = scalar_lea.vmem %s11, 3
      %v3950 = vld [vmem:[%s3949] sm:$0x1]
      %v3952 = vperm.slane %v3950, 0
      %v3958 = vunpack.c.l.b16 %v3945
      %v3959 = vunpack.c.l.b16 %v3946
      %v3960 = vunpack.c.l.b16 %v3947
      %v3961 = vunpack.c.l.b16 %v3948
      %v3962 = vpack.c.b16 %v3959, %v3958
      %v3963 = vpack.c.b16 %v3961, %v3960
      %3966 = vmatpush.bf16.msra.mxu0 0
      %3967 = vmatpush.bf16.msra.mxu0 0
      %3968 = vmatpush.bf16.msra.mxu0 0
      %3969 = vmatpush.bf16.msra.mxu0 0
      %3970 = vmatpush.bf16.msra.mxu0 0
      %3971 = vmatpush.bf16.msra.mxu0 0
      %3972 = vmatpush.bf16.msra.mxu0 %v3963
      %3973 = vmatpush.bf16.msra.mxu0 %v3962
      %3974 = vmatmul.bf16.gmra.mxu0 %v2233
      %v3975 = vpop.f32.mrf.mxu0
      %v3976 = vadd.f32 %v3952, %v3975
      %v3977 = vpop.f32.mrf.mxu0
      %v3978 = vadd.f32 %v3952, %v3977
      %3979 = vmatmul.bf16.gmra.mxu0 %v2236
      %v3980 = vpop.f32.mrf.mxu0
      %v3981 = vadd.f32 %v3952, %v3980
      %v3982 = vpop.f32.mrf.mxu0
      %v3983 = vadd.f32 %v3952, %v3982
      %3984 = vmatmul.bf16.gmra.mxu0 %v2239
      %v3985 = vpop.f32.mrf.mxu0
      %v3986 = vadd.f32 %v3952, %v3985
      %v3987 = vpop.f32.mrf.mxu0
      %v3988 = vadd.f32 %v3952, %v3987
      %3989 = vmatmul.bf16.gmra.mxu0 %v2242
      %v3990 = vpop.f32.mrf.mxu0
      %v3991 = vadd.f32 %v3952, %v3990
      %v3992 = vpop.f32.mrf.mxu0
      %v3993 = vadd.f32 %v3952, %v3992
      %3994 = vdwg.mxu0
      %s3995 = scalar_lea.vmem %s12, 48
      %v3996 = vld [vmem:[%s3995] sm:$0xf]
      %v3997 = vld [vmem:[%s3995 + $0x4] sm:$0xf]
      %v3998 = vld [vmem:[%s3995 + $0x8] sm:$0xf]
      %v3999 = vld [vmem:[%s3995 + $0xc] sm:$0xf]
      %s4000 = scalar_lea.vmem %s13, 3
      %v4001 = vld [vmem:[%s4000] sm:$0x1]
      %v4003 = vperm.slane %v4001, 0
      %v4009 = vunpack.c.l.b16 %v3996
      %v4010 = vunpack.c.l.b16 %v3997
      %v4011 = vunpack.c.l.b16 %v3998
      %v4012 = vunpack.c.l.b16 %v3999
      %v4013 = vpack.c.b16 %v4010, %v4009
      %v4014 = vpack.c.b16 %v4012, %v4011
      %4017 = vmatpush.bf16.msra.mxu0 0
      %4018 = vmatpush.bf16.msra.mxu0 0
      %4019 = vmatpush.bf16.msra.mxu0 0
      %4020 = vmatpush.bf16.msra.mxu0 0
      %4021 = vmatpush.bf16.msra.mxu0 0
      %4022 = vmatpush.bf16.msra.mxu0 0
      %4023 = vmatpush.bf16.msra.mxu0 %v4014
      %4024 = vmatpush.bf16.msra.mxu0 %v4013
      %4025 = vmatmul.bf16.gmra.mxu0 %v2233
      %v4026 = vpop.f32.mrf.mxu0
      %v4027 = vadd.f32 %v4003, %v4026
      %v4028 = vpop.f32.mrf.mxu0
      %v4029 = vadd.f32 %v4003, %v4028
      %4030 = vmatmul.bf16.gmra.mxu0 %v2236
      %v4031 = vpop.f32.mrf.mxu0
      %v4032 = vadd.f32 %v4003, %v4031
      %v4033 = vpop.f32.mrf.mxu0
      %v4034 = vadd.f32 %v4003, %v4033
      %4035 = vmatmul.bf16.gmra.mxu0 %v2239
      %v4036 = vpop.f32.mrf.mxu0
      %v4037 = vadd.f32 %v4003, %v4036
      %v4038 = vpop.f32.mrf.mxu0
      %v4039 = vadd.f32 %v4003, %v4038
      %4040 = vmatmul.bf16.gmra.mxu0 %v2242
      %v4041 = vpop.f32.mrf.mxu0
      %v4042 = vadd.f32 %v4003, %v4041
      %v4043 = vpop.f32.mrf.mxu0
      %v4044 = vadd.f32 %v4003, %v4043
      %4045 = vdwg.mxu0
      %v4046 = vpack.c.bf16 %v3925, %v3925
      %v4047 = vpack.c.bf16 %v3927, %v3927
      %v4048 = vpack.c.bf16 %v3930, %v3930
      %v4049 = vpack.c.bf16 %v3932, %v3932
      %v4050 = vpack.c.bf16 %v3935, %v3935
      %v4051 = vpack.c.bf16 %v3937, %v3937
      %v4052 = vpack.c.bf16 %v3940, %v3940
      %v4053 = vpack.c.bf16 %v3942, %v3942
      %v4054 = vpack.c.bf16 %v3976, %v3976
      %v4055 = vpack.c.bf16 %v3978, %v3978
      %v4056 = vpack.c.bf16 %v3981, %v3981
      %v4057 = vpack.c.bf16 %v3983, %v3983
      %v4058 = vpack.c.bf16 %v3986, %v3986
      %v4059 = vpack.c.bf16 %v3988, %v3988
      %v4060 = vpack.c.bf16 %v3991, %v3991
      %v4061 = vpack.c.bf16 %v3993, %v3993
      %v4062 = vpack.c.bf16 %v4027, %v4027
      %v4063 = vpack.c.bf16 %v4029, %v4029
      %v4064 = vpack.c.bf16 %v4032, %v4032
      %v4065 = vpack.c.bf16 %v4034, %v4034
      %v4066 = vpack.c.bf16 %v4037, %v4037
      %v4067 = vpack.c.bf16 %v4039, %v4039
      %v4068 = vpack.c.bf16 %v4042, %v4042
      %v4069 = vpack.c.bf16 %v4044, %v4044
      %v4072 = vunpack.c.l.b16 %v4046
      %v4073 = vunpack.c.l.b16 %v4047
      %v4074 = vpack.c.b16 %v4073, %v4072
      %v4077 = vunpack.c.l.b16 %v4054
      %v4078 = vunpack.c.l.b16 %v4055
      %v4079 = vpack.c.b16 %v4078, %v4077
      %v4081 = vsel %vm2405, %v4074, 0
      %v4084 = vsel %vm2405, %v4079, 0
      %4086 = vmatpush.bf16.xpose.msra.mxu0 0
      %4087 = vmatpush.bf16.xpose.msra.mxu0 0
      %4088 = vmatpush.bf16.xpose.msra.mxu0 0
      %4089 = vmatpush.bf16.xpose.msra.mxu0 0
      %4090 = vmatpush.bf16.xpose.msra.mxu0 0
      %4091 = vmatpush.bf16.xpose.msra.mxu0 0
      %4092 = vmatpush.bf16.xpose.msra.mxu0 0
      %4093 = vmatpush.bf16.xpose.msra.mxu0 %v4084
      %4094 = vmatmul.bf16.gmra.mxu0 %v4081
      %v4095 = vpop.f32.mrf.mxu0
      %v4096 = vadd.f32 0.0, %v4095
      %v4097 = vpop.f32.mrf.mxu0
      %v4098 = vadd.f32 0.0, %v4097
      %4099 = vdwg.mxu0
      %v4102 = vunpack.c.l.b16 %v4048
      %v4103 = vunpack.c.l.b16 %v4049
      %v4104 = vpack.c.b16 %v4103, %v4102
      %v4107 = vunpack.c.l.b16 %v4056
      %v4108 = vunpack.c.l.b16 %v4057
      %v4109 = vpack.c.b16 %v4108, %v4107
      %v4111 = vsel %vm2405, %v4104, 0
      %v4114 = vsel %vm2405, %v4109, 0
      %4116 = vmatpush.bf16.xpose.msra.mxu0 0
      %4117 = vmatpush.bf16.xpose.msra.mxu0 0
      %4118 = vmatpush.bf16.xpose.msra.mxu0 0
      %4119 = vmatpush.bf16.xpose.msra.mxu0 0
      %4120 = vmatpush.bf16.xpose.msra.mxu0 0
      %4121 = vmatpush.bf16.xpose.msra.mxu0 0
      %4122 = vmatpush.bf16.xpose.msra.mxu0 0
      %4123 = vmatpush.bf16.xpose.msra.mxu0 %v4114
      %4124 = vmatmul.bf16.gmra.mxu0 %v4111
      %v4125 = vpop.f32.mrf.mxu0
      %v4126 = vadd.f32 0.0, %v4125
      %v4127 = vpop.f32.mrf.mxu0
      %v4128 = vadd.f32 0.0, %v4127
      %4129 = vdwg.mxu0
      %v4132 = vunpack.c.l.b16 %v4050
      %v4133 = vunpack.c.l.b16 %v4051
      %v4134 = vpack.c.b16 %v4133, %v4132
      %v4137 = vunpack.c.l.b16 %v4058
      %v4138 = vunpack.c.l.b16 %v4059
      %v4139 = vpack.c.b16 %v4138, %v4137
      %v4141 = vsel %vm2405, %v4134, 0
      %v4144 = vsel %vm2405, %v4139, 0
      %4146 = vmatpush.bf16.xpose.msra.mxu0 0
      %4147 = vmatpush.bf16.xpose.msra.mxu0 0
      %4148 = vmatpush.bf16.xpose.msra.mxu0 0
      %4149 = vmatpush.bf16.xpose.msra.mxu0 0
      %4150 = vmatpush.bf16.xpose.msra.mxu0 0
      %4151 = vmatpush.bf16.xpose.msra.mxu0 0
      %4152 = vmatpush.bf16.xpose.msra.mxu0 0
      %4153 = vmatpush.bf16.xpose.msra.mxu0 %v4144
      %4154 = vmatmul.bf16.gmra.mxu0 %v4141
      %v4155 = vpop.f32.mrf.mxu0
      %v4156 = vadd.f32 0.0, %v4155
      %v4157 = vpop.f32.mrf.mxu0
      %v4158 = vadd.f32 0.0, %v4157
      %4159 = vdwg.mxu0
      %v4162 = vunpack.c.l.b16 %v4052
      %v4163 = vunpack.c.l.b16 %v4053
      %v4164 = vpack.c.b16 %v4163, %v4162
      %v4167 = vunpack.c.l.b16 %v4060
      %v4168 = vunpack.c.l.b16 %v4061
      %v4169 = vpack.c.b16 %v4168, %v4167
      %v4171 = vsel %vm2405, %v4164, 0
      %v4174 = vsel %vm2405, %v4169, 0
      %4176 = vmatpush.bf16.xpose.msra.mxu0 0
      %4177 = vmatpush.bf16.xpose.msra.mxu0 0
      %4178 = vmatpush.bf16.xpose.msra.mxu0 0
      %4179 = vmatpush.bf16.xpose.msra.mxu0 0
      %4180 = vmatpush.bf16.xpose.msra.mxu0 0
      %4181 = vmatpush.bf16.xpose.msra.mxu0 0
      %4182 = vmatpush.bf16.xpose.msra.mxu0 0
      %4183 = vmatpush.bf16.xpose.msra.mxu0 %v4174
      %4184 = vmatmul.bf16.gmra.mxu0 %v4171
      %v4185 = vpop.f32.mrf.mxu0
      %v4186 = vadd.f32 0.0, %v4185
      %v4187 = vpop.f32.mrf.mxu0
      %v4188 = vadd.f32 0.0, %v4187
      %4189 = vdwg.mxu0
      %v4190 = vsel %vm2516, %v4096, -inf
      %4191 = vmax.xlane.f32.xlu0 %v4190
      %v4192 = vpop.xlane.xlu0 %4191
      %v4193 = vsel %vm2516, %v4098, -inf
      %4194 = vmax.xlane.f32.xlu0 %v4193
      %v4195 = vpop.xlane.xlu0 %4194
      %v4196 = vsel %vm2516, %v4126, -inf
      %4197 = vmax.xlane.f32.xlu0 %v4196
      %v4198 = vpop.xlane.xlu0 %4197
      %v4199 = vsel %vm2516, %v4128, -inf
      %4200 = vmax.xlane.f32.xlu0 %v4199
      %v4201 = vpop.xlane.xlu0 %4200
      %v4202 = vsel %vm2516, %v4156, -inf
      %4203 = vmax.xlane.f32.xlu0 %v4202
      %v4204 = vpop.xlane.xlu0 %4203
      %v4205 = vsel %vm2516, %v4158, -inf
      %4206 = vmax.xlane.f32.xlu0 %v4205
      %v4207 = vpop.xlane.xlu0 %4206
      %v4208 = vsel %vm2516, %v4186, -inf
      %4209 = vmax.xlane.f32.xlu0 %v4208
      %v4210 = vpop.xlane.xlu0 %4209
      %v4211 = vsel %vm2516, %v4188, -inf
      %4212 = vmax.xlane.f32.xlu0 %v4211
      %v4213 = vpop.xlane.xlu0 %4212
      %v4214 = vsub.f32 %v4096, %v4192
      %v4215 = vsub.f32 %v4098, %v4195
      %v4216 = vsub.f32 %v4126, %v4198
      %v4217 = vsub.f32 %v4128, %v4201
      %v4218 = vsub.f32 %v4156, %v4204
      %v4219 = vsub.f32 %v4158, %v4207
      %v4220 = vsub.f32 %v4186, %v4210
      %v4221 = vsub.f32 %v4188, %v4213
      %v4222 = vmul.f32 %v4214, 1.442695
      %v4223 = vpow.pop %v4222
      %v4224 = vmul.f32 %v4215, 1.442695
      %v4225 = vpow.pop %v4224
      %v4226 = vmul.f32 %v4216, 1.442695
      %v4227 = vpow.pop %v4226
      %v4228 = vmul.f32 %v4217, 1.442695
      %v4229 = vpow.pop %v4228
      %v4230 = vmul.f32 %v4218, 1.442695
      %v4231 = vpow.pop %v4230
      %v4232 = vmul.f32 %v4219, 1.442695
      %v4233 = vpow.pop %v4232
      %v4234 = vmul.f32 %v4220, 1.442695
      %v4235 = vpow.pop %v4234
      %v4236 = vmul.f32 %v4221, 1.442695
      %v4237 = vpow.pop %v4236
      %v4238 = vsel %vm2516, %v4223, 0.0
      %4239 = vadd.xlane.f32.xlu0 %v4238
      %v4240 = vpop.xlane.xlu0 %4239
      %v4241 = vsel %vm2516, %v4225, 0.0
      %4242 = vadd.xlane.f32.xlu0 %v4241
      %v4243 = vpop.xlane.xlu0 %4242
      %v4244 = vsel %vm2516, %v4227, 0.0
      %4245 = vadd.xlane.f32.xlu0 %v4244
      %v4246 = vpop.xlane.xlu0 %4245
      %v4247 = vsel %vm2516, %v4229, 0.0
      %4248 = vadd.xlane.f32.xlu0 %v4247
      %v4249 = vpop.xlane.xlu0 %4248
      %v4250 = vsel %vm2516, %v4231, 0.0
      %4251 = vadd.xlane.f32.xlu0 %v4250
      %v4252 = vpop.xlane.xlu0 %4251
      %v4253 = vsel %vm2516, %v4233, 0.0
      %4254 = vadd.xlane.f32.xlu0 %v4253
      %v4255 = vpop.xlane.xlu0 %4254
      %v4256 = vsel %vm2516, %v4235, 0.0
      %4257 = vadd.xlane.f32.xlu0 %v4256
      %v4258 = vpop.xlane.xlu0 %4257
      %v4259 = vsel %vm2516, %v4237, 0.0
      %4260 = vadd.xlane.f32.xlu0 %v4259
      %v4261 = vpop.xlane.xlu0 %4260
      %v4262 = vrcp.pop %v4240
      %v4263 = vrcp.pop %v4243
      %v4264 = vrcp.pop %v4246
      %v4265 = vrcp.pop %v4249
      %v4266 = vrcp.pop %v4252
      %v4267 = vrcp.pop %v4255
      %v4268 = vrcp.pop %v4258
      %v4269 = vrcp.pop %v4261
      %v4270 = vmul.f32 %v4223, %v4262
      %v4271 = vmul.f32 %v4225, %v4263
      %v4272 = vmul.f32 %v4227, %v4264
      %v4273 = vmul.f32 %v4229, %v4265
      %v4274 = vmul.f32 %v4231, %v4266
      %v4275 = vmul.f32 %v4233, %v4267
      %v4276 = vmul.f32 %v4235, %v4268
      %v4277 = vmul.f32 %v4237, %v4269
      %v4278 = vpack.c.bf16 %v4270, %v4270
      %v4279 = vpack.c.bf16 %v4271, %v4271
      %v4280 = vpack.c.bf16 %v4272, %v4272
      %v4281 = vpack.c.bf16 %v4273, %v4273
      %v4282 = vpack.c.bf16 %v4274, %v4274
      %v4283 = vpack.c.bf16 %v4275, %v4275
      %v4284 = vpack.c.bf16 %v4276, %v4276
      %v4285 = vpack.c.bf16 %v4277, %v4277
      %v4288 = vunpack.c.l.b16 %v4278
      %v4289 = vunpack.c.l.b16 %v4279
      %v4290 = vpack.c.b16 %v4289, %v4288
      %v4293 = vunpack.c.l.b16 %v4062
      %v4294 = vunpack.c.l.b16 %v4063
      %v4295 = vpack.c.b16 %v4294, %v4293
      %v4298 = vsel %vm2516, %v4290, 0
      %4300 = vmatpush.bf16.msra.mxu0 0
      %4301 = vmatpush.bf16.msra.mxu0 0
      %4302 = vmatpush.bf16.msra.mxu0 0
      %4303 = vmatpush.bf16.msra.mxu0 0
      %4304 = vmatpush.bf16.msra.mxu0 0
      %4305 = vmatpush.bf16.msra.mxu0 0
      %4306 = vmatpush.bf16.msra.mxu0 0
      %4307 = vmatpush.bf16.msra.mxu0 %v4295
      %4308 = vmatmul.bf16.gmra.mxu0 %v4298
      %v4309 = vpop.f32.mrf.mxu0
      %v4310 = vadd.f32 0.0, %v4309
      %v4311 = vpop.f32.mrf.mxu0
      %v4312 = vadd.f32 0.0, %v4311
      %4313 = vdwg.mxu0
      %v4316 = vunpack.c.l.b16 %v4280
      %v4317 = vunpack.c.l.b16 %v4281
      %v4318 = vpack.c.b16 %v4317, %v4316
      %v4321 = vunpack.c.l.b16 %v4064
      %v4322 = vunpack.c.l.b16 %v4065
      %v4323 = vpack.c.b16 %v4322, %v4321
      %v4326 = vsel %vm2516, %v4318, 0
      %4328 = vmatpush.bf16.msra.mxu0 0
      %4329 = vmatpush.bf16.msra.mxu0 0
      %4330 = vmatpush.bf16.msra.mxu0 0
      %4331 = vmatpush.bf16.msra.mxu0 0
      %4332 = vmatpush.bf16.msra.mxu0 0
      %4333 = vmatpush.bf16.msra.mxu0 0
      %4334 = vmatpush.bf16.msra.mxu0 0
      %4335 = vmatpush.bf16.msra.mxu0 %v4323
      %4336 = vmatmul.bf16.gmra.mxu0 %v4326
      %v4337 = vpop.f32.mrf.mxu0
      %v4338 = vadd.f32 0.0, %v4337
      %v4339 = vpop.f32.mrf.mxu0
      %v4340 = vadd.f32 0.0, %v4339
      %4341 = vdwg.mxu0
      %v4344 = vunpack.c.l.b16 %v4282
      %v4345 = vunpack.c.l.b16 %v4283
      %v4346 = vpack.c.b16 %v4345, %v4344
      %v4349 = vunpack.c.l.b16 %v4066
      %v4350 = vunpack.c.l.b16 %v4067
      %v4351 = vpack.c.b16 %v4350, %v4349
      %v4354 = vsel %vm2516, %v4346, 0
      %4356 = vmatpush.bf16.msra.mxu0 0
      %4357 = vmatpush.bf16.msra.mxu0 0
      %4358 = vmatpush.bf16.msra.mxu0 0
      %4359 = vmatpush.bf16.msra.mxu0 0
      %4360 = vmatpush.bf16.msra.mxu0 0
      %4361 = vmatpush.bf16.msra.mxu0 0
      %4362 = vmatpush.bf16.msra.mxu0 0
      %4363 = vmatpush.bf16.msra.mxu0 %v4351
      %4364 = vmatmul.bf16.gmra.mxu0 %v4354
      %v4365 = vpop.f32.mrf.mxu0
      %v4366 = vadd.f32 0.0, %v4365
      %v4367 = vpop.f32.mrf.mxu0
      %v4368 = vadd.f32 0.0, %v4367
      %4369 = vdwg.mxu0
      %v4372 = vunpack.c.l.b16 %v4284
      %v4373 = vunpack.c.l.b16 %v4285
      %v4374 = vpack.c.b16 %v4373, %v4372
      %v4377 = vunpack.c.l.b16 %v4068
      %v4378 = vunpack.c.l.b16 %v4069
      %v4379 = vpack.c.b16 %v4378, %v4377
      %v4382 = vsel %vm2516, %v4374, 0
      %4384 = vmatpush.bf16.msra.mxu0 0
      %4385 = vmatpush.bf16.msra.mxu0 0
      %4386 = vmatpush.bf16.msra.mxu0 0
      %4387 = vmatpush.bf16.msra.mxu0 0
      %4388 = vmatpush.bf16.msra.mxu0 0
      %4389 = vmatpush.bf16.msra.mxu0 0
      %4390 = vmatpush.bf16.msra.mxu0 0
      %4391 = vmatpush.bf16.msra.mxu0 %v4379
      %4392 = vmatmul.bf16.gmra.mxu0 %v4382
      %v4393 = vpop.f32.mrf.mxu0
      %v4394 = vadd.f32 0.0, %v4393
      %v4395 = vpop.f32.mrf.mxu0
      %v4396 = vadd.f32 0.0, %v4395
      %4397 = vdwg.mxu0
      %v4398 = vpack.c.bf16 %v4312, %v4310
      %v4399 = vpack.c.bf16 %v4340, %v4338
      %v4400 = vpack.c.bf16 %v4368, %v4366
      %v4401 = vpack.c.bf16 %v4396, %v4394
      %s4402 = scalar_lea.vmem %s14, 12
      %v4403 = vld [vmem:[%s4402] sm:$0xf]
      %v4405 = vsel %vm2405, %v4398, 0
      %v4408 = vsel %vm2405, %v4399, 0
      %v4411 = vsel %vm2405, %v4400, 0
      %v4414 = vsel %vm2405, %v4401, 0
      %v4417 = vsel %vm3253, %v4403, 0
      %4419 = vmatpush.bf16.msra.mxu0 0
      %4420 = vmatpush.bf16.msra.mxu0 0
      %4421 = vmatpush.bf16.msra.mxu0 0
      %4422 = vmatpush.bf16.msra.mxu0 0
      %4423 = vmatpush.bf16.msra.mxu0 0
      %4424 = vmatpush.bf16.msra.mxu0 0
      %4425 = vmatpush.bf16.msra.mxu0 0
      %4426 = vmatpush.bf16.msra.mxu0 %v4417
      %4427 = vmatmul.bf16.gmra.mxu0 %v4405
      %v4428 = vpop.f32.mrf.mxu0
      %v4429 = vadd.f32 0.0, %v4428
      %v4430 = vpop.f32.mrf.mxu0
      %v4431 = vadd.f32 0.0, %v4430
      %4432 = vmatmul.bf16.gmra.mxu0 %v4408
      %v4433 = vpop.f32.mrf.mxu0
      %v4434 = vadd.f32 0.0, %v4433
      %v4435 = vpop.f32.mrf.mxu0
      %v4436 = vadd.f32 0.0, %v4435
      %4437 = vmatmul.bf16.gmra.mxu0 %v4411
      %v4438 = vpop.f32.mrf.mxu0
      %v4439 = vadd.f32 0.0, %v4438
      %v4440 = vpop.f32.mrf.mxu0
      %v4441 = vadd.f32 0.0, %v4440
      %4442 = vmatmul.bf16.gmra.mxu0 %v4414
      %v4443 = vpop.f32.mrf.mxu0
      %v4444 = vadd.f32 0.0, %v4443
      %v4445 = vpop.f32.mrf.mxu0
      %v4446 = vadd.f32 0.0, %v4445
      %4447 = vdwg.mxu0
      %v4448 = vadd.f32 %v3885, %v4429
      %v4449 = vadd.f32 %v3886, %v4431
      %v4450 = vadd.f32 %v3887, %v4434
      %v4451 = vadd.f32 %v3888, %v4436
      %v4452 = vadd.f32 %v3889, %v4439
      %v4453 = vadd.f32 %v3890, %v4441
      %v4454 = vadd.f32 %v3891, %v4444
      %v4455 = vadd.f32 %v3892, %v4446
      %v4456 = vld [vmem:[%s15] sm:$0x1]
      %v4458 = vperm.slane %v4456, 0
      %v4460 = vadd.f32 %v4448, %v4458
      %v4461 = vadd.f32 %v4449, %v4458
      %v4462 = vadd.f32 %v4450, %v4458
      %v4463 = vadd.f32 %v4451, %v4458
      %v4464 = vadd.f32 %v4452, %v4458
      %v4465 = vadd.f32 %v4453, %v4458
      %v4466 = vadd.f32 %v4454, %v4458
      %v4467 = vadd.f32 %v4455, %v4458
      %v4468 = vadd.f32 %v1430, %v4460
      %v4469 = vadd.f32 %v2203, %v4461
      %v4470 = vadd.f32 %v1431, %v4462
      %v4471 = vadd.f32 %v2204, %v4463
      %v4472 = vadd.f32 %v1432, %v4464
      %v4473 = vadd.f32 %v2205, %v4465
      %v4474 = vadd.f32 %v1433, %v4466
      %v4475 = vadd.f32 %v2206, %v4467
      %v4476 = vsel %vm2231, %v4468, 0.0
      %4477 = vadd.xlane.f32.xlu0 %v4476
      %v4478 = vpop.xlane.xlu0 %4477
      %v4479 = vsel %vm2231, %v4469, 0.0
      %4480 = vadd.xlane.f32.xlu0 %v4479
      %v4481 = vpop.xlane.xlu0 %4480
      %v4482 = vsel %vm2231, %v4470, 0.0
      %4483 = vadd.xlane.f32.xlu0 %v4482
      %v4484 = vpop.xlane.xlu0 %4483
      %v4485 = vsel %vm2231, %v4471, 0.0
      %4486 = vadd.xlane.f32.xlu0 %v4485
      %v4487 = vpop.xlane.xlu0 %4486
      %v4488 = vsel %vm2231, %v4472, 0.0
      %4489 = vadd.xlane.f32.xlu0 %v4488
      %v4490 = vpop.xlane.xlu0 %4489
      %v4491 = vsel %vm2231, %v4473, 0.0
      %4492 = vadd.xlane.f32.xlu0 %v4491
      %v4493 = vpop.xlane.xlu0 %4492
      %v4494 = vsel %vm2231, %v4474, 0.0
      %4495 = vadd.xlane.f32.xlu0 %v4494
      %v4496 = vpop.xlane.xlu0 %4495
      %v4497 = vsel %vm2231, %v4475, 0.0
      %4498 = vadd.xlane.f32.xlu0 %v4497
      %v4499 = vpop.xlane.xlu0 %4498
      %v4500 = vrcp.pop 32.0
      %v4501 = vmul.f32 32.0, %v4500
      %v4502 = vsub.f32 1.0, %v4501
      %v4503 = vmul.f32 %v4500, %v4502
      %v4504 = vadd.f32 %v4500, %v4503
      %vm4505 = vweird.f32 %v4500
      %v4506 = vsel %vm4505, %v4500, %v4504
      %v4507 = vmul.f32 %v4478, %v4506
      %v4508 = vmul.f32 %v4481, %v4506
      %v4509 = vmul.f32 %v4484, %v4506
      %v4510 = vmul.f32 %v4487, %v4506
      %v4511 = vmul.f32 %v4490, %v4506
      %v4512 = vmul.f32 %v4493, %v4506
      %v4513 = vmul.f32 %v4496, %v4506
      %v4514 = vmul.f32 %v4499, %v4506
      %v4515 = vsub.f32 %v4468, %v4507
      %v4516 = vsub.f32 %v4469, %v4508
      %v4517 = vsub.f32 %v4470, %v4509
      %v4518 = vsub.f32 %v4471, %v4510
      %v4519 = vsub.f32 %v4472, %v4511
      %v4520 = vsub.f32 %v4473, %v4512
      %v4521 = vsub.f32 %v4474, %v4513
      %v4522 = vsub.f32 %v4475, %v4514
      %v4523 = vmul.f32 %v4515, %v4515
      %v4524 = vmul.f32 %v4516, %v4516
      %v4525 = vmul.f32 %v4517, %v4517
      %v4526 = vmul.f32 %v4518, %v4518
      %v4527 = vmul.f32 %v4519, %v4519
      %v4528 = vmul.f32 %v4520, %v4520
      %v4529 = vmul.f32 %v4521, %v4521
      %v4530 = vmul.f32 %v4522, %v4522
      %v4531 = vsel %vm2231, %v4523, 0.0
      %4532 = vadd.xlane.f32.xlu0 %v4531
      %v4533 = vpop.xlane.xlu0 %4532
      %v4534 = vsel %vm2231, %v4524, 0.0
      %4535 = vadd.xlane.f32.xlu0 %v4534
      %v4536 = vpop.xlane.xlu0 %4535
      %v4537 = vsel %vm2231, %v4525, 0.0
      %4538 = vadd.xlane.f32.xlu0 %v4537
      %v4539 = vpop.xlane.xlu0 %4538
      %v4540 = vsel %vm2231, %v4526, 0.0
      %4541 = vadd.xlane.f32.xlu0 %v4540
      %v4542 = vpop.xlane.xlu0 %4541
      %v4543 = vsel %vm2231, %v4527, 0.0
      %4544 = vadd.xlane.f32.xlu0 %v4543
      %v4545 = vpop.xlane.xlu0 %4544
      %v4546 = vsel %vm2231, %v4528, 0.0
      %4547 = vadd.xlane.f32.xlu0 %v4546
      %v4548 = vpop.xlane.xlu0 %4547
      %v4549 = vsel %vm2231, %v4529, 0.0
      %4550 = vadd.xlane.f32.xlu0 %v4549
      %v4551 = vpop.xlane.xlu0 %4550
      %v4552 = vsel %vm2231, %v4530, 0.0
      %4553 = vadd.xlane.f32.xlu0 %v4552
      %v4554 = vpop.xlane.xlu0 %4553
      %v4555 = vmul.f32 %v4533, %v4506
      %v4556 = vmul.f32 %v4536, %v4506
      %v4557 = vmul.f32 %v4539, %v4506
      %v4558 = vmul.f32 %v4542, %v4506
      %v4559 = vmul.f32 %v4545, %v4506
      %v4560 = vmul.f32 %v4548, %v4506
      %v4561 = vmul.f32 %v4551, %v4506
      %v4562 = vmul.f32 %v4554, %v4506
      %v4563 = vadd.f32 %v4555, 1e-05
      %v4564 = vadd.f32 %v4556, 1e-05
      %v4565 = vadd.f32 %v4557, 1e-05
      %v4566 = vadd.f32 %v4558, 1e-05
      %v4567 = vadd.f32 %v4559, 1e-05
      %v4568 = vadd.f32 %v4560, 1e-05
      %v4569 = vadd.f32 %v4561, 1e-05
      %v4570 = vadd.f32 %v4562, 1e-05
      %v4571 = vrsqrt.pop %v4563
      %v4572 = vmul.f32 %v4571, %v4563
      %v4573 = vmul.f32 %v4572, %v4571
      %v4574 = vmul.f32 0.5, %v4573
      %v4575 = vsub.f32 1.5, %v4574
      %v4576 = vmul.f32 %v4571, %v4575
      %vm4577 = vweird.f32 %v4563
      %vm4578 = vweird.f32 %v4571
      %vm4579 = vmor %vm4577, %vm4578
      %v4580 = vsel %vm4579, %v4571, %v4576
      %v4581 = vrsqrt.pop %v4564
      %v4582 = vmul.f32 %v4581, %v4564
      %v4583 = vmul.f32 %v4582, %v4581
      %v4584 = vmul.f32 0.5, %v4583
      %v4585 = vsub.f32 1.5, %v4584
      %v4586 = vmul.f32 %v4581, %v4585
      %vm4587 = vweird.f32 %v4564
      %vm4588 = vweird.f32 %v4581
      %vm4589 = vmor %vm4587, %vm4588
      %v4590 = vsel %vm4589, %v4581, %v4586
      %v4591 = vrsqrt.pop %v4565
      %v4592 = vmul.f32 %v4591, %v4565
      %v4593 = vmul.f32 %v4592, %v4591
      %v4594 = vmul.f32 0.5, %v4593
      %v4595 = vsub.f32 1.5, %v4594
      %v4596 = vmul.f32 %v4591, %v4595
      %vm4597 = vweird.f32 %v4565
      %vm4598 = vweird.f32 %v4591
      %vm4599 = vmor %vm4597, %vm4598
      %v4600 = vsel %vm4599, %v4591, %v4596
      %v4601 = vrsqrt.pop %v4566
      %v4602 = vmul.f32 %v4601, %v4566
      %v4603 = vmul.f32 %v4602, %v4601
      %v4604 = vmul.f32 0.5, %v4603
      %v4605 = vsub.f32 1.5, %v4604
      %v4606 = vmul.f32 %v4601, %v4605
      %vm4607 = vweird.f32 %v4566
      %vm4608 = vweird.f32 %v4601
      %vm4609 = vmor %vm4607, %vm4608
      %v4610 = vsel %vm4609, %v4601, %v4606
      %v4611 = vrsqrt.pop %v4567
      %v4612 = vmul.f32 %v4611, %v4567
      %v4613 = vmul.f32 %v4612, %v4611
      %v4614 = vmul.f32 0.5, %v4613
      %v4615 = vsub.f32 1.5, %v4614
      %v4616 = vmul.f32 %v4611, %v4615
      %vm4617 = vweird.f32 %v4567
      %vm4618 = vweird.f32 %v4611
      %vm4619 = vmor %vm4617, %vm4618
      %v4620 = vsel %vm4619, %v4611, %v4616
      %v4621 = vrsqrt.pop %v4568
      %v4622 = vmul.f32 %v4621, %v4568
      %v4623 = vmul.f32 %v4622, %v4621
      %v4624 = vmul.f32 0.5, %v4623
      %v4625 = vsub.f32 1.5, %v4624
      %v4626 = vmul.f32 %v4621, %v4625
      %vm4627 = vweird.f32 %v4568
      %vm4628 = vweird.f32 %v4621
      %vm4629 = vmor %vm4627, %vm4628
      %v4630 = vsel %vm4629, %v4621, %v4626
      %v4631 = vrsqrt.pop %v4569
      %v4632 = vmul.f32 %v4631, %v4569
      %v4633 = vmul.f32 %v4632, %v4631
      %v4634 = vmul.f32 0.5, %v4633
      %v4635 = vsub.f32 1.5, %v4634
      %v4636 = vmul.f32 %v4631, %v4635
      %vm4637 = vweird.f32 %v4569
      %vm4638 = vweird.f32 %v4631
      %vm4639 = vmor %vm4637, %vm4638
      %v4640 = vsel %vm4639, %v4631, %v4636
      %v4641 = vrsqrt.pop %v4570
      %v4642 = vmul.f32 %v4641, %v4570
      %v4643 = vmul.f32 %v4642, %v4641
      %v4644 = vmul.f32 0.5, %v4643
      %v4645 = vsub.f32 1.5, %v4644
      %v4646 = vmul.f32 %v4641, %v4645
      %vm4647 = vweird.f32 %v4570
      %vm4648 = vweird.f32 %v4641
      %vm4649 = vmor %vm4647, %vm4648
      %v4650 = vsel %vm4649, %v4641, %v4646
      %v4651 = vmul.f32 %v4515, %v4580
      %v4652 = vmul.f32 %v4516, %v4590
      %v4653 = vmul.f32 %v4517, %v4600
      %v4654 = vmul.f32 %v4518, %v4610
      %v4655 = vmul.f32 %v4519, %v4620
      %v4656 = vmul.f32 %v4520, %v4630
      %v4657 = vmul.f32 %v4521, %v4640
      %v4658 = vmul.f32 %v4522, %v4650
      %v4659 = vld [vmem:[%s16] sm:$0x1]
      %v4661 = vperm.slane %v4659, 0
      %v4663 = vmul.f32 %v4651, %v4661
      %v4664 = vmul.f32 %v4652, %v4661
      %v4665 = vmul.f32 %v4653, %v4661
      %v4666 = vmul.f32 %v4654, %v4661
      %v4667 = vmul.f32 %v4655, %v4661
      %v4668 = vmul.f32 %v4656, %v4661
      %v4669 = vmul.f32 %v4657, %v4661
      %v4670 = vmul.f32 %v4658, %v4661
      %v4671 = vld [vmem:[%s17] sm:$0x1]
      %v4673 = vperm.slane %v4671, 0
      %v4675 = vadd.f32 %v4663, %v4673
      %v4676 = vadd.f32 %v4664, %v4673
      %v4677 = vadd.f32 %v4665, %v4673
      %v4678 = vadd.f32 %v4666, %v4673
      %v4679 = vadd.f32 %v4667, %v4673
      %v4680 = vadd.f32 %v4668, %v4673
      %v4681 = vadd.f32 %v4669, %v4673
      %v4682 = vadd.f32 %v4670, %v4673
      %v4683 = vpack.c.bf16 %v4676, %v4675
      %v4684 = vpack.c.bf16 %v4678, %v4677
      %v4685 = vpack.c.bf16 %v4680, %v4679
      %v4686 = vpack.c.bf16 %v4682, %v4681
      %s4687 = scalar_lea.vmem %s8, 64
      %v4688 = vld [vmem:[%s4687] sm:$0xf]
      %v4689 = vld [vmem:[%s4687 + $0x4] sm:$0xf]
      %v4690 = vld [vmem:[%s4687 + $0x8] sm:$0xf]
      %v4691 = vld [vmem:[%s4687 + $0xc] sm:$0xf]
      %s4692 = scalar_lea.vmem %s9, 4
      %v4693 = vld [vmem:[%s4692] sm:$0x1]
      %v4695 = vperm.slane %v4693, 0
      %v4701 = vunpack.c.l.b16 %v4688
      %v4702 = vunpack.c.l.b16 %v4689
      %v4703 = vunpack.c.l.b16 %v4690
      %v4704 = vunpack.c.l.b16 %v4691
      %v4705 = vpack.c.b16 %v4702, %v4701
      %v4706 = vpack.c.b16 %v4704, %v4703
      %v4710 = vsel %vm2231, %v4683, 0
      %v4713 = vsel %vm2231, %v4684, 0
      %v4716 = vsel %vm2231, %v4685, 0
      %v4719 = vsel %vm2231, %v4686, 0
      %4721 = vmatpush.bf16.msra.mxu0 0
      %4722 = vmatpush.bf16.msra.mxu0 0
      %4723 = vmatpush.bf16.msra.mxu0 0
      %4724 = vmatpush.bf16.msra.mxu0 0
      %4725 = vmatpush.bf16.msra.mxu0 0
      %4726 = vmatpush.bf16.msra.mxu0 0
      %4727 = vmatpush.bf16.msra.mxu0 %v4706
      %4728 = vmatpush.bf16.msra.mxu0 %v4705
      %4729 = vmatmul.bf16.gmra.mxu0 %v4710
      %v4730 = vpop.f32.mrf.mxu0
      %v4731 = vadd.f32 %v4695, %v4730
      %v4732 = vpop.f32.mrf.mxu0
      %v4733 = vadd.f32 %v4695, %v4732
      %4734 = vmatmul.bf16.gmra.mxu0 %v4713
      %v4735 = vpop.f32.mrf.mxu0
      %v4736 = vadd.f32 %v4695, %v4735
      %v4737 = vpop.f32.mrf.mxu0
      %v4738 = vadd.f32 %v4695, %v4737
      %4739 = vmatmul.bf16.gmra.mxu0 %v4716
      %v4740 = vpop.f32.mrf.mxu0
      %v4741 = vadd.f32 %v4695, %v4740
      %v4742 = vpop.f32.mrf.mxu0
      %v4743 = vadd.f32 %v4695, %v4742
      %4744 = vmatmul.bf16.gmra.mxu0 %v4719
      %v4745 = vpop.f32.mrf.mxu0
      %v4746 = vadd.f32 %v4695, %v4745
      %v4747 = vpop.f32.mrf.mxu0
      %v4748 = vadd.f32 %v4695, %v4747
      %4749 = vdwg.mxu0
      %s4750 = scalar_lea.vmem %s10, 64
      %v4751 = vld [vmem:[%s4750] sm:$0xf]
      %v4752 = vld [vmem:[%s4750 + $0x4] sm:$0xf]
      %v4753 = vld [vmem:[%s4750 + $0x8] sm:$0xf]
      %v4754 = vld [vmem:[%s4750 + $0xc] sm:$0xf]
      %s4755 = scalar_lea.vmem %s11, 4
      %v4756 = vld [vmem:[%s4755] sm:$0x1]
      %v4758 = vperm.slane %v4756, 0
      %v4764 = vunpack.c.l.b16 %v4751
      %v4765 = vunpack.c.l.b16 %v4752
      %v4766 = vunpack.c.l.b16 %v4753
      %v4767 = vunpack.c.l.b16 %v4754
      %v4768 = vpack.c.b16 %v4765, %v4764
      %v4769 = vpack.c.b16 %v4767, %v4766
      %4772 = vmatpush.bf16.msra.mxu0 0
      %4773 = vmatpush.bf16.msra.mxu0 0
      %4774 = vmatpush.bf16.msra.mxu0 0
      %4775 = vmatpush.bf16.msra.mxu0 0
      %4776 = vmatpush.bf16.msra.mxu0 0
      %4777 = vmatpush.bf16.msra.mxu0 0
      %4778 = vmatpush.bf16.msra.mxu0 %v4769
      %4779 = vmatpush.bf16.msra.mxu0 %v4768
      %4780 = vmatmul.bf16.gmra.mxu0 %v4710
      %v4781 = vpop.f32.mrf.mxu0
      %v4782 = vadd.f32 %v4758, %v4781
      %v4783 = vpop.f32.mrf.mxu0
      %v4784 = vadd.f32 %v4758, %v4783
      %4785 = vmatmul.bf16.gmra.mxu0 %v4713
      %v4786 = vpop.f32.mrf.mxu0
      %v4787 = vadd.f32 %v4758, %v4786
      %v4788 = vpop.f32.mrf.mxu0
      %v4789 = vadd.f32 %v4758, %v4788
      %4790 = vmatmul.bf16.gmra.mxu0 %v4716
      %v4791 = vpop.f32.mrf.mxu0
      %v4792 = vadd.f32 %v4758, %v4791
      %v4793 = vpop.f32.mrf.mxu0
      %v4794 = vadd.f32 %v4758, %v4793
      %4795 = vmatmul.bf16.gmra.mxu0 %v4719
      %v4796 = vpop.f32.mrf.mxu0
      %v4797 = vadd.f32 %v4758, %v4796
      %v4798 = vpop.f32.mrf.mxu0
      %v4799 = vadd.f32 %v4758, %v4798
      %4800 = vdwg.mxu0
      %s4801 = scalar_lea.vmem %s12, 64
      %v4802 = vld [vmem:[%s4801] sm:$0xf]
      %v4803 = vld [vmem:[%s4801 + $0x4] sm:$0xf]
      %v4804 = vld [vmem:[%s4801 + $0x8] sm:$0xf]
      %v4805 = vld [vmem:[%s4801 + $0xc] sm:$0xf]
      %s4806 = scalar_lea.vmem %s13, 4
      %v4807 = vld [vmem:[%s4806] sm:$0x1]
      %v4809 = vperm.slane %v4807, 0
      %v4815 = vunpack.c.l.b16 %v4802
      %v4816 = vunpack.c.l.b16 %v4803
      %v4817 = vunpack.c.l.b16 %v4804
      %v4818 = vunpack.c.l.b16 %v4805
      %v4819 = vpack.c.b16 %v4816, %v4815
      %v4820 = vpack.c.b16 %v4818, %v4817
      %4823 = vmatpush.bf16.msra.mxu0 0
      %4824 = vmatpush.bf16.msra.mxu0 0
      %4825 = vmatpush.bf16.msra.mxu0 0
      %4826 = vmatpush.bf16.msra.mxu0 0
      %4827 = vmatpush.bf16.msra.mxu0 0
      %4828 = vmatpush.bf16.msra.mxu0 0
      %4829 = vmatpush.bf16.msra.mxu0 %v4820
      %4830 = vmatpush.bf16.msra.mxu0 %v4819
      %4831 = vmatmul.bf16.gmra.mxu0 %v4710
      %v4832 = vpop.f32.mrf.mxu0
      %v4833 = vadd.f32 %v4809, %v4832
      %v4834 = vpop.f32.mrf.mxu0
      %v4835 = vadd.f32 %v4809, %v4834
      %4836 = vmatmul.bf16.gmra.mxu0 %v4713
      %v4837 = vpop.f32.mrf.mxu0
      %v4838 = vadd.f32 %v4809, %v4837
      %v4839 = vpop.f32.mrf.mxu0
      %v4840 = vadd.f32 %v4809, %v4839
      %4841 = vmatmul.bf16.gmra.mxu0 %v4716
      %v4842 = vpop.f32.mrf.mxu0
      %v4843 = vadd.f32 %v4809, %v4842
      %v4844 = vpop.f32.mrf.mxu0
      %v4845 = vadd.f32 %v4809, %v4844
      %4846 = vmatmul.bf16.gmra.mxu0 %v4719
      %v4847 = vpop.f32.mrf.mxu0
      %v4848 = vadd.f32 %v4809, %v4847
      %v4849 = vpop.f32.mrf.mxu0
      %v4850 = vadd.f32 %v4809, %v4849
      %4851 = vdwg.mxu0
      %v4852 = vpack.c.bf16 %v4731, %v4731
      %v4853 = vpack.c.bf16 %v4733, %v4733
      %v4854 = vpack.c.bf16 %v4736, %v4736
      %v4855 = vpack.c.bf16 %v4738, %v4738
      %v4856 = vpack.c.bf16 %v4741, %v4741
      %v4857 = vpack.c.bf16 %v4743, %v4743
      %v4858 = vpack.c.bf16 %v4746, %v4746
      %v4859 = vpack.c.bf16 %v4748, %v4748
      %v4860 = vpack.c.bf16 %v4782, %v4782
      %v4861 = vpack.c.bf16 %v4784, %v4784
      %v4862 = vpack.c.bf16 %v4787, %v4787
      %v4863 = vpack.c.bf16 %v4789, %v4789
      %v4864 = vpack.c.bf16 %v4792, %v4792
      %v4865 = vpack.c.bf16 %v4794, %v4794
      %v4866 = vpack.c.bf16 %v4797, %v4797
      %v4867 = vpack.c.bf16 %v4799, %v4799
      %v4868 = vpack.c.bf16 %v4833, %v4833
      %v4869 = vpack.c.bf16 %v4835, %v4835
      %v4870 = vpack.c.bf16 %v4838, %v4838
      %v4871 = vpack.c.bf16 %v4840, %v4840
      %v4872 = vpack.c.bf16 %v4843, %v4843
      %v4873 = vpack.c.bf16 %v4845, %v4845
      %v4874 = vpack.c.bf16 %v4848, %v4848
      %v4875 = vpack.c.bf16 %v4850, %v4850
      %v4878 = vunpack.c.l.b16 %v4852
      %v4879 = vunpack.c.l.b16 %v4853
      %v4880 = vpack.c.b16 %v4879, %v4878
      %v4883 = vunpack.c.l.b16 %v4860
      %v4884 = vunpack.c.l.b16 %v4861
      %v4885 = vpack.c.b16 %v4884, %v4883
      %v4887 = vsel %vm2405, %v4880, 0
      %v4890 = vsel %vm2405, %v4885, 0
      %4892 = vmatpush.bf16.xpose.msra.mxu0 0
      %4893 = vmatpush.bf16.xpose.msra.mxu0 0
      %4894 = vmatpush.bf16.xpose.msra.mxu0 0
      %4895 = vmatpush.bf16.xpose.msra.mxu0 0
      %4896 = vmatpush.bf16.xpose.msra.mxu0 0
      %4897 = vmatpush.bf16.xpose.msra.mxu0 0
      %4898 = vmatpush.bf16.xpose.msra.mxu0 0
      %4899 = vmatpush.bf16.xpose.msra.mxu0 %v4890
      %4900 = vmatmul.bf16.gmra.mxu0 %v4887
      %v4901 = vpop.f32.mrf.mxu0
      %v4902 = vadd.f32 0.0, %v4901
      %v4903 = vpop.f32.mrf.mxu0
      %v4904 = vadd.f32 0.0, %v4903
      %4905 = vdwg.mxu0
      %v4908 = vunpack.c.l.b16 %v4854
      %v4909 = vunpack.c.l.b16 %v4855
      %v4910 = vpack.c.b16 %v4909, %v4908
      %v4913 = vunpack.c.l.b16 %v4862
      %v4914 = vunpack.c.l.b16 %v4863
      %v4915 = vpack.c.b16 %v4914, %v4913
      %v4917 = vsel %vm2405, %v4910, 0
      %v4920 = vsel %vm2405, %v4915, 0
      %4922 = vmatpush.bf16.xpose.msra.mxu0 0
      %4923 = vmatpush.bf16.xpose.msra.mxu0 0
      %4924 = vmatpush.bf16.xpose.msra.mxu0 0
      %4925 = vmatpush.bf16.xpose.msra.mxu0 0
      %4926 = vmatpush.bf16.xpose.msra.mxu0 0
      %4927 = vmatpush.bf16.xpose.msra.mxu0 0
      %4928 = vmatpush.bf16.xpose.msra.mxu0 0
      %4929 = vmatpush.bf16.xpose.msra.mxu0 %v4920
      %4930 = vmatmul.bf16.gmra.mxu0 %v4917
      %v4931 = vpop.f32.mrf.mxu0
      %v4932 = vadd.f32 0.0, %v4931
      %v4933 = vpop.f32.mrf.mxu0
      %v4934 = vadd.f32 0.0, %v4933
      %4935 = vdwg.mxu0
      %v4938 = vunpack.c.l.b16 %v4856
      %v4939 = vunpack.c.l.b16 %v4857
      %v4940 = vpack.c.b16 %v4939, %v4938
      %v4943 = vunpack.c.l.b16 %v4864
      %v4944 = vunpack.c.l.b16 %v4865
      %v4945 = vpack.c.b16 %v4944, %v4943
      %v4947 = vsel %vm2405, %v4940, 0
      %v4950 = vsel %vm2405, %v4945, 0
      %4952 = vmatpush.bf16.xpose.msra.mxu0 0
      %4953 = vmatpush.bf16.xpose.msra.mxu0 0
      %4954 = vmatpush.bf16.xpose.msra.mxu0 0
      %4955 = vmatpush.bf16.xpose.msra.mxu0 0
      %4956 = vmatpush.bf16.xpose.msra.mxu0 0
      %4957 = vmatpush.bf16.xpose.msra.mxu0 0
      %4958 = vmatpush.bf16.xpose.msra.mxu0 0
      %4959 = vmatpush.bf16.xpose.msra.mxu0 %v4950
      %4960 = vmatmul.bf16.gmra.mxu0 %v4947
      %v4961 = vpop.f32.mrf.mxu0
      %v4962 = vadd.f32 0.0, %v4961
      %v4963 = vpop.f32.mrf.mxu0
      %v4964 = vadd.f32 0.0, %v4963
      %4965 = vdwg.mxu0
      %v4968 = vunpack.c.l.b16 %v4858
      %v4969 = vunpack.c.l.b16 %v4859
      %v4970 = vpack.c.b16 %v4969, %v4968
      %v4973 = vunpack.c.l.b16 %v4866
      %v4974 = vunpack.c.l.b16 %v4867
      %v4975 = vpack.c.b16 %v4974, %v4973
      %v4977 = vsel %vm2405, %v4970, 0
      %v4980 = vsel %vm2405, %v4975, 0
      %4982 = vmatpush.bf16.xpose.msra.mxu0 0
      %4983 = vmatpush.bf16.xpose.msra.mxu0 0
      %4984 = vmatpush.bf16.xpose.msra.mxu0 0
      %4985 = vmatpush.bf16.xpose.msra.mxu0 0
      %4986 = vmatpush.bf16.xpose.msra.mxu0 0
      %4987 = vmatpush.bf16.xpose.msra.mxu0 0
      %4988 = vmatpush.bf16.xpose.msra.mxu0 0
      %4989 = vmatpush.bf16.xpose.msra.mxu0 %v4980
      %4990 = vmatmul.bf16.gmra.mxu0 %v4977
      %v4991 = vpop.f32.mrf.mxu0
      %v4992 = vadd.f32 0.0, %v4991
      %v4993 = vpop.f32.mrf.mxu0
      %v4994 = vadd.f32 0.0, %v4993
      %4995 = vdwg.mxu0
      %v4996 = vsel %vm2516, %v4902, -inf
      %4997 = vmax.xlane.f32.xlu0 %v4996
      %v4998 = vpop.xlane.xlu0 %4997
      %v4999 = vsel %vm2516, %v4904, -inf
      %5000 = vmax.xlane.f32.xlu0 %v4999
      %v5001 = vpop.xlane.xlu0 %5000
      %v5002 = vsel %vm2516, %v4932, -inf
      %5003 = vmax.xlane.f32.xlu0 %v5002
      %v5004 = vpop.xlane.xlu0 %5003
      %v5005 = vsel %vm2516, %v4934, -inf
      %5006 = vmax.xlane.f32.xlu0 %v5005
      %v5007 = vpop.xlane.xlu0 %5006
      %v5008 = vsel %vm2516, %v4962, -inf
      %5009 = vmax.xlane.f32.xlu0 %v5008
      %v5010 = vpop.xlane.xlu0 %5009
      %v5011 = vsel %vm2516, %v4964, -inf
      %5012 = vmax.xlane.f32.xlu0 %v5011
      %v5013 = vpop.xlane.xlu0 %5012
      %v5014 = vsel %vm2516, %v4992, -inf
      %5015 = vmax.xlane.f32.xlu0 %v5014
      %v5016 = vpop.xlane.xlu0 %5015
      %v5017 = vsel %vm2516, %v4994, -inf
      %5018 = vmax.xlane.f32.xlu0 %v5017
      %v5019 = vpop.xlane.xlu0 %5018
      %v5020 = vsub.f32 %v4902, %v4998
      %v5021 = vsub.f32 %v4904, %v5001
      %v5022 = vsub.f32 %v4932, %v5004
      %v5023 = vsub.f32 %v4934, %v5007
      %v5024 = vsub.f32 %v4962, %v5010
      %v5025 = vsub.f32 %v4964, %v5013
      %v5026 = vsub.f32 %v4992, %v5016
      %v5027 = vsub.f32 %v4994, %v5019
      %v5028 = vmul.f32 %v5020, 1.442695
      %v5029 = vpow.pop %v5028
      %v5030 = vmul.f32 %v5021, 1.442695
      %v5031 = vpow.pop %v5030
      %v5032 = vmul.f32 %v5022, 1.442695
      %v5033 = vpow.pop %v5032
      %v5034 = vmul.f32 %v5023, 1.442695
      %v5035 = vpow.pop %v5034
      %v5036 = vmul.f32 %v5024, 1.442695
      %v5037 = vpow.pop %v5036
      %v5038 = vmul.f32 %v5025, 1.442695
      %v5039 = vpow.pop %v5038
      %v5040 = vmul.f32 %v5026, 1.442695
      %v5041 = vpow.pop %v5040
      %v5042 = vmul.f32 %v5027, 1.442695
      %v5043 = vpow.pop %v5042
      %v5044 = vsel %vm2516, %v5029, 0.0
      %5045 = vadd.xlane.f32.xlu0 %v5044
      %v5046 = vpop.xlane.xlu0 %5045
      %v5047 = vsel %vm2516, %v5031, 0.0
      %5048 = vadd.xlane.f32.xlu0 %v5047
      %v5049 = vpop.xlane.xlu0 %5048
      %v5050 = vsel %vm2516, %v5033, 0.0
      %5051 = vadd.xlane.f32.xlu0 %v5050
      %v5052 = vpop.xlane.xlu0 %5051
      %v5053 = vsel %vm2516, %v5035, 0.0
      %5054 = vadd.xlane.f32.xlu0 %v5053
      %v5055 = vpop.xlane.xlu0 %5054
      %v5056 = vsel %vm2516, %v5037, 0.0
      %5057 = vadd.xlane.f32.xlu0 %v5056
      %v5058 = vpop.xlane.xlu0 %5057
      %v5059 = vsel %vm2516, %v5039, 0.0
      %5060 = vadd.xlane.f32.xlu0 %v5059
      %v5061 = vpop.xlane.xlu0 %5060
      %v5062 = vsel %vm2516, %v5041, 0.0
      %5063 = vadd.xlane.f32.xlu0 %v5062
      %v5064 = vpop.xlane.xlu0 %5063
      %v5065 = vsel %vm2516, %v5043, 0.0
      %5066 = vadd.xlane.f32.xlu0 %v5065
      %v5067 = vpop.xlane.xlu0 %5066
      %v5068 = vrcp.pop %v5046
      %v5069 = vrcp.pop %v5049
      %v5070 = vrcp.pop %v5052
      %v5071 = vrcp.pop %v5055
      %v5072 = vrcp.pop %v5058
      %v5073 = vrcp.pop %v5061
      %v5074 = vrcp.pop %v5064
      %v5075 = vrcp.pop %v5067
      %v5076 = vmul.f32 %v5029, %v5068
      %v5077 = vmul.f32 %v5031, %v5069
      %v5078 = vmul.f32 %v5033, %v5070
      %v5079 = vmul.f32 %v5035, %v5071
      %v5080 = vmul.f32 %v5037, %v5072
      %v5081 = vmul.f32 %v5039, %v5073
      %v5082 = vmul.f32 %v5041, %v5074
      %v5083 = vmul.f32 %v5043, %v5075
      %v5084 = vpack.c.bf16 %v5076, %v5076
      %v5085 = vpack.c.bf16 %v5077, %v5077
      %v5086 = vpack.c.bf16 %v5078, %v5078
      %v5087 = vpack.c.bf16 %v5079, %v5079
      %v5088 = vpack.c.bf16 %v5080, %v5080
      %v5089 = vpack.c.bf16 %v5081, %v5081
      %v5090 = vpack.c.bf16 %v5082, %v5082
      %v5091 = vpack.c.bf16 %v5083, %v5083
      %v5094 = vunpack.c.l.b16 %v5084
      %v5095 = vunpack.c.l.b16 %v5085
      %v5096 = vpack.c.b16 %v5095, %v5094
      %v5099 = vunpack.c.l.b16 %v4868
      %v5100 = vunpack.c.l.b16 %v4869
      %v5101 = vpack.c.b16 %v5100, %v5099
      %v5104 = vsel %vm2516, %v5096, 0
      %5106 = vmatpush.bf16.msra.mxu0 0
      %5107 = vmatpush.bf16.msra.mxu0 0
      %5108 = vmatpush.bf16.msra.mxu0 0
      %5109 = vmatpush.bf16.msra.mxu0 0
      %5110 = vmatpush.bf16.msra.mxu0 0
      %5111 = vmatpush.bf16.msra.mxu0 0
      %5112 = vmatpush.bf16.msra.mxu0 0
      %5113 = vmatpush.bf16.msra.mxu0 %v5101
      %5114 = vmatmul.bf16.gmra.mxu0 %v5104
      %v5115 = vpop.f32.mrf.mxu0
      %v5116 = vadd.f32 0.0, %v5115
      %v5117 = vpop.f32.mrf.mxu0
      %v5118 = vadd.f32 0.0, %v5117
      %5119 = vdwg.mxu0
      %v5122 = vunpack.c.l.b16 %v5086
      %v5123 = vunpack.c.l.b16 %v5087
      %v5124 = vpack.c.b16 %v5123, %v5122
      %v5127 = vunpack.c.l.b16 %v4870
      %v5128 = vunpack.c.l.b16 %v4871
      %v5129 = vpack.c.b16 %v5128, %v5127
      %v5132 = vsel %vm2516, %v5124, 0
      %5134 = vmatpush.bf16.msra.mxu0 0
      %5135 = vmatpush.bf16.msra.mxu0 0
      %5136 = vmatpush.bf16.msra.mxu0 0
      %5137 = vmatpush.bf16.msra.mxu0 0
      %5138 = vmatpush.bf16.msra.mxu0 0
      %5139 = vmatpush.bf16.msra.mxu0 0
      %5140 = vmatpush.bf16.msra.mxu0 0
      %5141 = vmatpush.bf16.msra.mxu0 %v5129
      %5142 = vmatmul.bf16.gmra.mxu0 %v5132
      %v5143 = vpop.f32.mrf.mxu0
      %v5144 = vadd.f32 0.0, %v5143
      %v5145 = vpop.f32.mrf.mxu0
      %v5146 = vadd.f32 0.0, %v5145
      %5147 = vdwg.mxu0
      %v5150 = vunpack.c.l.b16 %v5088
      %v5151 = vunpack.c.l.b16 %v5089
      %v5152 = vpack.c.b16 %v5151, %v5150
      %v5155 = vunpack.c.l.b16 %v4872
      %v5156 = vunpack.c.l.b16 %v4873
      %v5157 = vpack.c.b16 %v5156, %v5155
      %v5160 = vsel %vm2516, %v5152, 0
      %5162 = vmatpush.bf16.msra.mxu0 0
      %5163 = vmatpush.bf16.msra.mxu0 0
      %5164 = vmatpush.bf16.msra.mxu0 0
      %5165 = vmatpush.bf16.msra.mxu0 0
      %5166 = vmatpush.bf16.msra.mxu0 0
      %5167 = vmatpush.bf16.msra.mxu0 0
      %5168 = vmatpush.bf16.msra.mxu0 0
      %5169 = vmatpush.bf16.msra.mxu0 %v5157
      %5170 = vmatmul.bf16.gmra.mxu0 %v5160
      %v5171 = vpop.f32.mrf.mxu0
      %v5172 = vadd.f32 0.0, %v5171
      %v5173 = vpop.f32.mrf.mxu0
      %v5174 = vadd.f32 0.0, %v5173
      %5175 = vdwg.mxu0
      %v5178 = vunpack.c.l.b16 %v5090
      %v5179 = vunpack.c.l.b16 %v5091
      %v5180 = vpack.c.b16 %v5179, %v5178
      %v5183 = vunpack.c.l.b16 %v4874
      %v5184 = vunpack.c.l.b16 %v4875
      %v5185 = vpack.c.b16 %v5184, %v5183
      %v5188 = vsel %vm2516, %v5180, 0
      %5190 = vmatpush.bf16.msra.mxu0 0
      %5191 = vmatpush.bf16.msra.mxu0 0
      %5192 = vmatpush.bf16.msra.mxu0 0
      %5193 = vmatpush.bf16.msra.mxu0 0
      %5194 = vmatpush.bf16.msra.mxu0 0
      %5195 = vmatpush.bf16.msra.mxu0 0
      %5196 = vmatpush.bf16.msra.mxu0 0
      %5197 = vmatpush.bf16.msra.mxu0 %v5185
      %5198 = vmatmul.bf16.gmra.mxu0 %v5188
      %v5199 = vpop.f32.mrf.mxu0
      %v5200 = vadd.f32 0.0, %v5199
      %v5201 = vpop.f32.mrf.mxu0
      %v5202 = vadd.f32 0.0, %v5201
      %5203 = vdwg.mxu0
      %v5204 = vpack.c.bf16 %v5118, %v5116
      %v5205 = vpack.c.bf16 %v5146, %v5144
      %v5206 = vpack.c.bf16 %v5174, %v5172
      %v5207 = vpack.c.bf16 %v5202, %v5200
      %s5208 = scalar_lea.vmem %s14, 16
      %v5209 = vld [vmem:[%s5208] sm:$0xf]
      %s5210 = scalar_lea.vmem %s8, 80
      %v5211 = vld [vmem:[%s5210] sm:$0xf]
      %v5212 = vld [vmem:[%s5210 + $0x4] sm:$0xf]
      %v5213 = vld [vmem:[%s5210 + $0x8] sm:$0xf]
      %v5214 = vld [vmem:[%s5210 + $0xc] sm:$0xf]
      %s5215 = scalar_lea.vmem %s9, 5
      %v5216 = vld [vmem:[%s5215] sm:$0x1]
      %v5218 = vperm.slane %v5216, 0
      %v5224 = vunpack.c.l.b16 %v5211
      %v5225 = vunpack.c.l.b16 %v5212
      %v5226 = vunpack.c.l.b16 %v5213
      %v5227 = vunpack.c.l.b16 %v5214
      %v5228 = vpack.c.b16 %v5225, %v5224
      %v5229 = vpack.c.b16 %v5227, %v5226
      %5232 = vmatpush.bf16.msra.mxu0 0
      %5233 = vmatpush.bf16.msra.mxu0 0
      %5234 = vmatpush.bf16.msra.mxu0 0
      %5235 = vmatpush.bf16.msra.mxu0 0
      %5236 = vmatpush.bf16.msra.mxu0 0
      %5237 = vmatpush.bf16.msra.mxu0 0
      %5238 = vmatpush.bf16.msra.mxu0 %v5229
      %5239 = vmatpush.bf16.msra.mxu0 %v5228
      %5240 = vmatmul.bf16.gmra.mxu0 %v4710
      %v5241 = vpop.f32.mrf.mxu0
      %v5242 = vadd.f32 %v5218, %v5241
      %v5243 = vpop.f32.mrf.mxu0
      %v5244 = vadd.f32 %v5218, %v5243
      %5245 = vmatmul.bf16.gmra.mxu0 %v4713
      %v5246 = vpop.f32.mrf.mxu0
      %v5247 = vadd.f32 %v5218, %v5246
      %v5248 = vpop.f32.mrf.mxu0
      %v5249 = vadd.f32 %v5218, %v5248
      %5250 = vmatmul.bf16.gmra.mxu0 %v4716
      %v5251 = vpop.f32.mrf.mxu0
      %v5252 = vadd.f32 %v5218, %v5251
      %v5253 = vpop.f32.mrf.mxu0
      %v5254 = vadd.f32 %v5218, %v5253
      %5255 = vmatmul.bf16.gmra.mxu0 %v4719
      %v5256 = vpop.f32.mrf.mxu0
      %v5257 = vadd.f32 %v5218, %v5256
      %v5258 = vpop.f32.mrf.mxu0
      %v5259 = vadd.f32 %v5218, %v5258
      %5260 = vdwg.mxu0
      %s5261 = scalar_lea.vmem %s10, 80
      %v5262 = vld [vmem:[%s5261] sm:$0xf]
      %v5263 = vld [vmem:[%s5261 + $0x4] sm:$0xf]
      %v5264 = vld [vmem:[%s5261 + $0x8] sm:$0xf]
      %v5265 = vld [vmem:[%s5261 + $0xc] sm:$0xf]
      %s5266 = scalar_lea.vmem %s11, 5
      %v5267 = vld [vmem:[%s5266] sm:$0x1]
      %v5269 = vperm.slane %v5267, 0
      %v5275 = vunpack.c.l.b16 %v5262
      %v5276 = vunpack.c.l.b16 %v5263
      %v5277 = vunpack.c.l.b16 %v5264
      %v5278 = vunpack.c.l.b16 %v5265
      %v5279 = vpack.c.b16 %v5276, %v5275
      %v5280 = vpack.c.b16 %v5278, %v5277
      %5283 = vmatpush.bf16.msra.mxu0 0
      %5284 = vmatpush.bf16.msra.mxu0 0
      %5285 = vmatpush.bf16.msra.mxu0 0
      %5286 = vmatpush.bf16.msra.mxu0 0
      %5287 = vmatpush.bf16.msra.mxu0 0
      %5288 = vmatpush.bf16.msra.mxu0 0
      %5289 = vmatpush.bf16.msra.mxu0 %v5280
      %5290 = vmatpush.bf16.msra.mxu0 %v5279
      %5291 = vmatmul.bf16.gmra.mxu0 %v4710
      %v5292 = vpop.f32.mrf.mxu0
      %v5293 = vadd.f32 %v5269, %v5292
      %v5294 = vpop.f32.mrf.mxu0
      %v5295 = vadd.f32 %v5269, %v5294
      %5296 = vmatmul.bf16.gmra.mxu0 %v4713
      %v5297 = vpop.f32.mrf.mxu0
      %v5298 = vadd.f32 %v5269, %v5297
      %v5299 = vpop.f32.mrf.mxu0
      %v5300 = vadd.f32 %v5269, %v5299
      %5301 = vmatmul.bf16.gmra.mxu0 %v4716
      %v5302 = vpop.f32.mrf.mxu0
      %v5303 = vadd.f32 %v5269, %v5302
      %v5304 = vpop.f32.mrf.mxu0
      %v5305 = vadd.f32 %v5269, %v5304
      %5306 = vmatmul.bf16.gmra.mxu0 %v4719
      %v5307 = vpop.f32.mrf.mxu0
      %v5308 = vadd.f32 %v5269, %v5307
      %v5309 = vpop.f32.mrf.mxu0
      %v5310 = vadd.f32 %v5269, %v5309
      %5311 = vdwg.mxu0
      %s5312 = scalar_lea.vmem %s12, 80
      %v5313 = vld [vmem:[%s5312] sm:$0xf]
      %v5314 = vld [vmem:[%s5312 + $0x4] sm:$0xf]
      %v5315 = vld [vmem:[%s5312 + $0x8] sm:$0xf]
      %v5316 = vld [vmem:[%s5312 + $0xc] sm:$0xf]
      %s5317 = scalar_lea.vmem %s13, 5
      %v5318 = vld [vmem:[%s5317] sm:$0x1]
      %v5320 = vperm.slane %v5318, 0
      %v5326 = vunpack.c.l.b16 %v5313
      %v5327 = vunpack.c.l.b16 %v5314
      %v5328 = vunpack.c.l.b16 %v5315
      %v5329 = vunpack.c.l.b16 %v5316
      %v5330 = vpack.c.b16 %v5327, %v5326
      %v5331 = vpack.c.b16 %v5329, %v5328
      %5334 = vmatpush.bf16.msra.mxu0 0
      %5335 = vmatpush.bf16.msra.mxu0 0
      %5336 = vmatpush.bf16.msra.mxu0 0
      %5337 = vmatpush.bf16.msra.mxu0 0
      %5338 = vmatpush.bf16.msra.mxu0 0
      %5339 = vmatpush.bf16.msra.mxu0 0
      %5340 = vmatpush.bf16.msra.mxu0 %v5331
      %5341 = vmatpush.bf16.msra.mxu0 %v5330
      %5342 = vmatmul.bf16.gmra.mxu0 %v4710
      %v5343 = vpop.f32.mrf.mxu0
      %v5344 = vadd.f32 %v5320, %v5343
      %v5345 = vpop.f32.mrf.mxu0
      %v5346 = vadd.f32 %v5320, %v5345
      %5347 = vmatmul.bf16.gmra.mxu0 %v4713
      %v5348 = vpop.f32.mrf.mxu0
      %v5349 = vadd.f32 %v5320, %v5348
      %v5350 = vpop.f32.mrf.mxu0
      %v5351 = vadd.f32 %v5320, %v5350
      %5352 = vmatmul.bf16.gmra.mxu0 %v4716
      %v5353 = vpop.f32.mrf.mxu0
      %v5354 = vadd.f32 %v5320, %v5353
      %v5355 = vpop.f32.mrf.mxu0
      %v5356 = vadd.f32 %v5320, %v5355
      %5357 = vmatmul.bf16.gmra.mxu0 %v4719
      %v5358 = vpop.f32.mrf.mxu0
      %v5359 = vadd.f32 %v5320, %v5358
      %v5360 = vpop.f32.mrf.mxu0
      %v5361 = vadd.f32 %v5320, %v5360
      %5362 = vdwg.mxu0
      %v5363 = vpack.c.bf16 %v5242, %v5242
      %v5364 = vpack.c.bf16 %v5244, %v5244
      %v5365 = vpack.c.bf16 %v5247, %v5247
      %v5366 = vpack.c.bf16 %v5249, %v5249
      %v5367 = vpack.c.bf16 %v5252, %v5252
      %v5368 = vpack.c.bf16 %v5254, %v5254
      %v5369 = vpack.c.bf16 %v5257, %v5257
      %v5370 = vpack.c.bf16 %v5259, %v5259
      %v5371 = vpack.c.bf16 %v5293, %v5293
      %v5372 = vpack.c.bf16 %v5295, %v5295
      %v5373 = vpack.c.bf16 %v5298, %v5298
      %v5374 = vpack.c.bf16 %v5300, %v5300
      %v5375 = vpack.c.bf16 %v5303, %v5303
      %v5376 = vpack.c.bf16 %v5305, %v5305
      %v5377 = vpack.c.bf16 %v5308, %v5308
      %v5378 = vpack.c.bf16 %v5310, %v5310
      %v5379 = vpack.c.bf16 %v5344, %v5344
      %v5380 = vpack.c.bf16 %v5346, %v5346
      %v5381 = vpack.c.bf16 %v5349, %v5349
      %v5382 = vpack.c.bf16 %v5351, %v5351
      %v5383 = vpack.c.bf16 %v5354, %v5354
      %v5384 = vpack.c.bf16 %v5356, %v5356
      %v5385 = vpack.c.bf16 %v5359, %v5359
      %v5386 = vpack.c.bf16 %v5361, %v5361
      %v5389 = vunpack.c.l.b16 %v5363
      %v5390 = vunpack.c.l.b16 %v5364
      %v5391 = vpack.c.b16 %v5390, %v5389
      %v5394 = vunpack.c.l.b16 %v5371
      %v5395 = vunpack.c.l.b16 %v5372
      %v5396 = vpack.c.b16 %v5395, %v5394
      %v5398 = vsel %vm2405, %v5391, 0
      %v5401 = vsel %vm2405, %v5396, 0
      %5403 = vmatpush.bf16.xpose.msra.mxu0 0
      %5404 = vmatpush.bf16.xpose.msra.mxu0 0
      %5405 = vmatpush.bf16.xpose.msra.mxu0 0
      %5406 = vmatpush.bf16.xpose.msra.mxu0 0
      %5407 = vmatpush.bf16.xpose.msra.mxu0 0
      %5408 = vmatpush.bf16.xpose.msra.mxu0 0
      %5409 = vmatpush.bf16.xpose.msra.mxu0 0
      %5410 = vmatpush.bf16.xpose.msra.mxu0 %v5401
      %5411 = vmatmul.bf16.gmra.mxu0 %v5398
      %v5412 = vpop.f32.mrf.mxu0
      %v5413 = vadd.f32 0.0, %v5412
      %v5414 = vpop.f32.mrf.mxu0
      %v5415 = vadd.f32 0.0, %v5414
      %5416 = vdwg.mxu0
      %v5419 = vunpack.c.l.b16 %v5365
      %v5420 = vunpack.c.l.b16 %v5366
      %v5421 = vpack.c.b16 %v5420, %v5419
      %v5424 = vunpack.c.l.b16 %v5373
      %v5425 = vunpack.c.l.b16 %v5374
      %v5426 = vpack.c.b16 %v5425, %v5424
      %v5428 = vsel %vm2405, %v5421, 0
      %v5431 = vsel %vm2405, %v5426, 0
      %5433 = vmatpush.bf16.xpose.msra.mxu0 0
      %5434 = vmatpush.bf16.xpose.msra.mxu0 0
      %5435 = vmatpush.bf16.xpose.msra.mxu0 0
      %5436 = vmatpush.bf16.xpose.msra.mxu0 0
      %5437 = vmatpush.bf16.xpose.msra.mxu0 0
      %5438 = vmatpush.bf16.xpose.msra.mxu0 0
      %5439 = vmatpush.bf16.xpose.msra.mxu0 0
      %5440 = vmatpush.bf16.xpose.msra.mxu0 %v5431
      %5441 = vmatmul.bf16.gmra.mxu0 %v5428
      %v5442 = vpop.f32.mrf.mxu0
      %v5443 = vadd.f32 0.0, %v5442
      %v5444 = vpop.f32.mrf.mxu0
      %v5445 = vadd.f32 0.0, %v5444
      %5446 = vdwg.mxu0
      %v5449 = vunpack.c.l.b16 %v5367
      %v5450 = vunpack.c.l.b16 %v5368
      %v5451 = vpack.c.b16 %v5450, %v5449
      %v5454 = vunpack.c.l.b16 %v5375
      %v5455 = vunpack.c.l.b16 %v5376
      %v5456 = vpack.c.b16 %v5455, %v5454
      %v5458 = vsel %vm2405, %v5451, 0
      %v5461 = vsel %vm2405, %v5456, 0
      %5463 = vmatpush.bf16.xpose.msra.mxu0 0
      %5464 = vmatpush.bf16.xpose.msra.mxu0 0
      %5465 = vmatpush.bf16.xpose.msra.mxu0 0
      %5466 = vmatpush.bf16.xpose.msra.mxu0 0
      %5467 = vmatpush.bf16.xpose.msra.mxu0 0
      %5468 = vmatpush.bf16.xpose.msra.mxu0 0
      %5469 = vmatpush.bf16.xpose.msra.mxu0 0
      %5470 = vmatpush.bf16.xpose.msra.mxu0 %v5461
      %5471 = vmatmul.bf16.gmra.mxu0 %v5458
      %v5472 = vpop.f32.mrf.mxu0
      %v5473 = vadd.f32 0.0, %v5472
      %v5474 = vpop.f32.mrf.mxu0
      %v5475 = vadd.f32 0.0, %v5474
      %5476 = vdwg.mxu0
      %v5479 = vunpack.c.l.b16 %v5369
      %v5480 = vunpack.c.l.b16 %v5370
      %v5481 = vpack.c.b16 %v5480, %v5479
      %v5484 = vunpack.c.l.b16 %v5377
      %v5485 = vunpack.c.l.b16 %v5378
      %v5486 = vpack.c.b16 %v5485, %v5484
      %v5488 = vsel %vm2405, %v5481, 0
      %v5491 = vsel %vm2405, %v5486, 0
      %5493 = vmatpush.bf16.xpose.msra.mxu0 0
      %5494 = vmatpush.bf16.xpose.msra.mxu0 0
      %5495 = vmatpush.bf16.xpose.msra.mxu0 0
      %5496 = vmatpush.bf16.xpose.msra.mxu0 0
      %5497 = vmatpush.bf16.xpose.msra.mxu0 0
      %5498 = vmatpush.bf16.xpose.msra.mxu0 0
      %5499 = vmatpush.bf16.xpose.msra.mxu0 0
      %5500 = vmatpush.bf16.xpose.msra.mxu0 %v5491
      %5501 = vmatmul.bf16.gmra.mxu0 %v5488
      %v5502 = vpop.f32.mrf.mxu0
      %v5503 = vadd.f32 0.0, %v5502
      %v5504 = vpop.f32.mrf.mxu0
      %v5505 = vadd.f32 0.0, %v5504
      %5506 = vdwg.mxu0
      %v5507 = vsel %vm2516, %v5413, -inf
      %5508 = vmax.xlane.f32.xlu0 %v5507
      %v5509 = vpop.xlane.xlu0 %5508
      %v5510 = vsel %vm2516, %v5415, -inf
      %5511 = vmax.xlane.f32.xlu0 %v5510
      %v5512 = vpop.xlane.xlu0 %5511
      %v5513 = vsel %vm2516, %v5443, -inf
      %5514 = vmax.xlane.f32.xlu0 %v5513
      %v5515 = vpop.xlane.xlu0 %5514
      %v5516 = vsel %vm2516, %v5445, -inf
      %5517 = vmax.xlane.f32.xlu0 %v5516
      %v5518 = vpop.xlane.xlu0 %5517
      %v5519 = vsel %vm2516, %v5473, -inf
      %5520 = vmax.xlane.f32.xlu0 %v5519
      %v5521 = vpop.xlane.xlu0 %5520
      %v5522 = vsel %vm2516, %v5475, -inf
      %5523 = vmax.xlane.f32.xlu0 %v5522
      %v5524 = vpop.xlane.xlu0 %5523
      %v5525 = vsel %vm2516, %v5503, -inf
      %5526 = vmax.xlane.f32.xlu0 %v5525
      %v5527 = vpop.xlane.xlu0 %5526
      %v5528 = vsel %vm2516, %v5505, -inf
      %5529 = vmax.xlane.f32.xlu0 %v5528
      %v5530 = vpop.xlane.xlu0 %5529
      %v5531 = vsub.f32 %v5413, %v5509
      %v5532 = vsub.f32 %v5415, %v5512
      %v5533 = vsub.f32 %v5443, %v5515
      %v5534 = vsub.f32 %v5445, %v5518
      %v5535 = vsub.f32 %v5473, %v5521
      %v5536 = vsub.f32 %v5475, %v5524
      %v5537 = vsub.f32 %v5503, %v5527
      %v5538 = vsub.f32 %v5505, %v5530
      %v5539 = vmul.f32 %v5531, 1.442695
      %v5540 = vpow.pop %v5539
      %v5541 = vmul.f32 %v5532, 1.442695
      %v5542 = vpow.pop %v5541
      %v5543 = vmul.f32 %v5533, 1.442695
      %v5544 = vpow.pop %v5543
      %v5545 = vmul.f32 %v5534, 1.442695
      %v5546 = vpow.pop %v5545
      %v5547 = vmul.f32 %v5535, 1.442695
      %v5548 = vpow.pop %v5547
      %v5549 = vmul.f32 %v5536, 1.442695
      %v5550 = vpow.pop %v5549
      %v5551 = vmul.f32 %v5537, 1.442695
      %v5552 = vpow.pop %v5551
      %v5553 = vmul.f32 %v5538, 1.442695
      %v5554 = vpow.pop %v5553
      %v5555 = vsel %vm2516, %v5540, 0.0
      %5556 = vadd.xlane.f32.xlu0 %v5555
      %v5557 = vpop.xlane.xlu0 %5556
      %v5558 = vsel %vm2516, %v5542, 0.0
      %5559 = vadd.xlane.f32.xlu0 %v5558
      %v5560 = vpop.xlane.xlu0 %5559
      %v5561 = vsel %vm2516, %v5544, 0.0
      %5562 = vadd.xlane.f32.xlu0 %v5561
      %v5563 = vpop.xlane.xlu0 %5562
      %v5564 = vsel %vm2516, %v5546, 0.0
      %5565 = vadd.xlane.f32.xlu0 %v5564
      %v5566 = vpop.xlane.xlu0 %5565
      %v5567 = vsel %vm2516, %v5548, 0.0
      %5568 = vadd.xlane.f32.xlu0 %v5567
      %v5569 = vpop.xlane.xlu0 %5568
      %v5570 = vsel %vm2516, %v5550, 0.0
      %5571 = vadd.xlane.f32.xlu0 %v5570
      %v5572 = vpop.xlane.xlu0 %5571
      %v5573 = vsel %vm2516, %v5552, 0.0
      %5574 = vadd.xlane.f32.xlu0 %v5573
      %v5575 = vpop.xlane.xlu0 %5574
      %v5576 = vsel %vm2516, %v5554, 0.0
      %5577 = vadd.xlane.f32.xlu0 %v5576
      %v5578 = vpop.xlane.xlu0 %5577
      %v5579 = vrcp.pop %v5557
      %v5580 = vrcp.pop %v5560
      %v5581 = vrcp.pop %v5563
      %v5582 = vrcp.pop %v5566
      %v5583 = vrcp.pop %v5569
      %v5584 = vrcp.pop %v5572
      %v5585 = vrcp.pop %v5575
      %v5586 = vrcp.pop %v5578
      %v5587 = vmul.f32 %v5540, %v5579
      %v5588 = vmul.f32 %v5542, %v5580
      %v5589 = vmul.f32 %v5544, %v5581
      %v5590 = vmul.f32 %v5546, %v5582
      %v5591 = vmul.f32 %v5548, %v5583
      %v5592 = vmul.f32 %v5550, %v5584
      %v5593 = vmul.f32 %v5552, %v5585
      %v5594 = vmul.f32 %v5554, %v5586
      %v5595 = vpack.c.bf16 %v5587, %v5587
      %v5596 = vpack.c.bf16 %v5588, %v5588
      %v5597 = vpack.c.bf16 %v5589, %v5589
      %v5598 = vpack.c.bf16 %v5590, %v5590
      %v5599 = vpack.c.bf16 %v5591, %v5591
      %v5600 = vpack.c.bf16 %v5592, %v5592
      %v5601 = vpack.c.bf16 %v5593, %v5593
      %v5602 = vpack.c.bf16 %v5594, %v5594
      %v5605 = vunpack.c.l.b16 %v5595
      %v5606 = vunpack.c.l.b16 %v5596
      %v5607 = vpack.c.b16 %v5606, %v5605
      %v5610 = vunpack.c.l.b16 %v5379
      %v5611 = vunpack.c.l.b16 %v5380
      %v5612 = vpack.c.b16 %v5611, %v5610
      %v5615 = vsel %vm2516, %v5607, 0
      %5617 = vmatpush.bf16.msra.mxu0 0
      %5618 = vmatpush.bf16.msra.mxu0 0
      %5619 = vmatpush.bf16.msra.mxu0 0
      %5620 = vmatpush.bf16.msra.mxu0 0
      %5621 = vmatpush.bf16.msra.mxu0 0
      %5622 = vmatpush.bf16.msra.mxu0 0
      %5623 = vmatpush.bf16.msra.mxu0 0
      %5624 = vmatpush.bf16.msra.mxu0 %v5612
      %5625 = vmatmul.bf16.gmra.mxu0 %v5615
      %v5626 = vpop.f32.mrf.mxu0
      %v5627 = vadd.f32 0.0, %v5626
      %v5628 = vpop.f32.mrf.mxu0
      %v5629 = vadd.f32 0.0, %v5628
      %5630 = vdwg.mxu0
      %v5633 = vunpack.c.l.b16 %v5597
      %v5634 = vunpack.c.l.b16 %v5598
      %v5635 = vpack.c.b16 %v5634, %v5633
      %v5638 = vunpack.c.l.b16 %v5381
      %v5639 = vunpack.c.l.b16 %v5382
      %v5640 = vpack.c.b16 %v5639, %v5638
      %v5643 = vsel %vm2516, %v5635, 0
      %5645 = vmatpush.bf16.msra.mxu0 0
      %5646 = vmatpush.bf16.msra.mxu0 0
      %5647 = vmatpush.bf16.msra.mxu0 0
      %5648 = vmatpush.bf16.msra.mxu0 0
      %5649 = vmatpush.bf16.msra.mxu0 0
      %5650 = vmatpush.bf16.msra.mxu0 0
      %5651 = vmatpush.bf16.msra.mxu0 0
      %5652 = vmatpush.bf16.msra.mxu0 %v5640
      %5653 = vmatmul.bf16.gmra.mxu0 %v5643
      %v5654 = vpop.f32.mrf.mxu0
      %v5655 = vadd.f32 0.0, %v5654
      %v5656 = vpop.f32.mrf.mxu0
      %v5657 = vadd.f32 0.0, %v5656
      %5658 = vdwg.mxu0
      %v5661 = vunpack.c.l.b16 %v5599
      %v5662 = vunpack.c.l.b16 %v5600
      %v5663 = vpack.c.b16 %v5662, %v5661
      %v5666 = vunpack.c.l.b16 %v5383
      %v5667 = vunpack.c.l.b16 %v5384
      %v5668 = vpack.c.b16 %v5667, %v5666
      %v5671 = vsel %vm2516, %v5663, 0
      %5673 = vmatpush.bf16.msra.mxu0 0
      %5674 = vmatpush.bf16.msra.mxu0 0
      %5675 = vmatpush.bf16.msra.mxu0 0
      %5676 = vmatpush.bf16.msra.mxu0 0
      %5677 = vmatpush.bf16.msra.mxu0 0
      %5678 = vmatpush.bf16.msra.mxu0 0
      %5679 = vmatpush.bf16.msra.mxu0 0
      %5680 = vmatpush.bf16.msra.mxu0 %v5668
      %5681 = vmatmul.bf16.gmra.mxu0 %v5671
      %v5682 = vpop.f32.mrf.mxu0
      %v5683 = vadd.f32 0.0, %v5682
      %v5684 = vpop.f32.mrf.mxu0
      %v5685 = vadd.f32 0.0, %v5684
      %5686 = vdwg.mxu0
      %v5689 = vunpack.c.l.b16 %v5601
      %v5690 = vunpack.c.l.b16 %v5602
      %v5691 = vpack.c.b16 %v5690, %v5689
      %v5694 = vunpack.c.l.b16 %v5385
      %v5695 = vunpack.c.l.b16 %v5386
      %v5696 = vpack.c.b16 %v5695, %v5694
      %v5699 = vsel %vm2516, %v5691, 0
      %5701 = vmatpush.bf16.msra.mxu0 0
      %5702 = vmatpush.bf16.msra.mxu0 0
      %5703 = vmatpush.bf16.msra.mxu0 0
      %5704 = vmatpush.bf16.msra.mxu0 0
      %5705 = vmatpush.bf16.msra.mxu0 0
      %5706 = vmatpush.bf16.msra.mxu0 0
      %5707 = vmatpush.bf16.msra.mxu0 0
      %5708 = vmatpush.bf16.msra.mxu0 %v5696
      %5709 = vmatmul.bf16.gmra.mxu0 %v5699
      %v5710 = vpop.f32.mrf.mxu0
      %v5711 = vadd.f32 0.0, %v5710
      %v5712 = vpop.f32.mrf.mxu0
      %v5713 = vadd.f32 0.0, %v5712
      %5714 = vdwg.mxu0
      %v5715 = vpack.c.bf16 %v5629, %v5627
      %v5716 = vpack.c.bf16 %v5657, %v5655
      %v5717 = vpack.c.bf16 %v5685, %v5683
      %v5718 = vpack.c.bf16 %v5713, %v5711
      %s5719 = scalar_lea.vmem %s14, 20
      %v5720 = vld [vmem:[%s5719] sm:$0xf]
      %v5722 = vsel %vm2405, %v5715, 0
      %v5725 = vsel %vm2405, %v5716, 0
      %v5728 = vsel %vm2405, %v5717, 0
      %v5731 = vsel %vm2405, %v5718, 0
      %v5734 = vsel %vm3253, %v5720, 0
      %5736 = vmatpush.bf16.msra.mxu0 0
      %5737 = vmatpush.bf16.msra.mxu0 0
      %5738 = vmatpush.bf16.msra.mxu0 0
      %5739 = vmatpush.bf16.msra.mxu0 0
      %5740 = vmatpush.bf16.msra.mxu0 0
      %5741 = vmatpush.bf16.msra.mxu0 0
      %5742 = vmatpush.bf16.msra.mxu0 0
      %5743 = vmatpush.bf16.msra.mxu0 %v5734
      %5744 = vmatmul.bf16.gmra.mxu0 %v5722
      %v5745 = vpop.f32.mrf.mxu0
      %v5746 = vadd.f32 0.0, %v5745
      %v5747 = vpop.f32.mrf.mxu0
      %v5748 = vadd.f32 0.0, %v5747
      %5749 = vmatmul.bf16.gmra.mxu0 %v5725
      %v5750 = vpop.f32.mrf.mxu0
      %v5751 = vadd.f32 0.0, %v5750
      %v5752 = vpop.f32.mrf.mxu0
      %v5753 = vadd.f32 0.0, %v5752
      %5754 = vmatmul.bf16.gmra.mxu0 %v5728
      %v5755 = vpop.f32.mrf.mxu0
      %v5756 = vadd.f32 0.0, %v5755
      %v5757 = vpop.f32.mrf.mxu0
      %v5758 = vadd.f32 0.0, %v5757
      %5759 = vmatmul.bf16.gmra.mxu0 %v5731
      %v5760 = vpop.f32.mrf.mxu0
      %v5761 = vadd.f32 0.0, %v5760
      %v5762 = vpop.f32.mrf.mxu0
      %v5763 = vadd.f32 0.0, %v5762
      %5764 = vdwg.mxu0
      %v5766 = vsel %vm2405, %v5204, 0
      %v5769 = vsel %vm2405, %v5205, 0
      %v5772 = vsel %vm2405, %v5206, 0
      %v5775 = vsel %vm2405, %v5207, 0
      %v5778 = vsel %vm3253, %v5209, 0
      %5780 = vmatpush.bf16.msra.mxu0 0
      %5781 = vmatpush.bf16.msra.mxu0 0
      %5782 = vmatpush.bf16.msra.mxu0 0
      %5783 = vmatpush.bf16.msra.mxu0 0
      %5784 = vmatpush.bf16.msra.mxu0 0
      %5785 = vmatpush.bf16.msra.mxu0 0
      %5786 = vmatpush.bf16.msra.mxu0 0
      %5787 = vmatpush.bf16.msra.mxu0 %v5778
      %5788 = vmatmul.bf16.gmra.mxu0 %v5766
      %v5789 = vpop.f32.mrf.mxu0
      %v5790 = vadd.f32 %v5746, %v5789
      %v5791 = vpop.f32.mrf.mxu0
      %v5792 = vadd.f32 %v5748, %v5791
      %5793 = vmatmul.bf16.gmra.mxu0 %v5769
      %v5794 = vpop.f32.mrf.mxu0
      %v5795 = vadd.f32 %v5751, %v5794
      %v5796 = vpop.f32.mrf.mxu0
      %v5797 = vadd.f32 %v5753, %v5796
      %5798 = vmatmul.bf16.gmra.mxu0 %v5772
      %v5799 = vpop.f32.mrf.mxu0
      %v5800 = vadd.f32 %v5756, %v5799
      %v5801 = vpop.f32.mrf.mxu0
      %v5802 = vadd.f32 %v5758, %v5801
      %5803 = vmatmul.bf16.gmra.mxu0 %v5775
      %v5804 = vpop.f32.mrf.mxu0
      %v5805 = vadd.f32 %v5761, %v5804
      %v5806 = vpop.f32.mrf.mxu0
      %v5807 = vadd.f32 %v5763, %v5806
      %5808 = vdwg.mxu0
      %s5809 = scalar_lea.vmem %s8, 96
      %v5810 = vld [vmem:[%s5809] sm:$0xf]
      %v5811 = vld [vmem:[%s5809 + $0x4] sm:$0xf]
      %v5812 = vld [vmem:[%s5809 + $0x8] sm:$0xf]
      %v5813 = vld [vmem:[%s5809 + $0xc] sm:$0xf]
      %s5814 = scalar_lea.vmem %s9, 6
      %v5815 = vld [vmem:[%s5814] sm:$0x1]
      %v5817 = vperm.slane %v5815, 0
      %v5823 = vunpack.c.l.b16 %v5810
      %v5824 = vunpack.c.l.b16 %v5811
      %v5825 = vunpack.c.l.b16 %v5812
      %v5826 = vunpack.c.l.b16 %v5813
      %v5827 = vpack.c.b16 %v5824, %v5823
      %v5828 = vpack.c.b16 %v5826, %v5825
      %5831 = vmatpush.bf16.msra.mxu0 0
      %5832 = vmatpush.bf16.msra.mxu0 0
      %5833 = vmatpush.bf16.msra.mxu0 0
      %5834 = vmatpush.bf16.msra.mxu0 0
      %5835 = vmatpush.bf16.msra.mxu0 0
      %5836 = vmatpush.bf16.msra.mxu0 0
      %5837 = vmatpush.bf16.msra.mxu0 %v5828
      %5838 = vmatpush.bf16.msra.mxu0 %v5827
      %5839 = vmatmul.bf16.gmra.mxu0 %v4710
      %v5840 = vpop.f32.mrf.mxu0
      %v5841 = vadd.f32 %v5817, %v5840
      %v5842 = vpop.f32.mrf.mxu0
      %v5843 = vadd.f32 %v5817, %v5842
      %5844 = vmatmul.bf16.gmra.mxu0 %v4713
      %v5845 = vpop.f32.mrf.mxu0
      %v5846 = vadd.f32 %v5817, %v5845
      %v5847 = vpop.f32.mrf.mxu0
      %v5848 = vadd.f32 %v5817, %v5847
      %5849 = vmatmul.bf16.gmra.mxu0 %v4716
      %v5850 = vpop.f32.mrf.mxu0
      %v5851 = vadd.f32 %v5817, %v5850
      %v5852 = vpop.f32.mrf.mxu0
      %v5853 = vadd.f32 %v5817, %v5852
      %5854 = vmatmul.bf16.gmra.mxu0 %v4719
      %v5855 = vpop.f32.mrf.mxu0
      %v5856 = vadd.f32 %v5817, %v5855
      %v5857 = vpop.f32.mrf.mxu0
      %v5858 = vadd.f32 %v5817, %v5857
      %5859 = vdwg.mxu0
      %s5860 = scalar_lea.vmem %s10, 96
      %v5861 = vld [vmem:[%s5860] sm:$0xf]
      %v5862 = vld [vmem:[%s5860 + $0x4] sm:$0xf]
      %v5863 = vld [vmem:[%s5860 + $0x8] sm:$0xf]
      %v5864 = vld [vmem:[%s5860 + $0xc] sm:$0xf]
      %s5865 = scalar_lea.vmem %s11, 6
      %v5866 = vld [vmem:[%s5865] sm:$0x1]
      %v5868 = vperm.slane %v5866, 0
      %v5874 = vunpack.c.l.b16 %v5861
      %v5875 = vunpack.c.l.b16 %v5862
      %v5876 = vunpack.c.l.b16 %v5863
      %v5877 = vunpack.c.l.b16 %v5864
      %v5878 = vpack.c.b16 %v5875, %v5874
      %v5879 = vpack.c.b16 %v5877, %v5876
      %5882 = vmatpush.bf16.msra.mxu0 0
      %5883 = vmatpush.bf16.msra.mxu0 0
      %5884 = vmatpush.bf16.msra.mxu0 0
      %5885 = vmatpush.bf16.msra.mxu0 0
      %5886 = vmatpush.bf16.msra.mxu0 0
      %5887 = vmatpush.bf16.msra.mxu0 0
      %5888 = vmatpush.bf16.msra.mxu0 %v5879
      %5889 = vmatpush.bf16.msra.mxu0 %v5878
      %5890 = vmatmul.bf16.gmra.mxu0 %v4710
      %v5891 = vpop.f32.mrf.mxu0
      %v5892 = vadd.f32 %v5868, %v5891
      %v5893 = vpop.f32.mrf.mxu0
      %v5894 = vadd.f32 %v5868, %v5893
      %5895 = vmatmul.bf16.gmra.mxu0 %v4713
      %v5896 = vpop.f32.mrf.mxu0
      %v5897 = vadd.f32 %v5868, %v5896
      %v5898 = vpop.f32.mrf.mxu0
      %v5899 = vadd.f32 %v5868, %v5898
      %5900 = vmatmul.bf16.gmra.mxu0 %v4716
      %v5901 = vpop.f32.mrf.mxu0
      %v5902 = vadd.f32 %v5868, %v5901
      %v5903 = vpop.f32.mrf.mxu0
      %v5904 = vadd.f32 %v5868, %v5903
      %5905 = vmatmul.bf16.gmra.mxu0 %v4719
      %v5906 = vpop.f32.mrf.mxu0
      %v5907 = vadd.f32 %v5868, %v5906
      %v5908 = vpop.f32.mrf.mxu0
      %v5909 = vadd.f32 %v5868, %v5908
      %5910 = vdwg.mxu0
      %s5911 = scalar_lea.vmem %s12, 96
      %v5912 = vld [vmem:[%s5911] sm:$0xf]
      %v5913 = vld [vmem:[%s5911 + $0x4] sm:$0xf]
      %v5914 = vld [vmem:[%s5911 + $0x8] sm:$0xf]
      %v5915 = vld [vmem:[%s5911 + $0xc] sm:$0xf]
      %s5916 = scalar_lea.vmem %s13, 6
      %v5917 = vld [vmem:[%s5916] sm:$0x1]
      %v5919 = vperm.slane %v5917, 0
      %v5925 = vunpack.c.l.b16 %v5912
      %v5926 = vunpack.c.l.b16 %v5913
      %v5927 = vunpack.c.l.b16 %v5914
      %v5928 = vunpack.c.l.b16 %v5915
      %v5929 = vpack.c.b16 %v5926, %v5925
      %v5930 = vpack.c.b16 %v5928, %v5927
      %5933 = vmatpush.bf16.msra.mxu0 0
      %5934 = vmatpush.bf16.msra.mxu0 0
      %5935 = vmatpush.bf16.msra.mxu0 0
      %5936 = vmatpush.bf16.msra.mxu0 0
      %5937 = vmatpush.bf16.msra.mxu0 0
      %5938 = vmatpush.bf16.msra.mxu0 0
      %5939 = vmatpush.bf16.msra.mxu0 %v5930
      %5940 = vmatpush.bf16.msra.mxu0 %v5929
      %5941 = vmatmul.bf16.gmra.mxu0 %v4710
      %v5942 = vpop.f32.mrf.mxu0
      %v5943 = vadd.f32 %v5919, %v5942
      %v5944 = vpop.f32.mrf.mxu0
      %v5945 = vadd.f32 %v5919, %v5944
      %5946 = vmatmul.bf16.gmra.mxu0 %v4713
      %v5947 = vpop.f32.mrf.mxu0
      %v5948 = vadd.f32 %v5919, %v5947
      %v5949 = vpop.f32.mrf.mxu0
      %v5950 = vadd.f32 %v5919, %v5949
      %5951 = vmatmul.bf16.gmra.mxu0 %v4716
      %v5952 = vpop.f32.mrf.mxu0
      %v5953 = vadd.f32 %v5919, %v5952
      %v5954 = vpop.f32.mrf.mxu0
      %v5955 = vadd.f32 %v5919, %v5954
      %5956 = vmatmul.bf16.gmra.mxu0 %v4719
      %v5957 = vpop.f32.mrf.mxu0
      %v5958 = vadd.f32 %v5919, %v5957
      %v5959 = vpop.f32.mrf.mxu0
      %v5960 = vadd.f32 %v5919, %v5959
      %5961 = vdwg.mxu0
      %v5962 = vpack.c.bf16 %v5841, %v5841
      %v5963 = vpack.c.bf16 %v5843, %v5843
      %v5964 = vpack.c.bf16 %v5846, %v5846
      %v5965 = vpack.c.bf16 %v5848, %v5848
      %v5966 = vpack.c.bf16 %v5851, %v5851
      %v5967 = vpack.c.bf16 %v5853, %v5853
      %v5968 = vpack.c.bf16 %v5856, %v5856
      %v5969 = vpack.c.bf16 %v5858, %v5858
      %v5970 = vpack.c.bf16 %v5892, %v5892
      %v5971 = vpack.c.bf16 %v5894, %v5894
      %v5972 = vpack.c.bf16 %v5897, %v5897
      %v5973 = vpack.c.bf16 %v5899, %v5899
      %v5974 = vpack.c.bf16 %v5902, %v5902
      %v5975 = vpack.c.bf16 %v5904, %v5904
      %v5976 = vpack.c.bf16 %v5907, %v5907
      %v5977 = vpack.c.bf16 %v5909, %v5909
      %v5978 = vpack.c.bf16 %v5943, %v5943
      %v5979 = vpack.c.bf16 %v5945, %v5945
      %v5980 = vpack.c.bf16 %v5948, %v5948
      %v5981 = vpack.c.bf16 %v5950, %v5950
      %v5982 = vpack.c.bf16 %v5953, %v5953
      %v5983 = vpack.c.bf16 %v5955, %v5955
      %v5984 = vpack.c.bf16 %v5958, %v5958
      %v5985 = vpack.c.bf16 %v5960, %v5960
      %v5988 = vunpack.c.l.b16 %v5962
      %v5989 = vunpack.c.l.b16 %v5963
      %v5990 = vpack.c.b16 %v5989, %v5988
      %v5993 = vunpack.c.l.b16 %v5970
      %v5994 = vunpack.c.l.b16 %v5971
      %v5995 = vpack.c.b16 %v5994, %v5993
      %v5997 = vsel %vm2405, %v5990, 0
      %v6000 = vsel %vm2405, %v5995, 0
      %6002 = vmatpush.bf16.xpose.msra.mxu0 0
      %6003 = vmatpush.bf16.xpose.msra.mxu0 0
      %6004 = vmatpush.bf16.xpose.msra.mxu0 0
      %6005 = vmatpush.bf16.xpose.msra.mxu0 0
      %6006 = vmatpush.bf16.xpose.msra.mxu0 0
      %6007 = vmatpush.bf16.xpose.msra.mxu0 0
      %6008 = vmatpush.bf16.xpose.msra.mxu0 0
      %6009 = vmatpush.bf16.xpose.msra.mxu0 %v6000
      %6010 = vmatmul.bf16.gmra.mxu0 %v5997
      %v6011 = vpop.f32.mrf.mxu0
      %v6012 = vadd.f32 0.0, %v6011
      %v6013 = vpop.f32.mrf.mxu0
      %v6014 = vadd.f32 0.0, %v6013
      %6015 = vdwg.mxu0
      %v6018 = vunpack.c.l.b16 %v5964
      %v6019 = vunpack.c.l.b16 %v5965
      %v6020 = vpack.c.b16 %v6019, %v6018
      %v6023 = vunpack.c.l.b16 %v5972
      %v6024 = vunpack.c.l.b16 %v5973
      %v6025 = vpack.c.b16 %v6024, %v6023
      %v6027 = vsel %vm2405, %v6020, 0
      %v6030 = vsel %vm2405, %v6025, 0
      %6032 = vmatpush.bf16.xpose.msra.mxu0 0
      %6033 = vmatpush.bf16.xpose.msra.mxu0 0
      %6034 = vmatpush.bf16.xpose.msra.mxu0 0
      %6035 = vmatpush.bf16.xpose.msra.mxu0 0
      %6036 = vmatpush.bf16.xpose.msra.mxu0 0
      %6037 = vmatpush.bf16.xpose.msra.mxu0 0
      %6038 = vmatpush.bf16.xpose.msra.mxu0 0
      %6039 = vmatpush.bf16.xpose.msra.mxu0 %v6030
      %6040 = vmatmul.bf16.gmra.mxu0 %v6027
      %v6041 = vpop.f32.mrf.mxu0
      %v6042 = vadd.f32 0.0, %v6041
      %v6043 = vpop.f32.mrf.mxu0
      %v6044 = vadd.f32 0.0, %v6043
      %6045 = vdwg.mxu0
      %v6048 = vunpack.c.l.b16 %v5966
      %v6049 = vunpack.c.l.b16 %v5967
      %v6050 = vpack.c.b16 %v6049, %v6048
      %v6053 = vunpack.c.l.b16 %v5974
      %v6054 = vunpack.c.l.b16 %v5975
      %v6055 = vpack.c.b16 %v6054, %v6053
      %v6057 = vsel %vm2405, %v6050, 0
      %v6060 = vsel %vm2405, %v6055, 0
      %6062 = vmatpush.bf16.xpose.msra.mxu0 0
      %6063 = vmatpush.bf16.xpose.msra.mxu0 0
      %6064 = vmatpush.bf16.xpose.msra.mxu0 0
      %6065 = vmatpush.bf16.xpose.msra.mxu0 0
      %6066 = vmatpush.bf16.xpose.msra.mxu0 0
      %6067 = vmatpush.bf16.xpose.msra.mxu0 0
      %6068 = vmatpush.bf16.xpose.msra.mxu0 0
      %6069 = vmatpush.bf16.xpose.msra.mxu0 %v6060
      %6070 = vmatmul.bf16.gmra.mxu0 %v6057
      %v6071 = vpop.f32.mrf.mxu0
      %v6072 = vadd.f32 0.0, %v6071
      %v6073 = vpop.f32.mrf.mxu0
      %v6074 = vadd.f32 0.0, %v6073
      %6075 = vdwg.mxu0
      %v6078 = vunpack.c.l.b16 %v5968
      %v6079 = vunpack.c.l.b16 %v5969
      %v6080 = vpack.c.b16 %v6079, %v6078
      %v6083 = vunpack.c.l.b16 %v5976
      %v6084 = vunpack.c.l.b16 %v5977
      %v6085 = vpack.c.b16 %v6084, %v6083
      %v6087 = vsel %vm2405, %v6080, 0
      %v6090 = vsel %vm2405, %v6085, 0
      %6092 = vmatpush.bf16.xpose.msra.mxu0 0
      %6093 = vmatpush.bf16.xpose.msra.mxu0 0
      %6094 = vmatpush.bf16.xpose.msra.mxu0 0
      %6095 = vmatpush.bf16.xpose.msra.mxu0 0
      %6096 = vmatpush.bf16.xpose.msra.mxu0 0
      %6097 = vmatpush.bf16.xpose.msra.mxu0 0
      %6098 = vmatpush.bf16.xpose.msra.mxu0 0
      %6099 = vmatpush.bf16.xpose.msra.mxu0 %v6090
      %6100 = vmatmul.bf16.gmra.mxu0 %v6087
      %v6101 = vpop.f32.mrf.mxu0
      %v6102 = vadd.f32 0.0, %v6101
      %v6103 = vpop.f32.mrf.mxu0
      %v6104 = vadd.f32 0.0, %v6103
      %6105 = vdwg.mxu0
      %v6106 = vsel %vm2516, %v6012, -inf
      %6107 = vmax.xlane.f32.xlu0 %v6106
      %v6108 = vpop.xlane.xlu0 %6107
      %v6109 = vsel %vm2516, %v6014, -inf
      %6110 = vmax.xlane.f32.xlu0 %v6109
      %v6111 = vpop.xlane.xlu0 %6110
      %v6112 = vsel %vm2516, %v6042, -inf
      %6113 = vmax.xlane.f32.xlu0 %v6112
      %v6114 = vpop.xlane.xlu0 %6113
      %v6115 = vsel %vm2516, %v6044, -inf
      %6116 = vmax.xlane.f32.xlu0 %v6115
      %v6117 = vpop.xlane.xlu0 %6116
      %v6118 = vsel %vm2516, %v6072, -inf
      %6119 = vmax.xlane.f32.xlu0 %v6118
      %v6120 = vpop.xlane.xlu0 %6119
      %v6121 = vsel %vm2516, %v6074, -inf
      %6122 = vmax.xlane.f32.xlu0 %v6121
      %v6123 = vpop.xlane.xlu0 %6122
      %v6124 = vsel %vm2516, %v6102, -inf
      %6125 = vmax.xlane.f32.xlu0 %v6124
      %v6126 = vpop.xlane.xlu0 %6125
      %v6127 = vsel %vm2516, %v6104, -inf
      %6128 = vmax.xlane.f32.xlu0 %v6127
      %v6129 = vpop.xlane.xlu0 %6128
      %v6130 = vsub.f32 %v6012, %v6108
      %v6131 = vsub.f32 %v6014, %v6111
      %v6132 = vsub.f32 %v6042, %v6114
      %v6133 = vsub.f32 %v6044, %v6117
      %v6134 = vsub.f32 %v6072, %v6120
      %v6135 = vsub.f32 %v6074, %v6123
      %v6136 = vsub.f32 %v6102, %v6126
      %v6137 = vsub.f32 %v6104, %v6129
      %v6138 = vmul.f32 %v6130, 1.442695
      %v6139 = vpow.pop %v6138
      %v6140 = vmul.f32 %v6131, 1.442695
      %v6141 = vpow.pop %v6140
      %v6142 = vmul.f32 %v6132, 1.442695
      %v6143 = vpow.pop %v6142
      %v6144 = vmul.f32 %v6133, 1.442695
      %v6145 = vpow.pop %v6144
      %v6146 = vmul.f32 %v6134, 1.442695
      %v6147 = vpow.pop %v6146
      %v6148 = vmul.f32 %v6135, 1.442695
      %v6149 = vpow.pop %v6148
      %v6150 = vmul.f32 %v6136, 1.442695
      %v6151 = vpow.pop %v6150
      %v6152 = vmul.f32 %v6137, 1.442695
      %v6153 = vpow.pop %v6152
      %v6154 = vsel %vm2516, %v6139, 0.0
      %6155 = vadd.xlane.f32.xlu0 %v6154
      %v6156 = vpop.xlane.xlu0 %6155
      %v6157 = vsel %vm2516, %v6141, 0.0
      %6158 = vadd.xlane.f32.xlu0 %v6157
      %v6159 = vpop.xlane.xlu0 %6158
      %v6160 = vsel %vm2516, %v6143, 0.0
      %6161 = vadd.xlane.f32.xlu0 %v6160
      %v6162 = vpop.xlane.xlu0 %6161
      %v6163 = vsel %vm2516, %v6145, 0.0
      %6164 = vadd.xlane.f32.xlu0 %v6163
      %v6165 = vpop.xlane.xlu0 %6164
      %v6166 = vsel %vm2516, %v6147, 0.0
      %6167 = vadd.xlane.f32.xlu0 %v6166
      %v6168 = vpop.xlane.xlu0 %6167
      %v6169 = vsel %vm2516, %v6149, 0.0
      %6170 = vadd.xlane.f32.xlu0 %v6169
      %v6171 = vpop.xlane.xlu0 %6170
      %v6172 = vsel %vm2516, %v6151, 0.0
      %6173 = vadd.xlane.f32.xlu0 %v6172
      %v6174 = vpop.xlane.xlu0 %6173
      %v6175 = vsel %vm2516, %v6153, 0.0
      %6176 = vadd.xlane.f32.xlu0 %v6175
      %v6177 = vpop.xlane.xlu0 %6176
      %v6178 = vrcp.pop %v6156
      %v6179 = vrcp.pop %v6159
      %v6180 = vrcp.pop %v6162
      %v6181 = vrcp.pop %v6165
      %v6182 = vrcp.pop %v6168
      %v6183 = vrcp.pop %v6171
      %v6184 = vrcp.pop %v6174
      %v6185 = vrcp.pop %v6177
      %v6186 = vmul.f32 %v6139, %v6178
      %v6187 = vmul.f32 %v6141, %v6179
      %v6188 = vmul.f32 %v6143, %v6180
      %v6189 = vmul.f32 %v6145, %v6181
      %v6190 = vmul.f32 %v6147, %v6182
      %v6191 = vmul.f32 %v6149, %v6183
      %v6192 = vmul.f32 %v6151, %v6184
      %v6193 = vmul.f32 %v6153, %v6185
      %v6194 = vpack.c.bf16 %v6186, %v6186
      %v6195 = vpack.c.bf16 %v6187, %v6187
      %v6196 = vpack.c.bf16 %v6188, %v6188
      %v6197 = vpack.c.bf16 %v6189, %v6189
      %v6198 = vpack.c.bf16 %v6190, %v6190
      %v6199 = vpack.c.bf16 %v6191, %v6191
      %v6200 = vpack.c.bf16 %v6192, %v6192
      %v6201 = vpack.c.bf16 %v6193, %v6193
      %v6204 = vunpack.c.l.b16 %v6194
      %v6205 = vunpack.c.l.b16 %v6195
      %v6206 = vpack.c.b16 %v6205, %v6204
      %v6209 = vunpack.c.l.b16 %v5978
      %v6210 = vunpack.c.l.b16 %v5979
      %v6211 = vpack.c.b16 %v6210, %v6209
      %v6214 = vsel %vm2516, %v6206, 0
      %6216 = vmatpush.bf16.msra.mxu0 0
      %6217 = vmatpush.bf16.msra.mxu0 0
      %6218 = vmatpush.bf16.msra.mxu0 0
      %6219 = vmatpush.bf16.msra.mxu0 0
      %6220 = vmatpush.bf16.msra.mxu0 0
      %6221 = vmatpush.bf16.msra.mxu0 0
      %6222 = vmatpush.bf16.msra.mxu0 0
      %6223 = vmatpush.bf16.msra.mxu0 %v6211
      %6224 = vmatmul.bf16.gmra.mxu0 %v6214
      %v6225 = vpop.f32.mrf.mxu0
      %v6226 = vadd.f32 0.0, %v6225
      %v6227 = vpop.f32.mrf.mxu0
      %v6228 = vadd.f32 0.0, %v6227
      %6229 = vdwg.mxu0
      %v6232 = vunpack.c.l.b16 %v6196
      %v6233 = vunpack.c.l.b16 %v6197
      %v6234 = vpack.c.b16 %v6233, %v6232
      %v6237 = vunpack.c.l.b16 %v5980
      %v6238 = vunpack.c.l.b16 %v5981
      %v6239 = vpack.c.b16 %v6238, %v6237
      %v6242 = vsel %vm2516, %v6234, 0
      %6244 = vmatpush.bf16.msra.mxu0 0
      %6245 = vmatpush.bf16.msra.mxu0 0
      %6246 = vmatpush.bf16.msra.mxu0 0
      %6247 = vmatpush.bf16.msra.mxu0 0
      %6248 = vmatpush.bf16.msra.mxu0 0
      %6249 = vmatpush.bf16.msra.mxu0 0
      %6250 = vmatpush.bf16.msra.mxu0 0
      %6251 = vmatpush.bf16.msra.mxu0 %v6239
      %6252 = vmatmul.bf16.gmra.mxu0 %v6242
      %v6253 = vpop.f32.mrf.mxu0
      %v6254 = vadd.f32 0.0, %v6253
      %v6255 = vpop.f32.mrf.mxu0
      %v6256 = vadd.f32 0.0, %v6255
      %6257 = vdwg.mxu0
      %v6260 = vunpack.c.l.b16 %v6198
      %v6261 = vunpack.c.l.b16 %v6199
      %v6262 = vpack.c.b16 %v6261, %v6260
      %v6265 = vunpack.c.l.b16 %v5982
      %v6266 = vunpack.c.l.b16 %v5983
      %v6267 = vpack.c.b16 %v6266, %v6265
      %v6270 = vsel %vm2516, %v6262, 0
      %6272 = vmatpush.bf16.msra.mxu0 0
      %6273 = vmatpush.bf16.msra.mxu0 0
      %6274 = vmatpush.bf16.msra.mxu0 0
      %6275 = vmatpush.bf16.msra.mxu0 0
      %6276 = vmatpush.bf16.msra.mxu0 0
      %6277 = vmatpush.bf16.msra.mxu0 0
      %6278 = vmatpush.bf16.msra.mxu0 0
      %6279 = vmatpush.bf16.msra.mxu0 %v6267
      %6280 = vmatmul.bf16.gmra.mxu0 %v6270
      %v6281 = vpop.f32.mrf.mxu0
      %v6282 = vadd.f32 0.0, %v6281
      %v6283 = vpop.f32.mrf.mxu0
      %v6284 = vadd.f32 0.0, %v6283
      %6285 = vdwg.mxu0
      %v6288 = vunpack.c.l.b16 %v6200
      %v6289 = vunpack.c.l.b16 %v6201
      %v6290 = vpack.c.b16 %v6289, %v6288
      %v6293 = vunpack.c.l.b16 %v5984
      %v6294 = vunpack.c.l.b16 %v5985
      %v6295 = vpack.c.b16 %v6294, %v6293
      %v6298 = vsel %vm2516, %v6290, 0
      %6300 = vmatpush.bf16.msra.mxu0 0
      %6301 = vmatpush.bf16.msra.mxu0 0
      %6302 = vmatpush.bf16.msra.mxu0 0
      %6303 = vmatpush.bf16.msra.mxu0 0
      %6304 = vmatpush.bf16.msra.mxu0 0
      %6305 = vmatpush.bf16.msra.mxu0 0
      %6306 = vmatpush.bf16.msra.mxu0 0
      %6307 = vmatpush.bf16.msra.mxu0 %v6295
      %6308 = vmatmul.bf16.gmra.mxu0 %v6298
      %v6309 = vpop.f32.mrf.mxu0
      %v6310 = vadd.f32 0.0, %v6309
      %v6311 = vpop.f32.mrf.mxu0
      %v6312 = vadd.f32 0.0, %v6311
      %6313 = vdwg.mxu0
      %v6314 = vpack.c.bf16 %v6228, %v6226
      %v6315 = vpack.c.bf16 %v6256, %v6254
      %v6316 = vpack.c.bf16 %v6284, %v6282
      %v6317 = vpack.c.bf16 %v6312, %v6310
      %s6318 = scalar_lea.vmem %s14, 24
      %v6319 = vld [vmem:[%s6318] sm:$0xf]
      %v6321 = vsel %vm2405, %v6314, 0
      %v6324 = vsel %vm2405, %v6315, 0
      %v6327 = vsel %vm2405, %v6316, 0
      %v6330 = vsel %vm2405, %v6317, 0
      %v6333 = vsel %vm3253, %v6319, 0
      %6335 = vmatpush.bf16.msra.mxu0 0
      %6336 = vmatpush.bf16.msra.mxu0 0
      %6337 = vmatpush.bf16.msra.mxu0 0
      %6338 = vmatpush.bf16.msra.mxu0 0
      %6339 = vmatpush.bf16.msra.mxu0 0
      %6340 = vmatpush.bf16.msra.mxu0 0
      %6341 = vmatpush.bf16.msra.mxu0 0
      %6342 = vmatpush.bf16.msra.mxu0 %v6333
      %6343 = vmatmul.bf16.gmra.mxu0 %v6321
      %v6344 = vpop.f32.mrf.mxu0
      %v6345 = vadd.f32 0.0, %v6344
      %v6346 = vpop.f32.mrf.mxu0
      %v6347 = vadd.f32 0.0, %v6346
      %6348 = vmatmul.bf16.gmra.mxu0 %v6324
      %v6349 = vpop.f32.mrf.mxu0
      %v6350 = vadd.f32 0.0, %v6349
      %v6351 = vpop.f32.mrf.mxu0
      %v6352 = vadd.f32 0.0, %v6351
      %6353 = vmatmul.bf16.gmra.mxu0 %v6327
      %v6354 = vpop.f32.mrf.mxu0
      %v6355 = vadd.f32 0.0, %v6354
      %v6356 = vpop.f32.mrf.mxu0
      %v6357 = vadd.f32 0.0, %v6356
      %6358 = vmatmul.bf16.gmra.mxu0 %v6330
      %v6359 = vpop.f32.mrf.mxu0
      %v6360 = vadd.f32 0.0, %v6359
      %v6361 = vpop.f32.mrf.mxu0
      %v6362 = vadd.f32 0.0, %v6361
      %6363 = vdwg.mxu0
      %v6364 = vadd.f32 %v5790, %v6345
      %v6365 = vadd.f32 %v5792, %v6347
      %v6366 = vadd.f32 %v5795, %v6350
      %v6367 = vadd.f32 %v5797, %v6352
      %v6368 = vadd.f32 %v5800, %v6355
      %v6369 = vadd.f32 %v5802, %v6357
      %v6370 = vadd.f32 %v5805, %v6360
      %v6371 = vadd.f32 %v5807, %v6362
      %s6372 = scalar_lea.vmem %s8, 112
      %v6373 = vld [vmem:[%s6372] sm:$0xf]
      %v6374 = vld [vmem:[%s6372 + $0x4] sm:$0xf]
      %v6375 = vld [vmem:[%s6372 + $0x8] sm:$0xf]
      %v6376 = vld [vmem:[%s6372 + $0xc] sm:$0xf]
      %s6377 = scalar_lea.vmem %s9, 7
      %v6378 = vld [vmem:[%s6377] sm:$0x1]
      %v6380 = vperm.slane %v6378, 0
      %v6386 = vunpack.c.l.b16 %v6373
      %v6387 = vunpack.c.l.b16 %v6374
      %v6388 = vunpack.c.l.b16 %v6375
      %v6389 = vunpack.c.l.b16 %v6376
      %v6390 = vpack.c.b16 %v6387, %v6386
      %v6391 = vpack.c.b16 %v6389, %v6388
      %6394 = vmatpush.bf16.msra.mxu0 0
      %6395 = vmatpush.bf16.msra.mxu0 0
      %6396 = vmatpush.bf16.msra.mxu0 0
      %6397 = vmatpush.bf16.msra.mxu0 0
      %6398 = vmatpush.bf16.msra.mxu0 0
      %6399 = vmatpush.bf16.msra.mxu0 0
      %6400 = vmatpush.bf16.msra.mxu0 %v6391
      %6401 = vmatpush.bf16.msra.mxu0 %v6390
      %6402 = vmatmul.bf16.gmra.mxu0 %v4710
      %v6403 = vpop.f32.mrf.mxu0
      %v6404 = vadd.f32 %v6380, %v6403
      %v6405 = vpop.f32.mrf.mxu0
      %v6406 = vadd.f32 %v6380, %v6405
      %6407 = vmatmul.bf16.gmra.mxu0 %v4713
      %v6408 = vpop.f32.mrf.mxu0
      %v6409 = vadd.f32 %v6380, %v6408
      %v6410 = vpop.f32.mrf.mxu0
      %v6411 = vadd.f32 %v6380, %v6410
      %6412 = vmatmul.bf16.gmra.mxu0 %v4716
      %v6413 = vpop.f32.mrf.mxu0
      %v6414 = vadd.f32 %v6380, %v6413
      %v6415 = vpop.f32.mrf.mxu0
      %v6416 = vadd.f32 %v6380, %v6415
      %6417 = vmatmul.bf16.gmra.mxu0 %v4719
      %v6418 = vpop.f32.mrf.mxu0
      %v6419 = vadd.f32 %v6380, %v6418
      %v6420 = vpop.f32.mrf.mxu0
      %v6421 = vadd.f32 %v6380, %v6420
      %6422 = vdwg.mxu0
      %s6423 = scalar_lea.vmem %s10, 112
      %v6424 = vld [vmem:[%s6423] sm:$0xf]
      %v6425 = vld [vmem:[%s6423 + $0x4] sm:$0xf]
      %v6426 = vld [vmem:[%s6423 + $0x8] sm:$0xf]
      %v6427 = vld [vmem:[%s6423 + $0xc] sm:$0xf]
      %s6428 = scalar_lea.vmem %s11, 7
      %v6429 = vld [vmem:[%s6428] sm:$0x1]
      %v6431 = vperm.slane %v6429, 0
      %v6437 = vunpack.c.l.b16 %v6424
      %v6438 = vunpack.c.l.b16 %v6425
      %v6439 = vunpack.c.l.b16 %v6426
      %v6440 = vunpack.c.l.b16 %v6427
      %v6441 = vpack.c.b16 %v6438, %v6437
      %v6442 = vpack.c.b16 %v6440, %v6439
      %6445 = vmatpush.bf16.msra.mxu0 0
      %6446 = vmatpush.bf16.msra.mxu0 0
      %6447 = vmatpush.bf16.msra.mxu0 0
      %6448 = vmatpush.bf16.msra.mxu0 0
      %6449 = vmatpush.bf16.msra.mxu0 0
      %6450 = vmatpush.bf16.msra.mxu0 0
      %6451 = vmatpush.bf16.msra.mxu0 %v6442
      %6452 = vmatpush.bf16.msra.mxu0 %v6441
      %6453 = vmatmul.bf16.gmra.mxu0 %v4710
      %v6454 = vpop.f32.mrf.mxu0
      %v6455 = vadd.f32 %v6431, %v6454
      %v6456 = vpop.f32.mrf.mxu0
      %v6457 = vadd.f32 %v6431, %v6456
      %6458 = vmatmul.bf16.gmra.mxu0 %v4713
      %v6459 = vpop.f32.mrf.mxu0
      %v6460 = vadd.f32 %v6431, %v6459
      %v6461 = vpop.f32.mrf.mxu0
      %v6462 = vadd.f32 %v6431, %v6461
      %6463 = vmatmul.bf16.gmra.mxu0 %v4716
      %v6464 = vpop.f32.mrf.mxu0
      %v6465 = vadd.f32 %v6431, %v6464
      %v6466 = vpop.f32.mrf.mxu0
      %v6467 = vadd.f32 %v6431, %v6466
      %6468 = vmatmul.bf16.gmra.mxu0 %v4719
      %v6469 = vpop.f32.mrf.mxu0
      %v6470 = vadd.f32 %v6431, %v6469
      %v6471 = vpop.f32.mrf.mxu0
      %v6472 = vadd.f32 %v6431, %v6471
      %6473 = vdwg.mxu0
      %s6474 = scalar_lea.vmem %s12, 112
      %v6475 = vld [vmem:[%s6474] sm:$0xf]
      %v6476 = vld [vmem:[%s6474 + $0x4] sm:$0xf]
      %v6477 = vld [vmem:[%s6474 + $0x8] sm:$0xf]
      %v6478 = vld [vmem:[%s6474 + $0xc] sm:$0xf]
      %s6479 = scalar_lea.vmem %s13, 7
      %v6480 = vld [vmem:[%s6479] sm:$0x1]
      %v6482 = vperm.slane %v6480, 0
      %v6488 = vunpack.c.l.b16 %v6475
      %v6489 = vunpack.c.l.b16 %v6476
      %v6490 = vunpack.c.l.b16 %v6477
      %v6491 = vunpack.c.l.b16 %v6478
      %v6492 = vpack.c.b16 %v6489, %v6488
      %v6493 = vpack.c.b16 %v6491, %v6490
      %6496 = vmatpush.bf16.msra.mxu0 0
      %6497 = vmatpush.bf16.msra.mxu0 0
      %6498 = vmatpush.bf16.msra.mxu0 0
      %6499 = vmatpush.bf16.msra.mxu0 0
      %6500 = vmatpush.bf16.msra.mxu0 0
      %6501 = vmatpush.bf16.msra.mxu0 0
      %6502 = vmatpush.bf16.msra.mxu0 %v6493
      %6503 = vmatpush.bf16.msra.mxu0 %v6492
      %6504 = vmatmul.bf16.gmra.mxu0 %v4710
      %v6505 = vpop.f32.mrf.mxu0
      %v6506 = vadd.f32 %v6482, %v6505
      %v6507 = vpop.f32.mrf.mxu0
      %v6508 = vadd.f32 %v6482, %v6507
      %6509 = vmatmul.bf16.gmra.mxu0 %v4713
      %v6510 = vpop.f32.mrf.mxu0
      %v6511 = vadd.f32 %v6482, %v6510
      %v6512 = vpop.f32.mrf.mxu0
      %v6513 = vadd.f32 %v6482, %v6512
      %6514 = vmatmul.bf16.gmra.mxu0 %v4716
      %v6515 = vpop.f32.mrf.mxu0
      %v6516 = vadd.f32 %v6482, %v6515
      %v6517 = vpop.f32.mrf.mxu0
      %v6518 = vadd.f32 %v6482, %v6517
      %6519 = vmatmul.bf16.gmra.mxu0 %v4719
      %v6520 = vpop.f32.mrf.mxu0
      %v6521 = vadd.f32 %v6482, %v6520
      %v6522 = vpop.f32.mrf.mxu0
      %v6523 = vadd.f32 %v6482, %v6522
      %6524 = vdwg.mxu0
      %v6525 = vpack.c.bf16 %v6404, %v6404
      %v6526 = vpack.c.bf16 %v6406, %v6406
      %v6527 = vpack.c.bf16 %v6409, %v6409
      %v6528 = vpack.c.bf16 %v6411, %v6411
      %v6529 = vpack.c.bf16 %v6414, %v6414
      %v6530 = vpack.c.bf16 %v6416, %v6416
      %v6531 = vpack.c.bf16 %v6419, %v6419
      %v6532 = vpack.c.bf16 %v6421, %v6421
      %v6533 = vpack.c.bf16 %v6455, %v6455
      %v6534 = vpack.c.bf16 %v6457, %v6457
      %v6535 = vpack.c.bf16 %v6460, %v6460
      %v6536 = vpack.c.bf16 %v6462, %v6462
      %v6537 = vpack.c.bf16 %v6465, %v6465
      %v6538 = vpack.c.bf16 %v6467, %v6467
      %v6539 = vpack.c.bf16 %v6470, %v6470
      %v6540 = vpack.c.bf16 %v6472, %v6472
      %v6541 = vpack.c.bf16 %v6506, %v6506
      %v6542 = vpack.c.bf16 %v6508, %v6508
      %v6543 = vpack.c.bf16 %v6511, %v6511
      %v6544 = vpack.c.bf16 %v6513, %v6513
      %v6545 = vpack.c.bf16 %v6516, %v6516
      %v6546 = vpack.c.bf16 %v6518, %v6518
      %v6547 = vpack.c.bf16 %v6521, %v6521
      %v6548 = vpack.c.bf16 %v6523, %v6523
      %v6551 = vunpack.c.l.b16 %v6525
      %v6552 = vunpack.c.l.b16 %v6526
      %v6553 = vpack.c.b16 %v6552, %v6551
      %v6556 = vunpack.c.l.b16 %v6533
      %v6557 = vunpack.c.l.b16 %v6534
      %v6558 = vpack.c.b16 %v6557, %v6556
      %v6560 = vsel %vm2405, %v6553, 0
      %v6563 = vsel %vm2405, %v6558, 0
      %6565 = vmatpush.bf16.xpose.msra.mxu0 0
      %6566 = vmatpush.bf16.xpose.msra.mxu0 0
      %6567 = vmatpush.bf16.xpose.msra.mxu0 0
      %6568 = vmatpush.bf16.xpose.msra.mxu0 0
      %6569 = vmatpush.bf16.xpose.msra.mxu0 0
      %6570 = vmatpush.bf16.xpose.msra.mxu0 0
      %6571 = vmatpush.bf16.xpose.msra.mxu0 0
      %6572 = vmatpush.bf16.xpose.msra.mxu0 %v6563
      %6573 = vmatmul.bf16.gmra.mxu0 %v6560
      %v6574 = vpop.f32.mrf.mxu0
      %v6575 = vadd.f32 0.0, %v6574
      %v6576 = vpop.f32.mrf.mxu0
      %v6577 = vadd.f32 0.0, %v6576
      %6578 = vdwg.mxu0
      %v6581 = vunpack.c.l.b16 %v6527
      %v6582 = vunpack.c.l.b16 %v6528
      %v6583 = vpack.c.b16 %v6582, %v6581
      %v6586 = vunpack.c.l.b16 %v6535
      %v6587 = vunpack.c.l.b16 %v6536
      %v6588 = vpack.c.b16 %v6587, %v6586
      %v6590 = vsel %vm2405, %v6583, 0
      %v6593 = vsel %vm2405, %v6588, 0
      %6595 = vmatpush.bf16.xpose.msra.mxu0 0
      %6596 = vmatpush.bf16.xpose.msra.mxu0 0
      %6597 = vmatpush.bf16.xpose.msra.mxu0 0
      %6598 = vmatpush.bf16.xpose.msra.mxu0 0
      %6599 = vmatpush.bf16.xpose.msra.mxu0 0
      %6600 = vmatpush.bf16.xpose.msra.mxu0 0
      %6601 = vmatpush.bf16.xpose.msra.mxu0 0
      %6602 = vmatpush.bf16.xpose.msra.mxu0 %v6593
      %6603 = vmatmul.bf16.gmra.mxu0 %v6590
      %v6604 = vpop.f32.mrf.mxu0
      %v6605 = vadd.f32 0.0, %v6604
      %v6606 = vpop.f32.mrf.mxu0
      %v6607 = vadd.f32 0.0, %v6606
      %6608 = vdwg.mxu0
      %v6611 = vunpack.c.l.b16 %v6529
      %v6612 = vunpack.c.l.b16 %v6530
      %v6613 = vpack.c.b16 %v6612, %v6611
      %v6616 = vunpack.c.l.b16 %v6537
      %v6617 = vunpack.c.l.b16 %v6538
      %v6618 = vpack.c.b16 %v6617, %v6616
      %v6620 = vsel %vm2405, %v6613, 0
      %v6623 = vsel %vm2405, %v6618, 0
      %6625 = vmatpush.bf16.xpose.msra.mxu0 0
      %6626 = vmatpush.bf16.xpose.msra.mxu0 0
      %6627 = vmatpush.bf16.xpose.msra.mxu0 0
      %6628 = vmatpush.bf16.xpose.msra.mxu0 0
      %6629 = vmatpush.bf16.xpose.msra.mxu0 0
      %6630 = vmatpush.bf16.xpose.msra.mxu0 0
      %6631 = vmatpush.bf16.xpose.msra.mxu0 0
      %6632 = vmatpush.bf16.xpose.msra.mxu0 %v6623
      %6633 = vmatmul.bf16.gmra.mxu0 %v6620
      %v6634 = vpop.f32.mrf.mxu0
      %v6635 = vadd.f32 0.0, %v6634
      %v6636 = vpop.f32.mrf.mxu0
      %v6637 = vadd.f32 0.0, %v6636
      %6638 = vdwg.mxu0
      %v6641 = vunpack.c.l.b16 %v6531
      %v6642 = vunpack.c.l.b16 %v6532
      %v6643 = vpack.c.b16 %v6642, %v6641
      %v6646 = vunpack.c.l.b16 %v6539
      %v6647 = vunpack.c.l.b16 %v6540
      %v6648 = vpack.c.b16 %v6647, %v6646
      %v6650 = vsel %vm2405, %v6643, 0
      %v6653 = vsel %vm2405, %v6648, 0
      %6655 = vmatpush.bf16.xpose.msra.mxu0 0
      %6656 = vmatpush.bf16.xpose.msra.mxu0 0
      %6657 = vmatpush.bf16.xpose.msra.mxu0 0
      %6658 = vmatpush.bf16.xpose.msra.mxu0 0
      %6659 = vmatpush.bf16.xpose.msra.mxu0 0
      %6660 = vmatpush.bf16.xpose.msra.mxu0 0
      %6661 = vmatpush.bf16.xpose.msra.mxu0 0
      %6662 = vmatpush.bf16.xpose.msra.mxu0 %v6653
      %6663 = vmatmul.bf16.gmra.mxu0 %v6650
      %v6664 = vpop.f32.mrf.mxu0
      %v6665 = vadd.f32 0.0, %v6664
      %v6666 = vpop.f32.mrf.mxu0
      %v6667 = vadd.f32 0.0, %v6666
      %6668 = vdwg.mxu0
      %v6669 = vsel %vm2516, %v6575, -inf
      %6670 = vmax.xlane.f32.xlu0 %v6669
      %v6671 = vpop.xlane.xlu0 %6670
      %v6672 = vsel %vm2516, %v6577, -inf
      %6673 = vmax.xlane.f32.xlu0 %v6672
      %v6674 = vpop.xlane.xlu0 %6673
      %v6675 = vsel %vm2516, %v6605, -inf
      %6676 = vmax.xlane.f32.xlu0 %v6675
      %v6677 = vpop.xlane.xlu0 %6676
      %v6678 = vsel %vm2516, %v6607, -inf
      %6679 = vmax.xlane.f32.xlu0 %v6678
      %v6680 = vpop.xlane.xlu0 %6679
      %v6681 = vsel %vm2516, %v6635, -inf
      %6682 = vmax.xlane.f32.xlu0 %v6681
      %v6683 = vpop.xlane.xlu0 %6682
      %v6684 = vsel %vm2516, %v6637, -inf
      %6685 = vmax.xlane.f32.xlu0 %v6684
      %v6686 = vpop.xlane.xlu0 %6685
      %v6687 = vsel %vm2516, %v6665, -inf
      %6688 = vmax.xlane.f32.xlu0 %v6687
      %v6689 = vpop.xlane.xlu0 %6688
      %v6690 = vsel %vm2516, %v6667, -inf
      %6691 = vmax.xlane.f32.xlu0 %v6690
      %v6692 = vpop.xlane.xlu0 %6691
      %v6693 = vsub.f32 %v6575, %v6671
      %v6694 = vsub.f32 %v6577, %v6674
      %v6695 = vsub.f32 %v6605, %v6677
      %v6696 = vsub.f32 %v6607, %v6680
      %v6697 = vsub.f32 %v6635, %v6683
      %v6698 = vsub.f32 %v6637, %v6686
      %v6699 = vsub.f32 %v6665, %v6689
      %v6700 = vsub.f32 %v6667, %v6692
      %v6701 = vmul.f32 %v6693, 1.442695
      %v6702 = vpow.pop %v6701
      %v6703 = vmul.f32 %v6694, 1.442695
      %v6704 = vpow.pop %v6703
      %v6705 = vmul.f32 %v6695, 1.442695
      %v6706 = vpow.pop %v6705
      %v6707 = vmul.f32 %v6696, 1.442695
      %v6708 = vpow.pop %v6707
      %v6709 = vmul.f32 %v6697, 1.442695
      %v6710 = vpow.pop %v6709
      %v6711 = vmul.f32 %v6698, 1.442695
      %v6712 = vpow.pop %v6711
      %v6713 = vmul.f32 %v6699, 1.442695
      %v6714 = vpow.pop %v6713
      %v6715 = vmul.f32 %v6700, 1.442695
      %v6716 = vpow.pop %v6715
      %v6717 = vsel %vm2516, %v6702, 0.0
      %6718 = vadd.xlane.f32.xlu0 %v6717
      %v6719 = vpop.xlane.xlu0 %6718
      %v6720 = vsel %vm2516, %v6704, 0.0
      %6721 = vadd.xlane.f32.xlu0 %v6720
      %v6722 = vpop.xlane.xlu0 %6721
      %v6723 = vsel %vm2516, %v6706, 0.0
      %6724 = vadd.xlane.f32.xlu0 %v6723
      %v6725 = vpop.xlane.xlu0 %6724
      %v6726 = vsel %vm2516, %v6708, 0.0
      %6727 = vadd.xlane.f32.xlu0 %v6726
      %v6728 = vpop.xlane.xlu0 %6727
      %v6729 = vsel %vm2516, %v6710, 0.0
      %6730 = vadd.xlane.f32.xlu0 %v6729
      %v6731 = vpop.xlane.xlu0 %6730
      %v6732 = vsel %vm2516, %v6712, 0.0
      %6733 = vadd.xlane.f32.xlu0 %v6732
      %v6734 = vpop.xlane.xlu0 %6733
      %v6735 = vsel %vm2516, %v6714, 0.0
      %6736 = vadd.xlane.f32.xlu0 %v6735
      %v6737 = vpop.xlane.xlu0 %6736
      %v6738 = vsel %vm2516, %v6716, 0.0
      %6739 = vadd.xlane.f32.xlu0 %v6738
      %v6740 = vpop.xlane.xlu0 %6739
      %v6741 = vrcp.pop %v6719
      %v6742 = vrcp.pop %v6722
      %v6743 = vrcp.pop %v6725
      %v6744 = vrcp.pop %v6728
      %v6745 = vrcp.pop %v6731
      %v6746 = vrcp.pop %v6734
      %v6747 = vrcp.pop %v6737
      %v6748 = vrcp.pop %v6740
      %v6749 = vmul.f32 %v6702, %v6741
      %v6750 = vmul.f32 %v6704, %v6742
      %v6751 = vmul.f32 %v6706, %v6743
      %v6752 = vmul.f32 %v6708, %v6744
      %v6753 = vmul.f32 %v6710, %v6745
      %v6754 = vmul.f32 %v6712, %v6746
      %v6755 = vmul.f32 %v6714, %v6747
      %v6756 = vmul.f32 %v6716, %v6748
      %v6757 = vpack.c.bf16 %v6749, %v6749
      %v6758 = vpack.c.bf16 %v6750, %v6750
      %v6759 = vpack.c.bf16 %v6751, %v6751
      %v6760 = vpack.c.bf16 %v6752, %v6752
      %v6761 = vpack.c.bf16 %v6753, %v6753
      %v6762 = vpack.c.bf16 %v6754, %v6754
      %v6763 = vpack.c.bf16 %v6755, %v6755
      %v6764 = vpack.c.bf16 %v6756, %v6756
      %v6767 = vunpack.c.l.b16 %v6757
      %v6768 = vunpack.c.l.b16 %v6758
      %v6769 = vpack.c.b16 %v6768, %v6767
      %v6772 = vunpack.c.l.b16 %v6541
      %v6773 = vunpack.c.l.b16 %v6542
      %v6774 = vpack.c.b16 %v6773, %v6772
      %v6777 = vsel %vm2516, %v6769, 0
      %6779 = vmatpush.bf16.msra.mxu0 0
      %6780 = vmatpush.bf16.msra.mxu0 0
      %6781 = vmatpush.bf16.msra.mxu0 0
      %6782 = vmatpush.bf16.msra.mxu0 0
      %6783 = vmatpush.bf16.msra.mxu0 0
      %6784 = vmatpush.bf16.msra.mxu0 0
      %6785 = vmatpush.bf16.msra.mxu0 0
      %6786 = vmatpush.bf16.msra.mxu0 %v6774
      %6787 = vmatmul.bf16.gmra.mxu0 %v6777
      %v6788 = vpop.f32.mrf.mxu0
      %v6789 = vadd.f32 0.0, %v6788
      %v6790 = vpop.f32.mrf.mxu0
      %v6791 = vadd.f32 0.0, %v6790
      %6792 = vdwg.mxu0
      %v6795 = vunpack.c.l.b16 %v6759
      %v6796 = vunpack.c.l.b16 %v6760
      %v6797 = vpack.c.b16 %v6796, %v6795
      %v6800 = vunpack.c.l.b16 %v6543
      %v6801 = vunpack.c.l.b16 %v6544
      %v6802 = vpack.c.b16 %v6801, %v6800
      %v6805 = vsel %vm2516, %v6797, 0
      %6807 = vmatpush.bf16.msra.mxu0 0
      %6808 = vmatpush.bf16.msra.mxu0 0
      %6809 = vmatpush.bf16.msra.mxu0 0
      %6810 = vmatpush.bf16.msra.mxu0 0
      %6811 = vmatpush.bf16.msra.mxu0 0
      %6812 = vmatpush.bf16.msra.mxu0 0
      %6813 = vmatpush.bf16.msra.mxu0 0
      %6814 = vmatpush.bf16.msra.mxu0 %v6802
      %6815 = vmatmul.bf16.gmra.mxu0 %v6805
      %v6816 = vpop.f32.mrf.mxu0
      %v6817 = vadd.f32 0.0, %v6816
      %v6818 = vpop.f32.mrf.mxu0
      %v6819 = vadd.f32 0.0, %v6818
      %6820 = vdwg.mxu0
      %v6823 = vunpack.c.l.b16 %v6761
      %v6824 = vunpack.c.l.b16 %v6762
      %v6825 = vpack.c.b16 %v6824, %v6823
      %v6828 = vunpack.c.l.b16 %v6545
      %v6829 = vunpack.c.l.b16 %v6546
      %v6830 = vpack.c.b16 %v6829, %v6828
      %v6833 = vsel %vm2516, %v6825, 0
      %6835 = vmatpush.bf16.msra.mxu0 0
      %6836 = vmatpush.bf16.msra.mxu0 0
      %6837 = vmatpush.bf16.msra.mxu0 0
      %6838 = vmatpush.bf16.msra.mxu0 0
      %6839 = vmatpush.bf16.msra.mxu0 0
      %6840 = vmatpush.bf16.msra.mxu0 0
      %6841 = vmatpush.bf16.msra.mxu0 0
      %6842 = vmatpush.bf16.msra.mxu0 %v6830
      %6843 = vmatmul.bf16.gmra.mxu0 %v6833
      %v6844 = vpop.f32.mrf.mxu0
      %v6845 = vadd.f32 0.0, %v6844
      %v6846 = vpop.f32.mrf.mxu0
      %v6847 = vadd.f32 0.0, %v6846
      %6848 = vdwg.mxu0
      %v6851 = vunpack.c.l.b16 %v6763
      %v6852 = vunpack.c.l.b16 %v6764
      %v6853 = vpack.c.b16 %v6852, %v6851
      %v6856 = vunpack.c.l.b16 %v6547
      %v6857 = vunpack.c.l.b16 %v6548
      %v6858 = vpack.c.b16 %v6857, %v6856
      %v6861 = vsel %vm2516, %v6853, 0
      %6863 = vmatpush.bf16.msra.mxu0 0
      %6864 = vmatpush.bf16.msra.mxu0 0
      %6865 = vmatpush.bf16.msra.mxu0 0
      %6866 = vmatpush.bf16.msra.mxu0 0
      %6867 = vmatpush.bf16.msra.mxu0 0
      %6868 = vmatpush.bf16.msra.mxu0 0
      %6869 = vmatpush.bf16.msra.mxu0 0
      %6870 = vmatpush.bf16.msra.mxu0 %v6858
      %6871 = vmatmul.bf16.gmra.mxu0 %v6861
      %v6872 = vpop.f32.mrf.mxu0
      %v6873 = vadd.f32 0.0, %v6872
      %v6874 = vpop.f32.mrf.mxu0
      %v6875 = vadd.f32 0.0, %v6874
      %6876 = vdwg.mxu0
      %v6877 = vpack.c.bf16 %v6791, %v6789
      %v6878 = vpack.c.bf16 %v6819, %v6817
      %v6879 = vpack.c.bf16 %v6847, %v6845
      %v6880 = vpack.c.bf16 %v6875, %v6873
      %s6881 = scalar_lea.vmem %s14, 28
      %v6882 = vld [vmem:[%s6881] sm:$0xf]
      %v6884 = vsel %vm2405, %v6877, 0
      %v6887 = vsel %vm2405, %v6878, 0
      %v6890 = vsel %vm2405, %v6879, 0
      %v6893 = vsel %vm2405, %v6880, 0
      %v6896 = vsel %vm3253, %v6882, 0
      %6898 = vmatpush.bf16.msra.mxu0 0
      %6899 = vmatpush.bf16.msra.mxu0 0
      %6900 = vmatpush.bf16.msra.mxu0 0
      %6901 = vmatpush.bf16.msra.mxu0 0
      %6902 = vmatpush.bf16.msra.mxu0 0
      %6903 = vmatpush.bf16.msra.mxu0 0
      %6904 = vmatpush.bf16.msra.mxu0 0
      %6905 = vmatpush.bf16.msra.mxu0 %v6896
      %6906 = vmatmul.bf16.gmra.mxu0 %v6884
      %v6907 = vpop.f32.mrf.mxu0
      %v6908 = vadd.f32 0.0, %v6907
      %v6909 = vpop.f32.mrf.mxu0
      %v6910 = vadd.f32 0.0, %v6909
      %6911 = vmatmul.bf16.gmra.mxu0 %v6887
      %v6912 = vpop.f32.mrf.mxu0
      %v6913 = vadd.f32 0.0, %v6912
      %v6914 = vpop.f32.mrf.mxu0
      %v6915 = vadd.f32 0.0, %v6914
      %6916 = vmatmul.bf16.gmra.mxu0 %v6890
      %v6917 = vpop.f32.mrf.mxu0
      %v6918 = vadd.f32 0.0, %v6917
      %v6919 = vpop.f32.mrf.mxu0
      %v6920 = vadd.f32 0.0, %v6919
      %6921 = vmatmul.bf16.gmra.mxu0 %v6893
      %v6922 = vpop.f32.mrf.mxu0
      %v6923 = vadd.f32 0.0, %v6922
      %v6924 = vpop.f32.mrf.mxu0
      %v6925 = vadd.f32 0.0, %v6924
      %6926 = vdwg.mxu0
      %v6927 = vadd.f32 %v6364, %v6908
      %v6928 = vadd.f32 %v6365, %v6910
      %v6929 = vadd.f32 %v6366, %v6913
      %v6930 = vadd.f32 %v6367, %v6915
      %v6931 = vadd.f32 %v6368, %v6918
      %v6932 = vadd.f32 %v6369, %v6920
      %v6933 = vadd.f32 %v6370, %v6923
      %v6934 = vadd.f32 %v6371, %v6925
      %s6935 = scalar_lea.vmem %s15, 1
      %v6936 = vld [vmem:[%s6935] sm:$0x1]
      %v6938 = vperm.slane %v6936, 0
      %v6940 = vadd.f32 %v6927, %v6938
      %v6941 = vadd.f32 %v6928, %v6938
      %v6942 = vadd.f32 %v6929, %v6938
      %v6943 = vadd.f32 %v6930, %v6938
      %v6944 = vadd.f32 %v6931, %v6938
      %v6945 = vadd.f32 %v6932, %v6938
      %v6946 = vadd.f32 %v6933, %v6938
      %v6947 = vadd.f32 %v6934, %v6938
      %v6948 = vadd.f32 %v4675, %v6940
      %v6949 = vadd.f32 %v4676, %v6941
      %v6950 = vadd.f32 %v4677, %v6942
      %v6951 = vadd.f32 %v4678, %v6943
      %v6952 = vadd.f32 %v4679, %v6944
      %v6953 = vadd.f32 %v4680, %v6945
      %v6954 = vadd.f32 %v4681, %v6946
      %v6955 = vadd.f32 %v4682, %v6947
      %v6956 = vsel %vm2231, %v6948, 0.0
      %6957 = vadd.xlane.f32.xlu0 %v6956
      %v6958 = vpop.xlane.xlu0 %6957
      %v6959 = vsel %vm2231, %v6949, 0.0
      %6960 = vadd.xlane.f32.xlu0 %v6959
      %v6961 = vpop.xlane.xlu0 %6960
      %v6962 = vsel %vm2231, %v6950, 0.0
      %6963 = vadd.xlane.f32.xlu0 %v6962
      %v6964 = vpop.xlane.xlu0 %6963
      %v6965 = vsel %vm2231, %v6951, 0.0
      %6966 = vadd.xlane.f32.xlu0 %v6965
      %v6967 = vpop.xlane.xlu0 %6966
      %v6968 = vsel %vm2231, %v6952, 0.0
      %6969 = vadd.xlane.f32.xlu0 %v6968
      %v6970 = vpop.xlane.xlu0 %6969
      %v6971 = vsel %vm2231, %v6953, 0.0
      %6972 = vadd.xlane.f32.xlu0 %v6971
      %v6973 = vpop.xlane.xlu0 %6972
      %v6974 = vsel %vm2231, %v6954, 0.0
      %6975 = vadd.xlane.f32.xlu0 %v6974
      %v6976 = vpop.xlane.xlu0 %6975
      %v6977 = vsel %vm2231, %v6955, 0.0
      %6978 = vadd.xlane.f32.xlu0 %v6977
      %v6979 = vpop.xlane.xlu0 %6978
      %v6980 = vmul.f32 %v6958, %v4506
      %v6981 = vmul.f32 %v6961, %v4506
      %v6982 = vmul.f32 %v6964, %v4506
      %v6983 = vmul.f32 %v6967, %v4506
      %v6984 = vmul.f32 %v6970, %v4506
      %v6985 = vmul.f32 %v6973, %v4506
      %v6986 = vmul.f32 %v6976, %v4506
      %v6987 = vmul.f32 %v6979, %v4506
      %v6988 = vsub.f32 %v6948, %v6980
      %v6989 = vsub.f32 %v6949, %v6981
      %v6990 = vsub.f32 %v6950, %v6982
      %v6991 = vsub.f32 %v6951, %v6983
      %v6992 = vsub.f32 %v6952, %v6984
      %v6993 = vsub.f32 %v6953, %v6985
      %v6994 = vsub.f32 %v6954, %v6986
      %v6995 = vsub.f32 %v6955, %v6987
      %v6996 = vmul.f32 %v6988, %v6988
      %v6997 = vmul.f32 %v6989, %v6989
      %v6998 = vmul.f32 %v6990, %v6990
      %v6999 = vmul.f32 %v6991, %v6991
      %v7000 = vmul.f32 %v6992, %v6992
      %v7001 = vmul.f32 %v6993, %v6993
      %v7002 = vmul.f32 %v6994, %v6994
      %v7003 = vmul.f32 %v6995, %v6995
      %v7004 = vsel %vm2231, %v6996, 0.0
      %7005 = vadd.xlane.f32.xlu0 %v7004
      %v7006 = vpop.xlane.xlu0 %7005
      %v7007 = vsel %vm2231, %v6997, 0.0
      %7008 = vadd.xlane.f32.xlu0 %v7007
      %v7009 = vpop.xlane.xlu0 %7008
      %v7010 = vsel %vm2231, %v6998, 0.0
      %7011 = vadd.xlane.f32.xlu0 %v7010
      %v7012 = vpop.xlane.xlu0 %7011
      %v7013 = vsel %vm2231, %v6999, 0.0
      %7014 = vadd.xlane.f32.xlu0 %v7013
      %v7015 = vpop.xlane.xlu0 %7014
      %v7016 = vsel %vm2231, %v7000, 0.0
      %7017 = vadd.xlane.f32.xlu0 %v7016
      %v7018 = vpop.xlane.xlu0 %7017
      %v7019 = vsel %vm2231, %v7001, 0.0
      %7020 = vadd.xlane.f32.xlu0 %v7019
      %v7021 = vpop.xlane.xlu0 %7020
      %v7022 = vsel %vm2231, %v7002, 0.0
      %7023 = vadd.xlane.f32.xlu0 %v7022
      %v7024 = vpop.xlane.xlu0 %7023
      %v7025 = vsel %vm2231, %v7003, 0.0
      %7026 = vadd.xlane.f32.xlu0 %v7025
      %v7027 = vpop.xlane.xlu0 %7026
      %v7028 = vmul.f32 %v7006, %v4506
      %v7029 = vmul.f32 %v7009, %v4506
      %v7030 = vmul.f32 %v7012, %v4506
      %v7031 = vmul.f32 %v7015, %v4506
      %v7032 = vmul.f32 %v7018, %v4506
      %v7033 = vmul.f32 %v7021, %v4506
      %v7034 = vmul.f32 %v7024, %v4506
      %v7035 = vmul.f32 %v7027, %v4506
      %v7036 = vadd.f32 %v7028, 1e-05
      %v7037 = vadd.f32 %v7029, 1e-05
      %v7038 = vadd.f32 %v7030, 1e-05
      %v7039 = vadd.f32 %v7031, 1e-05
      %v7040 = vadd.f32 %v7032, 1e-05
      %v7041 = vadd.f32 %v7033, 1e-05
      %v7042 = vadd.f32 %v7034, 1e-05
      %v7043 = vadd.f32 %v7035, 1e-05
      %v7044 = vrsqrt.pop %v7036
      %v7045 = vmul.f32 %v7044, %v7036
      %v7046 = vmul.f32 %v7045, %v7044
      %v7047 = vmul.f32 0.5, %v7046
      %v7048 = vsub.f32 1.5, %v7047
      %v7049 = vmul.f32 %v7044, %v7048
      %vm7050 = vweird.f32 %v7036
      %vm7051 = vweird.f32 %v7044
      %vm7052 = vmor %vm7050, %vm7051
      %v7053 = vsel %vm7052, %v7044, %v7049
      %v7054 = vrsqrt.pop %v7037
      %v7055 = vmul.f32 %v7054, %v7037
      %v7056 = vmul.f32 %v7055, %v7054
      %v7057 = vmul.f32 0.5, %v7056
      %v7058 = vsub.f32 1.5, %v7057
      %v7059 = vmul.f32 %v7054, %v7058
      %vm7060 = vweird.f32 %v7037
      %vm7061 = vweird.f32 %v7054
      %vm7062 = vmor %vm7060, %vm7061
      %v7063 = vsel %vm7062, %v7054, %v7059
      %v7064 = vrsqrt.pop %v7038
      %v7065 = vmul.f32 %v7064, %v7038
      %v7066 = vmul.f32 %v7065, %v7064
      %v7067 = vmul.f32 0.5, %v7066
      %v7068 = vsub.f32 1.5, %v7067
      %v7069 = vmul.f32 %v7064, %v7068
      %vm7070 = vweird.f32 %v7038
      %vm7071 = vweird.f32 %v7064
      %vm7072 = vmor %vm7070, %vm7071
      %v7073 = vsel %vm7072, %v7064, %v7069
      %v7074 = vrsqrt.pop %v7039
      %v7075 = vmul.f32 %v7074, %v7039
      %v7076 = vmul.f32 %v7075, %v7074
      %v7077 = vmul.f32 0.5, %v7076
      %v7078 = vsub.f32 1.5, %v7077
      %v7079 = vmul.f32 %v7074, %v7078
      %vm7080 = vweird.f32 %v7039
      %vm7081 = vweird.f32 %v7074
      %vm7082 = vmor %vm7080, %vm7081
      %v7083 = vsel %vm7082, %v7074, %v7079
      %v7084 = vrsqrt.pop %v7040
      %v7085 = vmul.f32 %v7084, %v7040
      %v7086 = vmul.f32 %v7085, %v7084
      %v7087 = vmul.f32 0.5, %v7086
      %v7088 = vsub.f32 1.5, %v7087
      %v7089 = vmul.f32 %v7084, %v7088
      %vm7090 = vweird.f32 %v7040
      %vm7091 = vweird.f32 %v7084
      %vm7092 = vmor %vm7090, %vm7091
      %v7093 = vsel %vm7092, %v7084, %v7089
      %v7094 = vrsqrt.pop %v7041
      %v7095 = vmul.f32 %v7094, %v7041
      %v7096 = vmul.f32 %v7095, %v7094
      %v7097 = vmul.f32 0.5, %v7096
      %v7098 = vsub.f32 1.5, %v7097
      %v7099 = vmul.f32 %v7094, %v7098
      %vm7100 = vweird.f32 %v7041
      %vm7101 = vweird.f32 %v7094
      %vm7102 = vmor %vm7100, %vm7101
      %v7103 = vsel %vm7102, %v7094, %v7099
      %v7104 = vrsqrt.pop %v7042
      %v7105 = vmul.f32 %v7104, %v7042
      %v7106 = vmul.f32 %v7105, %v7104
      %v7107 = vmul.f32 0.5, %v7106
      %v7108 = vsub.f32 1.5, %v7107
      %v7109 = vmul.f32 %v7104, %v7108
      %vm7110 = vweird.f32 %v7042
      %vm7111 = vweird.f32 %v7104
      %vm7112 = vmor %vm7110, %vm7111
      %v7113 = vsel %vm7112, %v7104, %v7109
      %v7114 = vrsqrt.pop %v7043
      %v7115 = vmul.f32 %v7114, %v7043
      %v7116 = vmul.f32 %v7115, %v7114
      %v7117 = vmul.f32 0.5, %v7116
      %v7118 = vsub.f32 1.5, %v7117
      %v7119 = vmul.f32 %v7114, %v7118
      %vm7120 = vweird.f32 %v7043
      %vm7121 = vweird.f32 %v7114
      %vm7122 = vmor %vm7120, %vm7121
      %v7123 = vsel %vm7122, %v7114, %v7119
      %v7124 = vmul.f32 %v6988, %v7053
      %v7125 = vmul.f32 %v6989, %v7063
      %v7126 = vmul.f32 %v6990, %v7073
      %v7127 = vmul.f32 %v6991, %v7083
      %v7128 = vmul.f32 %v6992, %v7093
      %v7129 = vmul.f32 %v6993, %v7103
      %v7130 = vmul.f32 %v6994, %v7113
      %v7131 = vmul.f32 %v6995, %v7123
      %s7132 = scalar_lea.vmem %s16, 1
      %v7133 = vld [vmem:[%s7132] sm:$0x1]
      %v7135 = vperm.slane %v7133, 0
      %v7137 = vmul.f32 %v7124, %v7135
      %v7138 = vmul.f32 %v7125, %v7135
      %v7139 = vmul.f32 %v7126, %v7135
      %v7140 = vmul.f32 %v7127, %v7135
      %v7141 = vmul.f32 %v7128, %v7135
      %v7142 = vmul.f32 %v7129, %v7135
      %v7143 = vmul.f32 %v7130, %v7135
      %v7144 = vmul.f32 %v7131, %v7135
      %s7145 = scalar_lea.vmem %s17, 1
      %v7146 = vld [vmem:[%s7145] sm:$0x1]
      %v7148 = vperm.slane %v7146, 0
      %v7150 = vadd.f32 %v7137, %v7148
      %v7151 = vadd.f32 %v7138, %v7148
      %v7152 = vadd.f32 %v7139, %v7148
      %v7153 = vadd.f32 %v7140, %v7148
      %v7154 = vadd.f32 %v7141, %v7148
      %v7155 = vadd.f32 %v7142, %v7148
      %v7156 = vadd.f32 %v7143, %v7148
      %v7157 = vadd.f32 %v7144, %v7148
      %v7158 = vsel %vm2231, %v7150, 0.0
      %v7159 = vsel %vm2231, %v7151, 0.0
      %v7160 = vadd.f32 %v7158, %v7159
      %v7161 = vrot.slane %v7160, 4
      %v7162 = vadd.f32 %v7160, %v7161
      %v7163 = vrot.slane %v7162, 2
      %v7164 = vadd.f32 %v7162, %v7163
      %v7165 = vrot.slane %v7164, 1
      %v7166 = vadd.f32 %v7164, %v7165
      %v7167 = vsel %vm2231, %v7152, 0.0
      %v7168 = vsel %vm2231, %v7153, 0.0
      %v7169 = vadd.f32 %v7167, %v7168
      %v7170 = vrot.slane %v7169, 4
      %v7171 = vadd.f32 %v7169, %v7170
      %v7172 = vrot.slane %v7171, 2
      %v7173 = vadd.f32 %v7171, %v7172
      %v7174 = vrot.slane %v7173, 1
      %v7175 = vadd.f32 %v7173, %v7174
      %v7176 = vsel %vm2231, %v7154, 0.0
      %v7177 = vsel %vm2231, %v7155, 0.0
      %v7178 = vadd.f32 %v7176, %v7177
      %v7179 = vrot.slane %v7178, 4
      %v7180 = vadd.f32 %v7178, %v7179
      %v7181 = vrot.slane %v7180, 2
      %v7182 = vadd.f32 %v7180, %v7181
      %v7183 = vrot.slane %v7182, 1
      %v7184 = vadd.f32 %v7182, %v7183
      %v7185 = vsel %vm2231, %v7156, 0.0
      %v7186 = vsel %vm2231, %v7157, 0.0
      %v7187 = vadd.f32 %v7185, %v7186
      %v7188 = vrot.slane %v7187, 4
      %v7189 = vadd.f32 %v7187, %v7188
      %v7190 = vrot.slane %v7189, 2
      %v7191 = vadd.f32 %v7189, %v7190
      %v7192 = vrot.slane %v7191, 1
      %v7193 = vadd.f32 %v7191, %v7192
      %v7194 = vrcp.pop 16.0
      %v7195 = vmul.f32 16.0, %v7194
      %v7196 = vsub.f32 1.0, %v7195
      %v7197 = vmul.f32 %v7194, %v7196
      %v7198 = vadd.f32 %v7194, %v7197
      %vm7199 = vweird.f32 %v7194
      %v7200 = vsel %vm7199, %v7194, %v7198
      %v7201 = vmul.f32 %v7166, %v7200
      %v7202 = vmul.f32 %v7175, %v7200
      %v7203 = vmul.f32 %v7184, %v7200
      %v7204 = vmul.f32 %v7193, %v7200
      %v7205 = vld [vmem:[%s18] sm:$0x1]
      %v7207 = vperm.slane %v7205, 0
      %v7209 = vmul.f32 %v7201, %v7207
      %v7210 = vmul.f32 %v7202, %v7207
      %v7211 = vmul.f32 %v7203, %v7207
      %v7212 = vmul.f32 %v7204, %v7207
      %v7217 = vrot.slane %v7210, 7
      %vm7218 = vcmask 1041409
      %v7219 = vsel %vm7218, %v7217, %v7209
      %v7220 = vrot.slane %v7211, 6
      %vm7221 = vcmask 1042434
      %v7222 = vsel %vm7221, %v7220, %v7219
      %v7223 = vrot.slane %v7212, 5
      %vm7224 = vcmask 1043459
      %v7225 = vsel %vm7224, %v7223, %v7222
      %vm7227 = vcmask 257024
      %v7228 = vsel %vm7227, %v7225, 0.0
      %7229 = vadd.xlane.f32.xlu0 %v7228
      %v7230 = vpop.xlane.xlu0 %7229
      %s7231 = sld [smem:[#allocation2]]
      %v7232 = vstv %s7231
      %v7233 = vadd.f32 %v7230, %v7232
      %v7234 = vxor.u32 %v7233, 2147483648
      %v7235 = vmul.f32 %v7234, 1.442695
      %v7236 = vpow.pop %v7235
      %v7237 = vadd.f32 %v7236, 1.0
      %v7238 = vrcp.pop %v7237
      %v7239 = vmul.f32 %v7237, %v7238
      %v7240 = vsub.f32 1.0, %v7239
      %v7241 = vmul.f32 %v7238, %v7240
      %v7242 = vadd.f32 %v7238, %v7241
      %vm7243 = vweird.f32 %v7237
      %vm7244 = vweird.f32 %v7238
      %vm7245 = vmor %vm7243, %vm7244
      %v7246 = vsel %vm7245, %v7238, %v7242
      %v7247 = vand.u32 2147483647, %v7237
      %vm7248 = vcmp.eq.f32.partialorder %v7247, 8.507059e+37
      %v7249 = vand.u32 %v7237, 2147483648
      %v7250 = vor.u32 1.1754944e-38, %v7249
      %v7251 = vsel %vm7248, %v7250, %v7246
      %v7252 = vmul.f32 1.0, %v7251
      %v7254 = vperm.slane %v7252, 0
      %v7255 = vperm.slane %v7252, 1
      %v7256 = vperm.slane %v7252, 2
      %v7257 = vperm.slane %v7252, 3
      %7262 = vst [vmem:[%s658] sm:$0x1] %v7254
      %7263 = vst [vmem:[%s658 + $0x1] sm:$0x1] %v7255
      %7264 = vst [vmem:[%s658 + $0x2] sm:$0x1] %v7256
      %7265 = vst [vmem:[%s658 + $0x3] sm:$0x1] %v7257
      %s7266 = smul.u32 4, %s32
      %p7267 = scmp.lt.s32.totalorder %s7266, 7
      %s7268 = scalar_select %p7267, %s7266, 7
      %s7269 = scalar_lea.vmem %s20, %s7268
      // Predicated region
      $region101: #{tcr_epitope_transformer.1} parent=99 // pred_check
        %p7270 = pneg %p480
      $region102: #{tcr_epitope_transformer.1} parent=99 // pred_check_branch
        %7272 = sbr.rel (%p7270) target = $region104
      $region103: #{tcr_epitope_transformer.1} parent=99 // pred_region
        %s7273 = smul.u32 4, %s32
      $region104: #{tcr_epitope_transformer.1} parent=99 // pred_fallthru
        _
    $region100: #{tcr_epitope_transformer.1} parent=5 // pred_fallthru
      _
    %p7274 = scmp.le.s32.totalorder 2, %s27
    // Predicated region
    $region105: #{tcr_epitope_transformer.1} parent=5 // pred_check
      %p7275 = pneg %p7274
    $region106: #{tcr_epitope_transformer.1} parent=5 // pred_check_branch
      %7277 = sbr.rel (%p7275) target = $region108
    $region107: #{tcr_epitope_transformer.1} parent=5 // pred_region
      %s7278 = ssub.s32 %s27, 2
      // Predicated region
      $region109: #{tcr_epitope_transformer.1} parent=107 // pred_check
        %p7279 = pneg %p486
      $region110: #{tcr_epitope_transformer.1} parent=107 // pred_check_branch
        %7281 = sbr.rel (%p7279) target = $region112
      $region111: #{tcr_epitope_transformer.1} parent=107 // pred_region
        %s7282 = smul.u32 4, %s33
        %p7283 = scmp.lt.s32.totalorder %s7282, 7
        %s7284 = scalar_select %p7283, %s7282, 7
        %s7285 = scalar_lea.vmem %s20, %s7284
      $region112: #{tcr_epitope_transformer.1} parent=107 // pred_fallthru
        _
    $region108: #{tcr_epitope_transformer.1} parent=5 // pred_fallthru
      _
  $region6: #{tcr_epitope_transformer.1} parent=0 // loop_footer
    %s31 = sadd.s32 1, %s27
  $region7: #{tcr_epitope_transformer.1} parent=0 // loop_footer_branch
    %26 = sbr.rel target = $region3
  $region8: #{tcr_epitope_transformer.1} parent=0 // loop_exit
    _

</llo_original>
